<compile_context>
chip_gen: v7x
topology: tpu7x:2x2x1
jax: 0.10.0
libtpu: 0.0.40
codegen_flags: <defaults>
</compile_context>

<pallas_src>
import functools

import jax
import jax.numpy as jnp
from jax import lax
from jax.experimental import pallas as pl
from jax.experimental.pallas import tpu as pltpu

HIDDEN_SIZE = 32
NUMBER_OF_KEYS = 12
NUMBER_OF_MODES = 4
CHORD_PREDICTION_LENGTH = 9
MELODY_PREDICTION_LENGTH = 16
NOTES_PER_CHORD = 4
HEADS_WIDTH = 1 + NUMBER_OF_KEYS + NUMBER_OF_MODES + 1 + 1  # tempo|key|mode|val|en = 19

H = HIDDEN_SIZE
G = 4 * H                     # LSTM gate width = 128 = one f32 lane-tile

# ---- packed-weight column offsets (128-aligned so in-kernel slices are tile-aligned) ----
# W32 (rows = H): [hw1 | dw_z | Z2FOLD | CH_PACK | c_pw2 | MH_PACK | m_pw2]
W_HW1, W_DWZ, W_Z2F, W_CHP, W_CPW2, W_MHP, W_MPW2 = 0, 256, 384, 896, 1152, 1280, 1536
W_COLS = 1664
# BIASES (1 row): [hb1 | hb2 | b_fold2 | Z2BIAS | c_pb1 | c_pb2 | m_pb1 | m_pb2]
B_HB1, B_HB2, B_BF2, B_Z2B, B_CPB1, B_CPB2, B_MPB1, B_MPB2 = 0, 256, 384, 512, 1024, 1152, 1280, 1408
B_COLS = 1536


# ----------------------------------------------------------------------------
# Single fused kernel: heads + downsample + autoregressive decode
# ----------------------------------------------------------------------------
def decoder_kernel(z_ref, w32_ref, hw2p_ref, bias_ref, cpack_ref, mpack_ref,
                   heads_out_ref, chord_out_ref, melody_out_ref, *, unroll):
    num_chords = chord_out_ref.shape[0]
    z = z_ref[...]
    B = z.shape[0]

    # ---------------- prologue: feature heads (5 MLPs packed into 2 matmuls) --------------
    hw1 = w32_ref[:, W_HW1:W_HW1 + 5 * H]                    # (H, 5H)
    hb1 = bias_ref[:, B_HB1:B_HB1 + 5 * H]                   # (1, 5H)
    h1 = jnp.maximum(z @ hw1 + hb1, 0.0)                     # (B, 5H)
    hz = h1 @ hw2p_ref[...]                                  # (B, 256): [heads | z2-part]
    heads = hz[:, 0:HEADS_WIDTH] + bias_ref[:, B_HB2:B_HB2 + HEADS_WIDTH]
    heads_out_ref[...] = heads

    # ---------------- downsample (feature embeddings folded into HW2P / b_fold2) ----------
    z2 = (z @ w32_ref[:, W_DWZ:W_DWZ + H]
          + hz[:, G:G + H]
          + bias_ref[:, B_BF2:B_BF2 + H])                    # (B, H)

    # ---------------- all loop-invariant pre-activations in ONE push ----------------------
    # [ce_pre_init | cbase_cwi | base_mdc_wi | seed_base]  (each 4H = 128 wide)
    loop_bases = z2 @ w32_ref[:, W_Z2F:W_Z2F + 4 * G] + bias_ref[:, B_Z2B:B_Z2B + 4 * G]
    ce_pre0 = loop_bases[:, 0:G]                             # z2 @ c_wi + c_b
    cbase3 = loop_bases[:, G:4 * G]                          # (B, 3*4H) loop-invariant adds

    # ---------------- hoist loop weights / bias broadcasts out of the serial loop ---------
    ch_pack = w32_ref[:, W_CHP:W_CHP + G + H]                # (H, 4H+H) = [c_wh | c_pw1]
    c_pw2 = w32_ref[:, W_CPW2:W_CPW2 + CHORD_PREDICTION_LENGTH]
    mh_pack = w32_ref[:, W_MHP:W_MHP + G + H]                # [m_wh | m_pw1]
    m_pw2 = w32_ref[:, W_MPW2:W_MPW2 + MELODY_PREDICTION_LENGTH]
    cpack = cpack_ref[...]                                   # (9, 3*4H)
    mpack = mpack_ref[...]                                   # (16, 4H)
    c_pb1 = jnp.broadcast_to(bias_ref[:, B_CPB1:B_CPB1 + H], (B, H))
    c_pb2 = jnp.broadcast_to(bias_ref[:, B_CPB2:B_CPB2 + CHORD_PREDICTION_LENGTH],
                             (B, CHORD_PREDICTION_LENGTH))
    m_pb1 = jnp.broadcast_to(bias_ref[:, B_MPB1:B_MPB1 + H], (B, H))
    m_pb2 = jnp.broadcast_to(bias_ref[:, B_MPB2:B_MPB2 + MELODY_PREDICTION_LENGTH],
                             (B, MELODY_PREDICTION_LENGTH))

    def fsig(x):
        # sigmoid via tanh: single EUP push, no exp+reciprocal expansion risk
        return 0.5 * jnp.tanh(0.5 * x) + 0.5

    def lstm_gates(x_pre, hh_pre, c):
        # x_pre already contains x @ wi + b ; hh_pre = h_prev @ wh
        g = x_pre + hh_pre                                   # (B, 4H), one VPU add
        sg = fsig(g)                                         # 1 EUP push on full vreg
        ig = sg[:, 0:H]
        fg = sg[:, H:2 * H]
        og = sg[:, 3 * H:4 * H]
        gg = jnp.tanh(g[:, 2 * H:3 * H])                     # 1 EUP push
        c_new = fg * c + ig * gg
        h_new = og * jnp.tanh(c_new)                         # 1 EUP push
        return h_new, c_new

    def onehot_max(pred):
        # single cross-lane reduction; tie-break differs from torch.argmax (measure-zero)
        mx = jnp.max(pred, axis=-1, keepdims=True)
        return (pred == mx).astype(pred.dtype)

    def chord_step(i, carry):
        c_hh, c_c, m_hh, m_c, ce_pre, me_pre = carry

        # ---- chord LSTM ----
        hxc, c_c = lstm_gates(ce_pre, c_hh, c_c)
        # one push: [next-step hh pre | prediction-MLP hidden pre]
        ccombo = hxc @ ch_pack                               # (B, 4H+H)
        c_hh = ccombo[:, 0:G]
        chord_pred = jnp.maximum(ccombo[:, G:G + H] + c_pb1, 0.0) @ c_pw2 + c_pb2
        chord_out_ref[i] = chord_pred

        # ---- folded argmax step: ONE (B,9)@(9,384) push ----
        cps = onehot_max(chord_pred) @ cpack + cbase3        # (B, 3*4H)
        ce_pre = cps[:, 0:G]                                 # next chord x-pre (ce @ c_wi + c_b)
        mel_base_pre = cps[:, G:2 * G]                       # (ce@m_dw_c + z2-part) @ m_wi + m_b
        me_pre = jnp.where(i == 0, cps[:, 2 * G:3 * G], me_pre)   # seed melody chain at step 0

        # ---- melody inner loop (static unroll) ----
        for j in range(NOTES_PER_CHORD):
            hxm, m_c = lstm_gates(me_pre, m_hh, m_c)
            mcombo = hxm @ mh_pack                           # (B, 4H+H)
            m_hh = mcombo[:, 0:G]
            mel_pred = jnp.maximum(mcombo[:, G:G + H] + m_pb1, 0.0) @ m_pw2 + m_pb2
            melody_out_ref[i * NOTES_PER_CHORD + j] = mel_pred
            me_pre = onehot_max(mel_pred) @ mpack + mel_base_pre

        return (c_hh, c_c, m_hh, m_c, ce_pre, me_pre)

    zeros_g = jnp.zeros((B, G), jnp.float32)
    zeros_h = jnp.zeros((B, H), jnp.float32)
    lax.fori_loop(0, num_chords, chord_step,
                  (zeros_g, zeros_h, zeros_g, zeros_h, ce_pre0, zeros_g),
                  unroll=unroll)


# ----------------------------------------------------------------------------
# Parameter preparation (packing / algebraic folding, done once per call)
# ----------------------------------------------------------------------------
def _prepare_params(p):
    f32 = jnp.float32
    order = ('tempo', 'key', 'mode', 'valence', 'energy')
    widths = (1, NUMBER_OF_KEYS, NUMBER_OF_MODES, 1, 1)

    # packed heads: wide first layer + block-diagonal second layer
    hw1 = jnp.concatenate([p[n][0] for n in order], axis=1)          # (H, 5H)
    hb1 = jnp.concatenate([p[n][1] for n in order], axis=1)          # (1, 5H)
    hb2 = jnp.concatenate([p[n][3] for n in order], axis=1)          # (1, 19)
    hw2 = jnp.zeros((5 * H, HEADS_WIDTH), f32)
    col = 0
    for k, n in enumerate(order):
        hw2 = hw2.at[k * H:(k + 1) * H, col:col + widths[k]].set(p[n][2])
        col += widths[k]

    # fold the 4 feature embeddings into the downsample
    dw, db = p['down']
    dw_z, dw_t, dw_m, dw_v, dw_e = (dw[i * H:(i + 1) * H] for i in range(5))
    te_w, te_b = p['te']
    me_w, me_b = p['me']
    ve_w, ve_b = p['ve']
    ee_w, ee_b = p['ee']
    w_fold = jnp.concatenate([
        te_w @ dw_t,                              # tempo row
        jnp.zeros((NUMBER_OF_KEYS, H), f32),      # key does not feed the downsample
        me_w @ dw_m,                              # mode rows
        ve_w @ dw_v,                              # valence row
        ee_w @ dw_e,                              # energy row
    ], axis=0)                                    # (19, H)
    b_fold = te_b @ dw_t + me_b @ dw_m + ve_b @ dw_v + ee_b @ dw_e + db

    # heads second layer packed with its fold into the downsample: [hw2 | hw2 @ w_fold]
    hw2p = jnp.zeros((5 * H, 2 * G), f32)
    hw2p = hw2p.at[:, 0:HEADS_WIDTH].set(hw2)
    hw2p = hw2p.at[:, G:G + H].set(hw2 @ w_fold)
    b_fold2 = hb2 @ w_fold + b_fold               # (1, H)

    # chord / melody pieces
    c_wi, c_wh, c_b = p['c_lstm_wi'], p['c_lstm_wh'], p['c_lstm_b']
    m_wi, m_wh, m_b = p['m_lstm_wi'], p['m_lstm_wh'], p['m_lstm_b']
    c_dw, c_db = p['c_down']
    c_dw_e, c_dw_z = c_dw[0:H], c_dw[H:2 * H]
    m_dw, m_db = p['m_down']
    m_dw_e, m_dw_c, m_dw_z = m_dw[0:H], m_dw[H:2 * H], m_dw[2 * H:3 * H]

    # all loop-invariant pre-activations expressed as z2 @ Z2FOLD + Z2BIAS
    z2fold = jnp.concatenate([
        c_wi,                                     # ce_pre_init
        c_dw_z @ c_wi,                            # cbase -> chord x-pre
        (c_dw_z @ m_dw_c + m_dw_z) @ m_wi,        # mel-base -> melody x-pre
        c_dw_z @ m_wi,                            # melody seed pre
    ], axis=1)                                    # (H, 4*4H)
    z2bias = jnp.concatenate([
        c_b,
        c_db @ c_wi + c_b,
        (c_db @ m_dw_c + m_db) @ m_wi + m_b,
        c_db @ m_wi + m_b,
    ], axis=1)                                    # (1, 4*4H)

    # per-step packed matrices (embedding tables folded all the way to pre-activations)
    c_embf = p['c_emb'] @ c_dw_e                  # (9, H)
    cpack = jnp.concatenate([
        c_embf @ c_wi,                            # next chord x-pre
        c_embf @ m_dw_c @ m_wi,                   # melody base pre
        c_embf @ m_wi,                            # melody seed pre
    ], axis=1)                                    # (9, 3*4H)
    mpack = (p['m_emb'] @ m_dw_e) @ m_wi          # (16, 4H)

    # h-side fused packs: [wh | pred-MLP layer1]
    c_pw1, c_pb1, c_pw2, c_pb2 = p['c_pred']
    m_pw1, m_pb1, m_pw2, m_pb2 = p['m_pred']
    ch_pack = jnp.concatenate([c_wh, c_pw1], axis=1)   # (H, 4H+H)
    mh_pack = jnp.concatenate([m_wh, m_pw1], axis=1)   # (H, 4H+H)

    def place(dst, col0, block):
        return dst.at[:, col0:col0 + block.shape[1]].set(block)

    # single (H, .) weight pack, segments at 128-aligned offsets
    w32 = jnp.zeros((H, W_COLS), f32)
    w32 = place(w32, W_HW1, hw1)
    w32 = place(w32, W_DWZ, dw_z)
    w32 = place(w32, W_Z2F, z2fold)
    w32 = place(w32, W_CHP, ch_pack)
    w32 = place(w32, W_CPW2, c_pw2)
    w32 = place(w32, W_MHP, mh_pack)
    w32 = place(w32, W_MPW2, m_pw2)

    # single bias pack
    biases = jnp.zeros((1, B_COLS), f32)
    biases = place(biases, B_HB1, hb1)
    biases = place(biases, B_HB2, hb2)
    biases = place(biases, B_BF2, b_fold2)
    biases = place(biases, B_Z2B, z2bias)
    biases = place(biases, B_CPB1, c_pb1)
    biases = place(biases, B_CPB2, c_pb2)
    biases = place(biases, B_MPB1, m_pb1)
    biases = place(biases, B_MPB2, m_pb2)

    return (w32, hw2p, biases, cpack, mpack)


# ----------------------------------------------------------------------------
# Wrapper
# ----------------------------------------------------------------------------
def decoder_forward(params, z, num_chords):
    B = z.shape[0]
    f32 = jnp.float32
    inputs = (z,) + tuple(_prepare_params(params))

    out_shapes = (
        jax.ShapeDtypeStruct((B, HEADS_WIDTH), f32),
        jax.ShapeDtypeStruct((num_chords, B, CHORD_PREDICTION_LENGTH), f32),
        jax.ShapeDtypeStruct((num_chords * NOTES_PER_CHORD, B, MELODY_PREDICTION_LENGTH), f32),
    )
    vmem = pl.BlockSpec(memory_space=pltpu.MemorySpace.VMEM)
    # keep the body visible to the scheduler for all realistic num_chords
    unroll = num_chords if 0 < num_chords <= 8 else 4
    kernel = functools.partial(decoder_kernel, unroll=unroll)

    heads, chord_raw, melody_raw = pl.pallas_call(
        kernel,
        out_shape=out_shapes,
        in_specs=[vmem] * len(inputs),
        out_specs=tuple([vmem] * len(out_shapes)),
    )(*inputs)

    tempo = heads[:, 0:1]
    key = heads[:, 1:1 + NUMBER_OF_KEYS]
    mode = heads[:, 1 + NUMBER_OF_KEYS:1 + NUMBER_OF_KEYS + NUMBER_OF_MODES]
    val = heads[:, HEADS_WIDTH - 2:HEADS_WIDTH - 1]
    en = heads[:, HEADS_WIDTH - 1:HEADS_WIDTH]
    chord_outputs = jnp.transpose(chord_raw, (1, 0, 2))        # (B, NC, 9)
    melody_outputs = jnp.transpose(melody_raw, (1, 0, 2))      # (B, NC*NPC, 16)
    return chord_outputs, melody_outputs, tempo, key, mode, val, en


# ----------------------------------------------------------------------------
# Deterministic parameter init (synthetic — shapes from the module __init__)
# ----------------------------------------------------------------------------
def init_params(key):
    keys = iter(jax.random.split(key, 64))

    def lin(nin, nout, scale=0.1):
        w = jax.random.normal(next(keys), (nin, nout), jnp.float32) * scale
        b = jax.random.normal(next(keys), (1, nout), jnp.float32) * scale
        return w, b

    p = {}
    for name, nout in (('key', NUMBER_OF_KEYS), ('mode', NUMBER_OF_MODES),
                       ('tempo', 1), ('valence', 1), ('energy', 1)):
        w1, b1 = lin(H, H)
        w2, b2 = lin(H, nout)
        p[name] = (w1, b1, w2, b2)
    p['te'] = lin(1, H)
    p['me'] = lin(NUMBER_OF_MODES, H)
    p['ve'] = lin(1, H)
    p['ee'] = lin(1, H)
    p['down'] = lin(5 * H, H)

    p['c_lstm_wi'] = jax.random.normal(next(keys), (H, 4 * H), jnp.float32) * 0.1
    p['c_lstm_wh'] = jax.random.normal(next(keys), (H, 4 * H), jnp.float32) * 0.1
    p['c_lstm_b'] = jax.random.normal(next(keys), (1, 4 * H), jnp.float32) * 0.1
    p['c_emb'] = jax.random.normal(next(keys), (CHORD_PREDICTION_LENGTH, H), jnp.float32) * 0.1
    cw1, cb1 = lin(H, H)
    cw2, cb2 = lin(H, CHORD_PREDICTION_LENGTH)
    p['c_pred'] = (cw1, cb1, cw2, cb2)
    p['c_down'] = lin(2 * H, H)

    p['m_lstm_wi'] = jax.random.normal(next(keys), (H, 4 * H), jnp.float32) * 0.1
    p['m_lstm_wh'] = jax.random.normal(next(keys), (H, 4 * H), jnp.float32) * 0.1
    p['m_lstm_b'] = jax.random.normal(next(keys), (1, 4 * H), jnp.float32) * 0.1
    p['m_emb'] = jax.random.normal(next(keys), (MELODY_PREDICTION_LENGTH, H), jnp.float32) * 0.1
    mw1, mb1 = lin(H, H)
    mw2, mb2 = lin(H, MELODY_PREDICTION_LENGTH)
    p['m_pred'] = (mw1, mb1, mw2, mb2)
    p['m_down'] = lin(3 * H, H)
    return p


# ----------------------------------------------------------------------------
# Pure-JAX reference (mirrors the PyTorch forward with default args)
# ----------------------------------------------------------------------------
def reference_forward(p, z, num_chords):
    mlp = lambda x, t: jnp.maximum(x @ t[0] + t[1], 0.0) @ t[2] + t[3]
    tempo = mlp(z, p['tempo'])
    key = mlp(z, p['key'])
    mode = mlp(z, p['mode'])
    val = mlp(z, p['valence'])
    en = mlp(z, p['energy'])
    t_emb = tempo @ p['te'][0] + p['te'][1]
    m_emb = mode @ p['me'][0] + p['me'][1]
    v_emb = val @ p['ve'][0] + p['ve'][1]
    e_emb = en @ p['ee'][0] + p['ee'][1]
    z2 = jnp.concatenate([z, t_emb, m_emb, v_emb, e_emb], axis=1) @ p['down'][0] + p['down'][1]

    B = z.shape[0]
    hxc = jnp.zeros((B, H)); cxc = jnp.zeros((B, H))
    hxm = jnp.zeros((B, H)); cxm = jnp.zeros((B, H))

    def lstm(x, h, c, wi, wh, b):
        g = x @ wi + h @ wh + b
        ig = jax.nn.sigmoid(g[:, :H]); fg = jax.nn.sigmoid(g[:, H:2 * H])
        gg = jnp.tanh(g[:, 2 * H:3 * H]); og = jax.nn.sigmoid(g[:, 3 * H:])
        c2 = fg * c + ig * gg
        return og * jnp.tanh(c2), c2

    ce = z2
    me = None
    chords, mels = [], []
    for _ in range(num_chords):
        hxc, cxc = lstm(ce, hxc, cxc, p['c_lstm_wi'], p['c_lstm_wh'], p['c_lstm_b'])
        cp = mlp(hxc, p['c_pred'])
        chords.append(cp)
        ce_emb = p['c_emb'][jnp.argmax(cp, axis=1)]
        ce = jnp.concatenate([ce_emb, z2], axis=1) @ p['c_down'][0] + p['c_down'][1]
        if me is None:
            me = ce
        for _j in range(NOTES_PER_CHORD):
            hxm, cxm = lstm(me, hxm, cxm, p['m_lstm_wi'], p['m_lstm_wh'], p['m_lstm_b'])
            mp = mlp(hxm, p['m_pred'])
            mels.append(mp)
            m_e = p['m_emb'][jnp.argmax(mp, axis=1)]
            me = jnp.concatenate([m_e, ce, z2], axis=1) @ p['m_down'][0] + p['m_down'][1]
    return (jnp.stack(chords, axis=1), jnp.stack(mels, axis=1),
            tempo, key, mode, val, en)


if __name__ == "__main__":
    B = 2
    NUM_CHORDS = 4
    root = jax.random.PRNGKey(0)
    k_param, k_z = jax.random.split(root)
    params = init_params(k_param)
    z = jax.random.normal(k_z, (B, HIDDEN_SIZE), jnp.float32)

    outs = decoder_forward(params, z, NUM_CHORDS)
    outs = jax.block_until_ready(outs)

    refs = reference_forward(params, z, NUM_CHORDS)
    for o, r in zip(outs, refs):
        assert o.shape == r.shape, (o.shape, r.shape)
        assert jnp.allclose(o, r, atol=1e-2, rtol=1e-2), float(jnp.max(jnp.abs(o - r)))

    print("KERNEL_OK")
</pallas_src>

<mosaic_0001>
module attributes {stable_mosaic.version = 11 : i64} {
  func.func @decoder_kernel(%arg0: memref<2x32xf32, #tpu.memory_space<vmem>>, %arg1: memref<32x1664xf32, #tpu.memory_space<vmem>>, %arg2: memref<160x256xf32, #tpu.memory_space<vmem>>, %arg3: memref<1x1536xf32, #tpu.memory_space<vmem>>, %arg4: memref<9x384xf32, #tpu.memory_space<vmem>>, %arg5: memref<16x128xf32, #tpu.memory_space<vmem>>, %arg6: memref<2x19xf32, #tpu.memory_space<vmem>>, %arg7: memref<4x2x9xf32, #tpu.memory_space<vmem>>, %arg8: memref<16x2x16xf32, #tpu.memory_space<vmem>>) attributes {dimension_semantics = [], scalar_prefetch = 0 : i64, scratch_operands = 0 : i64, tpu.core_type = #tpu.core_type<tc>} {
    %c0 = arith.constant 0 : index
    %c0_0 = arith.constant 0 : index
    %0 = vector.load %arg0[%c0, %c0_0] : memref<2x32xf32, #tpu.memory_space<vmem>>, vector<2x32xf32>
    %c0_1 = arith.constant 0 : index
    %c0_2 = arith.constant 0 : index
    %1 = vector.load %arg1[%c0_1, %c0_2] : memref<32x1664xf32, #tpu.memory_space<vmem>>, vector<32x160xf32>
    %c0_3 = arith.constant 0 : index
    %c0_4 = arith.constant 0 : index
    %2 = vector.load %arg3[%c0_3, %c0_4] : memref<1x1536xf32, #tpu.memory_space<vmem>>, vector<1x160xf32>
    %cst = arith.constant dense<0.000000e+00> : vector<2x160xf32>
    %3 = tpu.matmul %0, %1, %cst {dimension_numbers = #tpu.dot_dimension_numbers<[1], [0], [0], [1], [0, 0, 1, 1], [], []>} : vector<2x32xf32>, vector<32x160xf32>, vector<2x160xf32> -> vector<2x160xf32>
    %4 = vector.broadcast %2 : vector<1x160xf32> to vector<2x160xf32>
    %5 = arith.addf %3, %4 : vector<2x160xf32>
    %cst_5 = arith.constant 0.000000e+00 : f32
    %6 = vector.broadcast %cst_5 : f32 to vector<2x160xf32>
    %7 = arith.maximumf %5, %6 : vector<2x160xf32>
    %c0_6 = arith.constant 0 : index
    %c0_7 = arith.constant 0 : index
    %8 = vector.load %arg2[%c0_6, %c0_7] : memref<160x256xf32, #tpu.memory_space<vmem>>, vector<160x256xf32>
    %cst_8 = arith.constant dense<0.000000e+00> : vector<2x256xf32>
    %9 = tpu.matmul %7, %8, %cst_8 {dimension_numbers = #tpu.dot_dimension_numbers<[1], [0], [0], [1], [0, 0, 1, 1], [], []>} : vector<2x160xf32>, vector<160x256xf32>, vector<2x256xf32> -> vector<2x256xf32>
    %10 = vector.extract_strided_slice %9 {offsets = [0, 0], sizes = [2, 19], strides = [1, 1]} : vector<2x256xf32> to vector<2x19xf32>
    %c0_9 = arith.constant 0 : index
    %c256 = arith.constant 256 : index
    %11 = vector.load %arg3[%c0_9, %c256] : memref<1x1536xf32, #tpu.memory_space<vmem>>, vector<1x19xf32>
    %12 = vector.broadcast %11 : vector<1x19xf32> to vector<2x19xf32>
    %13 = arith.addf %10, %12 : vector<2x19xf32>
    %c0_10 = arith.constant 0 : index
    %c0_11 = arith.constant 0 : index
    %14 = vector.load %arg6[%c0_10, %c0_11] : memref<2x19xf32, #tpu.memory_space<vmem>>, vector<2x19xf32>
    tpu.vector_store %arg6[%c0_10, %c0_11], %13 {strides = array<i32>} : memref<2x19xf32, #tpu.memory_space<vmem>>, vector<2x19xf32>,
    %c0_12 = arith.constant 0 : index
    %c256_13 = arith.constant 256 : index
    %15 = vector.load %arg1[%c0_12, %c256_13] : memref<32x1664xf32, #tpu.memory_space<vmem>>, vector<32x32xf32>
    %cst_14 = arith.constant dense<0.000000e+00> : vector<2x32xf32>
    %16 = tpu.matmul %0, %15, %cst_14 {dimension_numbers = #tpu.dot_dimension_numbers<[1], [0], [0], [1], [0, 0, 1, 1], [], []>} : vector<2x32xf32>, vector<32x32xf32>, vector<2x32xf32> -> vector<2x32xf32>
    %17 = vector.extract_strided_slice %9 {offsets = [0, 128], sizes = [2, 32], strides = [1, 1]} : vector<2x256xf32> to vector<2x32xf32>
    %18 = arith.addf %16, %17 : vector<2x32xf32>
    %c0_15 = arith.constant 0 : index
    %c384 = arith.constant 384 : index
    %19 = vector.load %arg3[%c0_15, %c384] : memref<1x1536xf32, #tpu.memory_space<vmem>>, vector<1x32xf32>
    %20 = vector.broadcast %19 : vector<1x32xf32> to vector<2x32xf32>
    %21 = arith.addf %18, %20 : vector<2x32xf32>
    %c0_16 = arith.constant 0 : index
    %c384_17 = arith.constant 384 : index
    %22 = vector.load %arg1[%c0_16, %c384_17] : memref<32x1664xf32, #tpu.memory_space<vmem>>, vector<32x512xf32>
    %cst_18 = arith.constant dense<0.000000e+00> : vector<2x512xf32>
    %23 = tpu.matmul %21, %22, %cst_18 {dimension_numbers = #tpu.dot_dimension_numbers<[1], [0], [0], [1], [0, 0, 1, 1], [], []>} : vector<2x32xf32>, vector<32x512xf32>, vector<2x512xf32> -> vector<2x512xf32>
    %c0_19 = arith.constant 0 : index
    %c512 = arith.constant 512 : index
    %24 = vector.load %arg3[%c0_19, %c512] : memref<1x1536xf32, #tpu.memory_space<vmem>>, vector<1x512xf32>
    %25 = vector.broadcast %24 : vector<1x512xf32> to vector<2x512xf32>
    %26 = arith.addf %23, %25 : vector<2x512xf32>
    %27 = vector.extract_strided_slice %26 {offsets = [0, 0], sizes = [2, 128], strides = [1, 1]} : vector<2x512xf32> to vector<2x128xf32>
    %28 = vector.extract_strided_slice %26 {offsets = [0, 128], sizes = [2, 384], strides = [1, 1]} : vector<2x512xf32> to vector<2x384xf32>
    %c0_20 = arith.constant 0 : index
    %c896 = arith.constant 896 : index
    %29 = vector.load %arg1[%c0_20, %c896] : memref<32x1664xf32, #tpu.memory_space<vmem>>, vector<32x160xf32>
    %c0_21 = arith.constant 0 : index
    %c1152 = arith.constant 1152 : index
    %30 = vector.load %arg1[%c0_21, %c1152] : memref<32x1664xf32, #tpu.memory_space<vmem>>, vector<32x9xf32>
    %c0_22 = arith.constant 0 : index
    %c1280 = arith.constant 1280 : index
    %31 = vector.load %arg1[%c0_22, %c1280] : memref<32x1664xf32, #tpu.memory_space<vmem>>, vector<32x160xf32>
    %c0_23 = arith.constant 0 : index
    %c1536 = arith.constant 1536 : index
    %32 = vector.load %arg1[%c0_23, %c1536] : memref<32x1664xf32, #tpu.memory_space<vmem>>, vector<32x16xf32>
    %c0_24 = arith.constant 0 : index
    %c0_25 = arith.constant 0 : index
    %33 = vector.load %arg4[%c0_24, %c0_25] : memref<9x384xf32, #tpu.memory_space<vmem>>, vector<9x384xf32>
    %c0_26 = arith.constant 0 : index
    %c0_27 = arith.constant 0 : index
    %34 = vector.load %arg5[%c0_26, %c0_27] : memref<16x128xf32, #tpu.memory_space<vmem>>, vector<16x128xf32>
    %c0_28 = arith.constant 0 : index
    %c1024 = arith.constant 1024 : index
    %35 = vector.load %arg3[%c0_28, %c1024] : memref<1x1536xf32, #tpu.memory_space<vmem>>, vector<1x32xf32>
    %36 = vector.shape_cast %35 : vector<1x32xf32> to vector<1x32xf32>
    %37 = vector.broadcast %36 : vector<1x32xf32> to vector<2x32xf32>
    %c0_29 = arith.constant 0 : index
    %c1152_30 = arith.constant 1152 : index
    %38 = vector.load %arg3[%c0_29, %c1152_30] : memref<1x1536xf32, #tpu.memory_space<vmem>>, vector<1x9xf32>
    %39 = vector.shape_cast %38 : vector<1x9xf32> to vector<1x9xf32>
    %40 = vector.broadcast %39 : vector<1x9xf32> to vector<2x9xf32>
    %c0_31 = arith.constant 0 : index
    %c1280_32 = arith.constant 1280 : index
    %41 = vector.load %arg3[%c0_31, %c1280_32] : memref<1x1536xf32, #tpu.memory_space<vmem>>, vector<1x32xf32>
    %42 = vector.shape_cast %41 : vector<1x32xf32> to vector<1x32xf32>
    %43 = vector.broadcast %42 : vector<1x32xf32> to vector<2x32xf32>
    %c0_33 = arith.constant 0 : index
    %c1408 = arith.constant 1408 : index
    %44 = vector.load %arg3[%c0_33, %c1408] : memref<1x1536xf32, #tpu.memory_space<vmem>>, vector<1x16xf32>
    %45 = vector.shape_cast %44 : vector<1x16xf32> to vector<1x16xf32>
    %46 = vector.broadcast %45 : vector<1x16xf32> to vector<2x16xf32>
    %cst_34 = arith.constant 0.000000e+00 : f32
    %47 = vector.broadcast %cst_34 : f32 to vector<2x128xf32>
    %cst_35 = arith.constant 0.000000e+00 : f32
    %48 = vector.broadcast %cst_35 : f32 to vector<2x32xf32>
    %c0_i32 = arith.constant 0 : i32
    %49 = arith.addf %27, %47 : vector<2x128xf32>
    %cst_36 = arith.constant 5.000000e-01 : f32
    %50 = vector.broadcast %cst_36 : f32 to vector<2x128xf32>
    %51 = arith.mulf %50, %49 : vector<2x128xf32>
    %52 = math.tanh %51 : vector<2x128xf32>
    %cst_37 = arith.constant 5.000000e-01 : f32
    %53 = vector.broadcast %cst_37 : f32 to vector<2x128xf32>
    %54 = arith.mulf %53, %52 : vector<2x128xf32>
    %cst_38 = arith.constant 5.000000e-01 : f32
    %55 = vector.broadcast %cst_38 : f32 to vector<2x128xf32>
    %56 = arith.addf %54, %55 : vector<2x128xf32>
    %57 = vector.extract_strided_slice %56 {offsets = [0, 0], sizes = [2, 32], strides = [1, 1]} : vector<2x128xf32> to vector<2x32xf32>
    %58 = vector.extract_strided_slice %56 {offsets = [0, 32], sizes = [2, 32], strides = [1, 1]} : vector<2x128xf32> to vector<2x32xf32>
    %59 = vector.extract_strided_slice %56 {offsets = [0, 96], sizes = [2, 32], strides = [1, 1]} : vector<2x128xf32> to vector<2x32xf32>
    %60 = vector.extract_strided_slice %49 {offsets = [0, 64], sizes = [2, 32], strides = [1, 1]} : vector<2x128xf32> to vector<2x32xf32>
    %61 = math.tanh %60 : vector<2x32xf32>
    %62 = arith.mulf %58, %48 : vector<2x32xf32>
    %63 = arith.mulf %57, %61 : vector<2x32xf32>
    %64 = arith.addf %62, %63 : vector<2x32xf32>
    %65 = math.tanh %64 : vector<2x32xf32>
    %66 = arith.mulf %59, %65 : vector<2x32xf32>
    %cst_39 = arith.constant dense<0.000000e+00> : vector<2x160xf32>
    %67 = tpu.matmul %66, %29, %cst_39 {dimension_numbers = #tpu.dot_dimension_numbers<[1], [0], [0], [1], [0, 0, 1, 1], [], []>} : vector<2x32xf32>, vector<32x160xf32>, vector<2x160xf32> -> vector<2x160xf32>
    %68 = vector.extract_strided_slice %67 {offsets = [0, 0], sizes = [2, 128], strides = [1, 1]} : vector<2x160xf32> to vector<2x128xf32>
    %69 = vector.extract_strided_slice %67 {offsets = [0, 128], sizes = [2, 32], strides = [1, 1]} : vector<2x160xf32> to vector<2x32xf32>
    %70 = arith.addf %69, %37 : vector<2x32xf32>
    %cst_40 = arith.constant 0.000000e+00 : f32
    %71 = vector.broadcast %cst_40 : f32 to vector<2x32xf32>
    %72 = arith.maximumf %70, %71 : vector<2x32xf32>
    %cst_41 = arith.constant dense<0.000000e+00> : vector<2x9xf32>
    %73 = tpu.matmul %72, %30, %cst_41 {dimension_numbers = #tpu.dot_dimension_numbers<[1], [0], [0], [1], [0, 0, 1, 1], [], []>} : vector<2x32xf32>, vector<32x9xf32>, vector<2x9xf32> -> vector<2x9xf32>
    %74 = arith.addf %73, %40 : vector<2x9xf32>
    %75 = arith.index_cast %c0_i32 : i32 to index
    %c0_42 = arith.constant 0 : index
    %c0_43 = arith.constant 0 : index
    %76 = vector.load %arg7[%75, %c0_42, %c0_43] : memref<4x2x9xf32, #tpu.memory_space<vmem>>, vector<1x2x9xf32>
    %77 = vector.shape_cast %76 : vector<1x2x9xf32> to vector<2x9xf32>
    %78 = vector.shape_cast %74 : vector<2x9xf32> to vector<1x2x9xf32>
    tpu.vector_store %arg7[%75, %c0_42, %c0_43], %78 {strides = array<i32>} : memref<4x2x9xf32, #tpu.memory_space<vmem>>, vector<1x2x9xf32>,
    %cst_44 = arith.constant dense<0xFF800000> : vector<2xf32>
    %79 = vector.multi_reduction <maximumf>, %74, %cst_44 [1] : vector<2x9xf32> to vector<2xf32>
    %80 = vector.shape_cast %79 : vector<2xf32> to vector<2x1xf32>
    %81 = vector.broadcast %80 : vector<2x1xf32> to vector<2x9xf32>
    %82 = arith.cmpf oeq, %74, %81 : vector<2x9xf32>
    %83 = arith.extui %82 : vector<2x9xi1> to vector<2x9xi32>
    %84 = arith.sitofp %83 : vector<2x9xi32> to vector<2x9xf32>
    %cst_45 = arith.constant dense<0.000000e+00> : vector<2x384xf32>
    %85 = tpu.matmul %84, %33, %cst_45 {dimension_numbers = #tpu.dot_dimension_numbers<[1], [0], [0], [1], [0, 0, 1, 1], [], []>} : vector<2x9xf32>, vector<9x384xf32>, vector<2x384xf32> -> vector<2x384xf32>
    %86 = arith.addf %85, %28 : vector<2x384xf32>
    %87 = vector.extract_strided_slice %86 {offsets = [0, 0], sizes = [2, 128], strides = [1, 1]} : vector<2x384xf32> to vector<2x128xf32>
    %88 = vector.extract_strided_slice %86 {offsets = [0, 128], sizes = [2, 128], strides = [1, 1]} : vector<2x384xf32> to vector<2x128xf32>
    %c0_i32_46 = arith.constant 0 : i32
    %89 = arith.cmpi eq, %c0_i32, %c0_i32_46 : i32
    %90 = vector.extract_strided_slice %86 {offsets = [0, 256], sizes = [2, 128], strides = [1, 1]} : vector<2x384xf32> to vector<2x128xf32>
    %91 = arith.select %89, %90, %47 : vector<2x128xf32>
    %92 = arith.addf %91, %47 : vector<2x128xf32>
    %cst_47 = arith.constant 5.000000e-01 : f32
    %93 = vector.broadcast %cst_47 : f32 to vector<2x128xf32>
    %94 = arith.mulf %93, %92 : vector<2x128xf32>
    %95 = math.tanh %94 : vector<2x128xf32>
    %cst_48 = arith.constant 5.000000e-01 : f32
    %96 = vector.broadcast %cst_48 : f32 to vector<2x128xf32>
    %97 = arith.mulf %96, %95 : vector<2x128xf32>
    %cst_49 = arith.constant 5.000000e-01 : f32
    %98 = vector.broadcast %cst_49 : f32 to vector<2x128xf32>
    %99 = arith.addf %97, %98 : vector<2x128xf32>
    %100 = vector.extract_strided_slice %99 {offsets = [0, 0], sizes = [2, 32], strides = [1, 1]} : vector<2x128xf32> to vector<2x32xf32>
    %101 = vector.extract_strided_slice %99 {offsets = [0, 32], sizes = [2, 32], strides = [1, 1]} : vector<2x128xf32> to vector<2x32xf32>
    %102 = vector.extract_strided_slice %99 {offsets = [0, 96], sizes = [2, 32], strides = [1, 1]} : vector<2x128xf32> to vector<2x32xf32>
    %103 = vector.extract_strided_slice %92 {offsets = [0, 64], sizes = [2, 32], strides = [1, 1]} : vector<2x128xf32> to vector<2x32xf32>
    %104 = math.tanh %103 : vector<2x32xf32>
    %105 = arith.mulf %101, %48 : vector<2x32xf32>
    %106 = arith.mulf %100, %104 : vector<2x32xf32>
    %107 = arith.addf %105, %106 : vector<2x32xf32>
    %108 = math.tanh %107 : vector<2x32xf32>
    %109 = arith.mulf %102, %108 : vector<2x32xf32>
    %cst_50 = arith.constant dense<0.000000e+00> : vector<2x160xf32>
    %110 = tpu.matmul %109, %31, %cst_50 {dimension_numbers = #tpu.dot_dimension_numbers<[1], [0], [0], [1], [0, 0, 1, 1], [], []>} : vector<2x32xf32>, vector<32x160xf32>, vector<2x160xf32> -> vector<2x160xf32>
    %111 = vector.extract_strided_slice %110 {offsets = [0, 0], sizes = [2, 128], strides = [1, 1]} : vector<2x160xf32> to vector<2x128xf32>
    %112 = vector.extract_strided_slice %110 {offsets = [0, 128], sizes = [2, 32], strides = [1, 1]} : vector<2x160xf32> to vector<2x32xf32>
    %113 = arith.addf %112, %43 : vector<2x32xf32>
    %cst_51 = arith.constant 0.000000e+00 : f32
    %114 = vector.broadcast %cst_51 : f32 to vector<2x32xf32>
    %115 = arith.maximumf %113, %114 : vector<2x32xf32>
    %cst_52 = arith.constant dense<0.000000e+00> : vector<2x16xf32>
    %116 = tpu.matmul %115, %32, %cst_52 {dimension_numbers = #tpu.dot_dimension_numbers<[1], [0], [0], [1], [0, 0, 1, 1], [], []>} : vector<2x32xf32>, vector<32x16xf32>, vector<2x16xf32> -> vector<2x16xf32>
    %117 = arith.addf %116, %46 : vector<2x16xf32>
    %c4_i32 = arith.constant 4 : i32
    %118 = arith.muli %c0_i32, %c4_i32 : i32
    %c0_i32_53 = arith.constant 0 : i32
    %119 = arith.addi %118, %c0_i32_53 : i32
    %120 = arith.index_cast %119 : i32 to index
    %c0_54 = arith.constant 0 : index
    %c0_55 = arith.constant 0 : index
    %121 = vector.load %arg8[%120, %c0_54, %c0_55] : memref<16x2x16xf32, #tpu.memory_space<vmem>>, vector<1x2x16xf32>
    %122 = vector.shape_cast %121 : vector<1x2x16xf32> to vector<2x16xf32>
    %123 = vector.shape_cast %117 : vector<2x16xf32> to vector<1x2x16xf32>
    tpu.vector_store %arg8[%120, %c0_54, %c0_55], %123 {strides = array<i32>} : memref<16x2x16xf32, #tpu.memory_space<vmem>>, vector<1x2x16xf32>,
    %cst_56 = arith.constant dense<0xFF800000> : vector<2xf32>
    %124 = vector.multi_reduction <maximumf>, %117, %cst_56 [1] : vector<2x16xf32> to vector<2xf32>
    %125 = vector.shape_cast %124 : vector<2xf32> to vector<2x1xf32>
    %126 = vector.broadcast %125 : vector<2x1xf32> to vector<2x16xf32>
    %127 = arith.cmpf oeq, %117, %126 : vector<2x16xf32>
    %128 = arith.extui %127 : vector<2x16xi1> to vector<2x16xi32>
    %129 = arith.sitofp %128 : vector<2x16xi32> to vector<2x16xf32>
    %cst_57 = arith.constant dense<0.000000e+00> : vector<2x128xf32>
    %130 = tpu.matmul %129, %34, %cst_57 {dimension_numbers = #tpu.dot_dimension_numbers<[1], [0], [0], [1], [0, 0, 1, 1], [], []>} : vector<2x16xf32>, vector<16x128xf32>, vector<2x128xf32> -> vector<2x128xf32>
    %131 = arith.addf %130, %88 : vector<2x128xf32>
    %132 = arith.addf %131, %111 : vector<2x128xf32>
    %cst_58 = arith.constant 5.000000e-01 : f32
    %133 = vector.broadcast %cst_58 : f32 to vector<2x128xf32>
    %134 = arith.mulf %133, %132 : vector<2x128xf32>
    %135 = math.tanh %134 : vector<2x128xf32>
    %cst_59 = arith.constant 5.000000e-01 : f32
    %136 = vector.broadcast %cst_59 : f32 to vector<2x128xf32>
    %137 = arith.mulf %136, %135 : vector<2x128xf32>
    %cst_60 = arith.constant 5.000000e-01 : f32
    %138 = vector.broadcast %cst_60 : f32 to vector<2x128xf32>
    %139 = arith.addf %137, %138 : vector<2x128xf32>
    %140 = vector.extract_strided_slice %139 {offsets = [0, 0], sizes = [2, 32], strides = [1, 1]} : vector<2x128xf32> to vector<2x32xf32>
    %141 = vector.extract_strided_slice %139 {offsets = [0, 32], sizes = [2, 32], strides = [1, 1]} : vector<2x128xf32> to vector<2x32xf32>
    %142 = vector.extract_strided_slice %139 {offsets = [0, 96], sizes = [2, 32], strides = [1, 1]} : vector<2x128xf32> to vector<2x32xf32>
    %143 = vector.extract_strided_slice %132 {offsets = [0, 64], sizes = [2, 32], strides = [1, 1]} : vector<2x128xf32> to vector<2x32xf32>
    %144 = math.tanh %143 : vector<2x32xf32>
    %145 = arith.mulf %141, %107 : vector<2x32xf32>
    %146 = arith.mulf %140, %144 : vector<2x32xf32>
    %147 = arith.addf %145, %146 : vector<2x32xf32>
    %148 = math.tanh %147 : vector<2x32xf32>
    %149 = arith.mulf %142, %148 : vector<2x32xf32>
    %cst_61 = arith.constant dense<0.000000e+00> : vector<2x160xf32>
    %150 = tpu.matmul %149, %31, %cst_61 {dimension_numbers = #tpu.dot_dimension_numbers<[1], [0], [0], [1], [0, 0, 1, 1], [], []>} : vector<2x32xf32>, vector<32x160xf32>, vector<2x160xf32> -> vector<2x160xf32>
    %151 = vector.extract_strided_slice %150 {offsets = [0, 0], sizes = [2, 128], strides = [1, 1]} : vector<2x160xf32> to vector<2x128xf32>
    %152 = vector.extract_strided_slice %150 {offsets = [0, 128], sizes = [2, 32], strides = [1, 1]} : vector<2x160xf32> to vector<2x32xf32>
    %153 = arith.addf %152, %43 : vector<2x32xf32>
    %cst_62 = arith.constant 0.000000e+00 : f32
    %154 = vector.broadcast %cst_62 : f32 to vector<2x32xf32>
    %155 = arith.maximumf %153, %154 : vector<2x32xf32>
    %cst_63 = arith.constant dense<0.000000e+00> : vector<2x16xf32>
    %156 = tpu.matmul %155, %32, %cst_63 {dimension_numbers = #tpu.dot_dimension_numbers<[1], [0], [0], [1], [0, 0, 1, 1], [], []>} : vector<2x32xf32>, vector<32x16xf32>, vector<2x16xf32> -> vector<2x16xf32>
    %157 = arith.addf %156, %46 : vector<2x16xf32>
    %c4_i32_64 = arith.constant 4 : i32
    %158 = arith.muli %c0_i32, %c4_i32_64 : i32
    %c1_i32 = arith.constant 1 : i32
    %159 = arith.addi %158, %c1_i32 : i32
    %160 = arith.index_cast %159 : i32 to index
    %c0_65 = arith.constant 0 : index
    %c0_66 = arith.constant 0 : index
    %161 = vector.load %arg8[%160, %c0_65, %c0_66] : memref<16x2x16xf32, #tpu.memory_space<vmem>>, vector<1x2x16xf32>
    %162 = vector.shape_cast %161 : vector<1x2x16xf32> to vector<2x16xf32>
    %163 = vector.shape_cast %157 : vector<2x16xf32> to vector<1x2x16xf32>
    tpu.vector_store %arg8[%160, %c0_65, %c0_66], %163 {strides = array<i32>} : memref<16x2x16xf32, #tpu.memory_space<vmem>>, vector<1x2x16xf32>,
    %cst_67 = arith.constant dense<0xFF800000> : vector<2xf32>
    %164 = vector.multi_reduction <maximumf>, %157, %cst_67 [1] : vector<2x16xf32> to vector<2xf32>
    %165 = vector.shape_cast %164 : vector<2xf32> to vector<2x1xf32>
    %166 = vector.broadcast %165 : vector<2x1xf32> to vector<2x16xf32>
    %167 = arith.cmpf oeq, %157, %166 : vector<2x16xf32>
    %168 = arith.extui %167 : vector<2x16xi1> to vector<2x16xi32>
    %169 = arith.sitofp %168 : vector<2x16xi32> to vector<2x16xf32>
    %cst_68 = arith.constant dense<0.000000e+00> : vector<2x128xf32>
    %170 = tpu.matmul %169, %34, %cst_68 {dimension_numbers = #tpu.dot_dimension_numbers<[1], [0], [0], [1], [0, 0, 1, 1], [], []>} : vector<2x16xf32>, vector<16x128xf32>, vector<2x128xf32> -> vector<2x128xf32>
    %171 = arith.addf %170, %88 : vector<2x128xf32>
    %172 = arith.addf %171, %151 : vector<2x128xf32>
    %cst_69 = arith.constant 5.000000e-01 : f32
    %173 = vector.broadcast %cst_69 : f32 to vector<2x128xf32>
    %174 = arith.mulf %173, %172 : vector<2x128xf32>
    %175 = math.tanh %174 : vector<2x128xf32>
    %cst_70 = arith.constant 5.000000e-01 : f32
    %176 = vector.broadcast %cst_70 : f32 to vector<2x128xf32>
    %177 = arith.mulf %176, %175 : vector<2x128xf32>
    %cst_71 = arith.constant 5.000000e-01 : f32
    %178 = vector.broadcast %cst_71 : f32 to vector<2x128xf32>
    %179 = arith.addf %177, %178 : vector<2x128xf32>
    %180 = vector.extract_strided_slice %179 {offsets = [0, 0], sizes = [2, 32], strides = [1, 1]} : vector<2x128xf32> to vector<2x32xf32>
    %181 = vector.extract_strided_slice %179 {offsets = [0, 32], sizes = [2, 32], strides = [1, 1]} : vector<2x128xf32> to vector<2x32xf32>
    %182 = vector.extract_strided_slice %179 {offsets = [0, 96], sizes = [2, 32], strides = [1, 1]} : vector<2x128xf32> to vector<2x32xf32>
    %183 = vector.extract_strided_slice %172 {offsets = [0, 64], sizes = [2, 32], strides = [1, 1]} : vector<2x128xf32> to vector<2x32xf32>
    %184 = math.tanh %183 : vector<2x32xf32>
    %185 = arith.mulf %181, %147 : vector<2x32xf32>
    %186 = arith.mulf %180, %184 : vector<2x32xf32>
    %187 = arith.addf %185, %186 : vector<2x32xf32>
    %188 = math.tanh %187 : vector<2x32xf32>
    %189 = arith.mulf %182, %188 : vector<2x32xf32>
    %cst_72 = arith.constant dense<0.000000e+00> : vector<2x160xf32>
    %190 = tpu.matmul %189, %31, %cst_72 {dimension_numbers = #tpu.dot_dimension_numbers<[1], [0], [0], [1], [0, 0, 1, 1], [], []>} : vector<2x32xf32>, vector<32x160xf32>, vector<2x160xf32> -> vector<2x160xf32>
    %191 = vector.extract_strided_slice %190 {offsets = [0, 0], sizes = [2, 128], strides = [1, 1]} : vector<2x160xf32> to vector<2x128xf32>
    %192 = vector.extract_strided_slice %190 {offsets = [0, 128], sizes = [2, 32], strides = [1, 1]} : vector<2x160xf32> to vector<2x32xf32>
    %193 = arith.addf %192, %43 : vector<2x32xf32>
    %cst_73 = arith.constant 0.000000e+00 : f32
    %194 = vector.broadcast %cst_73 : f32 to vector<2x32xf32>
    %195 = arith.maximumf %193, %194 : vector<2x32xf32>
    %cst_74 = arith.constant dense<0.000000e+00> : vector<2x16xf32>
    %196 = tpu.matmul %195, %32, %cst_74 {dimension_numbers = #tpu.dot_dimension_numbers<[1], [0], [0], [1], [0, 0, 1, 1], [], []>} : vector<2x32xf32>, vector<32x16xf32>, vector<2x16xf32> -> vector<2x16xf32>
    %197 = arith.addf %196, %46 : vector<2x16xf32>
    %c4_i32_75 = arith.constant 4 : i32
    %198 = arith.muli %c0_i32, %c4_i32_75 : i32
    %c2_i32 = arith.constant 2 : i32
    %199 = arith.addi %198, %c2_i32 : i32
    %200 = arith.index_cast %199 : i32 to index
    %c0_76 = arith.constant 0 : index
    %c0_77 = arith.constant 0 : index
    %201 = vector.load %arg8[%200, %c0_76, %c0_77] : memref<16x2x16xf32, #tpu.memory_space<vmem>>, vector<1x2x16xf32>
    %202 = vector.shape_cast %201 : vector<1x2x16xf32> to vector<2x16xf32>
    %203 = vector.shape_cast %197 : vector<2x16xf32> to vector<1x2x16xf32>
    tpu.vector_store %arg8[%200, %c0_76, %c0_77], %203 {strides = array<i32>} : memref<16x2x16xf32, #tpu.memory_space<vmem>>, vector<1x2x16xf32>,
    %cst_78 = arith.constant dense<0xFF800000> : vector<2xf32>
    %204 = vector.multi_reduction <maximumf>, %197, %cst_78 [1] : vector<2x16xf32> to vector<2xf32>
    %205 = vector.shape_cast %204 : vector<2xf32> to vector<2x1xf32>
    %206 = vector.broadcast %205 : vector<2x1xf32> to vector<2x16xf32>
    %207 = arith.cmpf oeq, %197, %206 : vector<2x16xf32>
    %208 = arith.extui %207 : vector<2x16xi1> to vector<2x16xi32>
    %209 = arith.sitofp %208 : vector<2x16xi32> to vector<2x16xf32>
    %cst_79 = arith.constant dense<0.000000e+00> : vector<2x128xf32>
    %210 = tpu.matmul %209, %34, %cst_79 {dimension_numbers = #tpu.dot_dimension_numbers<[1], [0], [0], [1], [0, 0, 1, 1], [], []>} : vector<2x16xf32>, vector<16x128xf32>, vector<2x128xf32> -> vector<2x128xf32>
    %211 = arith.addf %210, %88 : vector<2x128xf32>
    %212 = arith.addf %211, %191 : vector<2x128xf32>
    %cst_80 = arith.constant 5.000000e-01 : f32
    %213 = vector.broadcast %cst_80 : f32 to vector<2x128xf32>
    %214 = arith.mulf %213, %212 : vector<2x128xf32>
    %215 = math.tanh %214 : vector<2x128xf32>
    %cst_81 = arith.constant 5.000000e-01 : f32
    %216 = vector.broadcast %cst_81 : f32 to vector<2x128xf32>
    %217 = arith.mulf %216, %215 : vector<2x128xf32>
    %cst_82 = arith.constant 5.000000e-01 : f32
    %218 = vector.broadcast %cst_82 : f32 to vector<2x128xf32>
    %219 = arith.addf %217, %218 : vector<2x128xf32>
    %220 = vector.extract_strided_slice %219 {offsets = [0, 0], sizes = [2, 32], strides = [1, 1]} : vector<2x128xf32> to vector<2x32xf32>
    %221 = vector.extract_strided_slice %219 {offsets = [0, 32], sizes = [2, 32], strides = [1, 1]} : vector<2x128xf32> to vector<2x32xf32>
    %222 = vector.extract_strided_slice %219 {offsets = [0, 96], sizes = [2, 32], strides = [1, 1]} : vector<2x128xf32> to vector<2x32xf32>
    %223 = vector.extract_strided_slice %212 {offsets = [0, 64], sizes = [2, 32], strides = [1, 1]} : vector<2x128xf32> to vector<2x32xf32>
    %224 = math.tanh %223 : vector<2x32xf32>
    %225 = arith.mulf %221, %187 : vector<2x32xf32>
    %226 = arith.mulf %220, %224 : vector<2x32xf32>
    %227 = arith.addf %225, %226 : vector<2x32xf32>
    %228 = math.tanh %227 : vector<2x32xf32>
    %229 = arith.mulf %222, %228 : vector<2x32xf32>
    %cst_83 = arith.constant dense<0.000000e+00> : vector<2x160xf32>
    %230 = tpu.matmul %229, %31, %cst_83 {dimension_numbers = #tpu.dot_dimension_numbers<[1], [0], [0], [1], [0, 0, 1, 1], [], []>} : vector<2x32xf32>, vector<32x160xf32>, vector<2x160xf32> -> vector<2x160xf32>
    %231 = vector.extract_strided_slice %230 {offsets = [0, 0], sizes = [2, 128], strides = [1, 1]} : vector<2x160xf32> to vector<2x128xf32>
    %232 = vector.extract_strided_slice %230 {offsets = [0, 128], sizes = [2, 32], strides = [1, 1]} : vector<2x160xf32> to vector<2x32xf32>
    %233 = arith.addf %232, %43 : vector<2x32xf32>
    %cst_84 = arith.constant 0.000000e+00 : f32
    %234 = vector.broadcast %cst_84 : f32 to vector<2x32xf32>
    %235 = arith.maximumf %233, %234 : vector<2x32xf32>
    %cst_85 = arith.constant dense<0.000000e+00> : vector<2x16xf32>
    %236 = tpu.matmul %235, %32, %cst_85 {dimension_numbers = #tpu.dot_dimension_numbers<[1], [0], [0], [1], [0, 0, 1, 1], [], []>} : vector<2x32xf32>, vector<32x16xf32>, vector<2x16xf32> -> vector<2x16xf32>
    %237 = arith.addf %236, %46 : vector<2x16xf32>
    %c4_i32_86 = arith.constant 4 : i32
    %238 = arith.muli %c0_i32, %c4_i32_86 : i32
    %c3_i32 = arith.constant 3 : i32
    %239 = arith.addi %238, %c3_i32 : i32
    %240 = arith.index_cast %239 : i32 to index
    %c0_87 = arith.constant 0 : index
    %c0_88 = arith.constant 0 : index
    %241 = vector.load %arg8[%240, %c0_87, %c0_88] : memref<16x2x16xf32, #tpu.memory_space<vmem>>, vector<1x2x16xf32>
    %242 = vector.shape_cast %241 : vector<1x2x16xf32> to vector<2x16xf32>
    %243 = vector.shape_cast %237 : vector<2x16xf32> to vector<1x2x16xf32>
    tpu.vector_store %arg8[%240, %c0_87, %c0_88], %243 {strides = array<i32>} : memref<16x2x16xf32, #tpu.memory_space<vmem>>, vector<1x2x16xf32>,
    %cst_89 = arith.constant dense<0xFF800000> : vector<2xf32>
    %244 = vector.multi_reduction <maximumf>, %237, %cst_89 [1] : vector<2x16xf32> to vector<2xf32>
    %245 = vector.shape_cast %244 : vector<2xf32> to vector<2x1xf32>
    %246 = vector.broadcast %245 : vector<2x1xf32> to vector<2x16xf32>
    %247 = arith.cmpf oeq, %237, %246 : vector<2x16xf32>
    %248 = arith.extui %247 : vector<2x16xi1> to vector<2x16xi32>
    %249 = arith.sitofp %248 : vector<2x16xi32> to vector<2x16xf32>
    %cst_90 = arith.constant dense<0.000000e+00> : vector<2x128xf32>
    %250 = tpu.matmul %249, %34, %cst_90 {dimension_numbers = #tpu.dot_dimension_numbers<[1], [0], [0], [1], [0, 0, 1, 1], [], []>} : vector<2x16xf32>, vector<16x128xf32>, vector<2x128xf32> -> vector<2x128xf32>
    %251 = arith.addf %250, %88 : vector<2x128xf32>
    %c1_i32_91 = arith.constant 1 : i32
    %252 = arith.addf %87, %68 : vector<2x128xf32>
    %cst_92 = arith.constant 5.000000e-01 : f32
    %253 = vector.broadcast %cst_92 : f32 to vector<2x128xf32>
    %254 = arith.mulf %253, %252 : vector<2x128xf32>
    %255 = math.tanh %254 : vector<2x128xf32>
    %cst_93 = arith.constant 5.000000e-01 : f32
    %256 = vector.broadcast %cst_93 : f32 to vector<2x128xf32>
    %257 = arith.mulf %256, %255 : vector<2x128xf32>
    %cst_94 = arith.constant 5.000000e-01 : f32
    %258 = vector.broadcast %cst_94 : f32 to vector<2x128xf32>
    %259 = arith.addf %257, %258 : vector<2x128xf32>
    %260 = vector.extract_strided_slice %259 {offsets = [0, 0], sizes = [2, 32], strides = [1, 1]} : vector<2x128xf32> to vector<2x32xf32>
    %261 = vector.extract_strided_slice %259 {offsets = [0, 32], sizes = [2, 32], strides = [1, 1]} : vector<2x128xf32> to vector<2x32xf32>
    %262 = vector.extract_strided_slice %259 {offsets = [0, 96], sizes = [2, 32], strides = [1, 1]} : vector<2x128xf32> to vector<2x32xf32>
    %263 = vector.extract_strided_slice %252 {offsets = [0, 64], sizes = [2, 32], strides = [1, 1]} : vector<2x128xf32> to vector<2x32xf32>
    %264 = math.tanh %263 : vector<2x32xf32>
    %265 = arith.mulf %261, %64 : vector<2x32xf32>
    %266 = arith.mulf %260, %264 : vector<2x32xf32>
    %267 = arith.addf %265, %266 : vector<2x32xf32>
    %268 = math.tanh %267 : vector<2x32xf32>
    %269 = arith.mulf %262, %268 : vector<2x32xf32>
    %cst_95 = arith.constant dense<0.000000e+00> : vector<2x160xf32>
    %270 = tpu.matmul %269, %29, %cst_95 {dimension_numbers = #tpu.dot_dimension_numbers<[1], [0], [0], [1], [0, 0, 1, 1], [], []>} : vector<2x32xf32>, vector<32x160xf32>, vector<2x160xf32> -> vector<2x160xf32>
    %271 = vector.extract_strided_slice %270 {offsets = [0, 0], sizes = [2, 128], strides = [1, 1]} : vector<2x160xf32> to vector<2x128xf32>
    %272 = vector.extract_strided_slice %270 {offsets = [0, 128], sizes = [2, 32], strides = [1, 1]} : vector<2x160xf32> to vector<2x32xf32>
    %273 = arith.addf %272, %37 : vector<2x32xf32>
    %cst_96 = arith.constant 0.000000e+00 : f32
    %274 = vector.broadcast %cst_96 : f32 to vector<2x32xf32>
    %275 = arith.maximumf %273, %274 : vector<2x32xf32>
    %cst_97 = arith.constant dense<0.000000e+00> : vector<2x9xf32>
    %276 = tpu.matmul %275, %30, %cst_97 {dimension_numbers = #tpu.dot_dimension_numbers<[1], [0], [0], [1], [0, 0, 1, 1], [], []>} : vector<2x32xf32>, vector<32x9xf32>, vector<2x9xf32> -> vector<2x9xf32>
    %277 = arith.addf %276, %40 : vector<2x9xf32>
    %278 = arith.index_cast %c1_i32_91 : i32 to index
    %c0_98 = arith.constant 0 : index
    %c0_99 = arith.constant 0 : index
    %279 = vector.load %arg7[%278, %c0_98, %c0_99] : memref<4x2x9xf32, #tpu.memory_space<vmem>>, vector<1x2x9xf32>
    %280 = vector.shape_cast %279 : vector<1x2x9xf32> to vector<2x9xf32>
    %281 = vector.shape_cast %277 : vector<2x9xf32> to vector<1x2x9xf32>
    tpu.vector_store %arg7[%278, %c0_98, %c0_99], %281 {strides = array<i32>} : memref<4x2x9xf32, #tpu.memory_space<vmem>>, vector<1x2x9xf32>,
    %cst_100 = arith.constant dense<0xFF800000> : vector<2xf32>
    %282 = vector.multi_reduction <maximumf>, %277, %cst_100 [1] : vector<2x9xf32> to vector<2xf32>
    %283 = vector.shape_cast %282 : vector<2xf32> to vector<2x1xf32>
    %284 = vector.broadcast %283 : vector<2x1xf32> to vector<2x9xf32>
    %285 = arith.cmpf oeq, %277, %284 : vector<2x9xf32>
    %286 = arith.extui %285 : vector<2x9xi1> to vector<2x9xi32>
    %287 = arith.sitofp %286 : vector<2x9xi32> to vector<2x9xf32>
    %cst_101 = arith.constant dense<0.000000e+00> : vector<2x384xf32>
    %288 = tpu.matmul %287, %33, %cst_101 {dimension_numbers = #tpu.dot_dimension_numbers<[1], [0], [0], [1], [0, 0, 1, 1], [], []>} : vector<2x9xf32>, vector<9x384xf32>, vector<2x384xf32> -> vector<2x384xf32>
    %289 = arith.addf %288, %28 : vector<2x384xf32>
    %290 = vector.extract_strided_slice %289 {offsets = [0, 0], sizes = [2, 128], strides = [1, 1]} : vector<2x384xf32> to vector<2x128xf32>
    %291 = vector.extract_strided_slice %289 {offsets = [0, 128], sizes = [2, 128], strides = [1, 1]} : vector<2x384xf32> to vector<2x128xf32>
    %c0_i32_102 = arith.constant 0 : i32
    %292 = arith.cmpi eq, %c1_i32_91, %c0_i32_102 : i32
    %293 = vector.extract_strided_slice %289 {offsets = [0, 256], sizes = [2, 128], strides = [1, 1]} : vector<2x384xf32> to vector<2x128xf32>
    %294 = arith.select %292, %293, %251 : vector<2x128xf32>
    %295 = arith.addf %294, %231 : vector<2x128xf32>
    %cst_103 = arith.constant 5.000000e-01 : f32
    %296 = vector.broadcast %cst_103 : f32 to vector<2x128xf32>
    %297 = arith.mulf %296, %295 : vector<2x128xf32>
    %298 = math.tanh %297 : vector<2x128xf32>
    %cst_104 = arith.constant 5.000000e-01 : f32
    %299 = vector.broadcast %cst_104 : f32 to vector<2x128xf32>
    %300 = arith.mulf %299, %298 : vector<2x128xf32>
    %cst_105 = arith.constant 5.000000e-01 : f32
    %301 = vector.broadcast %cst_105 : f32 to vector<2x128xf32>
    %302 = arith.addf %300, %301 : vector<2x128xf32>
    %303 = vector.extract_strided_slice %302 {offsets = [0, 0], sizes = [2, 32], strides = [1, 1]} : vector<2x128xf32> to vector<2x32xf32>
    %304 = vector.extract_strided_slice %302 {offsets = [0, 32], sizes = [2, 32], strides = [1, 1]} : vector<2x128xf32> to vector<2x32xf32>
    %305 = vector.extract_strided_slice %302 {offsets = [0, 96], sizes = [2, 32], strides = [1, 1]} : vector<2x128xf32> to vector<2x32xf32>
    %306 = vector.extract_strided_slice %295 {offsets = [0, 64], sizes = [2, 32], strides = [1, 1]} : vector<2x128xf32> to vector<2x32xf32>
    %307 = math.tanh %306 : vector<2x32xf32>
    %308 = arith.mulf %304, %227 : vector<2x32xf32>
    %309 = arith.mulf %303, %307 : vector<2x32xf32>
    %310 = arith.addf %308, %309 : vector<2x32xf32>
    %311 = math.tanh %310 : vector<2x32xf32>
    %312 = arith.mulf %305, %311 : vector<2x32xf32>
    %cst_106 = arith.constant dense<0.000000e+00> : vector<2x160xf32>
    %313 = tpu.matmul %312, %31, %cst_106 {dimension_numbers = #tpu.dot_dimension_numbers<[1], [0], [0], [1], [0, 0, 1, 1], [], []>} : vector<2x32xf32>, vector<32x160xf32>, vector<2x160xf32> -> vector<2x160xf32>
    %314 = vector.extract_strided_slice %313 {offsets = [0, 0], sizes = [2, 128], strides = [1, 1]} : vector<2x160xf32> to vector<2x128xf32>
    %315 = vector.extract_strided_slice %313 {offsets = [0, 128], sizes = [2, 32], strides = [1, 1]} : vector<2x160xf32> to vector<2x32xf32>
    %316 = arith.addf %315, %43 : vector<2x32xf32>
    %cst_107 = arith.constant 0.000000e+00 : f32
    %317 = vector.broadcast %cst_107 : f32 to vector<2x32xf32>
    %318 = arith.maximumf %316, %317 : vector<2x32xf32>
    %cst_108 = arith.constant dense<0.000000e+00> : vector<2x16xf32>
    %319 = tpu.matmul %318, %32, %cst_108 {dimension_numbers = #tpu.dot_dimension_numbers<[1], [0], [0], [1], [0, 0, 1, 1], [], []>} : vector<2x32xf32>, vector<32x16xf32>, vector<2x16xf32> -> vector<2x16xf32>
    %320 = arith.addf %319, %46 : vector<2x16xf32>
    %c4_i32_109 = arith.constant 4 : i32
    %321 = arith.muli %c1_i32_91, %c4_i32_109 : i32
    %c0_i32_110 = arith.constant 0 : i32
    %322 = arith.addi %321, %c0_i32_110 : i32
    %323 = arith.index_cast %322 : i32 to index
    %c0_111 = arith.constant 0 : index
    %c0_112 = arith.constant 0 : index
    %324 = vector.load %arg8[%323, %c0_111, %c0_112] : memref<16x2x16xf32, #tpu.memory_space<vmem>>, vector<1x2x16xf32>
    %325 = vector.shape_cast %324 : vector<1x2x16xf32> to vector<2x16xf32>
    %326 = vector.shape_cast %320 : vector<2x16xf32> to vector<1x2x16xf32>
    tpu.vector_store %arg8[%323, %c0_111, %c0_112], %326 {strides = array<i32>} : memref<16x2x16xf32, #tpu.memory_space<vmem>>, vector<1x2x16xf32>,
    %cst_113 = arith.constant dense<0xFF800000> : vector<2xf32>
    %327 = vector.multi_reduction <maximumf>, %320, %cst_113 [1] : vector<2x16xf32> to vector<2xf32>
    %328 = vector.shape_cast %327 : vector<2xf32> to vector<2x1xf32>
    %329 = vector.broadcast %328 : vector<2x1xf32> to vector<2x16xf32>
    %330 = arith.cmpf oeq, %320, %329 : vector<2x16xf32>
    %331 = arith.extui %330 : vector<2x16xi1> to vector<2x16xi32>
    %332 = arith.sitofp %331 : vector<2x16xi32> to vector<2x16xf32>
    %cst_114 = arith.constant dense<0.000000e+00> : vector<2x128xf32>
    %333 = tpu.matmul %332, %34, %cst_114 {dimension_numbers = #tpu.dot_dimension_numbers<[1], [0], [0], [1], [0, 0, 1, 1], [], []>} : vector<2x16xf32>, vector<16x128xf32>, vector<2x128xf32> -> vector<2x128xf32>
    %334 = arith.addf %333, %291 : vector<2x128xf32>
    %335 = arith.addf %334, %314 : vector<2x128xf32>
    %cst_115 = arith.constant 5.000000e-01 : f32
    %336 = vector.broadcast %cst_115 : f32 to vector<2x128xf32>
    %337 = arith.mulf %336, %335 : vector<2x128xf32>
    %338 = math.tanh %337 : vector<2x128xf32>
    %cst_116 = arith.constant 5.000000e-01 : f32
    %339 = vector.broadcast %cst_116 : f32 to vector<2x128xf32>
    %340 = arith.mulf %339, %338 : vector<2x128xf32>
    %cst_117 = arith.constant 5.000000e-01 : f32
    %341 = vector.broadcast %cst_117 : f32 to vector<2x128xf32>
    %342 = arith.addf %340, %341 : vector<2x128xf32>
    %343 = vector.extract_strided_slice %342 {offsets = [0, 0], sizes = [2, 32], strides = [1, 1]} : vector<2x128xf32> to vector<2x32xf32>
    %344 = vector.extract_strided_slice %342 {offsets = [0, 32], sizes = [2, 32], strides = [1, 1]} : vector<2x128xf32> to vector<2x32xf32>
    %345 = vector.extract_strided_slice %342 {offsets = [0, 96], sizes = [2, 32], strides = [1, 1]} : vector<2x128xf32> to vector<2x32xf32>
    %346 = vector.extract_strided_slice %335 {offsets = [0, 64], sizes = [2, 32], strides = [1, 1]} : vector<2x128xf32> to vector<2x32xf32>
    %347 = math.tanh %346 : vector<2x32xf32>
    %348 = arith.mulf %344, %310 : vector<2x32xf32>
    %349 = arith.mulf %343, %347 : vector<2x32xf32>
    %350 = arith.addf %348, %349 : vector<2x32xf32>
    %351 = math.tanh %350 : vector<2x32xf32>
    %352 = arith.mulf %345, %351 : vector<2x32xf32>
    %cst_118 = arith.constant dense<0.000000e+00> : vector<2x160xf32>
    %353 = tpu.matmul %352, %31, %cst_118 {dimension_numbers = #tpu.dot_dimension_numbers<[1], [0], [0], [1], [0, 0, 1, 1], [], []>} : vector<2x32xf32>, vector<32x160xf32>, vector<2x160xf32> -> vector<2x160xf32>
    %354 = vector.extract_strided_slice %353 {offsets = [0, 0], sizes = [2, 128], strides = [1, 1]} : vector<2x160xf32> to vector<2x128xf32>
    %355 = vector.extract_strided_slice %353 {offsets = [0, 128], sizes = [2, 32], strides = [1, 1]} : vector<2x160xf32> to vector<2x32xf32>
    %356 = arith.addf %355, %43 : vector<2x32xf32>
    %cst_119 = arith.constant 0.000000e+00 : f32
    %357 = vector.broadcast %cst_119 : f32 to vector<2x32xf32>
    %358 = arith.maximumf %356, %357 : vector<2x32xf32>
    %cst_120 = arith.constant dense<0.000000e+00> : vector<2x16xf32>
    %359 = tpu.matmul %358, %32, %cst_120 {dimension_numbers = #tpu.dot_dimension_numbers<[1], [0], [0], [1], [0, 0, 1, 1], [], []>} : vector<2x32xf32>, vector<32x16xf32>, vector<2x16xf32> -> vector<2x16xf32>
    %360 = arith.addf %359, %46 : vector<2x16xf32>
    %c4_i32_121 = arith.constant 4 : i32
    %361 = arith.muli %c1_i32_91, %c4_i32_121 : i32
    %c1_i32_122 = arith.constant 1 : i32
    %362 = arith.addi %361, %c1_i32_122 : i32
    %363 = arith.index_cast %362 : i32 to index
    %c0_123 = arith.constant 0 : index
    %c0_124 = arith.constant 0 : index
    %364 = vector.load %arg8[%363, %c0_123, %c0_124] : memref<16x2x16xf32, #tpu.memory_space<vmem>>, vector<1x2x16xf32>
    %365 = vector.shape_cast %364 : vector<1x2x16xf32> to vector<2x16xf32>
    %366 = vector.shape_cast %360 : vector<2x16xf32> to vector<1x2x16xf32>
    tpu.vector_store %arg8[%363, %c0_123, %c0_124], %366 {strides = array<i32>} : memref<16x2x16xf32, #tpu.memory_space<vmem>>, vector<1x2x16xf32>,
    %cst_125 = arith.constant dense<0xFF800000> : vector<2xf32>
    %367 = vector.multi_reduction <maximumf>, %360, %cst_125 [1] : vector<2x16xf32> to vector<2xf32>
    %368 = vector.shape_cast %367 : vector<2xf32> to vector<2x1xf32>
    %369 = vector.broadcast %368 : vector<2x1xf32> to vector<2x16xf32>
    %370 = arith.cmpf oeq, %360, %369 : vector<2x16xf32>
    %371 = arith.extui %370 : vector<2x16xi1> to vector<2x16xi32>
    %372 = arith.sitofp %371 : vector<2x16xi32> to vector<2x16xf32>
    %cst_126 = arith.constant dense<0.000000e+00> : vector<2x128xf32>
    %373 = tpu.matmul %372, %34, %cst_126 {dimension_numbers = #tpu.dot_dimension_numbers<[1], [0], [0], [1], [0, 0, 1, 1], [], []>} : vector<2x16xf32>, vector<16x128xf32>, vector<2x128xf32> -> vector<2x128xf32>
    %374 = arith.addf %373, %291 : vector<2x128xf32>
    %375 = arith.addf %374, %354 : vector<2x128xf32>
    %cst_127 = arith.constant 5.000000e-01 : f32
    %376 = vector.broadcast %cst_127 : f32 to vector<2x128xf32>
    %377 = arith.mulf %376, %375 : vector<2x128xf32>
    %378 = math.tanh %377 : vector<2x128xf32>
    %cst_128 = arith.constant 5.000000e-01 : f32
    %379 = vector.broadcast %cst_128 : f32 to vector<2x128xf32>
    %380 = arith.mulf %379, %378 : vector<2x128xf32>
    %cst_129 = arith.constant 5.000000e-01 : f32
    %381 = vector.broadcast %cst_129 : f32 to vector<2x128xf32>
    %382 = arith.addf %380, %381 : vector<2x128xf32>
    %383 = vector.extract_strided_slice %382 {offsets = [0, 0], sizes = [2, 32], strides = [1, 1]} : vector<2x128xf32> to vector<2x32xf32>
    %384 = vector.extract_strided_slice %382 {offsets = [0, 32], sizes = [2, 32], strides = [1, 1]} : vector<2x128xf32> to vector<2x32xf32>
    %385 = vector.extract_strided_slice %382 {offsets = [0, 96], sizes = [2, 32], strides = [1, 1]} : vector<2x128xf32> to vector<2x32xf32>
    %386 = vector.extract_strided_slice %375 {offsets = [0, 64], sizes = [2, 32], strides = [1, 1]} : vector<2x128xf32> to vector<2x32xf32>
    %387 = math.tanh %386 : vector<2x32xf32>
    %388 = arith.mulf %384, %350 : vector<2x32xf32>
    %389 = arith.mulf %383, %387 : vector<2x32xf32>
    %390 = arith.addf %388, %389 : vector<2x32xf32>
    %391 = math.tanh %390 : vector<2x32xf32>
    %392 = arith.mulf %385, %391 : vector<2x32xf32>
    %cst_130 = arith.constant dense<0.000000e+00> : vector<2x160xf32>
    %393 = tpu.matmul %392, %31, %cst_130 {dimension_numbers = #tpu.dot_dimension_numbers<[1], [0], [0], [1], [0, 0, 1, 1], [], []>} : vector<2x32xf32>, vector<32x160xf32>, vector<2x160xf32> -> vector<2x160xf32>
    %394 = vector.extract_strided_slice %393 {offsets = [0, 0], sizes = [2, 128], strides = [1, 1]} : vector<2x160xf32> to vector<2x128xf32>
    %395 = vector.extract_strided_slice %393 {offsets = [0, 128], sizes = [2, 32], strides = [1, 1]} : vector<2x160xf32> to vector<2x32xf32>
    %396 = arith.addf %395, %43 : vector<2x32xf32>
    %cst_131 = arith.constant 0.000000e+00 : f32
    %397 = vector.broadcast %cst_131 : f32 to vector<2x32xf32>
    %398 = arith.maximumf %396, %397 : vector<2x32xf32>
    %cst_132 = arith.constant dense<0.000000e+00> : vector<2x16xf32>
    %399 = tpu.matmul %398, %32, %cst_132 {dimension_numbers = #tpu.dot_dimension_numbers<[1], [0], [0], [1], [0, 0, 1, 1], [], []>} : vector<2x32xf32>, vector<32x16xf32>, vector<2x16xf32> -> vector<2x16xf32>
    %400 = arith.addf %399, %46 : vector<2x16xf32>
    %c4_i32_133 = arith.constant 4 : i32
    %401 = arith.muli %c1_i32_91, %c4_i32_133 : i32
    %c2_i32_134 = arith.constant 2 : i32
    %402 = arith.addi %401, %c2_i32_134 : i32
    %403 = arith.index_cast %402 : i32 to index
    %c0_135 = arith.constant 0 : index
    %c0_136 = arith.constant 0 : index
    %404 = vector.load %arg8[%403, %c0_135, %c0_136] : memref<16x2x16xf32, #tpu.memory_space<vmem>>, vector<1x2x16xf32>
    %405 = vector.shape_cast %404 : vector<1x2x16xf32> to vector<2x16xf32>
    %406 = vector.shape_cast %400 : vector<2x16xf32> to vector<1x2x16xf32>
    tpu.vector_store %arg8[%403, %c0_135, %c0_136], %406 {strides = array<i32>} : memref<16x2x16xf32, #tpu.memory_space<vmem>>, vector<1x2x16xf32>,
    %cst_137 = arith.constant dense<0xFF800000> : vector<2xf32>
    %407 = vector.multi_reduction <maximumf>, %400, %cst_137 [1] : vector<2x16xf32> to vector<2xf32>
    %408 = vector.shape_cast %407 : vector<2xf32> to vector<2x1xf32>
    %409 = vector.broadcast %408 : vector<2x1xf32> to vector<2x16xf32>
    %410 = arith.cmpf oeq, %400, %409 : vector<2x16xf32>
    %411 = arith.extui %410 : vector<2x16xi1> to vector<2x16xi32>
    %412 = arith.sitofp %411 : vector<2x16xi32> to vector<2x16xf32>
    %cst_138 = arith.constant dense<0.000000e+00> : vector<2x128xf32>
    %413 = tpu.matmul %412, %34, %cst_138 {dimension_numbers = #tpu.dot_dimension_numbers<[1], [0], [0], [1], [0, 0, 1, 1], [], []>} : vector<2x16xf32>, vector<16x128xf32>, vector<2x128xf32> -> vector<2x128xf32>
    %414 = arith.addf %413, %291 : vector<2x128xf32>
    %415 = arith.addf %414, %394 : vector<2x128xf32>
    %cst_139 = arith.constant 5.000000e-01 : f32
    %416 = vector.broadcast %cst_139 : f32 to vector<2x128xf32>
    %417 = arith.mulf %416, %415 : vector<2x128xf32>
    %418 = math.tanh %417 : vector<2x128xf32>
    %cst_140 = arith.constant 5.000000e-01 : f32
    %419 = vector.broadcast %cst_140 : f32 to vector<2x128xf32>
    %420 = arith.mulf %419, %418 : vector<2x128xf32>
    %cst_141 = arith.constant 5.000000e-01 : f32
    %421 = vector.broadcast %cst_141 : f32 to vector<2x128xf32>
    %422 = arith.addf %420, %421 : vector<2x128xf32>
    %423 = vector.extract_strided_slice %422 {offsets = [0, 0], sizes = [2, 32], strides = [1, 1]} : vector<2x128xf32> to vector<2x32xf32>
    %424 = vector.extract_strided_slice %422 {offsets = [0, 32], sizes = [2, 32], strides = [1, 1]} : vector<2x128xf32> to vector<2x32xf32>
    %425 = vector.extract_strided_slice %422 {offsets = [0, 96], sizes = [2, 32], strides = [1, 1]} : vector<2x128xf32> to vector<2x32xf32>
    %426 = vector.extract_strided_slice %415 {offsets = [0, 64], sizes = [2, 32], strides = [1, 1]} : vector<2x128xf32> to vector<2x32xf32>
    %427 = math.tanh %426 : vector<2x32xf32>
    %428 = arith.mulf %424, %390 : vector<2x32xf32>
    %429 = arith.mulf %423, %427 : vector<2x32xf32>
    %430 = arith.addf %428, %429 : vector<2x32xf32>
    %431 = math.tanh %430 : vector<2x32xf32>
    %432 = arith.mulf %425, %431 : vector<2x32xf32>
    %cst_142 = arith.constant dense<0.000000e+00> : vector<2x160xf32>
    %433 = tpu.matmul %432, %31, %cst_142 {dimension_numbers = #tpu.dot_dimension_numbers<[1], [0], [0], [1], [0, 0, 1, 1], [], []>} : vector<2x32xf32>, vector<32x160xf32>, vector<2x160xf32> -> vector<2x160xf32>
    %434 = vector.extract_strided_slice %433 {offsets = [0, 0], sizes = [2, 128], strides = [1, 1]} : vector<2x160xf32> to vector<2x128xf32>
    %435 = vector.extract_strided_slice %433 {offsets = [0, 128], sizes = [2, 32], strides = [1, 1]} : vector<2x160xf32> to vector<2x32xf32>
    %436 = arith.addf %435, %43 : vector<2x32xf32>
    %cst_143 = arith.constant 0.000000e+00 : f32
    %437 = vector.broadcast %cst_143 : f32 to vector<2x32xf32>
    %438 = arith.maximumf %436, %437 : vector<2x32xf32>
    %cst_144 = arith.constant dense<0.000000e+00> : vector<2x16xf32>
    %439 = tpu.matmul %438, %32, %cst_144 {dimension_numbers = #tpu.dot_dimension_numbers<[1], [0], [0], [1], [0, 0, 1, 1], [], []>} : vector<2x32xf32>, vector<32x16xf32>, vector<2x16xf32> -> vector<2x16xf32>
    %440 = arith.addf %439, %46 : vector<2x16xf32>
    %c4_i32_145 = arith.constant 4 : i32
    %441 = arith.muli %c1_i32_91, %c4_i32_145 : i32
    %c3_i32_146 = arith.constant 3 : i32
    %442 = arith.addi %441, %c3_i32_146 : i32
    %443 = arith.index_cast %442 : i32 to index
    %c0_147 = arith.constant 0 : index
    %c0_148 = arith.constant 0 : index
    %444 = vector.load %arg8[%443, %c0_147, %c0_148] : memref<16x2x16xf32, #tpu.memory_space<vmem>>, vector<1x2x16xf32>
    %445 = vector.shape_cast %444 : vector<1x2x16xf32> to vector<2x16xf32>
    %446 = vector.shape_cast %440 : vector<2x16xf32> to vector<1x2x16xf32>
    tpu.vector_store %arg8[%443, %c0_147, %c0_148], %446 {strides = array<i32>} : memref<16x2x16xf32, #tpu.memory_space<vmem>>, vector<1x2x16xf32>,
    %cst_149 = arith.constant dense<0xFF800000> : vector<2xf32>
    %447 = vector.multi_reduction <maximumf>, %440, %cst_149 [1] : vector<2x16xf32> to vector<2xf32>
    %448 = vector.shape_cast %447 : vector<2xf32> to vector<2x1xf32>
    %449 = vector.broadcast %448 : vector<2x1xf32> to vector<2x16xf32>
    %450 = arith.cmpf oeq, %440, %449 : vector<2x16xf32>
    %451 = arith.extui %450 : vector<2x16xi1> to vector<2x16xi32>
    %452 = arith.sitofp %451 : vector<2x16xi32> to vector<2x16xf32>
    %cst_150 = arith.constant dense<0.000000e+00> : vector<2x128xf32>
    %453 = tpu.matmul %452, %34, %cst_150 {dimension_numbers = #tpu.dot_dimension_numbers<[1], [0], [0], [1], [0, 0, 1, 1], [], []>} : vector<2x16xf32>, vector<16x128xf32>, vector<2x128xf32> -> vector<2x128xf32>
    %454 = arith.addf %453, %291 : vector<2x128xf32>
    %c2_i32_151 = arith.constant 2 : i32
    %455 = arith.addf %290, %271 : vector<2x128xf32>
    %cst_152 = arith.constant 5.000000e-01 : f32
    %456 = vector.broadcast %cst_152 : f32 to vector<2x128xf32>
    %457 = arith.mulf %456, %455 : vector<2x128xf32>
    %458 = math.tanh %457 : vector<2x128xf32>
    %cst_153 = arith.constant 5.000000e-01 : f32
    %459 = vector.broadcast %cst_153 : f32 to vector<2x128xf32>
    %460 = arith.mulf %459, %458 : vector<2x128xf32>
    %cst_154 = arith.constant 5.000000e-01 : f32
    %461 = vector.broadcast %cst_154 : f32 to vector<2x128xf32>
    %462 = arith.addf %460, %461 : vector<2x128xf32>
    %463 = vector.extract_strided_slice %462 {offsets = [0, 0], sizes = [2, 32], strides = [1, 1]} : vector<2x128xf32> to vector<2x32xf32>
    %464 = vector.extract_strided_slice %462 {offsets = [0, 32], sizes = [2, 32], strides = [1, 1]} : vector<2x128xf32> to vector<2x32xf32>
    %465 = vector.extract_strided_slice %462 {offsets = [0, 96], sizes = [2, 32], strides = [1, 1]} : vector<2x128xf32> to vector<2x32xf32>
    %466 = vector.extract_strided_slice %455 {offsets = [0, 64], sizes = [2, 32], strides = [1, 1]} : vector<2x128xf32> to vector<2x32xf32>
    %467 = math.tanh %466 : vector<2x32xf32>
    %468 = arith.mulf %464, %267 : vector<2x32xf32>
    %469 = arith.mulf %463, %467 : vector<2x32xf32>
    %470 = arith.addf %468, %469 : vector<2x32xf32>
    %471 = math.tanh %470 : vector<2x32xf32>
    %472 = arith.mulf %465, %471 : vector<2x32xf32>
    %cst_155 = arith.constant dense<0.000000e+00> : vector<2x160xf32>
    %473 = tpu.matmul %472, %29, %cst_155 {dimension_numbers = #tpu.dot_dimension_numbers<[1], [0], [0], [1], [0, 0, 1, 1], [], []>} : vector<2x32xf32>, vector<32x160xf32>, vector<2x160xf32> -> vector<2x160xf32>
    %474 = vector.extract_strided_slice %473 {offsets = [0, 0], sizes = [2, 128], strides = [1, 1]} : vector<2x160xf32> to vector<2x128xf32>
    %475 = vector.extract_strided_slice %473 {offsets = [0, 128], sizes = [2, 32], strides = [1, 1]} : vector<2x160xf32> to vector<2x32xf32>
    %476 = arith.addf %475, %37 : vector<2x32xf32>
    %cst_156 = arith.constant 0.000000e+00 : f32
    %477 = vector.broadcast %cst_156 : f32 to vector<2x32xf32>
    %478 = arith.maximumf %476, %477 : vector<2x32xf32>
    %cst_157 = arith.constant dense<0.000000e+00> : vector<2x9xf32>
    %479 = tpu.matmul %478, %30, %cst_157 {dimension_numbers = #tpu.dot_dimension_numbers<[1], [0], [0], [1], [0, 0, 1, 1], [], []>} : vector<2x32xf32>, vector<32x9xf32>, vector<2x9xf32> -> vector<2x9xf32>
    %480 = arith.addf %479, %40 : vector<2x9xf32>
    %481 = arith.index_cast %c2_i32_151 : i32 to index
    %c0_158 = arith.constant 0 : index
    %c0_159 = arith.constant 0 : index
    %482 = vector.load %arg7[%481, %c0_158, %c0_159] : memref<4x2x9xf32, #tpu.memory_space<vmem>>, vector<1x2x9xf32>
    %483 = vector.shape_cast %482 : vector<1x2x9xf32> to vector<2x9xf32>
    %484 = vector.shape_cast %480 : vector<2x9xf32> to vector<1x2x9xf32>
    tpu.vector_store %arg7[%481, %c0_158, %c0_159], %484 {strides = array<i32>} : memref<4x2x9xf32, #tpu.memory_space<vmem>>, vector<1x2x9xf32>,
    %cst_160 = arith.constant dense<0xFF800000> : vector<2xf32>
    %485 = vector.multi_reduction <maximumf>, %480, %cst_160 [1] : vector<2x9xf32> to vector<2xf32>
    %486 = vector.shape_cast %485 : vector<2xf32> to vector<2x1xf32>
    %487 = vector.broadcast %486 : vector<2x1xf32> to vector<2x9xf32>
    %488 = arith.cmpf oeq, %480, %487 : vector<2x9xf32>
    %489 = arith.extui %488 : vector<2x9xi1> to vector<2x9xi32>
    %490 = arith.sitofp %489 : vector<2x9xi32> to vector<2x9xf32>
    %cst_161 = arith.constant dense<0.000000e+00> : vector<2x384xf32>
    %491 = tpu.matmul %490, %33, %cst_161 {dimension_numbers = #tpu.dot_dimension_numbers<[1], [0], [0], [1], [0, 0, 1, 1], [], []>} : vector<2x9xf32>, vector<9x384xf32>, vector<2x384xf32> -> vector<2x384xf32>
    %492 = arith.addf %491, %28 : vector<2x384xf32>
    %493 = vector.extract_strided_slice %492 {offsets = [0, 0], sizes = [2, 128], strides = [1, 1]} : vector<2x384xf32> to vector<2x128xf32>
    %494 = vector.extract_strided_slice %492 {offsets = [0, 128], sizes = [2, 128], strides = [1, 1]} : vector<2x384xf32> to vector<2x128xf32>
    %c0_i32_162 = arith.constant 0 : i32
    %495 = arith.cmpi eq, %c2_i32_151, %c0_i32_162 : i32
    %496 = vector.extract_strided_slice %492 {offsets = [0, 256], sizes = [2, 128], strides = [1, 1]} : vector<2x384xf32> to vector<2x128xf32>
    %497 = arith.select %495, %496, %454 : vector<2x128xf32>
    %498 = arith.addf %497, %434 : vector<2x128xf32>
    %cst_163 = arith.constant 5.000000e-01 : f32
    %499 = vector.broadcast %cst_163 : f32 to vector<2x128xf32>
    %500 = arith.mulf %499, %498 : vector<2x128xf32>
    %501 = math.tanh %500 : vector<2x128xf32>
    %cst_164 = arith.constant 5.000000e-01 : f32
    %502 = vector.broadcast %cst_164 : f32 to vector<2x128xf32>
    %503 = arith.mulf %502, %501 : vector<2x128xf32>
    %cst_165 = arith.constant 5.000000e-01 : f32
    %504 = vector.broadcast %cst_165 : f32 to vector<2x128xf32>
    %505 = arith.addf %503, %504 : vector<2x128xf32>
    %506 = vector.extract_strided_slice %505 {offsets = [0, 0], sizes = [2, 32], strides = [1, 1]} : vector<2x128xf32> to vector<2x32xf32>
    %507 = vector.extract_strided_slice %505 {offsets = [0, 32], sizes = [2, 32], strides = [1, 1]} : vector<2x128xf32> to vector<2x32xf32>
    %508 = vector.extract_strided_slice %505 {offsets = [0, 96], sizes = [2, 32], strides = [1, 1]} : vector<2x128xf32> to vector<2x32xf32>
    %509 = vector.extract_strided_slice %498 {offsets = [0, 64], sizes = [2, 32], strides = [1, 1]} : vector<2x128xf32> to vector<2x32xf32>
    %510 = math.tanh %509 : vector<2x32xf32>
    %511 = arith.mulf %507, %430 : vector<2x32xf32>
    %512 = arith.mulf %506, %510 : vector<2x32xf32>
    %513 = arith.addf %511, %512 : vector<2x32xf32>
    %514 = math.tanh %513 : vector<2x32xf32>
    %515 = arith.mulf %508, %514 : vector<2x32xf32>
    %cst_166 = arith.constant dense<0.000000e+00> : vector<2x160xf32>
    %516 = tpu.matmul %515, %31, %cst_166 {dimension_numbers = #tpu.dot_dimension_numbers<[1], [0], [0], [1], [0, 0, 1, 1], [], []>} : vector<2x32xf32>, vector<32x160xf32>, vector<2x160xf32> -> vector<2x160xf32>
    %517 = vector.extract_strided_slice %516 {offsets = [0, 0], sizes = [2, 128], strides = [1, 1]} : vector<2x160xf32> to vector<2x128xf32>
    %518 = vector.extract_strided_slice %516 {offsets = [0, 128], sizes = [2, 32], strides = [1, 1]} : vector<2x160xf32> to vector<2x32xf32>
    %519 = arith.addf %518, %43 : vector<2x32xf32>
    %cst_167 = arith.constant 0.000000e+00 : f32
    %520 = vector.broadcast %cst_167 : f32 to vector<2x32xf32>
    %521 = arith.maximumf %519, %520 : vector<2x32xf32>
    %cst_168 = arith.constant dense<0.000000e+00> : vector<2x16xf32>
    %522 = tpu.matmul %521, %32, %cst_168 {dimension_numbers = #tpu.dot_dimension_numbers<[1], [0], [0], [1], [0, 0, 1, 1], [], []>} : vector<2x32xf32>, vector<32x16xf32>, vector<2x16xf32> -> vector<2x16xf32>
    %523 = arith.addf %522, %46 : vector<2x16xf32>
    %c4_i32_169 = arith.constant 4 : i32
    %524 = arith.muli %c2_i32_151, %c4_i32_169 : i32
    %c0_i32_170 = arith.constant 0 : i32
    %525 = arith.addi %524, %c0_i32_170 : i32
    %526 = arith.index_cast %525 : i32 to index
    %c0_171 = arith.constant 0 : index
    %c0_172 = arith.constant 0 : index
    %527 = vector.load %arg8[%526, %c0_171, %c0_172] : memref<16x2x16xf32, #tpu.memory_space<vmem>>, vector<1x2x16xf32>
    %528 = vector.shape_cast %527 : vector<1x2x16xf32> to vector<2x16xf32>
    %529 = vector.shape_cast %523 : vector<2x16xf32> to vector<1x2x16xf32>
    tpu.vector_store %arg8[%526, %c0_171, %c0_172], %529 {strides = array<i32>} : memref<16x2x16xf32, #tpu.memory_space<vmem>>, vector<1x2x16xf32>,
    %cst_173 = arith.constant dense<0xFF800000> : vector<2xf32>
    %530 = vector.multi_reduction <maximumf>, %523, %cst_173 [1] : vector<2x16xf32> to vector<2xf32>
    %531 = vector.shape_cast %530 : vector<2xf32> to vector<2x1xf32>
    %532 = vector.broadcast %531 : vector<2x1xf32> to vector<2x16xf32>
    %533 = arith.cmpf oeq, %523, %532 : vector<2x16xf32>
    %534 = arith.extui %533 : vector<2x16xi1> to vector<2x16xi32>
    %535 = arith.sitofp %534 : vector<2x16xi32> to vector<2x16xf32>
    %cst_174 = arith.constant dense<0.000000e+00> : vector<2x128xf32>
    %536 = tpu.matmul %535, %34, %cst_174 {dimension_numbers = #tpu.dot_dimension_numbers<[1], [0], [0], [1], [0, 0, 1, 1], [], []>} : vector<2x16xf32>, vector<16x128xf32>, vector<2x128xf32> -> vector<2x128xf32>
    %537 = arith.addf %536, %494 : vector<2x128xf32>
    %538 = arith.addf %537, %517 : vector<2x128xf32>
    %cst_175 = arith.constant 5.000000e-01 : f32
    %539 = vector.broadcast %cst_175 : f32 to vector<2x128xf32>
    %540 = arith.mulf %539, %538 : vector<2x128xf32>
    %541 = math.tanh %540 : vector<2x128xf32>
    %cst_176 = arith.constant 5.000000e-01 : f32
    %542 = vector.broadcast %cst_176 : f32 to vector<2x128xf32>
    %543 = arith.mulf %542, %541 : vector<2x128xf32>
    %cst_177 = arith.constant 5.000000e-01 : f32
    %544 = vector.broadcast %cst_177 : f32 to vector<2x128xf32>
    %545 = arith.addf %543, %544 : vector<2x128xf32>
    %546 = vector.extract_strided_slice %545 {offsets = [0, 0], sizes = [2, 32], strides = [1, 1]} : vector<2x128xf32> to vector<2x32xf32>
    %547 = vector.extract_strided_slice %545 {offsets = [0, 32], sizes = [2, 32], strides = [1, 1]} : vector<2x128xf32> to vector<2x32xf32>
    %548 = vector.extract_strided_slice %545 {offsets = [0, 96], sizes = [2, 32], strides = [1, 1]} : vector<2x128xf32> to vector<2x32xf32>
    %549 = vector.extract_strided_slice %538 {offsets = [0, 64], sizes = [2, 32], strides = [1, 1]} : vector<2x128xf32> to vector<2x32xf32>
    %550 = math.tanh %549 : vector<2x32xf32>
    %551 = arith.mulf %547, %513 : vector<2x32xf32>
    %552 = arith.mulf %546, %550 : vector<2x32xf32>
    %553 = arith.addf %551, %552 : vector<2x32xf32>
    %554 = math.tanh %553 : vector<2x32xf32>
    %555 = arith.mulf %548, %554 : vector<2x32xf32>
    %cst_178 = arith.constant dense<0.000000e+00> : vector<2x160xf32>
    %556 = tpu.matmul %555, %31, %cst_178 {dimension_numbers = #tpu.dot_dimension_numbers<[1], [0], [0], [1], [0, 0, 1, 1], [], []>} : vector<2x32xf32>, vector<32x160xf32>, vector<2x160xf32> -> vector<2x160xf32>
    %557 = vector.extract_strided_slice %556 {offsets = [0, 0], sizes = [2, 128], strides = [1, 1]} : vector<2x160xf32> to vector<2x128xf32>
    %558 = vector.extract_strided_slice %556 {offsets = [0, 128], sizes = [2, 32], strides = [1, 1]} : vector<2x160xf32> to vector<2x32xf32>
    %559 = arith.addf %558, %43 : vector<2x32xf32>
    %cst_179 = arith.constant 0.000000e+00 : f32
    %560 = vector.broadcast %cst_179 : f32 to vector<2x32xf32>
    %561 = arith.maximumf %559, %560 : vector<2x32xf32>
    %cst_180 = arith.constant dense<0.000000e+00> : vector<2x16xf32>
    %562 = tpu.matmul %561, %32, %cst_180 {dimension_numbers = #tpu.dot_dimension_numbers<[1], [0], [0], [1], [0, 0, 1, 1], [], []>} : vector<2x32xf32>, vector<32x16xf32>, vector<2x16xf32> -> vector<2x16xf32>
    %563 = arith.addf %562, %46 : vector<2x16xf32>
    %c4_i32_181 = arith.constant 4 : i32
    %564 = arith.muli %c2_i32_151, %c4_i32_181 : i32
    %c1_i32_182 = arith.constant 1 : i32
    %565 = arith.addi %564, %c1_i32_182 : i32
    %566 = arith.index_cast %565 : i32 to index
    %c0_183 = arith.constant 0 : index
    %c0_184 = arith.constant 0 : index
    %567 = vector.load %arg8[%566, %c0_183, %c0_184] : memref<16x2x16xf32, #tpu.memory_space<vmem>>, vector<1x2x16xf32>
    %568 = vector.shape_cast %567 : vector<1x2x16xf32> to vector<2x16xf32>
    %569 = vector.shape_cast %563 : vector<2x16xf32> to vector<1x2x16xf32>
    tpu.vector_store %arg8[%566, %c0_183, %c0_184], %569 {strides = array<i32>} : memref<16x2x16xf32, #tpu.memory_space<vmem>>, vector<1x2x16xf32>,
    %cst_185 = arith.constant dense<0xFF800000> : vector<2xf32>
    %570 = vector.multi_reduction <maximumf>, %563, %cst_185 [1] : vector<2x16xf32> to vector<2xf32>
    %571 = vector.shape_cast %570 : vector<2xf32> to vector<2x1xf32>
    %572 = vector.broadcast %571 : vector<2x1xf32> to vector<2x16xf32>
    %573 = arith.cmpf oeq, %563, %572 : vector<2x16xf32>
    %574 = arith.extui %573 : vector<2x16xi1> to vector<2x16xi32>
    %575 = arith.sitofp %574 : vector<2x16xi32> to vector<2x16xf32>
    %cst_186 = arith.constant dense<0.000000e+00> : vector<2x128xf32>
    %576 = tpu.matmul %575, %34, %cst_186 {dimension_numbers = #tpu.dot_dimension_numbers<[1], [0], [0], [1], [0, 0, 1, 1], [], []>} : vector<2x16xf32>, vector<16x128xf32>, vector<2x128xf32> -> vector<2x128xf32>
    %577 = arith.addf %576, %494 : vector<2x128xf32>
    %578 = arith.addf %577, %557 : vector<2x128xf32>
    %cst_187 = arith.constant 5.000000e-01 : f32
    %579 = vector.broadcast %cst_187 : f32 to vector<2x128xf32>
    %580 = arith.mulf %579, %578 : vector<2x128xf32>
    %581 = math.tanh %580 : vector<2x128xf32>
    %cst_188 = arith.constant 5.000000e-01 : f32
    %582 = vector.broadcast %cst_188 : f32 to vector<2x128xf32>
    %583 = arith.mulf %582, %581 : vector<2x128xf32>
    %cst_189 = arith.constant 5.000000e-01 : f32
    %584 = vector.broadcast %cst_189 : f32 to vector<2x128xf32>
    %585 = arith.addf %583, %584 : vector<2x128xf32>
    %586 = vector.extract_strided_slice %585 {offsets = [0, 0], sizes = [2, 32], strides = [1, 1]} : vector<2x128xf32> to vector<2x32xf32>
    %587 = vector.extract_strided_slice %585 {offsets = [0, 32], sizes = [2, 32], strides = [1, 1]} : vector<2x128xf32> to vector<2x32xf32>
    %588 = vector.extract_strided_slice %585 {offsets = [0, 96], sizes = [2, 32], strides = [1, 1]} : vector<2x128xf32> to vector<2x32xf32>
    %589 = vector.extract_strided_slice %578 {offsets = [0, 64], sizes = [2, 32], strides = [1, 1]} : vector<2x128xf32> to vector<2x32xf32>
    %590 = math.tanh %589 : vector<2x32xf32>
    %591 = arith.mulf %587, %553 : vector<2x32xf32>
    %592 = arith.mulf %586, %590 : vector<2x32xf32>
    %593 = arith.addf %591, %592 : vector<2x32xf32>
    %594 = math.tanh %593 : vector<2x32xf32>
    %595 = arith.mulf %588, %594 : vector<2x32xf32>
    %cst_190 = arith.constant dense<0.000000e+00> : vector<2x160xf32>
    %596 = tpu.matmul %595, %31, %cst_190 {dimension_numbers = #tpu.dot_dimension_numbers<[1], [0], [0], [1], [0, 0, 1, 1], [], []>} : vector<2x32xf32>, vector<32x160xf32>, vector<2x160xf32> -> vector<2x160xf32>
    %597 = vector.extract_strided_slice %596 {offsets = [0, 0], sizes = [2, 128], strides = [1, 1]} : vector<2x160xf32> to vector<2x128xf32>
    %598 = vector.extract_strided_slice %596 {offsets = [0, 128], sizes = [2, 32], strides = [1, 1]} : vector<2x160xf32> to vector<2x32xf32>
    %599 = arith.addf %598, %43 : vector<2x32xf32>
    %cst_191 = arith.constant 0.000000e+00 : f32
    %600 = vector.broadcast %cst_191 : f32 to vector<2x32xf32>
    %601 = arith.maximumf %599, %600 : vector<2x32xf32>
    %cst_192 = arith.constant dense<0.000000e+00> : vector<2x16xf32>
    %602 = tpu.matmul %601, %32, %cst_192 {dimension_numbers = #tpu.dot_dimension_numbers<[1], [0], [0], [1], [0, 0, 1, 1], [], []>} : vector<2x32xf32>, vector<32x16xf32>, vector<2x16xf32> -> vector<2x16xf32>
    %603 = arith.addf %602, %46 : vector<2x16xf32>
    %c4_i32_193 = arith.constant 4 : i32
    %604 = arith.muli %c2_i32_151, %c4_i32_193 : i32
    %c2_i32_194 = arith.constant 2 : i32
    %605 = arith.addi %604, %c2_i32_194 : i32
    %606 = arith.index_cast %605 : i32 to index
    %c0_195 = arith.constant 0 : index
    %c0_196 = arith.constant 0 : index
    %607 = vector.load %arg8[%606, %c0_195, %c0_196] : memref<16x2x16xf32, #tpu.memory_space<vmem>>, vector<1x2x16xf32>
    %608 = vector.shape_cast %607 : vector<1x2x16xf32> to vector<2x16xf32>
    %609 = vector.shape_cast %603 : vector<2x16xf32> to vector<1x2x16xf32>
    tpu.vector_store %arg8[%606, %c0_195, %c0_196], %609 {strides = array<i32>} : memref<16x2x16xf32, #tpu.memory_space<vmem>>, vector<1x2x16xf32>,
    %cst_197 = arith.constant dense<0xFF800000> : vector<2xf32>
    %610 = vector.multi_reduction <maximumf>, %603, %cst_197 [1] : vector<2x16xf32> to vector<2xf32>
    %611 = vector.shape_cast %610 : vector<2xf32> to vector<2x1xf32>
    %612 = vector.broadcast %611 : vector<2x1xf32> to vector<2x16xf32>
    %613 = arith.cmpf oeq, %603, %612 : vector<2x16xf32>
    %614 = arith.extui %613 : vector<2x16xi1> to vector<2x16xi32>
    %615 = arith.sitofp %614 : vector<2x16xi32> to vector<2x16xf32>
    %cst_198 = arith.constant dense<0.000000e+00> : vector<2x128xf32>
    %616 = tpu.matmul %615, %34, %cst_198 {dimension_numbers = #tpu.dot_dimension_numbers<[1], [0], [0], [1], [0, 0, 1, 1], [], []>} : vector<2x16xf32>, vector<16x128xf32>, vector<2x128xf32> -> vector<2x128xf32>
    %617 = arith.addf %616, %494 : vector<2x128xf32>
    %618 = arith.addf %617, %597 : vector<2x128xf32>
    %cst_199 = arith.constant 5.000000e-01 : f32
    %619 = vector.broadcast %cst_199 : f32 to vector<2x128xf32>
    %620 = arith.mulf %619, %618 : vector<2x128xf32>
    %621 = math.tanh %620 : vector<2x128xf32>
    %cst_200 = arith.constant 5.000000e-01 : f32
    %622 = vector.broadcast %cst_200 : f32 to vector<2x128xf32>
    %623 = arith.mulf %622, %621 : vector<2x128xf32>
    %cst_201 = arith.constant 5.000000e-01 : f32
    %624 = vector.broadcast %cst_201 : f32 to vector<2x128xf32>
    %625 = arith.addf %623, %624 : vector<2x128xf32>
    %626 = vector.extract_strided_slice %625 {offsets = [0, 0], sizes = [2, 32], strides = [1, 1]} : vector<2x128xf32> to vector<2x32xf32>
    %627 = vector.extract_strided_slice %625 {offsets = [0, 32], sizes = [2, 32], strides = [1, 1]} : vector<2x128xf32> to vector<2x32xf32>
    %628 = vector.extract_strided_slice %625 {offsets = [0, 96], sizes = [2, 32], strides = [1, 1]} : vector<2x128xf32> to vector<2x32xf32>
    %629 = vector.extract_strided_slice %618 {offsets = [0, 64], sizes = [2, 32], strides = [1, 1]} : vector<2x128xf32> to vector<2x32xf32>
    %630 = math.tanh %629 : vector<2x32xf32>
    %631 = arith.mulf %627, %593 : vector<2x32xf32>
    %632 = arith.mulf %626, %630 : vector<2x32xf32>
    %633 = arith.addf %631, %632 : vector<2x32xf32>
    %634 = math.tanh %633 : vector<2x32xf32>
    %635 = arith.mulf %628, %634 : vector<2x32xf32>
    %cst_202 = arith.constant dense<0.000000e+00> : vector<2x160xf32>
    %636 = tpu.matmul %635, %31, %cst_202 {dimension_numbers = #tpu.dot_dimension_numbers<[1], [0], [0], [1], [0, 0, 1, 1], [], []>} : vector<2x32xf32>, vector<32x160xf32>, vector<2x160xf32> -> vector<2x160xf32>
    %637 = vector.extract_strided_slice %636 {offsets = [0, 0], sizes = [2, 128], strides = [1, 1]} : vector<2x160xf32> to vector<2x128xf32>
    %638 = vector.extract_strided_slice %636 {offsets = [0, 128], sizes = [2, 32], strides = [1, 1]} : vector<2x160xf32> to vector<2x32xf32>
    %639 = arith.addf %638, %43 : vector<2x32xf32>
    %cst_203 = arith.constant 0.000000e+00 : f32
    %640 = vector.broadcast %cst_203 : f32 to vector<2x32xf32>
    %641 = arith.maximumf %639, %640 : vector<2x32xf32>
    %cst_204 = arith.constant dense<0.000000e+00> : vector<2x16xf32>
    %642 = tpu.matmul %641, %32, %cst_204 {dimension_numbers = #tpu.dot_dimension_numbers<[1], [0], [0], [1], [0, 0, 1, 1], [], []>} : vector<2x32xf32>, vector<32x16xf32>, vector<2x16xf32> -> vector<2x16xf32>
    %643 = arith.addf %642, %46 : vector<2x16xf32>
    %c4_i32_205 = arith.constant 4 : i32
    %644 = arith.muli %c2_i32_151, %c4_i32_205 : i32
    %c3_i32_206 = arith.constant 3 : i32
    %645 = arith.addi %644, %c3_i32_206 : i32
    %646 = arith.index_cast %645 : i32 to index
    %c0_207 = arith.constant 0 : index
    %c0_208 = arith.constant 0 : index
    %647 = vector.load %arg8[%646, %c0_207, %c0_208] : memref<16x2x16xf32, #tpu.memory_space<vmem>>, vector<1x2x16xf32>
    %648 = vector.shape_cast %647 : vector<1x2x16xf32> to vector<2x16xf32>
    %649 = vector.shape_cast %643 : vector<2x16xf32> to vector<1x2x16xf32>
    tpu.vector_store %arg8[%646, %c0_207, %c0_208], %649 {strides = array<i32>} : memref<16x2x16xf32, #tpu.memory_space<vmem>>, vector<1x2x16xf32>,
    %cst_209 = arith.constant dense<0xFF800000> : vector<2xf32>
    %650 = vector.multi_reduction <maximumf>, %643, %cst_209 [1] : vector<2x16xf32> to vector<2xf32>
    %651 = vector.shape_cast %650 : vector<2xf32> to vector<2x1xf32>
    %652 = vector.broadcast %651 : vector<2x1xf32> to vector<2x16xf32>
    %653 = arith.cmpf oeq, %643, %652 : vector<2x16xf32>
    %654 = arith.extui %653 : vector<2x16xi1> to vector<2x16xi32>
    %655 = arith.sitofp %654 : vector<2x16xi32> to vector<2x16xf32>
    %cst_210 = arith.constant dense<0.000000e+00> : vector<2x128xf32>
    %656 = tpu.matmul %655, %34, %cst_210 {dimension_numbers = #tpu.dot_dimension_numbers<[1], [0], [0], [1], [0, 0, 1, 1], [], []>} : vector<2x16xf32>, vector<16x128xf32>, vector<2x128xf32> -> vector<2x128xf32>
    %657 = arith.addf %656, %494 : vector<2x128xf32>
    %c3_i32_211 = arith.constant 3 : i32
    %658 = arith.addf %493, %474 : vector<2x128xf32>
    %cst_212 = arith.constant 5.000000e-01 : f32
    %659 = vector.broadcast %cst_212 : f32 to vector<2x128xf32>
    %660 = arith.mulf %659, %658 : vector<2x128xf32>
    %661 = math.tanh %660 : vector<2x128xf32>
    %cst_213 = arith.constant 5.000000e-01 : f32
    %662 = vector.broadcast %cst_213 : f32 to vector<2x128xf32>
    %663 = arith.mulf %662, %661 : vector<2x128xf32>
    %cst_214 = arith.constant 5.000000e-01 : f32
    %664 = vector.broadcast %cst_214 : f32 to vector<2x128xf32>
    %665 = arith.addf %663, %664 : vector<2x128xf32>
    %666 = vector.extract_strided_slice %665 {offsets = [0, 0], sizes = [2, 32], strides = [1, 1]} : vector<2x128xf32> to vector<2x32xf32>
    %667 = vector.extract_strided_slice %665 {offsets = [0, 32], sizes = [2, 32], strides = [1, 1]} : vector<2x128xf32> to vector<2x32xf32>
    %668 = vector.extract_strided_slice %665 {offsets = [0, 96], sizes = [2, 32], strides = [1, 1]} : vector<2x128xf32> to vector<2x32xf32>
    %669 = vector.extract_strided_slice %658 {offsets = [0, 64], sizes = [2, 32], strides = [1, 1]} : vector<2x128xf32> to vector<2x32xf32>
    %670 = math.tanh %669 : vector<2x32xf32>
    %671 = arith.mulf %667, %470 : vector<2x32xf32>
    %672 = arith.mulf %666, %670 : vector<2x32xf32>
    %673 = arith.addf %671, %672 : vector<2x32xf32>
    %674 = math.tanh %673 : vector<2x32xf32>
    %675 = arith.mulf %668, %674 : vector<2x32xf32>
    %cst_215 = arith.constant dense<0.000000e+00> : vector<2x160xf32>
    %676 = tpu.matmul %675, %29, %cst_215 {dimension_numbers = #tpu.dot_dimension_numbers<[1], [0], [0], [1], [0, 0, 1, 1], [], []>} : vector<2x32xf32>, vector<32x160xf32>, vector<2x160xf32> -> vector<2x160xf32>
    %677 = vector.extract_strided_slice %676 {offsets = [0, 0], sizes = [2, 128], strides = [1, 1]} : vector<2x160xf32> to vector<2x128xf32>
    %678 = vector.extract_strided_slice %676 {offsets = [0, 128], sizes = [2, 32], strides = [1, 1]} : vector<2x160xf32> to vector<2x32xf32>
    %679 = arith.addf %678, %37 : vector<2x32xf32>
    %cst_216 = arith.constant 0.000000e+00 : f32
    %680 = vector.broadcast %cst_216 : f32 to vector<2x32xf32>
    %681 = arith.maximumf %679, %680 : vector<2x32xf32>
    %cst_217 = arith.constant dense<0.000000e+00> : vector<2x9xf32>
    %682 = tpu.matmul %681, %30, %cst_217 {dimension_numbers = #tpu.dot_dimension_numbers<[1], [0], [0], [1], [0, 0, 1, 1], [], []>} : vector<2x32xf32>, vector<32x9xf32>, vector<2x9xf32> -> vector<2x9xf32>
    %683 = arith.addf %682, %40 : vector<2x9xf32>
    %684 = arith.index_cast %c3_i32_211 : i32 to index
    %c0_218 = arith.constant 0 : index
    %c0_219 = arith.constant 0 : index
    %685 = vector.load %arg7[%684, %c0_218, %c0_219] : memref<4x2x9xf32, #tpu.memory_space<vmem>>, vector<1x2x9xf32>
    %686 = vector.shape_cast %685 : vector<1x2x9xf32> to vector<2x9xf32>
    %687 = vector.shape_cast %683 : vector<2x9xf32> to vector<1x2x9xf32>
    tpu.vector_store %arg7[%684, %c0_218, %c0_219], %687 {strides = array<i32>} : memref<4x2x9xf32, #tpu.memory_space<vmem>>, vector<1x2x9xf32>,
    %cst_220 = arith.constant dense<0xFF800000> : vector<2xf32>
    %688 = vector.multi_reduction <maximumf>, %683, %cst_220 [1] : vector<2x9xf32> to vector<2xf32>
    %689 = vector.shape_cast %688 : vector<2xf32> to vector<2x1xf32>
    %690 = vector.broadcast %689 : vector<2x1xf32> to vector<2x9xf32>
    %691 = arith.cmpf oeq, %683, %690 : vector<2x9xf32>
    %692 = arith.extui %691 : vector<2x9xi1> to vector<2x9xi32>
    %693 = arith.sitofp %692 : vector<2x9xi32> to vector<2x9xf32>
    %cst_221 = arith.constant dense<0.000000e+00> : vector<2x384xf32>
    %694 = tpu.matmul %693, %33, %cst_221 {dimension_numbers = #tpu.dot_dimension_numbers<[1], [0], [0], [1], [0, 0, 1, 1], [], []>} : vector<2x9xf32>, vector<9x384xf32>, vector<2x384xf32> -> vector<2x384xf32>
    %695 = arith.addf %694, %28 : vector<2x384xf32>
    %696 = vector.extract_strided_slice %695 {offsets = [0, 0], sizes = [2, 128], strides = [1, 1]} : vector<2x384xf32> to vector<2x128xf32>
    %697 = vector.extract_strided_slice %695 {offsets = [0, 128], sizes = [2, 128], strides = [1, 1]} : vector<2x384xf32> to vector<2x128xf32>
    %c0_i32_222 = arith.constant 0 : i32
    %698 = arith.cmpi eq, %c3_i32_211, %c0_i32_222 : i32
    %699 = vector.extract_strided_slice %695 {offsets = [0, 256], sizes = [2, 128], strides = [1, 1]} : vector<2x384xf32> to vector<2x128xf32>
    %700 = arith.select %698, %699, %657 : vector<2x128xf32>
    %701 = arith.addf %700, %637 : vector<2x128xf32>
    %cst_223 = arith.constant 5.000000e-01 : f32
    %702 = vector.broadcast %cst_223 : f32 to vector<2x128xf32>
    %703 = arith.mulf %702, %701 : vector<2x128xf32>
    %704 = math.tanh %703 : vector<2x128xf32>
    %cst_224 = arith.constant 5.000000e-01 : f32
    %705 = vector.broadcast %cst_224 : f32 to vector<2x128xf32>
    %706 = arith.mulf %705, %704 : vector<2x128xf32>
    %cst_225 = arith.constant 5.000000e-01 : f32
    %707 = vector.broadcast %cst_225 : f32 to vector<2x128xf32>
    %708 = arith.addf %706, %707 : vector<2x128xf32>
    %709 = vector.extract_strided_slice %708 {offsets = [0, 0], sizes = [2, 32], strides = [1, 1]} : vector<2x128xf32> to vector<2x32xf32>
    %710 = vector.extract_strided_slice %708 {offsets = [0, 32], sizes = [2, 32], strides = [1, 1]} : vector<2x128xf32> to vector<2x32xf32>
    %711 = vector.extract_strided_slice %708 {offsets = [0, 96], sizes = [2, 32], strides = [1, 1]} : vector<2x128xf32> to vector<2x32xf32>
    %712 = vector.extract_strided_slice %701 {offsets = [0, 64], sizes = [2, 32], strides = [1, 1]} : vector<2x128xf32> to vector<2x32xf32>
    %713 = math.tanh %712 : vector<2x32xf32>
    %714 = arith.mulf %710, %633 : vector<2x32xf32>
    %715 = arith.mulf %709, %713 : vector<2x32xf32>
    %716 = arith.addf %714, %715 : vector<2x32xf32>
    %717 = math.tanh %716 : vector<2x32xf32>
    %718 = arith.mulf %711, %717 : vector<2x32xf32>
    %cst_226 = arith.constant dense<0.000000e+00> : vector<2x160xf32>
    %719 = tpu.matmul %718, %31, %cst_226 {dimension_numbers = #tpu.dot_dimension_numbers<[1], [0], [0], [1], [0, 0, 1, 1], [], []>} : vector<2x32xf32>, vector<32x160xf32>, vector<2x160xf32> -> vector<2x160xf32>
    %720 = vector.extract_strided_slice %719 {offsets = [0, 0], sizes = [2, 128], strides = [1, 1]} : vector<2x160xf32> to vector<2x128xf32>
    %721 = vector.extract_strided_slice %719 {offsets = [0, 128], sizes = [2, 32], strides = [1, 1]} : vector<2x160xf32> to vector<2x32xf32>
    %722 = arith.addf %721, %43 : vector<2x32xf32>
    %cst_227 = arith.constant 0.000000e+00 : f32
    %723 = vector.broadcast %cst_227 : f32 to vector<2x32xf32>
    %724 = arith.maximumf %722, %723 : vector<2x32xf32>
    %cst_228 = arith.constant dense<0.000000e+00> : vector<2x16xf32>
    %725 = tpu.matmul %724, %32, %cst_228 {dimension_numbers = #tpu.dot_dimension_numbers<[1], [0], [0], [1], [0, 0, 1, 1], [], []>} : vector<2x32xf32>, vector<32x16xf32>, vector<2x16xf32> -> vector<2x16xf32>
    %726 = arith.addf %725, %46 : vector<2x16xf32>
    %c4_i32_229 = arith.constant 4 : i32
    %727 = arith.muli %c3_i32_211, %c4_i32_229 : i32
    %c0_i32_230 = arith.constant 0 : i32
    %728 = arith.addi %727, %c0_i32_230 : i32
    %729 = arith.index_cast %728 : i32 to index
    %c0_231 = arith.constant 0 : index
    %c0_232 = arith.constant 0 : index
    %730 = vector.load %arg8[%729, %c0_231, %c0_232] : memref<16x2x16xf32, #tpu.memory_space<vmem>>, vector<1x2x16xf32>
    %731 = vector.shape_cast %730 : vector<1x2x16xf32> to vector<2x16xf32>
    %732 = vector.shape_cast %726 : vector<2x16xf32> to vector<1x2x16xf32>
    tpu.vector_store %arg8[%729, %c0_231, %c0_232], %732 {strides = array<i32>} : memref<16x2x16xf32, #tpu.memory_space<vmem>>, vector<1x2x16xf32>,
    %cst_233 = arith.constant dense<0xFF800000> : vector<2xf32>
    %733 = vector.multi_reduction <maximumf>, %726, %cst_233 [1] : vector<2x16xf32> to vector<2xf32>
    %734 = vector.shape_cast %733 : vector<2xf32> to vector<2x1xf32>
    %735 = vector.broadcast %734 : vector<2x1xf32> to vector<2x16xf32>
    %736 = arith.cmpf oeq, %726, %735 : vector<2x16xf32>
    %737 = arith.extui %736 : vector<2x16xi1> to vector<2x16xi32>
    %738 = arith.sitofp %737 : vector<2x16xi32> to vector<2x16xf32>
    %cst_234 = arith.constant dense<0.000000e+00> : vector<2x128xf32>
    %739 = tpu.matmul %738, %34, %cst_234 {dimension_numbers = #tpu.dot_dimension_numbers<[1], [0], [0], [1], [0, 0, 1, 1], [], []>} : vector<2x16xf32>, vector<16x128xf32>, vector<2x128xf32> -> vector<2x128xf32>
    %740 = arith.addf %739, %697 : vector<2x128xf32>
    %741 = arith.addf %740, %720 : vector<2x128xf32>
    %cst_235 = arith.constant 5.000000e-01 : f32
    %742 = vector.broadcast %cst_235 : f32 to vector<2x128xf32>
    %743 = arith.mulf %742, %741 : vector<2x128xf32>
    %744 = math.tanh %743 : vector<2x128xf32>
    %cst_236 = arith.constant 5.000000e-01 : f32
    %745 = vector.broadcast %cst_236 : f32 to vector<2x128xf32>
    %746 = arith.mulf %745, %744 : vector<2x128xf32>
    %cst_237 = arith.constant 5.000000e-01 : f32
    %747 = vector.broadcast %cst_237 : f32 to vector<2x128xf32>
    %748 = arith.addf %746, %747 : vector<2x128xf32>
    %749 = vector.extract_strided_slice %748 {offsets = [0, 0], sizes = [2, 32], strides = [1, 1]} : vector<2x128xf32> to vector<2x32xf32>
    %750 = vector.extract_strided_slice %748 {offsets = [0, 32], sizes = [2, 32], strides = [1, 1]} : vector<2x128xf32> to vector<2x32xf32>
    %751 = vector.extract_strided_slice %748 {offsets = [0, 96], sizes = [2, 32], strides = [1, 1]} : vector<2x128xf32> to vector<2x32xf32>
    %752 = vector.extract_strided_slice %741 {offsets = [0, 64], sizes = [2, 32], strides = [1, 1]} : vector<2x128xf32> to vector<2x32xf32>
    %753 = math.tanh %752 : vector<2x32xf32>
    %754 = arith.mulf %750, %716 : vector<2x32xf32>
    %755 = arith.mulf %749, %753 : vector<2x32xf32>
    %756 = arith.addf %754, %755 : vector<2x32xf32>
    %757 = math.tanh %756 : vector<2x32xf32>
    %758 = arith.mulf %751, %757 : vector<2x32xf32>
    %cst_238 = arith.constant dense<0.000000e+00> : vector<2x160xf32>
    %759 = tpu.matmul %758, %31, %cst_238 {dimension_numbers = #tpu.dot_dimension_numbers<[1], [0], [0], [1], [0, 0, 1, 1], [], []>} : vector<2x32xf32>, vector<32x160xf32>, vector<2x160xf32> -> vector<2x160xf32>
    %760 = vector.extract_strided_slice %759 {offsets = [0, 0], sizes = [2, 128], strides = [1, 1]} : vector<2x160xf32> to vector<2x128xf32>
    %761 = vector.extract_strided_slice %759 {offsets = [0, 128], sizes = [2, 32], strides = [1, 1]} : vector<2x160xf32> to vector<2x32xf32>
    %762 = arith.addf %761, %43 : vector<2x32xf32>
    %cst_239 = arith.constant 0.000000e+00 : f32
    %763 = vector.broadcast %cst_239 : f32 to vector<2x32xf32>
    %764 = arith.maximumf %762, %763 : vector<2x32xf32>
    %cst_240 = arith.constant dense<0.000000e+00> : vector<2x16xf32>
    %765 = tpu.matmul %764, %32, %cst_240 {dimension_numbers = #tpu.dot_dimension_numbers<[1], [0], [0], [1], [0, 0, 1, 1], [], []>} : vector<2x32xf32>, vector<32x16xf32>, vector<2x16xf32> -> vector<2x16xf32>
    %766 = arith.addf %765, %46 : vector<2x16xf32>
    %c4_i32_241 = arith.constant 4 : i32
    %767 = arith.muli %c3_i32_211, %c4_i32_241 : i32
    %c1_i32_242 = arith.constant 1 : i32
    %768 = arith.addi %767, %c1_i32_242 : i32
    %769 = arith.index_cast %768 : i32 to index
    %c0_243 = arith.constant 0 : index
    %c0_244 = arith.constant 0 : index
    %770 = vector.load %arg8[%769, %c0_243, %c0_244] : memref<16x2x16xf32, #tpu.memory_space<vmem>>, vector<1x2x16xf32>
    %771 = vector.shape_cast %770 : vector<1x2x16xf32> to vector<2x16xf32>
    %772 = vector.shape_cast %766 : vector<2x16xf32> to vector<1x2x16xf32>
    tpu.vector_store %arg8[%769, %c0_243, %c0_244], %772 {strides = array<i32>} : memref<16x2x16xf32, #tpu.memory_space<vmem>>, vector<1x2x16xf32>,
    %cst_245 = arith.constant dense<0xFF800000> : vector<2xf32>
    %773 = vector.multi_reduction <maximumf>, %766, %cst_245 [1] : vector<2x16xf32> to vector<2xf32>
    %774 = vector.shape_cast %773 : vector<2xf32> to vector<2x1xf32>
    %775 = vector.broadcast %774 : vector<2x1xf32> to vector<2x16xf32>
    %776 = arith.cmpf oeq, %766, %775 : vector<2x16xf32>
    %777 = arith.extui %776 : vector<2x16xi1> to vector<2x16xi32>
    %778 = arith.sitofp %777 : vector<2x16xi32> to vector<2x16xf32>
    %cst_246 = arith.constant dense<0.000000e+00> : vector<2x128xf32>
    %779 = tpu.matmul %778, %34, %cst_246 {dimension_numbers = #tpu.dot_dimension_numbers<[1], [0], [0], [1], [0, 0, 1, 1], [], []>} : vector<2x16xf32>, vector<16x128xf32>, vector<2x128xf32> -> vector<2x128xf32>
    %780 = arith.addf %779, %697 : vector<2x128xf32>
    %781 = arith.addf %780, %760 : vector<2x128xf32>
    %cst_247 = arith.constant 5.000000e-01 : f32
    %782 = vector.broadcast %cst_247 : f32 to vector<2x128xf32>
    %783 = arith.mulf %782, %781 : vector<2x128xf32>
    %784 = math.tanh %783 : vector<2x128xf32>
    %cst_248 = arith.constant 5.000000e-01 : f32
    %785 = vector.broadcast %cst_248 : f32 to vector<2x128xf32>
    %786 = arith.mulf %785, %784 : vector<2x128xf32>
    %cst_249 = arith.constant 5.000000e-01 : f32
    %787 = vector.broadcast %cst_249 : f32 to vector<2x128xf32>
    %788 = arith.addf %786, %787 : vector<2x128xf32>
    %789 = vector.extract_strided_slice %788 {offsets = [0, 0], sizes = [2, 32], strides = [1, 1]} : vector<2x128xf32> to vector<2x32xf32>
    %790 = vector.extract_strided_slice %788 {offsets = [0, 32], sizes = [2, 32], strides = [1, 1]} : vector<2x128xf32> to vector<2x32xf32>
    %791 = vector.extract_strided_slice %788 {offsets = [0, 96], sizes = [2, 32], strides = [1, 1]} : vector<2x128xf32> to vector<2x32xf32>
    %792 = vector.extract_strided_slice %781 {offsets = [0, 64], sizes = [2, 32], strides = [1, 1]} : vector<2x128xf32> to vector<2x32xf32>
    %793 = math.tanh %792 : vector<2x32xf32>
    %794 = arith.mulf %790, %756 : vector<2x32xf32>
    %795 = arith.mulf %789, %793 : vector<2x32xf32>
    %796 = arith.addf %794, %795 : vector<2x32xf32>
    %797 = math.tanh %796 : vector<2x32xf32>
    %798 = arith.mulf %791, %797 : vector<2x32xf32>
    %cst_250 = arith.constant dense<0.000000e+00> : vector<2x160xf32>
    %799 = tpu.matmul %798, %31, %cst_250 {dimension_numbers = #tpu.dot_dimension_numbers<[1], [0], [0], [1], [0, 0, 1, 1], [], []>} : vector<2x32xf32>, vector<32x160xf32>, vector<2x160xf32> -> vector<2x160xf32>
    %800 = vector.extract_strided_slice %799 {offsets = [0, 0], sizes = [2, 128], strides = [1, 1]} : vector<2x160xf32> to vector<2x128xf32>
    %801 = vector.extract_strided_slice %799 {offsets = [0, 128], sizes = [2, 32], strides = [1, 1]} : vector<2x160xf32> to vector<2x32xf32>
    %802 = arith.addf %801, %43 : vector<2x32xf32>
    %cst_251 = arith.constant 0.000000e+00 : f32
    %803 = vector.broadcast %cst_251 : f32 to vector<2x32xf32>
    %804 = arith.maximumf %802, %803 : vector<2x32xf32>
    %cst_252 = arith.constant dense<0.000000e+00> : vector<2x16xf32>
    %805 = tpu.matmul %804, %32, %cst_252 {dimension_numbers = #tpu.dot_dimension_numbers<[1], [0], [0], [1], [0, 0, 1, 1], [], []>} : vector<2x32xf32>, vector<32x16xf32>, vector<2x16xf32> -> vector<2x16xf32>
    %806 = arith.addf %805, %46 : vector<2x16xf32>
    %c4_i32_253 = arith.constant 4 : i32
    %807 = arith.muli %c3_i32_211, %c4_i32_253 : i32
    %c2_i32_254 = arith.constant 2 : i32
    %808 = arith.addi %807, %c2_i32_254 : i32
    %809 = arith.index_cast %808 : i32 to index
    %c0_255 = arith.constant 0 : index
    %c0_256 = arith.constant 0 : index
    %810 = vector.load %arg8[%809, %c0_255, %c0_256] : memref<16x2x16xf32, #tpu.memory_space<vmem>>, vector<1x2x16xf32>
    %811 = vector.shape_cast %810 : vector<1x2x16xf32> to vector<2x16xf32>
    %812 = vector.shape_cast %806 : vector<2x16xf32> to vector<1x2x16xf32>
    tpu.vector_store %arg8[%809, %c0_255, %c0_256], %812 {strides = array<i32>} : memref<16x2x16xf32, #tpu.memory_space<vmem>>, vector<1x2x16xf32>,
    %cst_257 = arith.constant dense<0xFF800000> : vector<2xf32>
    %813 = vector.multi_reduction <maximumf>, %806, %cst_257 [1] : vector<2x16xf32> to vector<2xf32>
    %814 = vector.shape_cast %813 : vector<2xf32> to vector<2x1xf32>
    %815 = vector.broadcast %814 : vector<2x1xf32> to vector<2x16xf32>
    %816 = arith.cmpf oeq, %806, %815 : vector<2x16xf32>
    %817 = arith.extui %816 : vector<2x16xi1> to vector<2x16xi32>
    %818 = arith.sitofp %817 : vector<2x16xi32> to vector<2x16xf32>
    %cst_258 = arith.constant dense<0.000000e+00> : vector<2x128xf32>
    %819 = tpu.matmul %818, %34, %cst_258 {dimension_numbers = #tpu.dot_dimension_numbers<[1], [0], [0], [1], [0, 0, 1, 1], [], []>} : vector<2x16xf32>, vector<16x128xf32>, vector<2x128xf32> -> vector<2x128xf32>
    %820 = arith.addf %819, %697 : vector<2x128xf32>
    %821 = arith.addf %820, %800 : vector<2x128xf32>
    %cst_259 = arith.constant 5.000000e-01 : f32
    %822 = vector.broadcast %cst_259 : f32 to vector<2x128xf32>
    %823 = arith.mulf %822, %821 : vector<2x128xf32>
    %824 = math.tanh %823 : vector<2x128xf32>
    %cst_260 = arith.constant 5.000000e-01 : f32
    %825 = vector.broadcast %cst_260 : f32 to vector<2x128xf32>
    %826 = arith.mulf %825, %824 : vector<2x128xf32>
    %cst_261 = arith.constant 5.000000e-01 : f32
    %827 = vector.broadcast %cst_261 : f32 to vector<2x128xf32>
    %828 = arith.addf %826, %827 : vector<2x128xf32>
    %829 = vector.extract_strided_slice %828 {offsets = [0, 0], sizes = [2, 32], strides = [1, 1]} : vector<2x128xf32> to vector<2x32xf32>
    %830 = vector.extract_strided_slice %828 {offsets = [0, 32], sizes = [2, 32], strides = [1, 1]} : vector<2x128xf32> to vector<2x32xf32>
    %831 = vector.extract_strided_slice %828 {offsets = [0, 96], sizes = [2, 32], strides = [1, 1]} : vector<2x128xf32> to vector<2x32xf32>
    %832 = vector.extract_strided_slice %821 {offsets = [0, 64], sizes = [2, 32], strides = [1, 1]} : vector<2x128xf32> to vector<2x32xf32>
    %833 = math.tanh %832 : vector<2x32xf32>
    %834 = arith.mulf %830, %796 : vector<2x32xf32>
    %835 = arith.mulf %829, %833 : vector<2x32xf32>
    %836 = arith.addf %834, %835 : vector<2x32xf32>
    %837 = math.tanh %836 : vector<2x32xf32>
    %838 = arith.mulf %831, %837 : vector<2x32xf32>
    %cst_262 = arith.constant dense<0.000000e+00> : vector<2x160xf32>
    %839 = tpu.matmul %838, %31, %cst_262 {dimension_numbers = #tpu.dot_dimension_numbers<[1], [0], [0], [1], [0, 0, 1, 1], [], []>} : vector<2x32xf32>, vector<32x160xf32>, vector<2x160xf32> -> vector<2x160xf32>
    %840 = vector.extract_strided_slice %839 {offsets = [0, 0], sizes = [2, 128], strides = [1, 1]} : vector<2x160xf32> to vector<2x128xf32>
    %841 = vector.extract_strided_slice %839 {offsets = [0, 128], sizes = [2, 32], strides = [1, 1]} : vector<2x160xf32> to vector<2x32xf32>
    %842 = arith.addf %841, %43 : vector<2x32xf32>
    %cst_263 = arith.constant 0.000000e+00 : f32
    %843 = vector.broadcast %cst_263 : f32 to vector<2x32xf32>
    %844 = arith.maximumf %842, %843 : vector<2x32xf32>
    %cst_264 = arith.constant dense<0.000000e+00> : vector<2x16xf32>
    %845 = tpu.matmul %844, %32, %cst_264 {dimension_numbers = #tpu.dot_dimension_numbers<[1], [0], [0], [1], [0, 0, 1, 1], [], []>} : vector<2x32xf32>, vector<32x16xf32>, vector<2x16xf32> -> vector<2x16xf32>
    %846 = arith.addf %845, %46 : vector<2x16xf32>
    %c4_i32_265 = arith.constant 4 : i32
    %847 = arith.muli %c3_i32_211, %c4_i32_265 : i32
    %c3_i32_266 = arith.constant 3 : i32
    %848 = arith.addi %847, %c3_i32_266 : i32
    %849 = arith.index_cast %848 : i32 to index
    %c0_267 = arith.constant 0 : index
    %c0_268 = arith.constant 0 : index
    %850 = vector.load %arg8[%849, %c0_267, %c0_268] : memref<16x2x16xf32, #tpu.memory_space<vmem>>, vector<1x2x16xf32>
    %851 = vector.shape_cast %850 : vector<1x2x16xf32> to vector<2x16xf32>
    %852 = vector.shape_cast %846 : vector<2x16xf32> to vector<1x2x16xf32>
    tpu.vector_store %arg8[%849, %c0_267, %c0_268], %852 {strides = array<i32>} : memref<16x2x16xf32, #tpu.memory_space<vmem>>, vector<1x2x16xf32>,
    %cst_269 = arith.constant dense<0xFF800000> : vector<2xf32>
    %853 = vector.multi_reduction <maximumf>, %846, %cst_269 [1] : vector<2x16xf32> to vector<2xf32>
    %854 = vector.shape_cast %853 : vector<2xf32> to vector<2x1xf32>
    %855 = vector.broadcast %854 : vector<2x1xf32> to vector<2x16xf32>
    %856 = arith.cmpf oeq, %846, %855 : vector<2x16xf32>
    %857 = arith.extui %856 : vector<2x16xi1> to vector<2x16xi32>
    %858 = arith.sitofp %857 : vector<2x16xi32> to vector<2x16xf32>
    %cst_270 = arith.constant dense<0.000000e+00> : vector<2x128xf32>
    %859 = tpu.matmul %858, %34, %cst_270 {dimension_numbers = #tpu.dot_dimension_numbers<[1], [0], [0], [1], [0, 0, 1, 1], [], []>} : vector<2x16xf32>, vector<16x128xf32>, vector<2x128xf32> -> vector<2x128xf32>
    %860 = arith.addf %859, %697 : vector<2x128xf32>
    %c4_i32_271 = arith.constant 4 : i32
    return
  }
}

</mosaic_0001>

<llo_original>
// kernel: tpu_custom_call.1
$region0: #{tpu_custom_call.1}
  #allocation0 [shape = 'u32[]', space=smem, size = 0x4, offset = 0x4, fixed_abs, tag = 'smem constant byte address 0x4 - core index']
  #allocation1 [shape = 'u32[144,128]{1,0:T(1,128)}', space=vmem, size = 0x12000, scoped, tag = 'internal scratch']
  %s0 = inlined_call_operand.hbm [shape: f32[2,32], index: 0, kind: input, shape index: {}]
  %s1 = inlined_call_operand.hbm [shape: f32[32,1664], index: 1, kind: input, shape index: {}]
  %s2 = inlined_call_operand.hbm [shape: f32[160,256], index: 2, kind: input, shape index: {}]
  %s3 = inlined_call_operand.hbm [shape: f32[1,1536], index: 3, kind: input, shape index: {}]
  %s4 = inlined_call_operand.hbm [shape: f32[9,384], index: 4, kind: input, shape index: {}]
  %s5 = inlined_call_operand.vmem [shape: f32[16,128], index: 5, kind: input, shape index: {}]
  %s6 = inlined_call_operand.hbm [shape: f32[2,19], index: 6, kind: output, shape index: {0}]
  %s7 = inlined_call_operand.hbm [shape: f32[4,2,9], index: 7, kind: output, shape index: {1}]
  %s8 = inlined_call_operand.hbm [shape: f32[16,2,16], index: 8, kind: output, shape index: {2}]
  %9 = xla_tuple %s6, %s7, %s8
  %s10 = sld [smem:[#allocation0]]
  $region70: #{tpu_custom_call.1} parent=0
    _
  %s12 = ssub.s32 1, %s10
  %s13 = scalar_select 0, %s12, %s10
  $region1: #{tpu_custom_call.1} parent=0
    #allocation2 [shape = 'u8[1024]{0}', space=vmem, size = 0x400, scoped, tag = 'input window, operand 0, single buffered']
    #allocation3 [shape = 's32[1]{0}', space=sflag, size = 0x4, scoped, tag = 'scoped memory for tpu_custom_call.1']
    #allocation4 [shape = 's32[1]{0}', space=sflag, size = 0x4, scoped, tag = 'scoped memory for tpu_custom_call.1']
    #allocation5 [shape = 'u8[212992]{0}', space=vmem, size = 0x34000, scoped, tag = 'input window, operand 1, single buffered']
    #allocation6 [shape = 's32[1]{0}', space=sflag, size = 0x4, scoped, tag = 'scoped memory for tpu_custom_call.1']
    #allocation7 [shape = 'u8[163840]{0}', space=vmem, size = 0x28000, scoped, tag = 'input window, operand 2, single buffered']
    #allocation8 [shape = 'u8[6144]{0}', space=vmem, size = 0x1800, scoped, tag = 'input window, operand 3, single buffered']
    #allocation9 [shape = 's32[1]{0}', space=sflag, size = 0x4, scoped, tag = 'scoped memory for tpu_custom_call.1']
    #allocation10 [shape = 'u8[24576]{0}', space=vmem, size = 0x6000, scoped, tag = 'input window, operand 4, single buffered']
    #allocation11 [shape = 'u8[1024]{0}', space=vmem, size = 0x400, scoped, tag = 'output window, operand 0, single buffered']
    #allocation12 [shape = 'u8[4096]{0}', space=vmem, size = 0x1000, scoped, tag = 'output window, operand 1, single buffered']
    #allocation13 [shape = 's32[1]{0}', space=sflag, size = 0x4, scoped, tag = 'scoped memory for tpu_custom_call.1']
    #allocation14 [shape = 'u8[16384]{0}', space=vmem, size = 0x4000, scoped, tag = 'output window, operand 2, single buffered']
    %14 = vsyncpa [#allocation3], 0
    %15 = vsyncpa [#allocation6], 0
    %16 = vsyncpa [#allocation9], 0
    %17 = vsyncpa [#allocation4], 0
    %18 = vsyncpa [#allocation13], 0
    // Predicated region
    $region2: #{tpu_custom_call.1} parent=1 // pred_check
      _
    $region3: #{tpu_custom_call.1} parent=1 // pred_check_branch
      %20 = sbr.rel (0) target = $region5
    $region4: #{tpu_custom_call.1} parent=1 // pred_region
      %s22 = ssub.s32 32, 32
      %23 = vsyncadd [#allocation3], %s22
      %s25 = sshll.u32 [#allocation2], 4
      %s26 = int_to_ptr.vmem [resolvable:$true] %s25
      %28 = dma.hbm_to_vmem [thread:$0]  %s0, 32, %s26, [#allocation3]
    $region5: #{tpu_custom_call.1} parent=1 // pred_fallthru
      _
    // Predicated region
    $region6: #{tpu_custom_call.1} parent=1 // pred_check
      _
    $region7: #{tpu_custom_call.1} parent=1 // pred_check_branch
      %30 = sbr.rel (0) target = $region9
    $region8: #{tpu_custom_call.1} parent=1 // pred_region
      %s32 = ssub.s32 6656, 6656
      %33 = vsyncadd [#allocation6], %s32
      %s34 = sshll.u32 [#allocation5], 4
      %s35 = int_to_ptr.vmem [resolvable:$true] %s34
      %40 = dma.hbm_to_vmem [thread:$0]  %s1, 6656, %s35, [#allocation6], 1664, 1664, 104
    $region9: #{tpu_custom_call.1} parent=1 // pred_fallthru
      _
    // Predicated region
    $region10: #{tpu_custom_call.1} parent=1 // pred_check
      _
    $region11: #{tpu_custom_call.1} parent=1 // pred_check_branch
      %42 = sbr.rel (0) target = $region13
    $region12: #{tpu_custom_call.1} parent=1 // pred_region
      %s44 = ssub.s32 5120, 5120
      %45 = vsyncadd [#allocation6], %s44
      %s46 = sshll.u32 [#allocation7], 4
      %s47 = int_to_ptr.vmem [resolvable:$true] %s46
      %52 = dma.hbm_to_vmem [thread:$0]  %s2, 5120, %s47, [#allocation6], 256, 256, 16
    $region13: #{tpu_custom_call.1} parent=1 // pred_fallthru
      _
    // Predicated region
    $region14: #{tpu_custom_call.1} parent=1 // pred_check
      _
    $region15: #{tpu_custom_call.1} parent=1 // pred_check_branch
      %54 = sbr.rel (0) target = $region17
    $region16: #{tpu_custom_call.1} parent=1 // pred_region
      %s56 = ssub.s32 192, 192
      %57 = vsyncadd [#allocation9], %s56
      %s59 = sshll.u32 [#allocation8], 4
      %s60 = int_to_ptr.vmem [resolvable:$true] %s59
      %62 = dma.hbm_to_vmem [thread:$0]  %s3, 192, %s60, [#allocation9]
    $region17: #{tpu_custom_call.1} parent=1 // pred_fallthru
      _
    // Predicated region
    $region18: #{tpu_custom_call.1} parent=1 // pred_check
      _
    $region19: #{tpu_custom_call.1} parent=1 // pred_check_branch
      %64 = sbr.rel (0) target = $region21
    $region20: #{tpu_custom_call.1} parent=1 // pred_region
      %s66 = ssub.s32 768, 768
      %67 = vsyncadd [#allocation9], %s66
      %s68 = sshll.u32 [#allocation10], 4
      %s69 = int_to_ptr.vmem [resolvable:$true] %s68
      %74 = dma.hbm_to_vmem [thread:$0]  %s4, 768, %s69, [#allocation9], 384, 384, 24
    $region21: #{tpu_custom_call.1} parent=1 // pred_fallthru
      _
    // Predicated region
    $region22: #{tpu_custom_call.1} parent=1 // pred_check
      _
    $region23: #{tpu_custom_call.1} parent=1 // pred_check_branch
      %76 = sbr.rel (0) target = $region25
    $region24: #{tpu_custom_call.1} parent=1 // pred_region
      _
    $region25: #{tpu_custom_call.1} parent=1 // pred_fallthru
      _
    // Predicated region
    $region26: #{tpu_custom_call.1} parent=1 // pred_check
      _
    $region27: #{tpu_custom_call.1} parent=1 // pred_check_branch
      %78 = sbr.rel (0) target = $region29
    $region28: #{tpu_custom_call.1} parent=1 // pred_region
      %79 = dma.done [#allocation3], 32
    $region29: #{tpu_custom_call.1} parent=1 // pred_fallthru
      _
    // Predicated region
    $region30: #{tpu_custom_call.1} parent=1 // pred_check
      _
    $region31: #{tpu_custom_call.1} parent=1 // pred_check_branch
      %81 = sbr.rel (0) target = $region33
    $region32: #{tpu_custom_call.1} parent=1 // pred_region
      %82 = dma.done [#allocation6], 6656
    $region33: #{tpu_custom_call.1} parent=1 // pred_fallthru
      _
    // Predicated region
    $region34: #{tpu_custom_call.1} parent=1 // pred_check
      _
    $region35: #{tpu_custom_call.1} parent=1 // pred_check_branch
      %84 = sbr.rel (0) target = $region37
    $region36: #{tpu_custom_call.1} parent=1 // pred_region
      %85 = dma.done [#allocation6], 5120
    $region37: #{tpu_custom_call.1} parent=1 // pred_fallthru
      _
    // Predicated region
    $region38: #{tpu_custom_call.1} parent=1 // pred_check
      _
    $region39: #{tpu_custom_call.1} parent=1 // pred_check_branch
      %87 = sbr.rel (0) target = $region41
    $region40: #{tpu_custom_call.1} parent=1 // pred_region
      %88 = dma.done [#allocation9], 192
    $region41: #{tpu_custom_call.1} parent=1 // pred_fallthru
      _
    // Predicated region
    $region42: #{tpu_custom_call.1} parent=1 // pred_check
      _
    $region43: #{tpu_custom_call.1} parent=1 // pred_check_branch
      %90 = sbr.rel (0) target = $region45
    $region44: #{tpu_custom_call.1} parent=1 // pred_region
      %91 = dma.done [#allocation9], 768
    $region45: #{tpu_custom_call.1} parent=1 // pred_fallthru
      _
    %v92 = vld [vmem:[#allocation2] sm:$0x3]
    %v93 = vld [vmem:[#allocation5] sm:$0xff]
    %v94 = vld [vmem:[#allocation5 + $0x8] sm:$0xff]
    %v95 = vld [vmem:[#allocation5 + $0x68] sm:$0xff]
    %v96 = vld [vmem:[#allocation5 + $0x70] sm:$0xff]
    %v97 = vld [vmem:[#allocation5 + $0xd0] sm:$0xff]
    %v98 = vld [vmem:[#allocation5 + $0xd8] sm:$0xff]
    %v99 = vld [vmem:[#allocation5 + $0x138] sm:$0xff]
    %v100 = vld [vmem:[#allocation5 + $0x140] sm:$0xff]
    %v101 = vld [vmem:[#allocation8] sm:$0x3]
    %v103 = vlaneseq
    %v104 = vshrl.u32 %v103, 7
    %v105 = vsub.s32 0, %v104
    %v106 = vrot.slane %v101, %v105
    %v107 = vlaneseq
    %v108 = vshrl.u32 %v107, 7
    %v109 = vsub.s32 1, %v108
    %v110 = vrot.slane %v101, %v109
    %vm113 = vcmask 261120
    %v115 = vsel %vm113, %v92, 0
    %117 = vmatprep.subr.mxu0 %v94
    %118 = vmatpush1.msra.mxu0 %v93
    %119 = vmatprep.subr.mxu0 %v96
    %120 = vmatpush1.msra.mxu0 %v95
    %121 = vmatprep.subr.mxu0 %v98
    %122 = vmatpush1.msra.mxu0 %v97
    %123 = vmatprep.subr.mxu0 %v100
    %124 = vmatpush1.msra.mxu0 %v99
    %125 = vmatprep.subr.mxu0 0.0
    %126 = vmatpush1.msra.mxu0 0.0
    %127 = vmatprep.subr.mxu0 0.0
    %128 = vmatpush1.msra.mxu0 0.0
    %129 = vmatprep.subr.mxu0 0.0
    %130 = vmatpush1.msra.mxu0 0.0
    %131 = vmatprep.subr.mxu0 0.0
    %132 = vmatpush1.msra.mxu0 0.0
    %133 = vmatprep.subr.mxu0 0.0
    %134 = vmatpush1.msra.mxu0 0.0
    %135 = vmatprep.subr.mxu0 0.0
    %136 = vmatpush1.msra.mxu0 0.0
    %137 = vmatprep.subr.mxu0 0.0
    %138 = vmatpush1.msra.mxu0 0.0
    %139 = vmatprep.subr.mxu0 0.0
    %140 = vmatpush1.msra.mxu0 0.0
    %141 = vmatprep.subr.mxu0 0.0
    %142 = vmatpush1.msra.mxu0 0.0
    %143 = vmatprep.subr.mxu0 0.0
    %144 = vmatpush1.msra.mxu0 0.0
    %145 = vmatprep.subr.mxu0 0.0
    %146 = vmatpush1.msra.mxu0 0.0
    %147 = vmatprep.subr.mxu0 0.0
    %148 = vmatpush1.msra.mxu0 0.0
    %149 = vmatprep.subr.mxu0 0.0
    %150 = vmatpush1.msra.mxu0 0.0
    %151 = vmatprep.subr.mxu0 0.0
    %152 = vmatpush1.msra.mxu0 0.0
    %153 = vmatprep.subr.mxu0 0.0
    %154 = vmatpush1.msra.mxu0 0.0
    %155 = vmatprep.subr.mxu0 0.0
    %156 = vmatpush1.msra.mxu0 0.0
    %157 = vmatprep.subr.mxu0 0.0
    %158 = vmatpush1.msra.mxu0 0.0
    %159 = vmatprep.subr.mxu0 0.0
    %160 = vmatpush1.msra.mxu0 0.0
    %161 = vmatprep.subr.mxu0 0.0
    %162 = vmatpush1.msra.mxu0 0.0
    %163 = vmatprep.subr.mxu0 0.0
    %164 = vmatpush1.msra.mxu0 0.0
    %165 = vmatprep.subr.mxu0 0.0
    %166 = vmatpush1.msra.mxu0 0.0
    %167 = vmatprep.subr.mxu0 0.0
    %168 = vmatpush1.msra.mxu0 0.0
    %169 = vmatprep.subr.mxu0 0.0
    %170 = vmatpush1.msra.mxu0 0.0
    %171 = vmatprep.subr.mxu0 0.0
    %172 = vmatpush1.msra.mxu0 0.0
    %173 = vmatprep.subr.mxu0 0.0
    %174 = vmatpush1.msra.mxu0 0.0
    %175 = vmatprep.subr.mxu0 0.0
    %176 = vmatpush1.msra.mxu0 0.0
    %177 = vmatprep.subr.mxu0 0.0
    %178 = vmatpush1.msra.mxu0 0.0
    %179 = vmatprep.subr.mxu0 0.0
    %180 = vmatpush1.msra.mxu0 0.0
    %181 = vmatprep.mubr.f32.mxu0 0.0
    %182 = vmatmul.mubr.f32.gmra.mrb[0].mxu0 %v115
    %v183 = vpop.f32.mrb[0].mxu0
    %v184 = vadd.f32 %v106, %v183
    %v185 = vpop.f32.mrb[0].mxu0
    %v186 = vadd.f32 %v110, %v185
    %187 = vdwg.mxu0
    %v188 = vmax.f32 %v184, 0.0
    %v189 = vmax.f32 %v186, 0.0
    %v190 = vld [vmem:[#allocation7] sm:$0xff]
    %v191 = vld [vmem:[#allocation7 + $0x8] sm:$0xff]
    %v192 = vld [vmem:[#allocation7 + $0x10] sm:$0xff]
    %v193 = vld [vmem:[#allocation7 + $0x18] sm:$0xff]
    %v194 = vld [vmem:[#allocation7 + $0x20] sm:$0xff]
    %v195 = vld [vmem:[#allocation7 + $0x28] sm:$0xff]
    %v196 = vld [vmem:[#allocation7 + $0x30] sm:$0xff]
    %v197 = vld [vmem:[#allocation7 + $0x38] sm:$0xff]
    %v198 = vld [vmem:[#allocation7 + $0x40] sm:$0xff]
    %v199 = vld [vmem:[#allocation7 + $0x48] sm:$0xff]
    %v200 = vld [vmem:[#allocation7 + $0x50] sm:$0xff]
    %v201 = vld [vmem:[#allocation7 + $0x58] sm:$0xff]
    %v202 = vld [vmem:[#allocation7 + $0x60] sm:$0xff]
    %v203 = vld [vmem:[#allocation7 + $0x68] sm:$0xff]
    %v204 = vld [vmem:[#allocation7 + $0x70] sm:$0xff]
    %v205 = vld [vmem:[#allocation7 + $0x78] sm:$0xff]
    %v206 = vld [vmem:[#allocation7 + $0x80] sm:$0xff]
    %v207 = vld [vmem:[#allocation7 + $0x88] sm:$0xff]
    %v208 = vld [vmem:[#allocation7 + $0x90] sm:$0xff]
    %v209 = vld [vmem:[#allocation7 + $0x98] sm:$0xff]
    %v210 = vld [vmem:[#allocation7 + $0xa0] sm:$0xff]
    %v211 = vld [vmem:[#allocation7 + $0xa8] sm:$0xff]
    %v212 = vld [vmem:[#allocation7 + $0xb0] sm:$0xff]
    %v213 = vld [vmem:[#allocation7 + $0xb8] sm:$0xff]
    %v214 = vld [vmem:[#allocation7 + $0xc0] sm:$0xff]
    %v215 = vld [vmem:[#allocation7 + $0xc8] sm:$0xff]
    %v216 = vld [vmem:[#allocation7 + $0xd0] sm:$0xff]
    %v217 = vld [vmem:[#allocation7 + $0xd8] sm:$0xff]
    %v218 = vld [vmem:[#allocation7 + $0xe0] sm:$0xff]
    %v219 = vld [vmem:[#allocation7 + $0xe8] sm:$0xff]
    %v220 = vld [vmem:[#allocation7 + $0xf0] sm:$0xff]
    %v221 = vld [vmem:[#allocation7 + $0xf8] sm:$0xff]
    %v222 = vld [vmem:[#allocation7 + $0x100] sm:$0xff]
    %v223 = vld [vmem:[#allocation7 + $0x108] sm:$0xff]
    %v224 = vld [vmem:[#allocation7 + $0x110] sm:$0xff]
    %v225 = vld [vmem:[#allocation7 + $0x118] sm:$0xff]
    %v226 = vld [vmem:[#allocation7 + $0x120] sm:$0xff]
    %v227 = vld [vmem:[#allocation7 + $0x128] sm:$0xff]
    %v228 = vld [vmem:[#allocation7 + $0x130] sm:$0xff]
    %v229 = vld [vmem:[#allocation7 + $0x138] sm:$0xff]
    %v231 = vsel %vm113, %v189, 0
    %233 = vmatprep.subr.mxu0 %v191
    %234 = vmatpush1.msra.mxu0 %v190
    %235 = vmatprep.subr.mxu0 %v193
    %236 = vmatpush1.msra.mxu0 %v192
    %237 = vmatprep.subr.mxu0 %v195
    %238 = vmatpush1.msra.mxu0 %v194
    %239 = vmatprep.subr.mxu0 %v197
    %240 = vmatpush1.msra.mxu0 %v196
    %241 = vmatprep.subr.mxu0 %v199
    %242 = vmatpush1.msra.mxu0 %v198
    %243 = vmatprep.subr.mxu0 %v201
    %244 = vmatpush1.msra.mxu0 %v200
    %245 = vmatprep.subr.mxu0 %v203
    %246 = vmatpush1.msra.mxu0 %v202
    %247 = vmatprep.subr.mxu0 %v205
    %248 = vmatpush1.msra.mxu0 %v204
    %249 = vmatprep.subr.mxu0 %v207
    %250 = vmatpush1.msra.mxu0 %v206
    %251 = vmatprep.subr.mxu0 %v209
    %252 = vmatpush1.msra.mxu0 %v208
    %253 = vmatprep.subr.mxu0 %v211
    %254 = vmatpush1.msra.mxu0 %v210
    %255 = vmatprep.subr.mxu0 %v213
    %256 = vmatpush1.msra.mxu0 %v212
    %257 = vmatprep.subr.mxu0 %v215
    %258 = vmatpush1.msra.mxu0 %v214
    %259 = vmatprep.subr.mxu0 %v217
    %260 = vmatpush1.msra.mxu0 %v216
    %261 = vmatprep.subr.mxu0 %v219
    %262 = vmatpush1.msra.mxu0 %v218
    %263 = vmatprep.subr.mxu0 %v221
    %264 = vmatpush1.msra.mxu0 %v220
    %265 = vmatprep.subr.mxu0 %v223
    %266 = vmatpush1.msra.mxu0 %v222
    %267 = vmatprep.subr.mxu0 %v225
    %268 = vmatpush1.msra.mxu0 %v224
    %269 = vmatprep.subr.mxu0 %v227
    %270 = vmatpush1.msra.mxu0 %v226
    %271 = vmatprep.subr.mxu0 %v229
    %272 = vmatpush1.msra.mxu0 %v228
    %273 = vmatprep.subr.mxu0 0.0
    %274 = vmatpush1.msra.mxu0 0.0
    %275 = vmatprep.subr.mxu0 0.0
    %276 = vmatpush1.msra.mxu0 0.0
    %277 = vmatprep.subr.mxu0 0.0
    %278 = vmatpush1.msra.mxu0 0.0
    %279 = vmatprep.subr.mxu0 0.0
    %280 = vmatpush1.msra.mxu0 0.0
    %281 = vmatprep.subr.mxu0 0.0
    %282 = vmatpush1.msra.mxu0 0.0
    %283 = vmatprep.subr.mxu0 0.0
    %284 = vmatpush1.msra.mxu0 0.0
    %285 = vmatprep.subr.mxu0 0.0
    %286 = vmatpush1.msra.mxu0 0.0
    %287 = vmatprep.subr.mxu0 0.0
    %288 = vmatpush1.msra.mxu0 0.0
    %289 = vmatprep.subr.mxu0 0.0
    %290 = vmatpush1.msra.mxu0 0.0
    %291 = vmatprep.subr.mxu0 0.0
    %292 = vmatpush1.msra.mxu0 0.0
    %293 = vmatprep.subr.mxu0 0.0
    %294 = vmatpush1.msra.mxu0 0.0
    %295 = vmatprep.subr.mxu0 0.0
    %296 = vmatpush1.msra.mxu0 0.0
    %297 = vmatprep.mubr.f32.mxu0 %v231
    %298 = vmatmul.mubr.f32.gmra.mrb[0].mxu0 %v188
    %v299 = vpop.f32.mrb[0].mxu0
    %v300 = vadd.f32 0.0, %v299
    %v301 = vpop.f32.mrb[0].mxu0
    %v302 = vadd.f32 0.0, %v301
    %303 = vdwg.mxu0
    %v304 = vld [vmem:[#allocation8 + $0x2] sm:$0x1]
    %v306 = vlaneseq
    %v307 = vshrl.u32 %v306, 7
    %v308 = vsub.s32 0, %v307
    %v309 = vrot.slane %v304, %v308
    %v311 = vadd.f32 %v300, %v309
    %vm312 = vcmask 148480
    %313 = vst.msk [vmem:[#allocation11] sm:$0x3] %vm312, %v311
    %v314 = vld [vmem:[#allocation5 + $0x10] sm:$0xff]
    %v315 = vld [vmem:[#allocation5 + $0x78] sm:$0xff]
    %v316 = vld [vmem:[#allocation5 + $0xe0] sm:$0xff]
    %v317 = vld [vmem:[#allocation5 + $0x148] sm:$0xff]
    %318 = vmatprep.subr.mxu0 0.0
    %319 = vmatpush1.msra.mxu0 %v314
    %320 = vmatprep.subr.mxu0 0.0
    %321 = vmatpush1.msra.mxu0 %v315
    %322 = vmatprep.subr.mxu0 0.0
    %323 = vmatpush1.msra.mxu0 %v316
    %324 = vmatprep.subr.mxu0 0.0
    %325 = vmatpush1.msra.mxu0 %v317
    %326 = vmatprep.subr.mxu0 0.0
    %327 = vmatpush1.msra.mxu0 0.0
    %328 = vmatprep.subr.mxu0 0.0
    %329 = vmatpush1.msra.mxu0 0.0
    %330 = vmatprep.subr.mxu0 0.0
    %331 = vmatpush1.msra.mxu0 0.0
    %332 = vmatprep.subr.mxu0 0.0
    %333 = vmatpush1.msra.mxu0 0.0
    %334 = vmatprep.subr.mxu0 0.0
    %335 = vmatpush1.msra.mxu0 0.0
    %336 = vmatprep.subr.mxu0 0.0
    %337 = vmatpush1.msra.mxu0 0.0
    %338 = vmatprep.subr.mxu0 0.0
    %339 = vmatpush1.msra.mxu0 0.0
    %340 = vmatprep.subr.mxu0 0.0
    %341 = vmatpush1.msra.mxu0 0.0
    %342 = vmatprep.subr.mxu0 0.0
    %343 = vmatpush1.msra.mxu0 0.0
    %344 = vmatprep.subr.mxu0 0.0
    %345 = vmatpush1.msra.mxu0 0.0
    %346 = vmatprep.subr.mxu0 0.0
    %347 = vmatpush1.msra.mxu0 0.0
    %348 = vmatprep.subr.mxu0 0.0
    %349 = vmatpush1.msra.mxu0 0.0
    %350 = vmatprep.subr.mxu0 0.0
    %351 = vmatpush1.msra.mxu0 0.0
    %352 = vmatprep.subr.mxu0 0.0
    %353 = vmatpush1.msra.mxu0 0.0
    %354 = vmatprep.subr.mxu0 0.0
    %355 = vmatpush1.msra.mxu0 0.0
    %356 = vmatprep.subr.mxu0 0.0
    %357 = vmatpush1.msra.mxu0 0.0
    %358 = vmatprep.subr.mxu0 0.0
    %359 = vmatpush1.msra.mxu0 0.0
    %360 = vmatprep.subr.mxu0 0.0
    %361 = vmatpush1.msra.mxu0 0.0
    %362 = vmatprep.subr.mxu0 0.0
    %363 = vmatpush1.msra.mxu0 0.0
    %364 = vmatprep.subr.mxu0 0.0
    %365 = vmatpush1.msra.mxu0 0.0
    %366 = vmatprep.subr.mxu0 0.0
    %367 = vmatpush1.msra.mxu0 0.0
    %368 = vmatprep.subr.mxu0 0.0
    %369 = vmatpush1.msra.mxu0 0.0
    %370 = vmatprep.subr.mxu0 0.0
    %371 = vmatpush1.msra.mxu0 0.0
    %372 = vmatprep.subr.mxu0 0.0
    %373 = vmatpush1.msra.mxu0 0.0
    %374 = vmatprep.subr.mxu0 0.0
    %375 = vmatpush1.msra.mxu0 0.0
    %376 = vmatprep.subr.mxu0 0.0
    %377 = vmatpush1.msra.mxu0 0.0
    %378 = vmatprep.subr.mxu0 0.0
    %379 = vmatpush1.msra.mxu0 0.0
    %380 = vmatprep.subr.mxu0 0.0
    %381 = vmatpush1.msra.mxu0 0.0
    %382 = vmatprep.mubr.f32.mxu0 0.0
    %383 = vmatmul.mubr.f32.gmra.mrb[0].mxu0 %v115
    %v384 = vpop.f32.mrb[0].mxu0
    %v385 = vadd.f32 %v302, %v384
    %v386 = vpop.f32.mrb[0].mxu0
    %387 = vdwg.mxu0
    %v388 = vld [vmem:[#allocation8 + $0x3] sm:$0x1]
    %v390 = vlaneseq
    %v391 = vshrl.u32 %v390, 7
    %v392 = vsub.s32 0, %v391
    %v393 = vrot.slane %v388, %v392
    %v395 = vadd.f32 %v385, %v393
    %v396 = vld [vmem:[#allocation5 + $0x18] sm:$0xff]
    %v397 = vld [vmem:[#allocation5 + $0x20] sm:$0xff]
    %v398 = vld [vmem:[#allocation5 + $0x28] sm:$0xff]
    %v399 = vld [vmem:[#allocation5 + $0x30] sm:$0xff]
    %v400 = vld [vmem:[#allocation5 + $0x80] sm:$0xff]
    %v401 = vld [vmem:[#allocation5 + $0x88] sm:$0xff]
    %v402 = vld [vmem:[#allocation5 + $0x90] sm:$0xff]
    %v403 = vld [vmem:[#allocation5 + $0x98] sm:$0xff]
    %v404 = vld [vmem:[#allocation5 + $0xe8] sm:$0xff]
    %v405 = vld [vmem:[#allocation5 + $0xf0] sm:$0xff]
    %v406 = vld [vmem:[#allocation5 + $0xf8] sm:$0xff]
    %v407 = vld [vmem:[#allocation5 + $0x100] sm:$0xff]
    %v408 = vld [vmem:[#allocation5 + $0x150] sm:$0xff]
    %v409 = vld [vmem:[#allocation5 + $0x158] sm:$0xff]
    %v410 = vld [vmem:[#allocation5 + $0x160] sm:$0xff]
    %v411 = vld [vmem:[#allocation5 + $0x168] sm:$0xff]
    %v412 = vld [vmem:[#allocation8 + $0x4] sm:$0xf]
    %v414 = vlaneseq
    %v415 = vshrl.u32 %v414, 7
    %v416 = vsub.s32 0, %v415
    %v417 = vrot.slane %v412, %v416
    %v418 = vlaneseq
    %v419 = vshrl.u32 %v418, 7
    %v420 = vsub.s32 1, %v419
    %v421 = vrot.slane %v412, %v420
    %v422 = vlaneseq
    %v423 = vshrl.u32 %v422, 7
    %v424 = vsub.s32 2, %v423
    %v425 = vrot.slane %v412, %v424
    %v426 = vlaneseq
    %v427 = vshrl.u32 %v426, 7
    %v428 = vsub.s32 3, %v427
    %v429 = vrot.slane %v412, %v428
    %v435 = vsel %vm113, %v395, 0
    %437 = vmatprep.subr.mxu0 %v397
    %438 = vmatpush1.msra.mxu0 %v396
    %439 = vmatprep.subr.mxu0 %v401
    %440 = vmatpush1.msra.mxu0 %v400
    %441 = vmatprep.subr.mxu0 %v405
    %442 = vmatpush1.msra.mxu0 %v404
    %443 = vmatprep.subr.mxu0 %v409
    %444 = vmatpush1.msra.mxu0 %v408
    %445 = vmatprep.subr.mxu0 0.0
    %446 = vmatpush1.msra.mxu0 0.0
    %447 = vmatprep.subr.mxu0 0.0
    %448 = vmatpush1.msra.mxu0 0.0
    %449 = vmatprep.subr.mxu0 0.0
    %450 = vmatpush1.msra.mxu0 0.0
    %451 = vmatprep.subr.mxu0 0.0
    %452 = vmatpush1.msra.mxu0 0.0
    %453 = vmatprep.subr.mxu0 0.0
    %454 = vmatpush1.msra.mxu0 0.0
    %455 = vmatprep.subr.mxu0 0.0
    %456 = vmatpush1.msra.mxu0 0.0
    %457 = vmatprep.subr.mxu0 0.0
    %458 = vmatpush1.msra.mxu0 0.0
    %459 = vmatprep.subr.mxu0 0.0
    %460 = vmatpush1.msra.mxu0 0.0
    %461 = vmatprep.subr.mxu0 0.0
    %462 = vmatpush1.msra.mxu0 0.0
    %463 = vmatprep.subr.mxu0 0.0
    %464 = vmatpush1.msra.mxu0 0.0
    %465 = vmatprep.subr.mxu0 0.0
    %466 = vmatpush1.msra.mxu0 0.0
    %467 = vmatprep.subr.mxu0 0.0
    %468 = vmatpush1.msra.mxu0 0.0
    %469 = vmatprep.subr.mxu0 0.0
    %470 = vmatpush1.msra.mxu0 0.0
    %471 = vmatprep.subr.mxu0 0.0
    %472 = vmatpush1.msra.mxu0 0.0
    %473 = vmatprep.subr.mxu0 0.0
    %474 = vmatpush1.msra.mxu0 0.0
    %475 = vmatprep.subr.mxu0 0.0
    %476 = vmatpush1.msra.mxu0 0.0
    %477 = vmatprep.subr.mxu0 0.0
    %478 = vmatpush1.msra.mxu0 0.0
    %479 = vmatprep.subr.mxu0 0.0
    %480 = vmatpush1.msra.mxu0 0.0
    %481 = vmatprep.subr.mxu0 0.0
    %482 = vmatpush1.msra.mxu0 0.0
    %483 = vmatprep.subr.mxu0 0.0
    %484 = vmatpush1.msra.mxu0 0.0
    %485 = vmatprep.subr.mxu0 0.0
    %486 = vmatpush1.msra.mxu0 0.0
    %487 = vmatprep.subr.mxu0 0.0
    %488 = vmatpush1.msra.mxu0 0.0
    %489 = vmatprep.subr.mxu0 0.0
    %490 = vmatpush1.msra.mxu0 0.0
    %491 = vmatprep.subr.mxu0 0.0
    %492 = vmatpush1.msra.mxu0 0.0
    %493 = vmatprep.subr.mxu0 0.0
    %494 = vmatpush1.msra.mxu0 0.0
    %495 = vmatprep.subr.mxu0 0.0
    %496 = vmatpush1.msra.mxu0 0.0
    %497 = vmatprep.subr.mxu0 0.0
    %498 = vmatpush1.msra.mxu0 0.0
    %499 = vmatprep.subr.mxu0 0.0
    %500 = vmatpush1.msra.mxu0 0.0
    %501 = vmatprep.mubr.f32.mxu0 0.0
    %502 = vmatmul.mubr.f32.gmra.mrb[0].mxu0 %v435
    %v503 = vpop.f32.mrb[0].mxu0
    %v504 = vadd.f32 %v417, %v503
    %v505 = vpop.f32.mrb[0].mxu0
    %v506 = vadd.f32 %v421, %v505
    %507 = vdwg.mxu0
    %508 = vmatprep.subr.mxu0 %v399
    %509 = vmatpush1.msra.mxu0 %v398
    %510 = vmatprep.subr.mxu0 %v403
    %511 = vmatpush1.msra.mxu0 %v402
    %512 = vmatprep.subr.mxu0 %v407
    %513 = vmatpush1.msra.mxu0 %v406
    %514 = vmatprep.subr.mxu0 %v411
    %515 = vmatpush1.msra.mxu0 %v410
    %516 = vmatprep.subr.mxu0 0.0
    %517 = vmatpush1.msra.mxu0 0.0
    %518 = vmatprep.subr.mxu0 0.0
    %519 = vmatpush1.msra.mxu0 0.0
    %520 = vmatprep.subr.mxu0 0.0
    %521 = vmatpush1.msra.mxu0 0.0
    %522 = vmatprep.subr.mxu0 0.0
    %523 = vmatpush1.msra.mxu0 0.0
    %524 = vmatprep.subr.mxu0 0.0
    %525 = vmatpush1.msra.mxu0 0.0
    %526 = vmatprep.subr.mxu0 0.0
    %527 = vmatpush1.msra.mxu0 0.0
    %528 = vmatprep.subr.mxu0 0.0
    %529 = vmatpush1.msra.mxu0 0.0
    %530 = vmatprep.subr.mxu0 0.0
    %531 = vmatpush1.msra.mxu0 0.0
    %532 = vmatprep.subr.mxu0 0.0
    %533 = vmatpush1.msra.mxu0 0.0
    %534 = vmatprep.subr.mxu0 0.0
    %535 = vmatpush1.msra.mxu0 0.0
    %536 = vmatprep.subr.mxu0 0.0
    %537 = vmatpush1.msra.mxu0 0.0
    %538 = vmatprep.subr.mxu0 0.0
    %539 = vmatpush1.msra.mxu0 0.0
    %540 = vmatprep.subr.mxu0 0.0
    %541 = vmatpush1.msra.mxu0 0.0
    %542 = vmatprep.subr.mxu0 0.0
    %543 = vmatpush1.msra.mxu0 0.0
    %544 = vmatprep.subr.mxu0 0.0
    %545 = vmatpush1.msra.mxu0 0.0
    %546 = vmatprep.subr.mxu0 0.0
    %547 = vmatpush1.msra.mxu0 0.0
    %548 = vmatprep.subr.mxu0 0.0
    %549 = vmatpush1.msra.mxu0 0.0
    %550 = vmatprep.subr.mxu0 0.0
    %551 = vmatpush1.msra.mxu0 0.0
    %552 = vmatprep.subr.mxu0 0.0
    %553 = vmatpush1.msra.mxu0 0.0
    %554 = vmatprep.subr.mxu0 0.0
    %555 = vmatpush1.msra.mxu0 0.0
    %556 = vmatprep.subr.mxu0 0.0
    %557 = vmatpush1.msra.mxu0 0.0
    %558 = vmatprep.subr.mxu0 0.0
    %559 = vmatpush1.msra.mxu0 0.0
    %560 = vmatprep.subr.mxu0 0.0
    %561 = vmatpush1.msra.mxu0 0.0
    %562 = vmatprep.subr.mxu0 0.0
    %563 = vmatpush1.msra.mxu0 0.0
    %564 = vmatprep.subr.mxu0 0.0
    %565 = vmatpush1.msra.mxu0 0.0
    %566 = vmatprep.subr.mxu0 0.0
    %567 = vmatpush1.msra.mxu0 0.0
    %568 = vmatprep.subr.mxu0 0.0
    %569 = vmatpush1.msra.mxu0 0.0
    %570 = vmatprep.subr.mxu0 0.0
    %571 = vmatpush1.msra.mxu0 0.0
    %572 = vmatprep.mubr.f32.mxu0 0.0
    %573 = vmatmul.mubr.f32.gmra.mrb[0].mxu0 %v435
    %v574 = vpop.f32.mrb[0].mxu0
    %v575 = vadd.f32 %v425, %v574
    %v576 = vpop.f32.mrb[0].mxu0
    %v577 = vadd.f32 %v429, %v576
    %578 = vdwg.mxu0
    %v579 = vld [vmem:[#allocation5 + $0x38] sm:$0xff]
    %v580 = vld [vmem:[#allocation5 + $0x40] sm:$0xff]
    %v581 = vld [vmem:[#allocation5 + $0xa0] sm:$0xff]
    %v582 = vld [vmem:[#allocation5 + $0xa8] sm:$0xff]
    %v583 = vld [vmem:[#allocation5 + $0x108] sm:$0xff]
    %v584 = vld [vmem:[#allocation5 + $0x110] sm:$0xff]
    %v585 = vld [vmem:[#allocation5 + $0x170] sm:$0xff]
    %v586 = vld [vmem:[#allocation5 + $0x178] sm:$0xff]
    %v587 = vld [vmem:[#allocation5 + $0x48] sm:$0xff]
    %v588 = vld [vmem:[#allocation5 + $0xb0] sm:$0xff]
    %v589 = vld [vmem:[#allocation5 + $0x118] sm:$0xff]
    %v590 = vld [vmem:[#allocation5 + $0x180] sm:$0xff]
    %v591 = vld [vmem:[#allocation5 + $0x50] sm:$0xff]
    %v592 = vld [vmem:[#allocation5 + $0x58] sm:$0xff]
    %v593 = vld [vmem:[#allocation5 + $0xb8] sm:$0xff]
    %v594 = vld [vmem:[#allocation5 + $0xc0] sm:$0xff]
    %v595 = vld [vmem:[#allocation5 + $0x120] sm:$0xff]
    %v596 = vld [vmem:[#allocation5 + $0x128] sm:$0xff]
    %v597 = vld [vmem:[#allocation5 + $0x188] sm:$0xff]
    %v598 = vld [vmem:[#allocation5 + $0x190] sm:$0xff]
    %v599 = vld [vmem:[#allocation5 + $0x60] sm:$0xff]
    %v600 = vld [vmem:[#allocation5 + $0xc8] sm:$0xff]
    %v601 = vld [vmem:[#allocation5 + $0x130] sm:$0xff]
    %v602 = vld [vmem:[#allocation5 + $0x198] sm:$0xff]
    %v603 = vld [vmem:[#allocation10] sm:$0xff]
    %v604 = vld [vmem:[#allocation10 + $0x8] sm:$0xff]
    %v605 = vld [vmem:[#allocation10 + $0x10] sm:$0xff]
    %v606 = vld [vmem:[#allocation10 + $0x18] sm:$0x1]
    %v607 = vld [vmem:[#allocation10 + $0x20] sm:$0x1]
    %v608 = vld [vmem:[#allocation10 + $0x28] sm:$0x1]
    %v609 = vld [vmem:[%s5] sm:$0xff]
    %v610 = vld [vmem:[%s5 + $0x8] sm:$0xff]
    %v611 = vld [vmem:[#allocation8 + $0x8] sm:$0x1]
    %v613 = vlaneseq
    %v614 = vshrl.u32 %v613, 7
    %v615 = vsub.s32 0, %v614
    %v616 = vrot.slane %v611, %v615
    %v618 = vld [vmem:[#allocation8 + $0x9] sm:$0x1]
    %v620 = vlaneseq
    %v621 = vshrl.u32 %v620, 7
    %v622 = vsub.s32 0, %v621
    %v623 = vrot.slane %v618, %v622
    %v625 = vld [vmem:[#allocation8 + $0xa] sm:$0x1]
    %v627 = vlaneseq
    %v628 = vshrl.u32 %v627, 7
    %v629 = vsub.s32 0, %v628
    %v630 = vrot.slane %v625, %v629
    %v632 = vld [vmem:[#allocation8 + $0xb] sm:$0x1]
    %v634 = vlaneseq
    %v635 = vshrl.u32 %v634, 7
    %v636 = vsub.s32 0, %v635
    %v637 = vrot.slane %v632, %v636
    %v639 = vadd.f32 %v504, 0.0
    %v640 = vmul.f32 %v639, 0.5
    %v641 = vtanh.pop %v640
    %v642 = vmul.f32 %v641, 0.5
    %v643 = vadd.f32 %v642, 0.5
    %v644 = vtanh.pop %v639
    %v645 = vmul.f32 %v643, 0.0
    %647 = vrot.lane.b32.xlu0 %v644, 64
    %v648 = vpop.permute.xlu0 %647
    %v650 = vmul.f32 %v643, %v648
    %652 = vrot.lane.b32.xlu0 %v650, 32
    %v653 = vpop.permute.xlu0 %652
    %v655 = vadd.f32 %v645, %v653
    %v656 = vtanh.pop %v655
    %658 = vrot.lane.b32.xlu0 %v656, 64
    %v659 = vpop.permute.xlu0 %658
    %v661 = vmul.f32 %v643, %v659
    %663 = vrot.lane.b32.xlu0 %v661, 32
    %v664 = vpop.permute.xlu0 %663
    %v665 = vsel %vm113, %v664, 0
    %667 = vmatprep.subr.mxu0 %v580
    %668 = vmatpush1.msra.mxu0 %v579
    %669 = vmatprep.subr.mxu0 %v582
    %670 = vmatpush1.msra.mxu0 %v581
    %671 = vmatprep.subr.mxu0 %v584
    %672 = vmatpush1.msra.mxu0 %v583
    %673 = vmatprep.subr.mxu0 %v586
    %674 = vmatpush1.msra.mxu0 %v585
    %675 = vmatprep.subr.mxu0 0.0
    %676 = vmatpush1.msra.mxu0 0.0
    %677 = vmatprep.subr.mxu0 0.0
    %678 = vmatpush1.msra.mxu0 0.0
    %679 = vmatprep.subr.mxu0 0.0
    %680 = vmatpush1.msra.mxu0 0.0
    %681 = vmatprep.subr.mxu0 0.0
    %682 = vmatpush1.msra.mxu0 0.0
    %683 = vmatprep.subr.mxu0 0.0
    %684 = vmatpush1.msra.mxu0 0.0
    %685 = vmatprep.subr.mxu0 0.0
    %686 = vmatpush1.msra.mxu0 0.0
    %687 = vmatprep.subr.mxu0 0.0
    %688 = vmatpush1.msra.mxu0 0.0
    %689 = vmatprep.subr.mxu0 0.0
    %690 = vmatpush1.msra.mxu0 0.0
    %691 = vmatprep.subr.mxu0 0.0
    %692 = vmatpush1.msra.mxu0 0.0
    %693 = vmatprep.subr.mxu0 0.0
    %694 = vmatpush1.msra.mxu0 0.0
    %695 = vmatprep.subr.mxu0 0.0
    %696 = vmatpush1.msra.mxu0 0.0
    %697 = vmatprep.subr.mxu0 0.0
    %698 = vmatpush1.msra.mxu0 0.0
    %699 = vmatprep.subr.mxu0 0.0
    %700 = vmatpush1.msra.mxu0 0.0
    %701 = vmatprep.subr.mxu0 0.0
    %702 = vmatpush1.msra.mxu0 0.0
    %703 = vmatprep.subr.mxu0 0.0
    %704 = vmatpush1.msra.mxu0 0.0
    %705 = vmatprep.subr.mxu0 0.0
    %706 = vmatpush1.msra.mxu0 0.0
    %707 = vmatprep.subr.mxu0 0.0
    %708 = vmatpush1.msra.mxu0 0.0
    %709 = vmatprep.subr.mxu0 0.0
    %710 = vmatpush1.msra.mxu0 0.0
    %711 = vmatprep.subr.mxu0 0.0
    %712 = vmatpush1.msra.mxu0 0.0
    %713 = vmatprep.subr.mxu0 0.0
    %714 = vmatpush1.msra.mxu0 0.0
    %715 = vmatprep.subr.mxu0 0.0
    %716 = vmatpush1.msra.mxu0 0.0
    %717 = vmatprep.subr.mxu0 0.0
    %718 = vmatpush1.msra.mxu0 0.0
    %719 = vmatprep.subr.mxu0 0.0
    %720 = vmatpush1.msra.mxu0 0.0
    %721 = vmatprep.subr.mxu0 0.0
    %722 = vmatpush1.msra.mxu0 0.0
    %723 = vmatprep.subr.mxu0 0.0
    %724 = vmatpush1.msra.mxu0 0.0
    %725 = vmatprep.subr.mxu0 0.0
    %726 = vmatpush1.msra.mxu0 0.0
    %727 = vmatprep.subr.mxu0 0.0
    %728 = vmatpush1.msra.mxu0 0.0
    %729 = vmatprep.subr.mxu0 0.0
    %730 = vmatpush1.msra.mxu0 0.0
    %731 = vmatprep.mubr.f32.mxu0 0.0
    %732 = vmatmul.mubr.f32.gmra.mrb[0].mxu0 %v665
    %v733 = vpop.f32.mrb[0].mxu0
    %v734 = vadd.f32 0.0, %v733
    %v735 = vpop.f32.mrb[0].mxu0
    %v736 = vadd.f32 0.0, %v735
    %737 = vdwg.mxu0
    %v738 = vadd.f32 %v736, %v616
    %v739 = vmax.f32 %v738, 0.0
    %v741 = vsel %vm113, %v739, 0
    %743 = vmatprep.subr.mxu0 0.0
    %744 = vmatpush1.msra.mxu0 %v587
    %745 = vmatprep.subr.mxu0 0.0
    %746 = vmatpush1.msra.mxu0 %v588
    %747 = vmatprep.subr.mxu0 0.0
    %748 = vmatpush1.msra.mxu0 %v589
    %749 = vmatprep.subr.mxu0 0.0
    %750 = vmatpush1.msra.mxu0 %v590
    %751 = vmatprep.subr.mxu0 0.0
    %752 = vmatpush1.msra.mxu0 0.0
    %753 = vmatprep.subr.mxu0 0.0
    %754 = vmatpush1.msra.mxu0 0.0
    %755 = vmatprep.subr.mxu0 0.0
    %756 = vmatpush1.msra.mxu0 0.0
    %757 = vmatprep.subr.mxu0 0.0
    %758 = vmatpush1.msra.mxu0 0.0
    %759 = vmatprep.subr.mxu0 0.0
    %760 = vmatpush1.msra.mxu0 0.0
    %761 = vmatprep.subr.mxu0 0.0
    %762 = vmatpush1.msra.mxu0 0.0
    %763 = vmatprep.subr.mxu0 0.0
    %764 = vmatpush1.msra.mxu0 0.0
    %765 = vmatprep.subr.mxu0 0.0
    %766 = vmatpush1.msra.mxu0 0.0
    %767 = vmatprep.subr.mxu0 0.0
    %768 = vmatpush1.msra.mxu0 0.0
    %769 = vmatprep.subr.mxu0 0.0
    %770 = vmatpush1.msra.mxu0 0.0
    %771 = vmatprep.subr.mxu0 0.0
    %772 = vmatpush1.msra.mxu0 0.0
    %773 = vmatprep.subr.mxu0 0.0
    %774 = vmatpush1.msra.mxu0 0.0
    %775 = vmatprep.subr.mxu0 0.0
    %776 = vmatpush1.msra.mxu0 0.0
    %777 = vmatprep.subr.mxu0 0.0
    %778 = vmatpush1.msra.mxu0 0.0
    %779 = vmatprep.subr.mxu0 0.0
    %780 = vmatpush1.msra.mxu0 0.0
    %781 = vmatprep.subr.mxu0 0.0
    %782 = vmatpush1.msra.mxu0 0.0
    %783 = vmatprep.subr.mxu0 0.0
    %784 = vmatpush1.msra.mxu0 0.0
    %785 = vmatprep.subr.mxu0 0.0
    %786 = vmatpush1.msra.mxu0 0.0
    %787 = vmatprep.subr.mxu0 0.0
    %788 = vmatpush1.msra.mxu0 0.0
    %789 = vmatprep.subr.mxu0 0.0
    %790 = vmatpush1.msra.mxu0 0.0
    %791 = vmatprep.subr.mxu0 0.0
    %792 = vmatpush1.msra.mxu0 0.0
    %793 = vmatprep.subr.mxu0 0.0
    %794 = vmatpush1.msra.mxu0 0.0
    %795 = vmatprep.subr.mxu0 0.0
    %796 = vmatpush1.msra.mxu0 0.0
    %797 = vmatprep.subr.mxu0 0.0
    %798 = vmatpush1.msra.mxu0 0.0
    %799 = vmatprep.subr.mxu0 0.0
    %800 = vmatpush1.msra.mxu0 0.0
    %801 = vmatprep.subr.mxu0 0.0
    %802 = vmatpush1.msra.mxu0 0.0
    %803 = vmatprep.subr.mxu0 0.0
    %804 = vmatpush1.msra.mxu0 0.0
    %805 = vmatprep.subr.mxu0 0.0
    %806 = vmatpush1.msra.mxu0 0.0
    %807 = vmatprep.mubr.f32.mxu0 0.0
    %808 = vmatmul.mubr.f32.gmra.mrb[0].mxu0 %v741
    %v809 = vpop.f32.mrb[0].mxu0
    %v810 = vadd.f32 %v623, %v809
    %v811 = vpop.f32.mrb[0].mxu0
    %812 = vdwg.mxu0
    %vm813 = vcmask 66560
    %814 = vst.msk [vmem:[#allocation12] sm:$0x3] %vm813, %v810
    %v815 = vsel %vm813, %v810, -inf
    %816 = vmax.xlane.f32.xlu0 %v815
    %v817 = vpop.xlane.xlu0 %816
    %vm818 = vcmp.eq.f32.partialorder %v810, %v817
    %v819 = vsel %vm818, 1, 0
    %v820 = vcvt.s32.f32 %v819
    %vm821 = vcmask 72704
    %v823 = vsel %vm821, %v820, 0
    %vm825 = vcmask 1040384
    %v827 = vsel %vm825, %v606, 0
    %v830 = vsel %vm825, %v607, 0
    %v833 = vsel %vm825, %v608, 0
    %835 = vmatprep.subr.mxu0 %v604
    %836 = vmatpush1.msra.mxu0 %v603
    %837 = vmatprep.subr.mxu0 %v830
    %838 = vmatpush1.msra.mxu0 %v827
    %839 = vmatprep.subr.mxu0 0.0
    %840 = vmatpush1.msra.mxu0 0.0
    %841 = vmatprep.subr.mxu0 0.0
    %842 = vmatpush1.msra.mxu0 0.0
    %843 = vmatprep.subr.mxu0 0.0
    %844 = vmatpush1.msra.mxu0 0.0
    %845 = vmatprep.subr.mxu0 0.0
    %846 = vmatpush1.msra.mxu0 0.0
    %847 = vmatprep.subr.mxu0 0.0
    %848 = vmatpush1.msra.mxu0 0.0
    %849 = vmatprep.subr.mxu0 0.0
    %850 = vmatpush1.msra.mxu0 0.0
    %851 = vmatprep.subr.mxu0 0.0
    %852 = vmatpush1.msra.mxu0 0.0
    %853 = vmatprep.subr.mxu0 0.0
    %854 = vmatpush1.msra.mxu0 0.0
    %855 = vmatprep.subr.mxu0 0.0
    %856 = vmatpush1.msra.mxu0 0.0
    %857 = vmatprep.subr.mxu0 0.0
    %858 = vmatpush1.msra.mxu0 0.0
    %859 = vmatprep.subr.mxu0 0.0
    %860 = vmatpush1.msra.mxu0 0.0
    %861 = vmatprep.subr.mxu0 0.0
    %862 = vmatpush1.msra.mxu0 0.0
    %863 = vmatprep.subr.mxu0 0.0
    %864 = vmatpush1.msra.mxu0 0.0
    %865 = vmatprep.subr.mxu0 0.0
    %866 = vmatpush1.msra.mxu0 0.0
    %867 = vmatprep.subr.mxu0 0.0
    %868 = vmatpush1.msra.mxu0 0.0
    %869 = vmatprep.subr.mxu0 0.0
    %870 = vmatpush1.msra.mxu0 0.0
    %871 = vmatprep.subr.mxu0 0.0
    %872 = vmatpush1.msra.mxu0 0.0
    %873 = vmatprep.subr.mxu0 0.0
    %874 = vmatpush1.msra.mxu0 0.0
    %875 = vmatprep.subr.mxu0 0.0
    %876 = vmatpush1.msra.mxu0 0.0
    %877 = vmatprep.subr.mxu0 0.0
    %878 = vmatpush1.msra.mxu0 0.0
    %879 = vmatprep.subr.mxu0 0.0
    %880 = vmatpush1.msra.mxu0 0.0
    %881 = vmatprep.subr.mxu0 0.0
    %882 = vmatpush1.msra.mxu0 0.0
    %883 = vmatprep.subr.mxu0 0.0
    %884 = vmatpush1.msra.mxu0 0.0
    %885 = vmatprep.subr.mxu0 0.0
    %886 = vmatpush1.msra.mxu0 0.0
    %887 = vmatprep.subr.mxu0 0.0
    %888 = vmatpush1.msra.mxu0 0.0
    %889 = vmatprep.subr.mxu0 0.0
    %890 = vmatpush1.msra.mxu0 0.0
    %891 = vmatprep.subr.mxu0 0.0
    %892 = vmatpush1.msra.mxu0 0.0
    %893 = vmatprep.subr.mxu0 0.0
    %894 = vmatpush1.msra.mxu0 0.0
    %895 = vmatprep.subr.mxu0 0.0
    %896 = vmatpush1.msra.mxu0 0.0
    %897 = vmatprep.subr.mxu0 0.0
    %898 = vmatpush1.msra.mxu0 0.0
    %899 = vmatprep.mubr.f32.mxu0 0.0
    %900 = vmatmul.mubr.f32.gmra.mrb[0].mxu0 %v823
    %v901 = vpop.f32.mrb[0].mxu0
    %v902 = vadd.f32 %v506, %v901
    %v903 = vpop.f32.mrb[0].mxu0
    %v904 = vadd.f32 %v575, %v903
    %905 = vdwg.mxu0
    %906 = vmatprep.subr.mxu0 0.0
    %907 = vmatpush1.msra.mxu0 %v605
    %908 = vmatprep.subr.mxu0 0.0
    %909 = vmatpush1.msra.mxu0 %v833
    %910 = vmatprep.subr.mxu0 0.0
    %911 = vmatpush1.msra.mxu0 0.0
    %912 = vmatprep.subr.mxu0 0.0
    %913 = vmatpush1.msra.mxu0 0.0
    %914 = vmatprep.subr.mxu0 0.0
    %915 = vmatpush1.msra.mxu0 0.0
    %916 = vmatprep.subr.mxu0 0.0
    %917 = vmatpush1.msra.mxu0 0.0
    %918 = vmatprep.subr.mxu0 0.0
    %919 = vmatpush1.msra.mxu0 0.0
    %920 = vmatprep.subr.mxu0 0.0
    %921 = vmatpush1.msra.mxu0 0.0
    %922 = vmatprep.subr.mxu0 0.0
    %923 = vmatpush1.msra.mxu0 0.0
    %924 = vmatprep.subr.mxu0 0.0
    %925 = vmatpush1.msra.mxu0 0.0
    %926 = vmatprep.subr.mxu0 0.0
    %927 = vmatpush1.msra.mxu0 0.0
    %928 = vmatprep.subr.mxu0 0.0
    %929 = vmatpush1.msra.mxu0 0.0
    %930 = vmatprep.subr.mxu0 0.0
    %931 = vmatpush1.msra.mxu0 0.0
    %932 = vmatprep.subr.mxu0 0.0
    %933 = vmatpush1.msra.mxu0 0.0
    %934 = vmatprep.subr.mxu0 0.0
    %935 = vmatpush1.msra.mxu0 0.0
    %936 = vmatprep.subr.mxu0 0.0
    %937 = vmatpush1.msra.mxu0 0.0
    %938 = vmatprep.subr.mxu0 0.0
    %939 = vmatpush1.msra.mxu0 0.0
    %940 = vmatprep.subr.mxu0 0.0
    %941 = vmatpush1.msra.mxu0 0.0
    %942 = vmatprep.subr.mxu0 0.0
    %943 = vmatpush1.msra.mxu0 0.0
    %944 = vmatprep.subr.mxu0 0.0
    %945 = vmatpush1.msra.mxu0 0.0
    %946 = vmatprep.subr.mxu0 0.0
    %947 = vmatpush1.msra.mxu0 0.0
    %948 = vmatprep.subr.mxu0 0.0
    %949 = vmatpush1.msra.mxu0 0.0
    %950 = vmatprep.subr.mxu0 0.0
    %951 = vmatpush1.msra.mxu0 0.0
    %952 = vmatprep.subr.mxu0 0.0
    %953 = vmatpush1.msra.mxu0 0.0
    %954 = vmatprep.subr.mxu0 0.0
    %955 = vmatpush1.msra.mxu0 0.0
    %956 = vmatprep.subr.mxu0 0.0
    %957 = vmatpush1.msra.mxu0 0.0
    %958 = vmatprep.subr.mxu0 0.0
    %959 = vmatpush1.msra.mxu0 0.0
    %960 = vmatprep.subr.mxu0 0.0
    %961 = vmatpush1.msra.mxu0 0.0
    %962 = vmatprep.subr.mxu0 0.0
    %963 = vmatpush1.msra.mxu0 0.0
    %964 = vmatprep.subr.mxu0 0.0
    %965 = vmatpush1.msra.mxu0 0.0
    %966 = vmatprep.subr.mxu0 0.0
    %967 = vmatpush1.msra.mxu0 0.0
    %968 = vmatprep.subr.mxu0 0.0
    %969 = vmatpush1.msra.mxu0 0.0
    %970 = vmatprep.mubr.f32.mxu0 0.0
    %971 = vmatmul.mubr.f32.gmra.mrb[0].mxu0 %v823
    %v972 = vpop.f32.mrb[0].mxu0
    %v973 = vadd.f32 %v577, %v972
    %v974 = vpop.f32.mrb[0].mxu0
    %975 = vdwg.mxu0
    %v976 = vadd.f32 %v973, 0.0
    %v977 = vmul.f32 %v976, 0.5
    %v978 = vtanh.pop %v977
    %v979 = vmul.f32 %v978, 0.5
    %v980 = vadd.f32 %v979, 0.5
    %v981 = vtanh.pop %v976
    %v982 = vmul.f32 %v980, 0.0
    %984 = vrot.lane.b32.xlu0 %v981, 64
    %v985 = vpop.permute.xlu0 %984
    %v987 = vmul.f32 %v980, %v985
    %989 = vrot.lane.b32.xlu0 %v987, 32
    %v990 = vpop.permute.xlu0 %989
    %v992 = vadd.f32 %v982, %v990
    %v993 = vtanh.pop %v992
    %995 = vrot.lane.b32.xlu0 %v993, 64
    %v996 = vpop.permute.xlu0 %995
    %v998 = vmul.f32 %v980, %v996
    %1000 = vrot.lane.b32.xlu0 %v998, 32
    %v1001 = vpop.permute.xlu0 %1000
    %v1002 = vsel %vm113, %v1001, 0
    %1004 = vmatprep.subr.mxu0 %v592
    %1005 = vmatpush1.msra.mxu0 %v591
    %1006 = vmatprep.subr.mxu0 %v594
    %1007 = vmatpush1.msra.mxu0 %v593
    %1008 = vmatprep.subr.mxu0 %v596
    %1009 = vmatpush1.msra.mxu0 %v595
    %1010 = vmatprep.subr.mxu0 %v598
    %1011 = vmatpush1.msra.mxu0 %v597
    %1012 = vmatprep.subr.mxu0 0.0
    %1013 = vmatpush1.msra.mxu0 0.0
    %1014 = vmatprep.subr.mxu0 0.0
    %1015 = vmatpush1.msra.mxu0 0.0
    %1016 = vmatprep.subr.mxu0 0.0
    %1017 = vmatpush1.msra.mxu0 0.0
    %1018 = vmatprep.subr.mxu0 0.0
    %1019 = vmatpush1.msra.mxu0 0.0
    %1020 = vmatprep.subr.mxu0 0.0
    %1021 = vmatpush1.msra.mxu0 0.0
    %1022 = vmatprep.subr.mxu0 0.0
    %1023 = vmatpush1.msra.mxu0 0.0
    %1024 = vmatprep.subr.mxu0 0.0
    %1025 = vmatpush1.msra.mxu0 0.0
    %1026 = vmatprep.subr.mxu0 0.0
    %1027 = vmatpush1.msra.mxu0 0.0
    %1028 = vmatprep.subr.mxu0 0.0
    %1029 = vmatpush1.msra.mxu0 0.0
    %1030 = vmatprep.subr.mxu0 0.0
    %1031 = vmatpush1.msra.mxu0 0.0
    %1032 = vmatprep.subr.mxu0 0.0
    %1033 = vmatpush1.msra.mxu0 0.0
    %1034 = vmatprep.subr.mxu0 0.0
    %1035 = vmatpush1.msra.mxu0 0.0
    %1036 = vmatprep.subr.mxu0 0.0
    %1037 = vmatpush1.msra.mxu0 0.0
    %1038 = vmatprep.subr.mxu0 0.0
    %1039 = vmatpush1.msra.mxu0 0.0
    %1040 = vmatprep.subr.mxu0 0.0
    %1041 = vmatpush1.msra.mxu0 0.0
    %1042 = vmatprep.subr.mxu0 0.0
    %1043 = vmatpush1.msra.mxu0 0.0
    %1044 = vmatprep.subr.mxu0 0.0
    %1045 = vmatpush1.msra.mxu0 0.0
    %1046 = vmatprep.subr.mxu0 0.0
    %1047 = vmatpush1.msra.mxu0 0.0
    %1048 = vmatprep.subr.mxu0 0.0
    %1049 = vmatpush1.msra.mxu0 0.0
    %1050 = vmatprep.subr.mxu0 0.0
    %1051 = vmatpush1.msra.mxu0 0.0
    %1052 = vmatprep.subr.mxu0 0.0
    %1053 = vmatpush1.msra.mxu0 0.0
    %1054 = vmatprep.subr.mxu0 0.0
    %1055 = vmatpush1.msra.mxu0 0.0
    %1056 = vmatprep.subr.mxu0 0.0
    %1057 = vmatpush1.msra.mxu0 0.0
    %1058 = vmatprep.subr.mxu0 0.0
    %1059 = vmatpush1.msra.mxu0 0.0
    %1060 = vmatprep.subr.mxu0 0.0
    %1061 = vmatpush1.msra.mxu0 0.0
    %1062 = vmatprep.subr.mxu0 0.0
    %1063 = vmatpush1.msra.mxu0 0.0
    %1064 = vmatprep.subr.mxu0 0.0
    %1065 = vmatpush1.msra.mxu0 0.0
    %1066 = vmatprep.subr.mxu0 0.0
    %1067 = vmatpush1.msra.mxu0 0.0
    %1068 = vmatprep.mubr.f32.mxu0 0.0
    %1069 = vmatmul.mubr.f32.gmra.mrb[0].mxu0 %v1002
    %v1070 = vpop.f32.mrb[0].mxu0
    %v1071 = vadd.f32 0.0, %v1070
    %v1072 = vpop.f32.mrb[0].mxu0
    %v1073 = vadd.f32 0.0, %v1072
    %1074 = vdwg.mxu0
    %v1075 = vadd.f32 %v1073, %v630
    %v1076 = vmax.f32 %v1075, 0.0
    %v1078 = vsel %vm113, %v1076, 0
    %1080 = vmatprep.subr.mxu0 0.0
    %1081 = vmatpush1.msra.mxu0 %v599
    %1082 = vmatprep.subr.mxu0 0.0
    %1083 = vmatpush1.msra.mxu0 %v600
    %1084 = vmatprep.subr.mxu0 0.0
    %1085 = vmatpush1.msra.mxu0 %v601
    %1086 = vmatprep.subr.mxu0 0.0
    %1087 = vmatpush1.msra.mxu0 %v602
    %1088 = vmatprep.subr.mxu0 0.0
    %1089 = vmatpush1.msra.mxu0 0.0
    %1090 = vmatprep.subr.mxu0 0.0
    %1091 = vmatpush1.msra.mxu0 0.0
    %1092 = vmatprep.subr.mxu0 0.0
    %1093 = vmatpush1.msra.mxu0 0.0
    %1094 = vmatprep.subr.mxu0 0.0
    %1095 = vmatpush1.msra.mxu0 0.0
    %1096 = vmatprep.subr.mxu0 0.0
    %1097 = vmatpush1.msra.mxu0 0.0
    %1098 = vmatprep.subr.mxu0 0.0
    %1099 = vmatpush1.msra.mxu0 0.0
    %1100 = vmatprep.subr.mxu0 0.0
    %1101 = vmatpush1.msra.mxu0 0.0
    %1102 = vmatprep.subr.mxu0 0.0
    %1103 = vmatpush1.msra.mxu0 0.0
    %1104 = vmatprep.subr.mxu0 0.0
    %1105 = vmatpush1.msra.mxu0 0.0
    %1106 = vmatprep.subr.mxu0 0.0
    %1107 = vmatpush1.msra.mxu0 0.0
    %1108 = vmatprep.subr.mxu0 0.0
    %1109 = vmatpush1.msra.mxu0 0.0
    %1110 = vmatprep.subr.mxu0 0.0
    %1111 = vmatpush1.msra.mxu0 0.0
    %1112 = vmatprep.subr.mxu0 0.0
    %1113 = vmatpush1.msra.mxu0 0.0
    %1114 = vmatprep.subr.mxu0 0.0
    %1115 = vmatpush1.msra.mxu0 0.0
    %1116 = vmatprep.subr.mxu0 0.0
    %1117 = vmatpush1.msra.mxu0 0.0
    %1118 = vmatprep.subr.mxu0 0.0
    %1119 = vmatpush1.msra.mxu0 0.0
    %1120 = vmatprep.subr.mxu0 0.0
    %1121 = vmatpush1.msra.mxu0 0.0
    %1122 = vmatprep.subr.mxu0 0.0
    %1123 = vmatpush1.msra.mxu0 0.0
    %1124 = vmatprep.subr.mxu0 0.0
    %1125 = vmatpush1.msra.mxu0 0.0
    %1126 = vmatprep.subr.mxu0 0.0
    %1127 = vmatpush1.msra.mxu0 0.0
    %1128 = vmatprep.subr.mxu0 0.0
    %1129 = vmatpush1.msra.mxu0 0.0
    %1130 = vmatprep.subr.mxu0 0.0
    %1131 = vmatpush1.msra.mxu0 0.0
    %1132 = vmatprep.subr.mxu0 0.0
    %1133 = vmatpush1.msra.mxu0 0.0
    %1134 = vmatprep.subr.mxu0 0.0
    %1135 = vmatpush1.msra.mxu0 0.0
    %1136 = vmatprep.subr.mxu0 0.0
    %1137 = vmatpush1.msra.mxu0 0.0
    %1138 = vmatprep.subr.mxu0 0.0
    %1139 = vmatpush1.msra.mxu0 0.0
    %1140 = vmatprep.subr.mxu0 0.0
    %1141 = vmatpush1.msra.mxu0 0.0
    %1142 = vmatprep.subr.mxu0 0.0
    %1143 = vmatpush1.msra.mxu0 0.0
    %1144 = vmatprep.mubr.f32.mxu0 0.0
    %1145 = vmatmul.mubr.f32.gmra.mrb[0].mxu0 %v1078
    %v1146 = vpop.f32.mrb[0].mxu0
    %v1147 = vadd.f32 %v637, %v1146
    %v1148 = vpop.f32.mrb[0].mxu0
    %1149 = vdwg.mxu0
    %vm1150 = vcmask 123904
    %1151 = vst.msk [vmem:[#allocation14] sm:$0x3] %vm1150, %v1147
    %v1152 = vsel %vm1150, %v1147, -inf
    %1153 = vmax.xlane.f32.xlu0 %v1152
    %v1154 = vpop.xlane.xlu0 %1153
    %vm1155 = vcmp.eq.f32.partialorder %v1147, %v1154
    %v1156 = vsel %vm1155, 1, 0
    %v1157 = vcvt.s32.f32 %v1156
    %vm1158 = vcmask 130048
    %v1160 = vsel %vm1158, %v1157, 0
    %1162 = vmatprep.subr.mxu0 0.0
    %1163 = vmatpush1.msra.mxu0 %v609
    %1164 = vmatprep.subr.mxu0 0.0
    %1165 = vmatpush1.msra.mxu0 %v610
    %1166 = vmatprep.subr.mxu0 0.0
    %1167 = vmatpush1.msra.mxu0 0.0
    %1168 = vmatprep.subr.mxu0 0.0
    %1169 = vmatpush1.msra.mxu0 0.0
    %1170 = vmatprep.subr.mxu0 0.0
    %1171 = vmatpush1.msra.mxu0 0.0
    %1172 = vmatprep.subr.mxu0 0.0
    %1173 = vmatpush1.msra.mxu0 0.0
    %1174 = vmatprep.subr.mxu0 0.0
    %1175 = vmatpush1.msra.mxu0 0.0
    %1176 = vmatprep.subr.mxu0 0.0
    %1177 = vmatpush1.msra.mxu0 0.0
    %1178 = vmatprep.subr.mxu0 0.0
    %1179 = vmatpush1.msra.mxu0 0.0
    %1180 = vmatprep.subr.mxu0 0.0
    %1181 = vmatpush1.msra.mxu0 0.0
    %1182 = vmatprep.subr.mxu0 0.0
    %1183 = vmatpush1.msra.mxu0 0.0
    %1184 = vmatprep.subr.mxu0 0.0
    %1185 = vmatpush1.msra.mxu0 0.0
    %1186 = vmatprep.subr.mxu0 0.0
    %1187 = vmatpush1.msra.mxu0 0.0
    %1188 = vmatprep.subr.mxu0 0.0
    %1189 = vmatpush1.msra.mxu0 0.0
    %1190 = vmatprep.subr.mxu0 0.0
    %1191 = vmatpush1.msra.mxu0 0.0
    %1192 = vmatprep.subr.mxu0 0.0
    %1193 = vmatpush1.msra.mxu0 0.0
    %1194 = vmatprep.subr.mxu0 0.0
    %1195 = vmatpush1.msra.mxu0 0.0
    %1196 = vmatprep.subr.mxu0 0.0
    %1197 = vmatpush1.msra.mxu0 0.0
    %1198 = vmatprep.subr.mxu0 0.0
    %1199 = vmatpush1.msra.mxu0 0.0
    %1200 = vmatprep.subr.mxu0 0.0
    %1201 = vmatpush1.msra.mxu0 0.0
    %1202 = vmatprep.subr.mxu0 0.0
    %1203 = vmatpush1.msra.mxu0 0.0
    %1204 = vmatprep.subr.mxu0 0.0
    %1205 = vmatpush1.msra.mxu0 0.0
    %1206 = vmatprep.subr.mxu0 0.0
    %1207 = vmatpush1.msra.mxu0 0.0
    %1208 = vmatprep.subr.mxu0 0.0
    %1209 = vmatpush1.msra.mxu0 0.0
    %1210 = vmatprep.subr.mxu0 0.0
    %1211 = vmatpush1.msra.mxu0 0.0
    %1212 = vmatprep.subr.mxu0 0.0
    %1213 = vmatpush1.msra.mxu0 0.0
    %1214 = vmatprep.subr.mxu0 0.0
    %1215 = vmatpush1.msra.mxu0 0.0
    %1216 = vmatprep.subr.mxu0 0.0
    %1217 = vmatpush1.msra.mxu0 0.0
    %1218 = vmatprep.subr.mxu0 0.0
    %1219 = vmatpush1.msra.mxu0 0.0
    %1220 = vmatprep.subr.mxu0 0.0
    %1221 = vmatpush1.msra.mxu0 0.0
    %1222 = vmatprep.subr.mxu0 0.0
    %1223 = vmatpush1.msra.mxu0 0.0
    %1224 = vmatprep.subr.mxu0 0.0
    %1225 = vmatpush1.msra.mxu0 0.0
    %1226 = vmatprep.mubr.f32.mxu0 0.0
    %1227 = vmatmul.mubr.f32.gmra.mrb[0].mxu0 %v1160
    %v1228 = vpop.f32.mrb[0].mxu0
    %v1229 = vadd.f32 %v904, %v1228
    %v1230 = vpop.f32.mrb[0].mxu0
    %1231 = vdwg.mxu0
    %v1232 = vadd.f32 %v1229, %v1071
    %v1233 = vmul.f32 %v1232, 0.5
    %v1234 = vtanh.pop %v1233
    %v1235 = vmul.f32 %v1234, 0.5
    %v1236 = vadd.f32 %v1235, 0.5
    %v1237 = vtanh.pop %v1232
    %v1238 = vmul.f32 %v1236, %v992
    %1240 = vrot.lane.b32.xlu0 %v1237, 64
    %v1241 = vpop.permute.xlu0 %1240
    %v1243 = vmul.f32 %v1236, %v1241
    %1245 = vrot.lane.b32.xlu0 %v1243, 32
    %v1246 = vpop.permute.xlu0 %1245
    %v1248 = vadd.f32 %v1238, %v1246
    %v1249 = vtanh.pop %v1248
    %1251 = vrot.lane.b32.xlu0 %v1249, 64
    %v1252 = vpop.permute.xlu0 %1251
    %v1254 = vmul.f32 %v1236, %v1252
    %1256 = vrot.lane.b32.xlu0 %v1254, 32
    %v1257 = vpop.permute.xlu0 %1256
    %v1258 = vsel %vm113, %v1257, 0
    %1260 = vmatprep.subr.mxu0 %v592
    %1261 = vmatpush1.msra.mxu0 %v591
    %1262 = vmatprep.subr.mxu0 %v594
    %1263 = vmatpush1.msra.mxu0 %v593
    %1264 = vmatprep.subr.mxu0 %v596
    %1265 = vmatpush1.msra.mxu0 %v595
    %1266 = vmatprep.subr.mxu0 %v598
    %1267 = vmatpush1.msra.mxu0 %v597
    %1268 = vmatprep.subr.mxu0 0.0
    %1269 = vmatpush1.msra.mxu0 0.0
    %1270 = vmatprep.subr.mxu0 0.0
    %1271 = vmatpush1.msra.mxu0 0.0
    %1272 = vmatprep.subr.mxu0 0.0
    %1273 = vmatpush1.msra.mxu0 0.0
    %1274 = vmatprep.subr.mxu0 0.0
    %1275 = vmatpush1.msra.mxu0 0.0
    %1276 = vmatprep.subr.mxu0 0.0
    %1277 = vmatpush1.msra.mxu0 0.0
    %1278 = vmatprep.subr.mxu0 0.0
    %1279 = vmatpush1.msra.mxu0 0.0
    %1280 = vmatprep.subr.mxu0 0.0
    %1281 = vmatpush1.msra.mxu0 0.0
    %1282 = vmatprep.subr.mxu0 0.0
    %1283 = vmatpush1.msra.mxu0 0.0
    %1284 = vmatprep.subr.mxu0 0.0
    %1285 = vmatpush1.msra.mxu0 0.0
    %1286 = vmatprep.subr.mxu0 0.0
    %1287 = vmatpush1.msra.mxu0 0.0
    %1288 = vmatprep.subr.mxu0 0.0
    %1289 = vmatpush1.msra.mxu0 0.0
    %1290 = vmatprep.subr.mxu0 0.0
    %1291 = vmatpush1.msra.mxu0 0.0
    %1292 = vmatprep.subr.mxu0 0.0
    %1293 = vmatpush1.msra.mxu0 0.0
    %1294 = vmatprep.subr.mxu0 0.0
    %1295 = vmatpush1.msra.mxu0 0.0
    %1296 = vmatprep.subr.mxu0 0.0
    %1297 = vmatpush1.msra.mxu0 0.0
    %1298 = vmatprep.subr.mxu0 0.0
    %1299 = vmatpush1.msra.mxu0 0.0
    %1300 = vmatprep.subr.mxu0 0.0
    %1301 = vmatpush1.msra.mxu0 0.0
    %1302 = vmatprep.subr.mxu0 0.0
    %1303 = vmatpush1.msra.mxu0 0.0
    %1304 = vmatprep.subr.mxu0 0.0
    %1305 = vmatpush1.msra.mxu0 0.0
    %1306 = vmatprep.subr.mxu0 0.0
    %1307 = vmatpush1.msra.mxu0 0.0
    %1308 = vmatprep.subr.mxu0 0.0
    %1309 = vmatpush1.msra.mxu0 0.0
    %1310 = vmatprep.subr.mxu0 0.0
    %1311 = vmatpush1.msra.mxu0 0.0
    %1312 = vmatprep.subr.mxu0 0.0
    %1313 = vmatpush1.msra.mxu0 0.0
    %1314 = vmatprep.subr.mxu0 0.0
    %1315 = vmatpush1.msra.mxu0 0.0
    %1316 = vmatprep.subr.mxu0 0.0
    %1317 = vmatpush1.msra.mxu0 0.0
    %1318 = vmatprep.subr.mxu0 0.0
    %1319 = vmatpush1.msra.mxu0 0.0
    %1320 = vmatprep.subr.mxu0 0.0
    %1321 = vmatpush1.msra.mxu0 0.0
    %1322 = vmatprep.subr.mxu0 0.0
    %1323 = vmatpush1.msra.mxu0 0.0
    %1324 = vmatprep.mubr.f32.mxu0 0.0
    %1325 = vmatmul.mubr.f32.gmra.mrb[0].mxu0 %v1258
    %v1326 = vpop.f32.mrb[0].mxu0
    %v1327 = vadd.f32 0.0, %v1326
    %v1328 = vpop.f32.mrb[0].mxu0
    %v1329 = vadd.f32 0.0, %v1328
    %1330 = vdwg.mxu0
    %v1331 = vadd.f32 %v1329, %v630
    %v1332 = vmax.f32 %v1331, 0.0
    %v1334 = vsel %vm113, %v1332, 0
    %1336 = vmatprep.subr.mxu0 0.0
    %1337 = vmatpush1.msra.mxu0 %v599
    %1338 = vmatprep.subr.mxu0 0.0
    %1339 = vmatpush1.msra.mxu0 %v600
    %1340 = vmatprep.subr.mxu0 0.0
    %1341 = vmatpush1.msra.mxu0 %v601
    %1342 = vmatprep.subr.mxu0 0.0
    %1343 = vmatpush1.msra.mxu0 %v602
    %1344 = vmatprep.subr.mxu0 0.0
    %1345 = vmatpush1.msra.mxu0 0.0
    %1346 = vmatprep.subr.mxu0 0.0
    %1347 = vmatpush1.msra.mxu0 0.0
    %1348 = vmatprep.subr.mxu0 0.0
    %1349 = vmatpush1.msra.mxu0 0.0
    %1350 = vmatprep.subr.mxu0 0.0
    %1351 = vmatpush1.msra.mxu0 0.0
    %1352 = vmatprep.subr.mxu0 0.0
    %1353 = vmatpush1.msra.mxu0 0.0
    %1354 = vmatprep.subr.mxu0 0.0
    %1355 = vmatpush1.msra.mxu0 0.0
    %1356 = vmatprep.subr.mxu0 0.0
    %1357 = vmatpush1.msra.mxu0 0.0
    %1358 = vmatprep.subr.mxu0 0.0
    %1359 = vmatpush1.msra.mxu0 0.0
    %1360 = vmatprep.subr.mxu0 0.0
    %1361 = vmatpush1.msra.mxu0 0.0
    %1362 = vmatprep.subr.mxu0 0.0
    %1363 = vmatpush1.msra.mxu0 0.0
    %1364 = vmatprep.subr.mxu0 0.0
    %1365 = vmatpush1.msra.mxu0 0.0
    %1366 = vmatprep.subr.mxu0 0.0
    %1367 = vmatpush1.msra.mxu0 0.0
    %1368 = vmatprep.subr.mxu0 0.0
    %1369 = vmatpush1.msra.mxu0 0.0
    %1370 = vmatprep.subr.mxu0 0.0
    %1371 = vmatpush1.msra.mxu0 0.0
    %1372 = vmatprep.subr.mxu0 0.0
    %1373 = vmatpush1.msra.mxu0 0.0
    %1374 = vmatprep.subr.mxu0 0.0
    %1375 = vmatpush1.msra.mxu0 0.0
    %1376 = vmatprep.subr.mxu0 0.0
    %1377 = vmatpush1.msra.mxu0 0.0
    %1378 = vmatprep.subr.mxu0 0.0
    %1379 = vmatpush1.msra.mxu0 0.0
    %1380 = vmatprep.subr.mxu0 0.0
    %1381 = vmatpush1.msra.mxu0 0.0
    %1382 = vmatprep.subr.mxu0 0.0
    %1383 = vmatpush1.msra.mxu0 0.0
    %1384 = vmatprep.subr.mxu0 0.0
    %1385 = vmatpush1.msra.mxu0 0.0
    %1386 = vmatprep.subr.mxu0 0.0
    %1387 = vmatpush1.msra.mxu0 0.0
    %1388 = vmatprep.subr.mxu0 0.0
    %1389 = vmatpush1.msra.mxu0 0.0
    %1390 = vmatprep.subr.mxu0 0.0
    %1391 = vmatpush1.msra.mxu0 0.0
    %1392 = vmatprep.subr.mxu0 0.0
    %1393 = vmatpush1.msra.mxu0 0.0
    %1394 = vmatprep.subr.mxu0 0.0
    %1395 = vmatpush1.msra.mxu0 0.0
    %1396 = vmatprep.subr.mxu0 0.0
    %1397 = vmatpush1.msra.mxu0 0.0
    %1398 = vmatprep.subr.mxu0 0.0
    %1399 = vmatpush1.msra.mxu0 0.0
    %1400 = vmatprep.mubr.f32.mxu0 0.0
    %1401 = vmatmul.mubr.f32.gmra.mrb[0].mxu0 %v1334
    %v1402 = vpop.f32.mrb[0].mxu0
    %v1403 = vadd.f32 %v637, %v1402
    %v1404 = vpop.f32.mrb[0].mxu0
    %1405 = vdwg.mxu0
    %s1406 = scalar_lea.vmem [#allocation14], 2
    %1407 = vst.msk [vmem:[%s1406] sm:$0x3] %vm1150, %v1403
    %v1408 = vsel %vm1150, %v1403, -inf
    %1409 = vmax.xlane.f32.xlu0 %v1408
    %v1410 = vpop.xlane.xlu0 %1409
    %vm1411 = vcmp.eq.f32.partialorder %v1403, %v1410
    %v1412 = vsel %vm1411, 1, 0
    %v1413 = vcvt.s32.f32 %v1412
    %v1415 = vsel %vm1158, %v1413, 0
    %1417 = vmatprep.subr.mxu0 0.0
    %1418 = vmatpush1.msra.mxu0 %v609
    %1419 = vmatprep.subr.mxu0 0.0
    %1420 = vmatpush1.msra.mxu0 %v610
    %1421 = vmatprep.subr.mxu0 0.0
    %1422 = vmatpush1.msra.mxu0 0.0
    %1423 = vmatprep.subr.mxu0 0.0
    %1424 = vmatpush1.msra.mxu0 0.0
    %1425 = vmatprep.subr.mxu0 0.0
    %1426 = vmatpush1.msra.mxu0 0.0
    %1427 = vmatprep.subr.mxu0 0.0
    %1428 = vmatpush1.msra.mxu0 0.0
    %1429 = vmatprep.subr.mxu0 0.0
    %1430 = vmatpush1.msra.mxu0 0.0
    %1431 = vmatprep.subr.mxu0 0.0
    %1432 = vmatpush1.msra.mxu0 0.0
    %1433 = vmatprep.subr.mxu0 0.0
    %1434 = vmatpush1.msra.mxu0 0.0
    %1435 = vmatprep.subr.mxu0 0.0
    %1436 = vmatpush1.msra.mxu0 0.0
    %1437 = vmatprep.subr.mxu0 0.0
    %1438 = vmatpush1.msra.mxu0 0.0
    %1439 = vmatprep.subr.mxu0 0.0
    %1440 = vmatpush1.msra.mxu0 0.0
    %1441 = vmatprep.subr.mxu0 0.0
    %1442 = vmatpush1.msra.mxu0 0.0
    %1443 = vmatprep.subr.mxu0 0.0
    %1444 = vmatpush1.msra.mxu0 0.0
    %1445 = vmatprep.subr.mxu0 0.0
    %1446 = vmatpush1.msra.mxu0 0.0
    %1447 = vmatprep.subr.mxu0 0.0
    %1448 = vmatpush1.msra.mxu0 0.0
    %1449 = vmatprep.subr.mxu0 0.0
    %1450 = vmatpush1.msra.mxu0 0.0
    %1451 = vmatprep.subr.mxu0 0.0
    %1452 = vmatpush1.msra.mxu0 0.0
    %1453 = vmatprep.subr.mxu0 0.0
    %1454 = vmatpush1.msra.mxu0 0.0
    %1455 = vmatprep.subr.mxu0 0.0
    %1456 = vmatpush1.msra.mxu0 0.0
    %1457 = vmatprep.subr.mxu0 0.0
    %1458 = vmatpush1.msra.mxu0 0.0
    %1459 = vmatprep.subr.mxu0 0.0
    %1460 = vmatpush1.msra.mxu0 0.0
    %1461 = vmatprep.subr.mxu0 0.0
    %1462 = vmatpush1.msra.mxu0 0.0
    %1463 = vmatprep.subr.mxu0 0.0
    %1464 = vmatpush1.msra.mxu0 0.0
    %1465 = vmatprep.subr.mxu0 0.0
    %1466 = vmatpush1.msra.mxu0 0.0
    %1467 = vmatprep.subr.mxu0 0.0
    %1468 = vmatpush1.msra.mxu0 0.0
    %1469 = vmatprep.subr.mxu0 0.0
    %1470 = vmatpush1.msra.mxu0 0.0
    %1471 = vmatprep.subr.mxu0 0.0
    %1472 = vmatpush1.msra.mxu0 0.0
    %1473 = vmatprep.subr.mxu0 0.0
    %1474 = vmatpush1.msra.mxu0 0.0
    %1475 = vmatprep.subr.mxu0 0.0
    %1476 = vmatpush1.msra.mxu0 0.0
    %1477 = vmatprep.subr.mxu0 0.0
    %1478 = vmatpush1.msra.mxu0 0.0
    %1479 = vmatprep.subr.mxu0 0.0
    %1480 = vmatpush1.msra.mxu0 0.0
    %1481 = vmatprep.mubr.f32.mxu0 0.0
    %1482 = vmatmul.mubr.f32.gmra.mrb[0].mxu0 %v1415
    %v1483 = vpop.f32.mrb[0].mxu0
    %v1484 = vadd.f32 %v904, %v1483
    %v1485 = vpop.f32.mrb[0].mxu0
    %1486 = vdwg.mxu0
    %v1487 = vadd.f32 %v1484, %v1327
    %v1488 = vmul.f32 %v1487, 0.5
    %v1489 = vtanh.pop %v1488
    %v1490 = vmul.f32 %v1489, 0.5
    %v1491 = vadd.f32 %v1490, 0.5
    %v1492 = vtanh.pop %v1487
    %v1493 = vmul.f32 %v1491, %v1248
    %1495 = vrot.lane.b32.xlu0 %v1492, 64
    %v1496 = vpop.permute.xlu0 %1495
    %v1498 = vmul.f32 %v1491, %v1496
    %1500 = vrot.lane.b32.xlu0 %v1498, 32
    %v1501 = vpop.permute.xlu0 %1500
    %v1503 = vadd.f32 %v1493, %v1501
    %v1504 = vtanh.pop %v1503
    %1506 = vrot.lane.b32.xlu0 %v1504, 64
    %v1507 = vpop.permute.xlu0 %1506
    %v1509 = vmul.f32 %v1491, %v1507
    %1511 = vrot.lane.b32.xlu0 %v1509, 32
    %v1512 = vpop.permute.xlu0 %1511
    %v1513 = vsel %vm113, %v1512, 0
    %1515 = vmatprep.subr.mxu0 %v592
    %1516 = vmatpush1.msra.mxu0 %v591
    %1517 = vmatprep.subr.mxu0 %v594
    %1518 = vmatpush1.msra.mxu0 %v593
    %1519 = vmatprep.subr.mxu0 %v596
    %1520 = vmatpush1.msra.mxu0 %v595
    %1521 = vmatprep.subr.mxu0 %v598
    %1522 = vmatpush1.msra.mxu0 %v597
    %1523 = vmatprep.subr.mxu0 0.0
    %1524 = vmatpush1.msra.mxu0 0.0
    %1525 = vmatprep.subr.mxu0 0.0
    %1526 = vmatpush1.msra.mxu0 0.0
    %1527 = vmatprep.subr.mxu0 0.0
    %1528 = vmatpush1.msra.mxu0 0.0
    %1529 = vmatprep.subr.mxu0 0.0
    %1530 = vmatpush1.msra.mxu0 0.0
    %1531 = vmatprep.subr.mxu0 0.0
    %1532 = vmatpush1.msra.mxu0 0.0
    %1533 = vmatprep.subr.mxu0 0.0
    %1534 = vmatpush1.msra.mxu0 0.0
    %1535 = vmatprep.subr.mxu0 0.0
    %1536 = vmatpush1.msra.mxu0 0.0
    %1537 = vmatprep.subr.mxu0 0.0
    %1538 = vmatpush1.msra.mxu0 0.0
    %1539 = vmatprep.subr.mxu0 0.0
    %1540 = vmatpush1.msra.mxu0 0.0
    %1541 = vmatprep.subr.mxu0 0.0
    %1542 = vmatpush1.msra.mxu0 0.0
    %1543 = vmatprep.subr.mxu0 0.0
    %1544 = vmatpush1.msra.mxu0 0.0
    %1545 = vmatprep.subr.mxu0 0.0
    %1546 = vmatpush1.msra.mxu0 0.0
    %1547 = vmatprep.subr.mxu0 0.0
    %1548 = vmatpush1.msra.mxu0 0.0
    %1549 = vmatprep.subr.mxu0 0.0
    %1550 = vmatpush1.msra.mxu0 0.0
    %1551 = vmatprep.subr.mxu0 0.0
    %1552 = vmatpush1.msra.mxu0 0.0
    %1553 = vmatprep.subr.mxu0 0.0
    %1554 = vmatpush1.msra.mxu0 0.0
    %1555 = vmatprep.subr.mxu0 0.0
    %1556 = vmatpush1.msra.mxu0 0.0
    %1557 = vmatprep.subr.mxu0 0.0
    %1558 = vmatpush1.msra.mxu0 0.0
    %1559 = vmatprep.subr.mxu0 0.0
    %1560 = vmatpush1.msra.mxu0 0.0
    %1561 = vmatprep.subr.mxu0 0.0
    %1562 = vmatpush1.msra.mxu0 0.0
    %1563 = vmatprep.subr.mxu0 0.0
    %1564 = vmatpush1.msra.mxu0 0.0
    %1565 = vmatprep.subr.mxu0 0.0
    %1566 = vmatpush1.msra.mxu0 0.0
    %1567 = vmatprep.subr.mxu0 0.0
    %1568 = vmatpush1.msra.mxu0 0.0
    %1569 = vmatprep.subr.mxu0 0.0
    %1570 = vmatpush1.msra.mxu0 0.0
    %1571 = vmatprep.subr.mxu0 0.0
    %1572 = vmatpush1.msra.mxu0 0.0
    %1573 = vmatprep.subr.mxu0 0.0
    %1574 = vmatpush1.msra.mxu0 0.0
    %1575 = vmatprep.subr.mxu0 0.0
    %1576 = vmatpush1.msra.mxu0 0.0
    %1577 = vmatprep.subr.mxu0 0.0
    %1578 = vmatpush1.msra.mxu0 0.0
    %1579 = vmatprep.mubr.f32.mxu0 0.0
    %1580 = vmatmul.mubr.f32.gmra.mrb[0].mxu0 %v1513
    %v1581 = vpop.f32.mrb[0].mxu0
    %v1582 = vadd.f32 0.0, %v1581
    %v1583 = vpop.f32.mrb[0].mxu0
    %v1584 = vadd.f32 0.0, %v1583
    %1585 = vdwg.mxu0
    %v1586 = vadd.f32 %v1584, %v630
    %v1587 = vmax.f32 %v1586, 0.0
    %v1589 = vsel %vm113, %v1587, 0
    %1591 = vmatprep.subr.mxu0 0.0
    %1592 = vmatpush1.msra.mxu0 %v599
    %1593 = vmatprep.subr.mxu0 0.0
    %1594 = vmatpush1.msra.mxu0 %v600
    %1595 = vmatprep.subr.mxu0 0.0
    %1596 = vmatpush1.msra.mxu0 %v601
    %1597 = vmatprep.subr.mxu0 0.0
    %1598 = vmatpush1.msra.mxu0 %v602
    %1599 = vmatprep.subr.mxu0 0.0
    %1600 = vmatpush1.msra.mxu0 0.0
    %1601 = vmatprep.subr.mxu0 0.0
    %1602 = vmatpush1.msra.mxu0 0.0
    %1603 = vmatprep.subr.mxu0 0.0
    %1604 = vmatpush1.msra.mxu0 0.0
    %1605 = vmatprep.subr.mxu0 0.0
    %1606 = vmatpush1.msra.mxu0 0.0
    %1607 = vmatprep.subr.mxu0 0.0
    %1608 = vmatpush1.msra.mxu0 0.0
    %1609 = vmatprep.subr.mxu0 0.0
    %1610 = vmatpush1.msra.mxu0 0.0
    %1611 = vmatprep.subr.mxu0 0.0
    %1612 = vmatpush1.msra.mxu0 0.0
    %1613 = vmatprep.subr.mxu0 0.0
    %1614 = vmatpush1.msra.mxu0 0.0
    %1615 = vmatprep.subr.mxu0 0.0
    %1616 = vmatpush1.msra.mxu0 0.0
    %1617 = vmatprep.subr.mxu0 0.0
    %1618 = vmatpush1.msra.mxu0 0.0
    %1619 = vmatprep.subr.mxu0 0.0
    %1620 = vmatpush1.msra.mxu0 0.0
    %1621 = vmatprep.subr.mxu0 0.0
    %1622 = vmatpush1.msra.mxu0 0.0
    %1623 = vmatprep.subr.mxu0 0.0
    %1624 = vmatpush1.msra.mxu0 0.0
    %1625 = vmatprep.subr.mxu0 0.0
    %1626 = vmatpush1.msra.mxu0 0.0
    %1627 = vmatprep.subr.mxu0 0.0
    %1628 = vmatpush1.msra.mxu0 0.0
    %1629 = vmatprep.subr.mxu0 0.0
    %1630 = vmatpush1.msra.mxu0 0.0
    %1631 = vmatprep.subr.mxu0 0.0
    %1632 = vmatpush1.msra.mxu0 0.0
    %1633 = vmatprep.subr.mxu0 0.0
    %1634 = vmatpush1.msra.mxu0 0.0
    %1635 = vmatprep.subr.mxu0 0.0
    %1636 = vmatpush1.msra.mxu0 0.0
    %1637 = vmatprep.subr.mxu0 0.0
    %1638 = vmatpush1.msra.mxu0 0.0
    %1639 = vmatprep.subr.mxu0 0.0
    %1640 = vmatpush1.msra.mxu0 0.0
    %1641 = vmatprep.subr.mxu0 0.0
    %1642 = vmatpush1.msra.mxu0 0.0
    %1643 = vmatprep.subr.mxu0 0.0
    %1644 = vmatpush1.msra.mxu0 0.0
    %1645 = vmatprep.subr.mxu0 0.0
    %1646 = vmatpush1.msra.mxu0 0.0
    %1647 = vmatprep.subr.mxu0 0.0
    %1648 = vmatpush1.msra.mxu0 0.0
    %1649 = vmatprep.subr.mxu0 0.0
    %1650 = vmatpush1.msra.mxu0 0.0
    %1651 = vmatprep.subr.mxu0 0.0
    %1652 = vmatpush1.msra.mxu0 0.0
    %1653 = vmatprep.subr.mxu0 0.0
    %1654 = vmatpush1.msra.mxu0 0.0
    %1655 = vmatprep.mubr.f32.mxu0 0.0
    %1656 = vmatmul.mubr.f32.gmra.mrb[0].mxu0 %v1589
    %v1657 = vpop.f32.mrb[0].mxu0
    %v1658 = vadd.f32 %v637, %v1657
    %v1659 = vpop.f32.mrb[0].mxu0
    %1660 = vdwg.mxu0
    %s1661 = scalar_lea.vmem [#allocation14], 4
    %1662 = vst.msk [vmem:[%s1661] sm:$0x3] %vm1150, %v1658
    %v1663 = vsel %vm1150, %v1658, -inf
    %1664 = vmax.xlane.f32.xlu0 %v1663
    %v1665 = vpop.xlane.xlu0 %1664
    %vm1666 = vcmp.eq.f32.partialorder %v1658, %v1665
    %v1667 = vsel %vm1666, 1, 0
    %v1668 = vcvt.s32.f32 %v1667
    %v1670 = vsel %vm1158, %v1668, 0
    %1672 = vmatprep.subr.mxu0 0.0
    %1673 = vmatpush1.msra.mxu0 %v609
    %1674 = vmatprep.subr.mxu0 0.0
    %1675 = vmatpush1.msra.mxu0 %v610
    %1676 = vmatprep.subr.mxu0 0.0
    %1677 = vmatpush1.msra.mxu0 0.0
    %1678 = vmatprep.subr.mxu0 0.0
    %1679 = vmatpush1.msra.mxu0 0.0
    %1680 = vmatprep.subr.mxu0 0.0
    %1681 = vmatpush1.msra.mxu0 0.0
    %1682 = vmatprep.subr.mxu0 0.0
    %1683 = vmatpush1.msra.mxu0 0.0
    %1684 = vmatprep.subr.mxu0 0.0
    %1685 = vmatpush1.msra.mxu0 0.0
    %1686 = vmatprep.subr.mxu0 0.0
    %1687 = vmatpush1.msra.mxu0 0.0
    %1688 = vmatprep.subr.mxu0 0.0
    %1689 = vmatpush1.msra.mxu0 0.0
    %1690 = vmatprep.subr.mxu0 0.0
    %1691 = vmatpush1.msra.mxu0 0.0
    %1692 = vmatprep.subr.mxu0 0.0
    %1693 = vmatpush1.msra.mxu0 0.0
    %1694 = vmatprep.subr.mxu0 0.0
    %1695 = vmatpush1.msra.mxu0 0.0
    %1696 = vmatprep.subr.mxu0 0.0
    %1697 = vmatpush1.msra.mxu0 0.0
    %1698 = vmatprep.subr.mxu0 0.0
    %1699 = vmatpush1.msra.mxu0 0.0
    %1700 = vmatprep.subr.mxu0 0.0
    %1701 = vmatpush1.msra.mxu0 0.0
    %1702 = vmatprep.subr.mxu0 0.0
    %1703 = vmatpush1.msra.mxu0 0.0
    %1704 = vmatprep.subr.mxu0 0.0
    %1705 = vmatpush1.msra.mxu0 0.0
    %1706 = vmatprep.subr.mxu0 0.0
    %1707 = vmatpush1.msra.mxu0 0.0
    %1708 = vmatprep.subr.mxu0 0.0
    %1709 = vmatpush1.msra.mxu0 0.0
    %1710 = vmatprep.subr.mxu0 0.0
    %1711 = vmatpush1.msra.mxu0 0.0
    %1712 = vmatprep.subr.mxu0 0.0
    %1713 = vmatpush1.msra.mxu0 0.0
    %1714 = vmatprep.subr.mxu0 0.0
    %1715 = vmatpush1.msra.mxu0 0.0
    %1716 = vmatprep.subr.mxu0 0.0
    %1717 = vmatpush1.msra.mxu0 0.0
    %1718 = vmatprep.subr.mxu0 0.0
    %1719 = vmatpush1.msra.mxu0 0.0
    %1720 = vmatprep.subr.mxu0 0.0
    %1721 = vmatpush1.msra.mxu0 0.0
    %1722 = vmatprep.subr.mxu0 0.0
    %1723 = vmatpush1.msra.mxu0 0.0
    %1724 = vmatprep.subr.mxu0 0.0
    %1725 = vmatpush1.msra.mxu0 0.0
    %1726 = vmatprep.subr.mxu0 0.0
    %1727 = vmatpush1.msra.mxu0 0.0
    %1728 = vmatprep.subr.mxu0 0.0
    %1729 = vmatpush1.msra.mxu0 0.0
    %1730 = vmatprep.subr.mxu0 0.0
    %1731 = vmatpush1.msra.mxu0 0.0
    %1732 = vmatprep.subr.mxu0 0.0
    %1733 = vmatpush1.msra.mxu0 0.0
    %1734 = vmatprep.subr.mxu0 0.0
    %1735 = vmatpush1.msra.mxu0 0.0
    %1736 = vmatprep.mubr.f32.mxu0 0.0
    %1737 = vmatmul.mubr.f32.gmra.mrb[0].mxu0 %v1670
    %v1738 = vpop.f32.mrb[0].mxu0
    %v1739 = vadd.f32 %v904, %v1738
    %v1740 = vpop.f32.mrb[0].mxu0
    %1741 = vdwg.mxu0
    %v1742 = vadd.f32 %v1739, %v1582
    %v1743 = vmul.f32 %v1742, 0.5
    %v1744 = vtanh.pop %v1743
    %v1745 = vmul.f32 %v1744, 0.5
    %v1746 = vadd.f32 %v1745, 0.5
    %v1747 = vtanh.pop %v1742
    %v1748 = vmul.f32 %v1746, %v1503
    %1750 = vrot.lane.b32.xlu0 %v1747, 64
    %v1751 = vpop.permute.xlu0 %1750
    %v1753 = vmul.f32 %v1746, %v1751
    %1755 = vrot.lane.b32.xlu0 %v1753, 32
    %v1756 = vpop.permute.xlu0 %1755
    %v1758 = vadd.f32 %v1748, %v1756
    %v1759 = vtanh.pop %v1758
    %1761 = vrot.lane.b32.xlu0 %v1759, 64
    %v1762 = vpop.permute.xlu0 %1761
    %v1764 = vmul.f32 %v1746, %v1762
    %1766 = vrot.lane.b32.xlu0 %v1764, 32
    %v1767 = vpop.permute.xlu0 %1766
    %v1768 = vsel %vm113, %v1767, 0
    %1770 = vmatprep.subr.mxu0 %v592
    %1771 = vmatpush1.msra.mxu0 %v591
    %1772 = vmatprep.subr.mxu0 %v594
    %1773 = vmatpush1.msra.mxu0 %v593
    %1774 = vmatprep.subr.mxu0 %v596
    %1775 = vmatpush1.msra.mxu0 %v595
    %1776 = vmatprep.subr.mxu0 %v598
    %1777 = vmatpush1.msra.mxu0 %v597
    %1778 = vmatprep.subr.mxu0 0.0
    %1779 = vmatpush1.msra.mxu0 0.0
    %1780 = vmatprep.subr.mxu0 0.0
    %1781 = vmatpush1.msra.mxu0 0.0
    %1782 = vmatprep.subr.mxu0 0.0
    %1783 = vmatpush1.msra.mxu0 0.0
    %1784 = vmatprep.subr.mxu0 0.0
    %1785 = vmatpush1.msra.mxu0 0.0
    %1786 = vmatprep.subr.mxu0 0.0
    %1787 = vmatpush1.msra.mxu0 0.0
    %1788 = vmatprep.subr.mxu0 0.0
    %1789 = vmatpush1.msra.mxu0 0.0
    %1790 = vmatprep.subr.mxu0 0.0
    %1791 = vmatpush1.msra.mxu0 0.0
    %1792 = vmatprep.subr.mxu0 0.0
    %1793 = vmatpush1.msra.mxu0 0.0
    %1794 = vmatprep.subr.mxu0 0.0
    %1795 = vmatpush1.msra.mxu0 0.0
    %1796 = vmatprep.subr.mxu0 0.0
    %1797 = vmatpush1.msra.mxu0 0.0
    %1798 = vmatprep.subr.mxu0 0.0
    %1799 = vmatpush1.msra.mxu0 0.0
    %1800 = vmatprep.subr.mxu0 0.0
    %1801 = vmatpush1.msra.mxu0 0.0
    %1802 = vmatprep.subr.mxu0 0.0
    %1803 = vmatpush1.msra.mxu0 0.0
    %1804 = vmatprep.subr.mxu0 0.0
    %1805 = vmatpush1.msra.mxu0 0.0
    %1806 = vmatprep.subr.mxu0 0.0
    %1807 = vmatpush1.msra.mxu0 0.0
    %1808 = vmatprep.subr.mxu0 0.0
    %1809 = vmatpush1.msra.mxu0 0.0
    %1810 = vmatprep.subr.mxu0 0.0
    %1811 = vmatpush1.msra.mxu0 0.0
    %1812 = vmatprep.subr.mxu0 0.0
    %1813 = vmatpush1.msra.mxu0 0.0
    %1814 = vmatprep.subr.mxu0 0.0
    %1815 = vmatpush1.msra.mxu0 0.0
    %1816 = vmatprep.subr.mxu0 0.0
    %1817 = vmatpush1.msra.mxu0 0.0
    %1818 = vmatprep.subr.mxu0 0.0
    %1819 = vmatpush1.msra.mxu0 0.0
    %1820 = vmatprep.subr.mxu0 0.0
    %1821 = vmatpush1.msra.mxu0 0.0
    %1822 = vmatprep.subr.mxu0 0.0
    %1823 = vmatpush1.msra.mxu0 0.0
    %1824 = vmatprep.subr.mxu0 0.0
    %1825 = vmatpush1.msra.mxu0 0.0
    %1826 = vmatprep.subr.mxu0 0.0
    %1827 = vmatpush1.msra.mxu0 0.0
    %1828 = vmatprep.subr.mxu0 0.0
    %1829 = vmatpush1.msra.mxu0 0.0
    %1830 = vmatprep.subr.mxu0 0.0
    %1831 = vmatpush1.msra.mxu0 0.0
    %1832 = vmatprep.subr.mxu0 0.0
    %1833 = vmatpush1.msra.mxu0 0.0
    %1834 = vmatprep.mubr.f32.mxu0 0.0
    %1835 = vmatmul.mubr.f32.gmra.mrb[0].mxu0 %v1768
    %v1836 = vpop.f32.mrb[0].mxu0
    %v1837 = vadd.f32 0.0, %v1836
    %v1838 = vpop.f32.mrb[0].mxu0
    %v1839 = vadd.f32 0.0, %v1838
    %1840 = vdwg.mxu0
    %v1841 = vadd.f32 %v1839, %v630
    %v1842 = vmax.f32 %v1841, 0.0
    %v1844 = vsel %vm113, %v1842, 0
    %1846 = vmatprep.subr.mxu0 0.0
    %1847 = vmatpush1.msra.mxu0 %v599
    %1848 = vmatprep.subr.mxu0 0.0
    %1849 = vmatpush1.msra.mxu0 %v600
    %1850 = vmatprep.subr.mxu0 0.0
    %1851 = vmatpush1.msra.mxu0 %v601
    %1852 = vmatprep.subr.mxu0 0.0
    %1853 = vmatpush1.msra.mxu0 %v602
    %1854 = vmatprep.subr.mxu0 0.0
    %1855 = vmatpush1.msra.mxu0 0.0
    %1856 = vmatprep.subr.mxu0 0.0
    %1857 = vmatpush1.msra.mxu0 0.0
    %1858 = vmatprep.subr.mxu0 0.0
    %1859 = vmatpush1.msra.mxu0 0.0
    %1860 = vmatprep.subr.mxu0 0.0
    %1861 = vmatpush1.msra.mxu0 0.0
    %1862 = vmatprep.subr.mxu0 0.0
    %1863 = vmatpush1.msra.mxu0 0.0
    %1864 = vmatprep.subr.mxu0 0.0
    %1865 = vmatpush1.msra.mxu0 0.0
    %1866 = vmatprep.subr.mxu0 0.0
    %1867 = vmatpush1.msra.mxu0 0.0
    %1868 = vmatprep.subr.mxu0 0.0
    %1869 = vmatpush1.msra.mxu0 0.0
    %1870 = vmatprep.subr.mxu0 0.0
    %1871 = vmatpush1.msra.mxu0 0.0
    %1872 = vmatprep.subr.mxu0 0.0
    %1873 = vmatpush1.msra.mxu0 0.0
    %1874 = vmatprep.subr.mxu0 0.0
    %1875 = vmatpush1.msra.mxu0 0.0
    %1876 = vmatprep.subr.mxu0 0.0
    %1877 = vmatpush1.msra.mxu0 0.0
    %1878 = vmatprep.subr.mxu0 0.0
    %1879 = vmatpush1.msra.mxu0 0.0
    %1880 = vmatprep.subr.mxu0 0.0
    %1881 = vmatpush1.msra.mxu0 0.0
    %1882 = vmatprep.subr.mxu0 0.0
    %1883 = vmatpush1.msra.mxu0 0.0
    %1884 = vmatprep.subr.mxu0 0.0
    %1885 = vmatpush1.msra.mxu0 0.0
    %1886 = vmatprep.subr.mxu0 0.0
    %1887 = vmatpush1.msra.mxu0 0.0
    %1888 = vmatprep.subr.mxu0 0.0
    %1889 = vmatpush1.msra.mxu0 0.0
    %1890 = vmatprep.subr.mxu0 0.0
    %1891 = vmatpush1.msra.mxu0 0.0
    %1892 = vmatprep.subr.mxu0 0.0
    %1893 = vmatpush1.msra.mxu0 0.0
    %1894 = vmatprep.subr.mxu0 0.0
    %1895 = vmatpush1.msra.mxu0 0.0
    %1896 = vmatprep.subr.mxu0 0.0
    %1897 = vmatpush1.msra.mxu0 0.0
    %1898 = vmatprep.subr.mxu0 0.0
    %1899 = vmatpush1.msra.mxu0 0.0
    %1900 = vmatprep.subr.mxu0 0.0
    %1901 = vmatpush1.msra.mxu0 0.0
    %1902 = vmatprep.subr.mxu0 0.0
    %1903 = vmatpush1.msra.mxu0 0.0
    %1904 = vmatprep.subr.mxu0 0.0
    %1905 = vmatpush1.msra.mxu0 0.0
    %1906 = vmatprep.subr.mxu0 0.0
    %1907 = vmatpush1.msra.mxu0 0.0
    %1908 = vmatprep.subr.mxu0 0.0
    %1909 = vmatpush1.msra.mxu0 0.0
    %1910 = vmatprep.mubr.f32.mxu0 0.0
    %1911 = vmatmul.mubr.f32.gmra.mrb[0].mxu0 %v1844
    %v1912 = vpop.f32.mrb[0].mxu0
    %v1913 = vadd.f32 %v637, %v1912
    %v1914 = vpop.f32.mrb[0].mxu0
    %1915 = vdwg.mxu0
    %s1916 = scalar_lea.vmem [#allocation14], 6
    %1917 = vst.msk [vmem:[%s1916] sm:$0x3] %vm1150, %v1913
    %v1918 = vsel %vm1150, %v1913, -inf
    %1919 = vmax.xlane.f32.xlu0 %v1918
    %v1920 = vpop.xlane.xlu0 %1919
    %vm1921 = vcmp.eq.f32.partialorder %v1913, %v1920
    %v1922 = vsel %vm1921, 1, 0
    %v1923 = vcvt.s32.f32 %v1922
    %v1925 = vsel %vm1158, %v1923, 0
    %1927 = vmatprep.subr.mxu0 0.0
    %1928 = vmatpush1.msra.mxu0 %v609
    %1929 = vmatprep.subr.mxu0 0.0
    %1930 = vmatpush1.msra.mxu0 %v610
    %1931 = vmatprep.subr.mxu0 0.0
    %1932 = vmatpush1.msra.mxu0 0.0
    %1933 = vmatprep.subr.mxu0 0.0
    %1934 = vmatpush1.msra.mxu0 0.0
    %1935 = vmatprep.subr.mxu0 0.0
    %1936 = vmatpush1.msra.mxu0 0.0
    %1937 = vmatprep.subr.mxu0 0.0
    %1938 = vmatpush1.msra.mxu0 0.0
    %1939 = vmatprep.subr.mxu0 0.0
    %1940 = vmatpush1.msra.mxu0 0.0
    %1941 = vmatprep.subr.mxu0 0.0
    %1942 = vmatpush1.msra.mxu0 0.0
    %1943 = vmatprep.subr.mxu0 0.0
    %1944 = vmatpush1.msra.mxu0 0.0
    %1945 = vmatprep.subr.mxu0 0.0
    %1946 = vmatpush1.msra.mxu0 0.0
    %1947 = vmatprep.subr.mxu0 0.0
    %1948 = vmatpush1.msra.mxu0 0.0
    %1949 = vmatprep.subr.mxu0 0.0
    %1950 = vmatpush1.msra.mxu0 0.0
    %1951 = vmatprep.subr.mxu0 0.0
    %1952 = vmatpush1.msra.mxu0 0.0
    %1953 = vmatprep.subr.mxu0 0.0
    %1954 = vmatpush1.msra.mxu0 0.0
    %1955 = vmatprep.subr.mxu0 0.0
    %1956 = vmatpush1.msra.mxu0 0.0
    %1957 = vmatprep.subr.mxu0 0.0
    %1958 = vmatpush1.msra.mxu0 0.0
    %1959 = vmatprep.subr.mxu0 0.0
    %1960 = vmatpush1.msra.mxu0 0.0
    %1961 = vmatprep.subr.mxu0 0.0
    %1962 = vmatpush1.msra.mxu0 0.0
    %1963 = vmatprep.subr.mxu0 0.0
    %1964 = vmatpush1.msra.mxu0 0.0
    %1965 = vmatprep.subr.mxu0 0.0
    %1966 = vmatpush1.msra.mxu0 0.0
    %1967 = vmatprep.subr.mxu0 0.0
    %1968 = vmatpush1.msra.mxu0 0.0
    %1969 = vmatprep.subr.mxu0 0.0
    %1970 = vmatpush1.msra.mxu0 0.0
    %1971 = vmatprep.subr.mxu0 0.0
    %1972 = vmatpush1.msra.mxu0 0.0
    %1973 = vmatprep.subr.mxu0 0.0
    %1974 = vmatpush1.msra.mxu0 0.0
    %1975 = vmatprep.subr.mxu0 0.0
    %1976 = vmatpush1.msra.mxu0 0.0
    %1977 = vmatprep.subr.mxu0 0.0
    %1978 = vmatpush1.msra.mxu0 0.0
    %1979 = vmatprep.subr.mxu0 0.0
    %1980 = vmatpush1.msra.mxu0 0.0
    %1981 = vmatprep.subr.mxu0 0.0
    %1982 = vmatpush1.msra.mxu0 0.0
    %1983 = vmatprep.subr.mxu0 0.0
    %1984 = vmatpush1.msra.mxu0 0.0
    %1985 = vmatprep.subr.mxu0 0.0
    %1986 = vmatpush1.msra.mxu0 0.0
    %1987 = vmatprep.subr.mxu0 0.0
    %1988 = vmatpush1.msra.mxu0 0.0
    %1989 = vmatprep.subr.mxu0 0.0
    %1990 = vmatpush1.msra.mxu0 0.0
    %1991 = vmatprep.mubr.f32.mxu0 0.0
    %1992 = vmatmul.mubr.f32.gmra.mrb[0].mxu0 %v1925
    %v1993 = vpop.f32.mrb[0].mxu0
    %v1994 = vadd.f32 %v904, %v1993
    %v1995 = vpop.f32.mrb[0].mxu0
    %1996 = vdwg.mxu0
    %v1997 = vadd.f32 %v902, %v734
    %v1998 = vmul.f32 %v1997, 0.5
    %v1999 = vtanh.pop %v1998
    %v2000 = vmul.f32 %v1999, 0.5
    %v2001 = vadd.f32 %v2000, 0.5
    %v2002 = vtanh.pop %v1997
    %v2003 = vmul.f32 %v2001, %v655
    %2005 = vrot.lane.b32.xlu0 %v2002, 64
    %v2006 = vpop.permute.xlu0 %2005
    %v2008 = vmul.f32 %v2001, %v2006
    %2010 = vrot.lane.b32.xlu0 %v2008, 32
    %v2011 = vpop.permute.xlu0 %2010
    %v2013 = vadd.f32 %v2003, %v2011
    %v2014 = vtanh.pop %v2013
    %2016 = vrot.lane.b32.xlu0 %v2014, 64
    %v2017 = vpop.permute.xlu0 %2016
    %v2019 = vmul.f32 %v2001, %v2017
    %2021 = vrot.lane.b32.xlu0 %v2019, 32
    %v2022 = vpop.permute.xlu0 %2021
    %v2023 = vsel %vm113, %v2022, 0
    %2025 = vmatprep.subr.mxu0 %v580
    %2026 = vmatpush1.msra.mxu0 %v579
    %2027 = vmatprep.subr.mxu0 %v582
    %2028 = vmatpush1.msra.mxu0 %v581
    %2029 = vmatprep.subr.mxu0 %v584
    %2030 = vmatpush1.msra.mxu0 %v583
    %2031 = vmatprep.subr.mxu0 %v586
    %2032 = vmatpush1.msra.mxu0 %v585
    %2033 = vmatprep.subr.mxu0 0.0
    %2034 = vmatpush1.msra.mxu0 0.0
    %2035 = vmatprep.subr.mxu0 0.0
    %2036 = vmatpush1.msra.mxu0 0.0
    %2037 = vmatprep.subr.mxu0 0.0
    %2038 = vmatpush1.msra.mxu0 0.0
    %2039 = vmatprep.subr.mxu0 0.0
    %2040 = vmatpush1.msra.mxu0 0.0
    %2041 = vmatprep.subr.mxu0 0.0
    %2042 = vmatpush1.msra.mxu0 0.0
    %2043 = vmatprep.subr.mxu0 0.0
    %2044 = vmatpush1.msra.mxu0 0.0
    %2045 = vmatprep.subr.mxu0 0.0
    %2046 = vmatpush1.msra.mxu0 0.0
    %2047 = vmatprep.subr.mxu0 0.0
    %2048 = vmatpush1.msra.mxu0 0.0
    %2049 = vmatprep.subr.mxu0 0.0
    %2050 = vmatpush1.msra.mxu0 0.0
    %2051 = vmatprep.subr.mxu0 0.0
    %2052 = vmatpush1.msra.mxu0 0.0
    %2053 = vmatprep.subr.mxu0 0.0
    %2054 = vmatpush1.msra.mxu0 0.0
    %2055 = vmatprep.subr.mxu0 0.0
    %2056 = vmatpush1.msra.mxu0 0.0
    %2057 = vmatprep.subr.mxu0 0.0
    %2058 = vmatpush1.msra.mxu0 0.0
    %2059 = vmatprep.subr.mxu0 0.0
    %2060 = vmatpush1.msra.mxu0 0.0
    %2061 = vmatprep.subr.mxu0 0.0
    %2062 = vmatpush1.msra.mxu0 0.0
    %2063 = vmatprep.subr.mxu0 0.0
    %2064 = vmatpush1.msra.mxu0 0.0
    %2065 = vmatprep.subr.mxu0 0.0
    %2066 = vmatpush1.msra.mxu0 0.0
    %2067 = vmatprep.subr.mxu0 0.0
    %2068 = vmatpush1.msra.mxu0 0.0
    %2069 = vmatprep.subr.mxu0 0.0
    %2070 = vmatpush1.msra.mxu0 0.0
    %2071 = vmatprep.subr.mxu0 0.0
    %2072 = vmatpush1.msra.mxu0 0.0
    %2073 = vmatprep.subr.mxu0 0.0
    %2074 = vmatpush1.msra.mxu0 0.0
    %2075 = vmatprep.subr.mxu0 0.0
    %2076 = vmatpush1.msra.mxu0 0.0
    %2077 = vmatprep.subr.mxu0 0.0
    %2078 = vmatpush1.msra.mxu0 0.0
    %2079 = vmatprep.subr.mxu0 0.0
    %2080 = vmatpush1.msra.mxu0 0.0
    %2081 = vmatprep.subr.mxu0 0.0
    %2082 = vmatpush1.msra.mxu0 0.0
    %2083 = vmatprep.subr.mxu0 0.0
    %2084 = vmatpush1.msra.mxu0 0.0
    %2085 = vmatprep.subr.mxu0 0.0
    %2086 = vmatpush1.msra.mxu0 0.0
    %2087 = vmatprep.subr.mxu0 0.0
    %2088 = vmatpush1.msra.mxu0 0.0
    %2089 = vmatprep.mubr.f32.mxu0 0.0
    %2090 = vmatmul.mubr.f32.gmra.mrb[0].mxu0 %v2023
    %v2091 = vpop.f32.mrb[0].mxu0
    %v2092 = vadd.f32 0.0, %v2091
    %v2093 = vpop.f32.mrb[0].mxu0
    %v2094 = vadd.f32 0.0, %v2093
    %2095 = vdwg.mxu0
    %v2096 = vadd.f32 %v2094, %v616
    %v2097 = vmax.f32 %v2096, 0.0
    %v2099 = vsel %vm113, %v2097, 0
    %2101 = vmatprep.subr.mxu0 0.0
    %2102 = vmatpush1.msra.mxu0 %v587
    %2103 = vmatprep.subr.mxu0 0.0
    %2104 = vmatpush1.msra.mxu0 %v588
    %2105 = vmatprep.subr.mxu0 0.0
    %2106 = vmatpush1.msra.mxu0 %v589
    %2107 = vmatprep.subr.mxu0 0.0
    %2108 = vmatpush1.msra.mxu0 %v590
    %2109 = vmatprep.subr.mxu0 0.0
    %2110 = vmatpush1.msra.mxu0 0.0
    %2111 = vmatprep.subr.mxu0 0.0
    %2112 = vmatpush1.msra.mxu0 0.0
    %2113 = vmatprep.subr.mxu0 0.0
    %2114 = vmatpush1.msra.mxu0 0.0
    %2115 = vmatprep.subr.mxu0 0.0
    %2116 = vmatpush1.msra.mxu0 0.0
    %2117 = vmatprep.subr.mxu0 0.0
    %2118 = vmatpush1.msra.mxu0 0.0
    %2119 = vmatprep.subr.mxu0 0.0
    %2120 = vmatpush1.msra.mxu0 0.0
    %2121 = vmatprep.subr.mxu0 0.0
    %2122 = vmatpush1.msra.mxu0 0.0
    %2123 = vmatprep.subr.mxu0 0.0
    %2124 = vmatpush1.msra.mxu0 0.0
    %2125 = vmatprep.subr.mxu0 0.0
    %2126 = vmatpush1.msra.mxu0 0.0
    %2127 = vmatprep.subr.mxu0 0.0
    %2128 = vmatpush1.msra.mxu0 0.0
    %2129 = vmatprep.subr.mxu0 0.0
    %2130 = vmatpush1.msra.mxu0 0.0
    %2131 = vmatprep.subr.mxu0 0.0
    %2132 = vmatpush1.msra.mxu0 0.0
    %2133 = vmatprep.subr.mxu0 0.0
    %2134 = vmatpush1.msra.mxu0 0.0
    %2135 = vmatprep.subr.mxu0 0.0
    %2136 = vmatpush1.msra.mxu0 0.0
    %2137 = vmatprep.subr.mxu0 0.0
    %2138 = vmatpush1.msra.mxu0 0.0
    %2139 = vmatprep.subr.mxu0 0.0
    %2140 = vmatpush1.msra.mxu0 0.0
    %2141 = vmatprep.subr.mxu0 0.0
    %2142 = vmatpush1.msra.mxu0 0.0
    %2143 = vmatprep.subr.mxu0 0.0
    %2144 = vmatpush1.msra.mxu0 0.0
    %2145 = vmatprep.subr.mxu0 0.0
    %2146 = vmatpush1.msra.mxu0 0.0
    %2147 = vmatprep.subr.mxu0 0.0
    %2148 = vmatpush1.msra.mxu0 0.0
    %2149 = vmatprep.subr.mxu0 0.0
    %2150 = vmatpush1.msra.mxu0 0.0
    %2151 = vmatprep.subr.mxu0 0.0
    %2152 = vmatpush1.msra.mxu0 0.0
    %2153 = vmatprep.subr.mxu0 0.0
    %2154 = vmatpush1.msra.mxu0 0.0
    %2155 = vmatprep.subr.mxu0 0.0
    %2156 = vmatpush1.msra.mxu0 0.0
    %2157 = vmatprep.subr.mxu0 0.0
    %2158 = vmatpush1.msra.mxu0 0.0
    %2159 = vmatprep.subr.mxu0 0.0
    %2160 = vmatpush1.msra.mxu0 0.0
    %2161 = vmatprep.subr.mxu0 0.0
    %2162 = vmatpush1.msra.mxu0 0.0
    %2163 = vmatprep.subr.mxu0 0.0
    %2164 = vmatpush1.msra.mxu0 0.0
    %2165 = vmatprep.mubr.f32.mxu0 0.0
    %2166 = vmatmul.mubr.f32.gmra.mrb[0].mxu0 %v2099
    %v2167 = vpop.f32.mrb[0].mxu0
    %v2168 = vadd.f32 %v623, %v2167
    %v2169 = vpop.f32.mrb[0].mxu0
    %2170 = vdwg.mxu0
    %s2171 = scalar_lea.vmem [#allocation12], 2
    %2172 = vst.msk [vmem:[%s2171] sm:$0x3] %vm813, %v2168
    %v2173 = vsel %vm813, %v2168, -inf
    %2174 = vmax.xlane.f32.xlu0 %v2173
    %v2175 = vpop.xlane.xlu0 %2174
    %vm2176 = vcmp.eq.f32.partialorder %v2168, %v2175
    %v2177 = vsel %vm2176, 1, 0
    %v2178 = vcvt.s32.f32 %v2177
    %v2180 = vsel %vm821, %v2178, 0
    %2182 = vmatprep.subr.mxu0 %v604
    %2183 = vmatpush1.msra.mxu0 %v603
    %2184 = vmatprep.subr.mxu0 %v830
    %2185 = vmatpush1.msra.mxu0 %v827
    %2186 = vmatprep.subr.mxu0 0.0
    %2187 = vmatpush1.msra.mxu0 0.0
    %2188 = vmatprep.subr.mxu0 0.0
    %2189 = vmatpush1.msra.mxu0 0.0
    %2190 = vmatprep.subr.mxu0 0.0
    %2191 = vmatpush1.msra.mxu0 0.0
    %2192 = vmatprep.subr.mxu0 0.0
    %2193 = vmatpush1.msra.mxu0 0.0
    %2194 = vmatprep.subr.mxu0 0.0
    %2195 = vmatpush1.msra.mxu0 0.0
    %2196 = vmatprep.subr.mxu0 0.0
    %2197 = vmatpush1.msra.mxu0 0.0
    %2198 = vmatprep.subr.mxu0 0.0
    %2199 = vmatpush1.msra.mxu0 0.0
    %2200 = vmatprep.subr.mxu0 0.0
    %2201 = vmatpush1.msra.mxu0 0.0
    %2202 = vmatprep.subr.mxu0 0.0
    %2203 = vmatpush1.msra.mxu0 0.0
    %2204 = vmatprep.subr.mxu0 0.0
    %2205 = vmatpush1.msra.mxu0 0.0
    %2206 = vmatprep.subr.mxu0 0.0
    %2207 = vmatpush1.msra.mxu0 0.0
    %2208 = vmatprep.subr.mxu0 0.0
    %2209 = vmatpush1.msra.mxu0 0.0
    %2210 = vmatprep.subr.mxu0 0.0
    %2211 = vmatpush1.msra.mxu0 0.0
    %2212 = vmatprep.subr.mxu0 0.0
    %2213 = vmatpush1.msra.mxu0 0.0
    %2214 = vmatprep.subr.mxu0 0.0
    %2215 = vmatpush1.msra.mxu0 0.0
    %2216 = vmatprep.subr.mxu0 0.0
    %2217 = vmatpush1.msra.mxu0 0.0
    %2218 = vmatprep.subr.mxu0 0.0
    %2219 = vmatpush1.msra.mxu0 0.0
    %2220 = vmatprep.subr.mxu0 0.0
    %2221 = vmatpush1.msra.mxu0 0.0
    %2222 = vmatprep.subr.mxu0 0.0
    %2223 = vmatpush1.msra.mxu0 0.0
    %2224 = vmatprep.subr.mxu0 0.0
    %2225 = vmatpush1.msra.mxu0 0.0
    %2226 = vmatprep.subr.mxu0 0.0
    %2227 = vmatpush1.msra.mxu0 0.0
    %2228 = vmatprep.subr.mxu0 0.0
    %2229 = vmatpush1.msra.mxu0 0.0
    %2230 = vmatprep.subr.mxu0 0.0
    %2231 = vmatpush1.msra.mxu0 0.0
    %2232 = vmatprep.subr.mxu0 0.0
    %2233 = vmatpush1.msra.mxu0 0.0
    %2234 = vmatprep.subr.mxu0 0.0
    %2235 = vmatpush1.msra.mxu0 0.0
    %2236 = vmatprep.subr.mxu0 0.0
    %2237 = vmatpush1.msra.mxu0 0.0
    %2238 = vmatprep.subr.mxu0 0.0
    %2239 = vmatpush1.msra.mxu0 0.0
    %2240 = vmatprep.subr.mxu0 0.0
    %2241 = vmatpush1.msra.mxu0 0.0
    %2242 = vmatprep.subr.mxu0 0.0
    %2243 = vmatpush1.msra.mxu0 0.0
    %2244 = vmatprep.subr.mxu0 0.0
    %2245 = vmatpush1.msra.mxu0 0.0
    %2246 = vmatprep.mubr.f32.mxu0 0.0
    %2247 = vmatmul.mubr.f32.gmra.mrb[0].mxu0 %v2180
    %v2248 = vpop.f32.mrb[0].mxu0
    %v2249 = vadd.f32 %v506, %v2248
    %v2250 = vpop.f32.mrb[0].mxu0
    %v2251 = vadd.f32 %v575, %v2250
    %2252 = vdwg.mxu0
    %v2253 = vadd.f32 %v1994, %v1837
    %v2254 = vmul.f32 %v2253, 0.5
    %v2255 = vtanh.pop %v2254
    %v2256 = vmul.f32 %v2255, 0.5
    %v2257 = vadd.f32 %v2256, 0.5
    %v2258 = vtanh.pop %v2253
    %v2259 = vmul.f32 %v2257, %v1758
    %2261 = vrot.lane.b32.xlu0 %v2258, 64
    %v2262 = vpop.permute.xlu0 %2261
    %v2264 = vmul.f32 %v2257, %v2262
    %2266 = vrot.lane.b32.xlu0 %v2264, 32
    %v2267 = vpop.permute.xlu0 %2266
    %v2269 = vadd.f32 %v2259, %v2267
    %v2270 = vtanh.pop %v2269
    %2272 = vrot.lane.b32.xlu0 %v2270, 64
    %v2273 = vpop.permute.xlu0 %2272
    %v2275 = vmul.f32 %v2257, %v2273
    %2277 = vrot.lane.b32.xlu0 %v2275, 32
    %v2278 = vpop.permute.xlu0 %2277
    %v2279 = vsel %vm113, %v2278, 0
    %2281 = vmatprep.subr.mxu0 %v592
    %2282 = vmatpush1.msra.mxu0 %v591
    %2283 = vmatprep.subr.mxu0 %v594
    %2284 = vmatpush1.msra.mxu0 %v593
    %2285 = vmatprep.subr.mxu0 %v596
    %2286 = vmatpush1.msra.mxu0 %v595
    %2287 = vmatprep.subr.mxu0 %v598
    %2288 = vmatpush1.msra.mxu0 %v597
    %2289 = vmatprep.subr.mxu0 0.0
    %2290 = vmatpush1.msra.mxu0 0.0
    %2291 = vmatprep.subr.mxu0 0.0
    %2292 = vmatpush1.msra.mxu0 0.0
    %2293 = vmatprep.subr.mxu0 0.0
    %2294 = vmatpush1.msra.mxu0 0.0
    %2295 = vmatprep.subr.mxu0 0.0
    %2296 = vmatpush1.msra.mxu0 0.0
    %2297 = vmatprep.subr.mxu0 0.0
    %2298 = vmatpush1.msra.mxu0 0.0
    %2299 = vmatprep.subr.mxu0 0.0
    %2300 = vmatpush1.msra.mxu0 0.0
    %2301 = vmatprep.subr.mxu0 0.0
    %2302 = vmatpush1.msra.mxu0 0.0
    %2303 = vmatprep.subr.mxu0 0.0
    %2304 = vmatpush1.msra.mxu0 0.0
    %2305 = vmatprep.subr.mxu0 0.0
    %2306 = vmatpush1.msra.mxu0 0.0
    %2307 = vmatprep.subr.mxu0 0.0
    %2308 = vmatpush1.msra.mxu0 0.0
    %2309 = vmatprep.subr.mxu0 0.0
    %2310 = vmatpush1.msra.mxu0 0.0
    %2311 = vmatprep.subr.mxu0 0.0
    %2312 = vmatpush1.msra.mxu0 0.0
    %2313 = vmatprep.subr.mxu0 0.0
    %2314 = vmatpush1.msra.mxu0 0.0
    %2315 = vmatprep.subr.mxu0 0.0
    %2316 = vmatpush1.msra.mxu0 0.0
    %2317 = vmatprep.subr.mxu0 0.0
    %2318 = vmatpush1.msra.mxu0 0.0
    %2319 = vmatprep.subr.mxu0 0.0
    %2320 = vmatpush1.msra.mxu0 0.0
    %2321 = vmatprep.subr.mxu0 0.0
    %2322 = vmatpush1.msra.mxu0 0.0
    %2323 = vmatprep.subr.mxu0 0.0
    %2324 = vmatpush1.msra.mxu0 0.0
    %2325 = vmatprep.subr.mxu0 0.0
    %2326 = vmatpush1.msra.mxu0 0.0
    %2327 = vmatprep.subr.mxu0 0.0
    %2328 = vmatpush1.msra.mxu0 0.0
    %2329 = vmatprep.subr.mxu0 0.0
    %2330 = vmatpush1.msra.mxu0 0.0
    %2331 = vmatprep.subr.mxu0 0.0
    %2332 = vmatpush1.msra.mxu0 0.0
    %2333 = vmatprep.subr.mxu0 0.0
    %2334 = vmatpush1.msra.mxu0 0.0
    %2335 = vmatprep.subr.mxu0 0.0
    %2336 = vmatpush1.msra.mxu0 0.0
    %2337 = vmatprep.subr.mxu0 0.0
    %2338 = vmatpush1.msra.mxu0 0.0
    %2339 = vmatprep.subr.mxu0 0.0
    %2340 = vmatpush1.msra.mxu0 0.0
    %2341 = vmatprep.subr.mxu0 0.0
    %2342 = vmatpush1.msra.mxu0 0.0
    %2343 = vmatprep.subr.mxu0 0.0
    %2344 = vmatpush1.msra.mxu0 0.0
    %2345 = vmatprep.mubr.f32.mxu0 0.0
    %2346 = vmatmul.mubr.f32.gmra.mrb[0].mxu0 %v2279
    %v2347 = vpop.f32.mrb[0].mxu0
    %v2348 = vadd.f32 0.0, %v2347
    %v2349 = vpop.f32.mrb[0].mxu0
    %v2350 = vadd.f32 0.0, %v2349
    %2351 = vdwg.mxu0
    %v2352 = vadd.f32 %v2350, %v630
    %v2353 = vmax.f32 %v2352, 0.0
    %v2355 = vsel %vm113, %v2353, 0
    %2357 = vmatprep.subr.mxu0 0.0
    %2358 = vmatpush1.msra.mxu0 %v599
    %2359 = vmatprep.subr.mxu0 0.0
    %2360 = vmatpush1.msra.mxu0 %v600
    %2361 = vmatprep.subr.mxu0 0.0
    %2362 = vmatpush1.msra.mxu0 %v601
    %2363 = vmatprep.subr.mxu0 0.0
    %2364 = vmatpush1.msra.mxu0 %v602
    %2365 = vmatprep.subr.mxu0 0.0
    %2366 = vmatpush1.msra.mxu0 0.0
    %2367 = vmatprep.subr.mxu0 0.0
    %2368 = vmatpush1.msra.mxu0 0.0
    %2369 = vmatprep.subr.mxu0 0.0
    %2370 = vmatpush1.msra.mxu0 0.0
    %2371 = vmatprep.subr.mxu0 0.0
    %2372 = vmatpush1.msra.mxu0 0.0
    %2373 = vmatprep.subr.mxu0 0.0
    %2374 = vmatpush1.msra.mxu0 0.0
    %2375 = vmatprep.subr.mxu0 0.0
    %2376 = vmatpush1.msra.mxu0 0.0
    %2377 = vmatprep.subr.mxu0 0.0
    %2378 = vmatpush1.msra.mxu0 0.0
    %2379 = vmatprep.subr.mxu0 0.0
    %2380 = vmatpush1.msra.mxu0 0.0
    %2381 = vmatprep.subr.mxu0 0.0
    %2382 = vmatpush1.msra.mxu0 0.0
    %2383 = vmatprep.subr.mxu0 0.0
    %2384 = vmatpush1.msra.mxu0 0.0
    %2385 = vmatprep.subr.mxu0 0.0
    %2386 = vmatpush1.msra.mxu0 0.0
    %2387 = vmatprep.subr.mxu0 0.0
    %2388 = vmatpush1.msra.mxu0 0.0
    %2389 = vmatprep.subr.mxu0 0.0
    %2390 = vmatpush1.msra.mxu0 0.0
    %2391 = vmatprep.subr.mxu0 0.0
    %2392 = vmatpush1.msra.mxu0 0.0
    %2393 = vmatprep.subr.mxu0 0.0
    %2394 = vmatpush1.msra.mxu0 0.0
    %2395 = vmatprep.subr.mxu0 0.0
    %2396 = vmatpush1.msra.mxu0 0.0
    %2397 = vmatprep.subr.mxu0 0.0
    %2398 = vmatpush1.msra.mxu0 0.0
    %2399 = vmatprep.subr.mxu0 0.0
    %2400 = vmatpush1.msra.mxu0 0.0
    %2401 = vmatprep.subr.mxu0 0.0
    %2402 = vmatpush1.msra.mxu0 0.0
    %2403 = vmatprep.subr.mxu0 0.0
    %2404 = vmatpush1.msra.mxu0 0.0
    %2405 = vmatprep.subr.mxu0 0.0
    %2406 = vmatpush1.msra.mxu0 0.0
    %2407 = vmatprep.subr.mxu0 0.0
    %2408 = vmatpush1.msra.mxu0 0.0
    %2409 = vmatprep.subr.mxu0 0.0
    %2410 = vmatpush1.msra.mxu0 0.0
    %2411 = vmatprep.subr.mxu0 0.0
    %2412 = vmatpush1.msra.mxu0 0.0
    %2413 = vmatprep.subr.mxu0 0.0
    %2414 = vmatpush1.msra.mxu0 0.0
    %2415 = vmatprep.subr.mxu0 0.0
    %2416 = vmatpush1.msra.mxu0 0.0
    %2417 = vmatprep.subr.mxu0 0.0
    %2418 = vmatpush1.msra.mxu0 0.0
    %2419 = vmatprep.subr.mxu0 0.0
    %2420 = vmatpush1.msra.mxu0 0.0
    %2421 = vmatprep.mubr.f32.mxu0 0.0
    %2422 = vmatmul.mubr.f32.gmra.mrb[0].mxu0 %v2355
    %v2423 = vpop.f32.mrb[0].mxu0
    %v2424 = vadd.f32 %v637, %v2423
    %v2425 = vpop.f32.mrb[0].mxu0
    %2426 = vdwg.mxu0
    %s2427 = scalar_lea.vmem [#allocation14], 8
    %2428 = vst.msk [vmem:[%s2427] sm:$0x3] %vm1150, %v2424
    %v2429 = vsel %vm1150, %v2424, -inf
    %2430 = vmax.xlane.f32.xlu0 %v2429
    %v2431 = vpop.xlane.xlu0 %2430
    %vm2432 = vcmp.eq.f32.partialorder %v2424, %v2431
    %v2433 = vsel %vm2432, 1, 0
    %v2434 = vcvt.s32.f32 %v2433
    %v2436 = vsel %vm1158, %v2434, 0
    %2438 = vmatprep.subr.mxu0 0.0
    %2439 = vmatpush1.msra.mxu0 %v609
    %2440 = vmatprep.subr.mxu0 0.0
    %2441 = vmatpush1.msra.mxu0 %v610
    %2442 = vmatprep.subr.mxu0 0.0
    %2443 = vmatpush1.msra.mxu0 0.0
    %2444 = vmatprep.subr.mxu0 0.0
    %2445 = vmatpush1.msra.mxu0 0.0
    %2446 = vmatprep.subr.mxu0 0.0
    %2447 = vmatpush1.msra.mxu0 0.0
    %2448 = vmatprep.subr.mxu0 0.0
    %2449 = vmatpush1.msra.mxu0 0.0
    %2450 = vmatprep.subr.mxu0 0.0
    %2451 = vmatpush1.msra.mxu0 0.0
    %2452 = vmatprep.subr.mxu0 0.0
    %2453 = vmatpush1.msra.mxu0 0.0
    %2454 = vmatprep.subr.mxu0 0.0
    %2455 = vmatpush1.msra.mxu0 0.0
    %2456 = vmatprep.subr.mxu0 0.0
    %2457 = vmatpush1.msra.mxu0 0.0
    %2458 = vmatprep.subr.mxu0 0.0
    %2459 = vmatpush1.msra.mxu0 0.0
    %2460 = vmatprep.subr.mxu0 0.0
    %2461 = vmatpush1.msra.mxu0 0.0
    %2462 = vmatprep.subr.mxu0 0.0
    %2463 = vmatpush1.msra.mxu0 0.0
    %2464 = vmatprep.subr.mxu0 0.0
    %2465 = vmatpush1.msra.mxu0 0.0
    %2466 = vmatprep.subr.mxu0 0.0
    %2467 = vmatpush1.msra.mxu0 0.0
    %2468 = vmatprep.subr.mxu0 0.0
    %2469 = vmatpush1.msra.mxu0 0.0
    %2470 = vmatprep.subr.mxu0 0.0
    %2471 = vmatpush1.msra.mxu0 0.0
    %2472 = vmatprep.subr.mxu0 0.0
    %2473 = vmatpush1.msra.mxu0 0.0
    %2474 = vmatprep.subr.mxu0 0.0
    %2475 = vmatpush1.msra.mxu0 0.0
    %2476 = vmatprep.subr.mxu0 0.0
    %2477 = vmatpush1.msra.mxu0 0.0
    %2478 = vmatprep.subr.mxu0 0.0
    %2479 = vmatpush1.msra.mxu0 0.0
    %2480 = vmatprep.subr.mxu0 0.0
    %2481 = vmatpush1.msra.mxu0 0.0
    %2482 = vmatprep.subr.mxu0 0.0
    %2483 = vmatpush1.msra.mxu0 0.0
    %2484 = vmatprep.subr.mxu0 0.0
    %2485 = vmatpush1.msra.mxu0 0.0
    %2486 = vmatprep.subr.mxu0 0.0
    %2487 = vmatpush1.msra.mxu0 0.0
    %2488 = vmatprep.subr.mxu0 0.0
    %2489 = vmatpush1.msra.mxu0 0.0
    %2490 = vmatprep.subr.mxu0 0.0
    %2491 = vmatpush1.msra.mxu0 0.0
    %2492 = vmatprep.subr.mxu0 0.0
    %2493 = vmatpush1.msra.mxu0 0.0
    %2494 = vmatprep.subr.mxu0 0.0
    %2495 = vmatpush1.msra.mxu0 0.0
    %2496 = vmatprep.subr.mxu0 0.0
    %2497 = vmatpush1.msra.mxu0 0.0
    %2498 = vmatprep.subr.mxu0 0.0
    %2499 = vmatpush1.msra.mxu0 0.0
    %2500 = vmatprep.subr.mxu0 0.0
    %2501 = vmatpush1.msra.mxu0 0.0
    %2502 = vmatprep.mubr.f32.mxu0 0.0
    %2503 = vmatmul.mubr.f32.gmra.mrb[0].mxu0 %v2436
    %v2504 = vpop.f32.mrb[0].mxu0
    %v2505 = vadd.f32 %v2251, %v2504
    %v2506 = vpop.f32.mrb[0].mxu0
    %2507 = vdwg.mxu0
    %v2508 = vadd.f32 %v2505, %v2348
    %v2509 = vmul.f32 %v2508, 0.5
    %v2510 = vtanh.pop %v2509
    %v2511 = vmul.f32 %v2510, 0.5
    %v2512 = vadd.f32 %v2511, 0.5
    %v2513 = vtanh.pop %v2508
    %v2514 = vmul.f32 %v2512, %v2269
    %2516 = vrot.lane.b32.xlu0 %v2513, 64
    %v2517 = vpop.permute.xlu0 %2516
    %v2519 = vmul.f32 %v2512, %v2517
    %2521 = vrot.lane.b32.xlu0 %v2519, 32
    %v2522 = vpop.permute.xlu0 %2521
    %v2524 = vadd.f32 %v2514, %v2522
    %v2525 = vtanh.pop %v2524
    %2527 = vrot.lane.b32.xlu0 %v2525, 64
    %v2528 = vpop.permute.xlu0 %2527
    %v2530 = vmul.f32 %v2512, %v2528
    %2532 = vrot.lane.b32.xlu0 %v2530, 32
    %v2533 = vpop.permute.xlu0 %2532
    %v2534 = vsel %vm113, %v2533, 0
    %2536 = vmatprep.subr.mxu0 %v592
    %2537 = vmatpush1.msra.mxu0 %v591
    %2538 = vmatprep.subr.mxu0 %v594
    %2539 = vmatpush1.msra.mxu0 %v593
    %2540 = vmatprep.subr.mxu0 %v596
    %2541 = vmatpush1.msra.mxu0 %v595
    %2542 = vmatprep.subr.mxu0 %v598
    %2543 = vmatpush1.msra.mxu0 %v597
    %2544 = vmatprep.subr.mxu0 0.0
    %2545 = vmatpush1.msra.mxu0 0.0
    %2546 = vmatprep.subr.mxu0 0.0
    %2547 = vmatpush1.msra.mxu0 0.0
    %2548 = vmatprep.subr.mxu0 0.0
    %2549 = vmatpush1.msra.mxu0 0.0
    %2550 = vmatprep.subr.mxu0 0.0
    %2551 = vmatpush1.msra.mxu0 0.0
    %2552 = vmatprep.subr.mxu0 0.0
    %2553 = vmatpush1.msra.mxu0 0.0
    %2554 = vmatprep.subr.mxu0 0.0
    %2555 = vmatpush1.msra.mxu0 0.0
    %2556 = vmatprep.subr.mxu0 0.0
    %2557 = vmatpush1.msra.mxu0 0.0
    %2558 = vmatprep.subr.mxu0 0.0
    %2559 = vmatpush1.msra.mxu0 0.0
    %2560 = vmatprep.subr.mxu0 0.0
    %2561 = vmatpush1.msra.mxu0 0.0
    %2562 = vmatprep.subr.mxu0 0.0
    %2563 = vmatpush1.msra.mxu0 0.0
    %2564 = vmatprep.subr.mxu0 0.0
    %2565 = vmatpush1.msra.mxu0 0.0
    %2566 = vmatprep.subr.mxu0 0.0
    %2567 = vmatpush1.msra.mxu0 0.0
    %2568 = vmatprep.subr.mxu0 0.0
    %2569 = vmatpush1.msra.mxu0 0.0
    %2570 = vmatprep.subr.mxu0 0.0
    %2571 = vmatpush1.msra.mxu0 0.0
    %2572 = vmatprep.subr.mxu0 0.0
    %2573 = vmatpush1.msra.mxu0 0.0
    %2574 = vmatprep.subr.mxu0 0.0
    %2575 = vmatpush1.msra.mxu0 0.0
    %2576 = vmatprep.subr.mxu0 0.0
    %2577 = vmatpush1.msra.mxu0 0.0
    %2578 = vmatprep.subr.mxu0 0.0
    %2579 = vmatpush1.msra.mxu0 0.0
    %2580 = vmatprep.subr.mxu0 0.0
    %2581 = vmatpush1.msra.mxu0 0.0
    %2582 = vmatprep.subr.mxu0 0.0
    %2583 = vmatpush1.msra.mxu0 0.0
    %2584 = vmatprep.subr.mxu0 0.0
    %2585 = vmatpush1.msra.mxu0 0.0
    %2586 = vmatprep.subr.mxu0 0.0
    %2587 = vmatpush1.msra.mxu0 0.0
    %2588 = vmatprep.subr.mxu0 0.0
    %2589 = vmatpush1.msra.mxu0 0.0
    %2590 = vmatprep.subr.mxu0 0.0
    %2591 = vmatpush1.msra.mxu0 0.0
    %2592 = vmatprep.subr.mxu0 0.0
    %2593 = vmatpush1.msra.mxu0 0.0
    %2594 = vmatprep.subr.mxu0 0.0
    %2595 = vmatpush1.msra.mxu0 0.0
    %2596 = vmatprep.subr.mxu0 0.0
    %2597 = vmatpush1.msra.mxu0 0.0
    %2598 = vmatprep.subr.mxu0 0.0
    %2599 = vmatpush1.msra.mxu0 0.0
    %2600 = vmatprep.mubr.f32.mxu0 0.0
    %2601 = vmatmul.mubr.f32.gmra.mrb[0].mxu0 %v2534
    %v2602 = vpop.f32.mrb[0].mxu0
    %v2603 = vadd.f32 0.0, %v2602
    %v2604 = vpop.f32.mrb[0].mxu0
    %v2605 = vadd.f32 0.0, %v2604
    %2606 = vdwg.mxu0
    %v2607 = vadd.f32 %v2605, %v630
    %v2608 = vmax.f32 %v2607, 0.0
    %v2610 = vsel %vm113, %v2608, 0
    %2612 = vmatprep.subr.mxu0 0.0
    %2613 = vmatpush1.msra.mxu0 %v599
    %2614 = vmatprep.subr.mxu0 0.0
    %2615 = vmatpush1.msra.mxu0 %v600
    %2616 = vmatprep.subr.mxu0 0.0
    %2617 = vmatpush1.msra.mxu0 %v601
    %2618 = vmatprep.subr.mxu0 0.0
    %2619 = vmatpush1.msra.mxu0 %v602
    %2620 = vmatprep.subr.mxu0 0.0
    %2621 = vmatpush1.msra.mxu0 0.0
    %2622 = vmatprep.subr.mxu0 0.0
    %2623 = vmatpush1.msra.mxu0 0.0
    %2624 = vmatprep.subr.mxu0 0.0
    %2625 = vmatpush1.msra.mxu0 0.0
    %2626 = vmatprep.subr.mxu0 0.0
    %2627 = vmatpush1.msra.mxu0 0.0
    %2628 = vmatprep.subr.mxu0 0.0
    %2629 = vmatpush1.msra.mxu0 0.0
    %2630 = vmatprep.subr.mxu0 0.0
    %2631 = vmatpush1.msra.mxu0 0.0
    %2632 = vmatprep.subr.mxu0 0.0
    %2633 = vmatpush1.msra.mxu0 0.0
    %2634 = vmatprep.subr.mxu0 0.0
    %2635 = vmatpush1.msra.mxu0 0.0
    %2636 = vmatprep.subr.mxu0 0.0
    %2637 = vmatpush1.msra.mxu0 0.0
    %2638 = vmatprep.subr.mxu0 0.0
    %2639 = vmatpush1.msra.mxu0 0.0
    %2640 = vmatprep.subr.mxu0 0.0
    %2641 = vmatpush1.msra.mxu0 0.0
    %2642 = vmatprep.subr.mxu0 0.0
    %2643 = vmatpush1.msra.mxu0 0.0
    %2644 = vmatprep.subr.mxu0 0.0
    %2645 = vmatpush1.msra.mxu0 0.0
    %2646 = vmatprep.subr.mxu0 0.0
    %2647 = vmatpush1.msra.mxu0 0.0
    %2648 = vmatprep.subr.mxu0 0.0
    %2649 = vmatpush1.msra.mxu0 0.0
    %2650 = vmatprep.subr.mxu0 0.0
    %2651 = vmatpush1.msra.mxu0 0.0
    %2652 = vmatprep.subr.mxu0 0.0
    %2653 = vmatpush1.msra.mxu0 0.0
    %2654 = vmatprep.subr.mxu0 0.0
    %2655 = vmatpush1.msra.mxu0 0.0
    %2656 = vmatprep.subr.mxu0 0.0
    %2657 = vmatpush1.msra.mxu0 0.0
    %2658 = vmatprep.subr.mxu0 0.0
    %2659 = vmatpush1.msra.mxu0 0.0
    %2660 = vmatprep.subr.mxu0 0.0
    %2661 = vmatpush1.msra.mxu0 0.0
    %2662 = vmatprep.subr.mxu0 0.0
    %2663 = vmatpush1.msra.mxu0 0.0
    %2664 = vmatprep.subr.mxu0 0.0
    %2665 = vmatpush1.msra.mxu0 0.0
    %2666 = vmatprep.subr.mxu0 0.0
    %2667 = vmatpush1.msra.mxu0 0.0
    %2668 = vmatprep.subr.mxu0 0.0
    %2669 = vmatpush1.msra.mxu0 0.0
    %2670 = vmatprep.subr.mxu0 0.0
    %2671 = vmatpush1.msra.mxu0 0.0
    %2672 = vmatprep.subr.mxu0 0.0
    %2673 = vmatpush1.msra.mxu0 0.0
    %2674 = vmatprep.subr.mxu0 0.0
    %2675 = vmatpush1.msra.mxu0 0.0
    %2676 = vmatprep.mubr.f32.mxu0 0.0
    %2677 = vmatmul.mubr.f32.gmra.mrb[0].mxu0 %v2610
    %v2678 = vpop.f32.mrb[0].mxu0
    %v2679 = vadd.f32 %v637, %v2678
    %v2680 = vpop.f32.mrb[0].mxu0
    %2681 = vdwg.mxu0
    %s2682 = scalar_lea.vmem [#allocation14], 10
    %2683 = vst.msk [vmem:[%s2682] sm:$0x3] %vm1150, %v2679
    %v2684 = vsel %vm1150, %v2679, -inf
    %2685 = vmax.xlane.f32.xlu0 %v2684
    %v2686 = vpop.xlane.xlu0 %2685
    %vm2687 = vcmp.eq.f32.partialorder %v2679, %v2686
    %v2688 = vsel %vm2687, 1, 0
    %v2689 = vcvt.s32.f32 %v2688
    %v2691 = vsel %vm1158, %v2689, 0
    %2693 = vmatprep.subr.mxu0 0.0
    %2694 = vmatpush1.msra.mxu0 %v609
    %2695 = vmatprep.subr.mxu0 0.0
    %2696 = vmatpush1.msra.mxu0 %v610
    %2697 = vmatprep.subr.mxu0 0.0
    %2698 = vmatpush1.msra.mxu0 0.0
    %2699 = vmatprep.subr.mxu0 0.0
    %2700 = vmatpush1.msra.mxu0 0.0
    %2701 = vmatprep.subr.mxu0 0.0
    %2702 = vmatpush1.msra.mxu0 0.0
    %2703 = vmatprep.subr.mxu0 0.0
    %2704 = vmatpush1.msra.mxu0 0.0
    %2705 = vmatprep.subr.mxu0 0.0
    %2706 = vmatpush1.msra.mxu0 0.0
    %2707 = vmatprep.subr.mxu0 0.0
    %2708 = vmatpush1.msra.mxu0 0.0
    %2709 = vmatprep.subr.mxu0 0.0
    %2710 = vmatpush1.msra.mxu0 0.0
    %2711 = vmatprep.subr.mxu0 0.0
    %2712 = vmatpush1.msra.mxu0 0.0
    %2713 = vmatprep.subr.mxu0 0.0
    %2714 = vmatpush1.msra.mxu0 0.0
    %2715 = vmatprep.subr.mxu0 0.0
    %2716 = vmatpush1.msra.mxu0 0.0
    %2717 = vmatprep.subr.mxu0 0.0
    %2718 = vmatpush1.msra.mxu0 0.0
    %2719 = vmatprep.subr.mxu0 0.0
    %2720 = vmatpush1.msra.mxu0 0.0
    %2721 = vmatprep.subr.mxu0 0.0
    %2722 = vmatpush1.msra.mxu0 0.0
    %2723 = vmatprep.subr.mxu0 0.0
    %2724 = vmatpush1.msra.mxu0 0.0
    %2725 = vmatprep.subr.mxu0 0.0
    %2726 = vmatpush1.msra.mxu0 0.0
    %2727 = vmatprep.subr.mxu0 0.0
    %2728 = vmatpush1.msra.mxu0 0.0
    %2729 = vmatprep.subr.mxu0 0.0
    %2730 = vmatpush1.msra.mxu0 0.0
    %2731 = vmatprep.subr.mxu0 0.0
    %2732 = vmatpush1.msra.mxu0 0.0
    %2733 = vmatprep.subr.mxu0 0.0
    %2734 = vmatpush1.msra.mxu0 0.0
    %2735 = vmatprep.subr.mxu0 0.0
    %2736 = vmatpush1.msra.mxu0 0.0
    %2737 = vmatprep.subr.mxu0 0.0
    %2738 = vmatpush1.msra.mxu0 0.0
    %2739 = vmatprep.subr.mxu0 0.0
    %2740 = vmatpush1.msra.mxu0 0.0
    %2741 = vmatprep.subr.mxu0 0.0
    %2742 = vmatpush1.msra.mxu0 0.0
    %2743 = vmatprep.subr.mxu0 0.0
    %2744 = vmatpush1.msra.mxu0 0.0
    %2745 = vmatprep.subr.mxu0 0.0
    %2746 = vmatpush1.msra.mxu0 0.0
    %2747 = vmatprep.subr.mxu0 0.0
    %2748 = vmatpush1.msra.mxu0 0.0
    %2749 = vmatprep.subr.mxu0 0.0
    %2750 = vmatpush1.msra.mxu0 0.0
    %2751 = vmatprep.subr.mxu0 0.0
    %2752 = vmatpush1.msra.mxu0 0.0
    %2753 = vmatprep.subr.mxu0 0.0
    %2754 = vmatpush1.msra.mxu0 0.0
    %2755 = vmatprep.subr.mxu0 0.0
    %2756 = vmatpush1.msra.mxu0 0.0
    %2757 = vmatprep.mubr.f32.mxu0 0.0
    %2758 = vmatmul.mubr.f32.gmra.mrb[0].mxu0 %v2691
    %v2759 = vpop.f32.mrb[0].mxu0
    %v2760 = vadd.f32 %v2251, %v2759
    %v2761 = vpop.f32.mrb[0].mxu0
    %2762 = vdwg.mxu0
    %v2763 = vadd.f32 %v2760, %v2603
    %v2764 = vmul.f32 %v2763, 0.5
    %v2765 = vtanh.pop %v2764
    %v2766 = vmul.f32 %v2765, 0.5
    %v2767 = vadd.f32 %v2766, 0.5
    %v2768 = vtanh.pop %v2763
    %v2769 = vmul.f32 %v2767, %v2524
    %2771 = vrot.lane.b32.xlu0 %v2768, 64
    %v2772 = vpop.permute.xlu0 %2771
    %v2774 = vmul.f32 %v2767, %v2772
    %2776 = vrot.lane.b32.xlu0 %v2774, 32
    %v2777 = vpop.permute.xlu0 %2776
    %v2779 = vadd.f32 %v2769, %v2777
    %v2780 = vtanh.pop %v2779
    %2782 = vrot.lane.b32.xlu0 %v2780, 64
    %v2783 = vpop.permute.xlu0 %2782
    %v2785 = vmul.f32 %v2767, %v2783
    %2787 = vrot.lane.b32.xlu0 %v2785, 32
    %v2788 = vpop.permute.xlu0 %2787
    %v2789 = vsel %vm113, %v2788, 0
    %2791 = vmatprep.subr.mxu0 %v592
    %2792 = vmatpush1.msra.mxu0 %v591
    %2793 = vmatprep.subr.mxu0 %v594
    %2794 = vmatpush1.msra.mxu0 %v593
    %2795 = vmatprep.subr.mxu0 %v596
    %2796 = vmatpush1.msra.mxu0 %v595
    %2797 = vmatprep.subr.mxu0 %v598
    %2798 = vmatpush1.msra.mxu0 %v597
    %2799 = vmatprep.subr.mxu0 0.0
    %2800 = vmatpush1.msra.mxu0 0.0
    %2801 = vmatprep.subr.mxu0 0.0
    %2802 = vmatpush1.msra.mxu0 0.0
    %2803 = vmatprep.subr.mxu0 0.0
    %2804 = vmatpush1.msra.mxu0 0.0
    %2805 = vmatprep.subr.mxu0 0.0
    %2806 = vmatpush1.msra.mxu0 0.0
    %2807 = vmatprep.subr.mxu0 0.0
    %2808 = vmatpush1.msra.mxu0 0.0
    %2809 = vmatprep.subr.mxu0 0.0
    %2810 = vmatpush1.msra.mxu0 0.0
    %2811 = vmatprep.subr.mxu0 0.0
    %2812 = vmatpush1.msra.mxu0 0.0
    %2813 = vmatprep.subr.mxu0 0.0
    %2814 = vmatpush1.msra.mxu0 0.0
    %2815 = vmatprep.subr.mxu0 0.0
    %2816 = vmatpush1.msra.mxu0 0.0
    %2817 = vmatprep.subr.mxu0 0.0
    %2818 = vmatpush1.msra.mxu0 0.0
    %2819 = vmatprep.subr.mxu0 0.0
    %2820 = vmatpush1.msra.mxu0 0.0
    %2821 = vmatprep.subr.mxu0 0.0
    %2822 = vmatpush1.msra.mxu0 0.0
    %2823 = vmatprep.subr.mxu0 0.0
    %2824 = vmatpush1.msra.mxu0 0.0
    %2825 = vmatprep.subr.mxu0 0.0
    %2826 = vmatpush1.msra.mxu0 0.0
    %2827 = vmatprep.subr.mxu0 0.0
    %2828 = vmatpush1.msra.mxu0 0.0
    %2829 = vmatprep.subr.mxu0 0.0
    %2830 = vmatpush1.msra.mxu0 0.0
    %2831 = vmatprep.subr.mxu0 0.0
    %2832 = vmatpush1.msra.mxu0 0.0
    %2833 = vmatprep.subr.mxu0 0.0
    %2834 = vmatpush1.msra.mxu0 0.0
    %2835 = vmatprep.subr.mxu0 0.0
    %2836 = vmatpush1.msra.mxu0 0.0
    %2837 = vmatprep.subr.mxu0 0.0
    %2838 = vmatpush1.msra.mxu0 0.0
    %2839 = vmatprep.subr.mxu0 0.0
    %2840 = vmatpush1.msra.mxu0 0.0
    %2841 = vmatprep.subr.mxu0 0.0
    %2842 = vmatpush1.msra.mxu0 0.0
    %2843 = vmatprep.subr.mxu0 0.0
    %2844 = vmatpush1.msra.mxu0 0.0
    %2845 = vmatprep.subr.mxu0 0.0
    %2846 = vmatpush1.msra.mxu0 0.0
    %2847 = vmatprep.subr.mxu0 0.0
    %2848 = vmatpush1.msra.mxu0 0.0
    %2849 = vmatprep.subr.mxu0 0.0
    %2850 = vmatpush1.msra.mxu0 0.0
    %2851 = vmatprep.subr.mxu0 0.0
    %2852 = vmatpush1.msra.mxu0 0.0
    %2853 = vmatprep.subr.mxu0 0.0
    %2854 = vmatpush1.msra.mxu0 0.0
    %2855 = vmatprep.mubr.f32.mxu0 0.0
    %2856 = vmatmul.mubr.f32.gmra.mrb[0].mxu0 %v2789
    %v2857 = vpop.f32.mrb[0].mxu0
    %v2858 = vadd.f32 0.0, %v2857
    %v2859 = vpop.f32.mrb[0].mxu0
    %v2860 = vadd.f32 0.0, %v2859
    %2861 = vdwg.mxu0
    %v2862 = vadd.f32 %v2860, %v630
    %v2863 = vmax.f32 %v2862, 0.0
    %v2865 = vsel %vm113, %v2863, 0
    %2867 = vmatprep.subr.mxu0 0.0
    %2868 = vmatpush1.msra.mxu0 %v599
    %2869 = vmatprep.subr.mxu0 0.0
    %2870 = vmatpush1.msra.mxu0 %v600
    %2871 = vmatprep.subr.mxu0 0.0
    %2872 = vmatpush1.msra.mxu0 %v601
    %2873 = vmatprep.subr.mxu0 0.0
    %2874 = vmatpush1.msra.mxu0 %v602
    %2875 = vmatprep.subr.mxu0 0.0
    %2876 = vmatpush1.msra.mxu0 0.0
    %2877 = vmatprep.subr.mxu0 0.0
    %2878 = vmatpush1.msra.mxu0 0.0
    %2879 = vmatprep.subr.mxu0 0.0
    %2880 = vmatpush1.msra.mxu0 0.0
    %2881 = vmatprep.subr.mxu0 0.0
    %2882 = vmatpush1.msra.mxu0 0.0
    %2883 = vmatprep.subr.mxu0 0.0
    %2884 = vmatpush1.msra.mxu0 0.0
    %2885 = vmatprep.subr.mxu0 0.0
    %2886 = vmatpush1.msra.mxu0 0.0
    %2887 = vmatprep.subr.mxu0 0.0
    %2888 = vmatpush1.msra.mxu0 0.0
    %2889 = vmatprep.subr.mxu0 0.0
    %2890 = vmatpush1.msra.mxu0 0.0
    %2891 = vmatprep.subr.mxu0 0.0
    %2892 = vmatpush1.msra.mxu0 0.0
    %2893 = vmatprep.subr.mxu0 0.0
    %2894 = vmatpush1.msra.mxu0 0.0
    %2895 = vmatprep.subr.mxu0 0.0
    %2896 = vmatpush1.msra.mxu0 0.0
    %2897 = vmatprep.subr.mxu0 0.0
    %2898 = vmatpush1.msra.mxu0 0.0
    %2899 = vmatprep.subr.mxu0 0.0
    %2900 = vmatpush1.msra.mxu0 0.0
    %2901 = vmatprep.subr.mxu0 0.0
    %2902 = vmatpush1.msra.mxu0 0.0
    %2903 = vmatprep.subr.mxu0 0.0
    %2904 = vmatpush1.msra.mxu0 0.0
    %2905 = vmatprep.subr.mxu0 0.0
    %2906 = vmatpush1.msra.mxu0 0.0
    %2907 = vmatprep.subr.mxu0 0.0
    %2908 = vmatpush1.msra.mxu0 0.0
    %2909 = vmatprep.subr.mxu0 0.0
    %2910 = vmatpush1.msra.mxu0 0.0
    %2911 = vmatprep.subr.mxu0 0.0
    %2912 = vmatpush1.msra.mxu0 0.0
    %2913 = vmatprep.subr.mxu0 0.0
    %2914 = vmatpush1.msra.mxu0 0.0
    %2915 = vmatprep.subr.mxu0 0.0
    %2916 = vmatpush1.msra.mxu0 0.0
    %2917 = vmatprep.subr.mxu0 0.0
    %2918 = vmatpush1.msra.mxu0 0.0
    %2919 = vmatprep.subr.mxu0 0.0
    %2920 = vmatpush1.msra.mxu0 0.0
    %2921 = vmatprep.subr.mxu0 0.0
    %2922 = vmatpush1.msra.mxu0 0.0
    %2923 = vmatprep.subr.mxu0 0.0
    %2924 = vmatpush1.msra.mxu0 0.0
    %2925 = vmatprep.subr.mxu0 0.0
    %2926 = vmatpush1.msra.mxu0 0.0
    %2927 = vmatprep.subr.mxu0 0.0
    %2928 = vmatpush1.msra.mxu0 0.0
    %2929 = vmatprep.subr.mxu0 0.0
    %2930 = vmatpush1.msra.mxu0 0.0
    %2931 = vmatprep.mubr.f32.mxu0 0.0
    %2932 = vmatmul.mubr.f32.gmra.mrb[0].mxu0 %v2865
    %v2933 = vpop.f32.mrb[0].mxu0
    %v2934 = vadd.f32 %v637, %v2933
    %v2935 = vpop.f32.mrb[0].mxu0
    %2936 = vdwg.mxu0
    %s2937 = scalar_lea.vmem [#allocation14], 12
    %2938 = vst.msk [vmem:[%s2937] sm:$0x3] %vm1150, %v2934
    %v2939 = vsel %vm1150, %v2934, -inf
    %2940 = vmax.xlane.f32.xlu0 %v2939
    %v2941 = vpop.xlane.xlu0 %2940
    %vm2942 = vcmp.eq.f32.partialorder %v2934, %v2941
    %v2943 = vsel %vm2942, 1, 0
    %v2944 = vcvt.s32.f32 %v2943
    %v2946 = vsel %vm1158, %v2944, 0
    %2948 = vmatprep.subr.mxu0 0.0
    %2949 = vmatpush1.msra.mxu0 %v609
    %2950 = vmatprep.subr.mxu0 0.0
    %2951 = vmatpush1.msra.mxu0 %v610
    %2952 = vmatprep.subr.mxu0 0.0
    %2953 = vmatpush1.msra.mxu0 0.0
    %2954 = vmatprep.subr.mxu0 0.0
    %2955 = vmatpush1.msra.mxu0 0.0
    %2956 = vmatprep.subr.mxu0 0.0
    %2957 = vmatpush1.msra.mxu0 0.0
    %2958 = vmatprep.subr.mxu0 0.0
    %2959 = vmatpush1.msra.mxu0 0.0
    %2960 = vmatprep.subr.mxu0 0.0
    %2961 = vmatpush1.msra.mxu0 0.0
    %2962 = vmatprep.subr.mxu0 0.0
    %2963 = vmatpush1.msra.mxu0 0.0
    %2964 = vmatprep.subr.mxu0 0.0
    %2965 = vmatpush1.msra.mxu0 0.0
    %2966 = vmatprep.subr.mxu0 0.0
    %2967 = vmatpush1.msra.mxu0 0.0
    %2968 = vmatprep.subr.mxu0 0.0
    %2969 = vmatpush1.msra.mxu0 0.0
    %2970 = vmatprep.subr.mxu0 0.0
    %2971 = vmatpush1.msra.mxu0 0.0
    %2972 = vmatprep.subr.mxu0 0.0
    %2973 = vmatpush1.msra.mxu0 0.0
    %2974 = vmatprep.subr.mxu0 0.0
    %2975 = vmatpush1.msra.mxu0 0.0
    %2976 = vmatprep.subr.mxu0 0.0
    %2977 = vmatpush1.msra.mxu0 0.0
    %2978 = vmatprep.subr.mxu0 0.0
    %2979 = vmatpush1.msra.mxu0 0.0
    %2980 = vmatprep.subr.mxu0 0.0
    %2981 = vmatpush1.msra.mxu0 0.0
    %2982 = vmatprep.subr.mxu0 0.0
    %2983 = vmatpush1.msra.mxu0 0.0
    %2984 = vmatprep.subr.mxu0 0.0
    %2985 = vmatpush1.msra.mxu0 0.0
    %2986 = vmatprep.subr.mxu0 0.0
    %2987 = vmatpush1.msra.mxu0 0.0
    %2988 = vmatprep.subr.mxu0 0.0
    %2989 = vmatpush1.msra.mxu0 0.0
    %2990 = vmatprep.subr.mxu0 0.0
    %2991 = vmatpush1.msra.mxu0 0.0
    %2992 = vmatprep.subr.mxu0 0.0
    %2993 = vmatpush1.msra.mxu0 0.0
    %2994 = vmatprep.subr.mxu0 0.0
    %2995 = vmatpush1.msra.mxu0 0.0
    %2996 = vmatprep.subr.mxu0 0.0
    %2997 = vmatpush1.msra.mxu0 0.0
    %2998 = vmatprep.subr.mxu0 0.0
    %2999 = vmatpush1.msra.mxu0 0.0
    %3000 = vmatprep.subr.mxu0 0.0
    %3001 = vmatpush1.msra.mxu0 0.0
    %3002 = vmatprep.subr.mxu0 0.0
    %3003 = vmatpush1.msra.mxu0 0.0
    %3004 = vmatprep.subr.mxu0 0.0
    %3005 = vmatpush1.msra.mxu0 0.0
    %3006 = vmatprep.subr.mxu0 0.0
    %3007 = vmatpush1.msra.mxu0 0.0
    %3008 = vmatprep.subr.mxu0 0.0
    %3009 = vmatpush1.msra.mxu0 0.0
    %3010 = vmatprep.subr.mxu0 0.0
    %3011 = vmatpush1.msra.mxu0 0.0
    %3012 = vmatprep.mubr.f32.mxu0 0.0
    %3013 = vmatmul.mubr.f32.gmra.mrb[0].mxu0 %v2946
    %v3014 = vpop.f32.mrb[0].mxu0
    %v3015 = vadd.f32 %v2251, %v3014
    %v3016 = vpop.f32.mrb[0].mxu0
    %3017 = vdwg.mxu0
    %v3018 = vadd.f32 %v3015, %v2858
    %v3019 = vmul.f32 %v3018, 0.5
    %v3020 = vtanh.pop %v3019
    %v3021 = vmul.f32 %v3020, 0.5
    %v3022 = vadd.f32 %v3021, 0.5
    %v3023 = vtanh.pop %v3018
    %v3024 = vmul.f32 %v3022, %v2779
    %3026 = vrot.lane.b32.xlu0 %v3023, 64
    %v3027 = vpop.permute.xlu0 %3026
    %v3029 = vmul.f32 %v3022, %v3027
    %3031 = vrot.lane.b32.xlu0 %v3029, 32
    %v3032 = vpop.permute.xlu0 %3031
    %v3034 = vadd.f32 %v3024, %v3032
    %v3035 = vtanh.pop %v3034
    %3037 = vrot.lane.b32.xlu0 %v3035, 64
    %v3038 = vpop.permute.xlu0 %3037
    %v3040 = vmul.f32 %v3022, %v3038
    %3042 = vrot.lane.b32.xlu0 %v3040, 32
    %v3043 = vpop.permute.xlu0 %3042
    %v3044 = vsel %vm113, %v3043, 0
    %3046 = vmatprep.subr.mxu0 %v592
    %3047 = vmatpush1.msra.mxu0 %v591
    %3048 = vmatprep.subr.mxu0 %v594
    %3049 = vmatpush1.msra.mxu0 %v593
    %3050 = vmatprep.subr.mxu0 %v596
    %3051 = vmatpush1.msra.mxu0 %v595
    %3052 = vmatprep.subr.mxu0 %v598
    %3053 = vmatpush1.msra.mxu0 %v597
    %3054 = vmatprep.subr.mxu0 0.0
    %3055 = vmatpush1.msra.mxu0 0.0
    %3056 = vmatprep.subr.mxu0 0.0
    %3057 = vmatpush1.msra.mxu0 0.0
    %3058 = vmatprep.subr.mxu0 0.0
    %3059 = vmatpush1.msra.mxu0 0.0
    %3060 = vmatprep.subr.mxu0 0.0
    %3061 = vmatpush1.msra.mxu0 0.0
    %3062 = vmatprep.subr.mxu0 0.0
    %3063 = vmatpush1.msra.mxu0 0.0
    %3064 = vmatprep.subr.mxu0 0.0
    %3065 = vmatpush1.msra.mxu0 0.0
    %3066 = vmatprep.subr.mxu0 0.0
    %3067 = vmatpush1.msra.mxu0 0.0
    %3068 = vmatprep.subr.mxu0 0.0
    %3069 = vmatpush1.msra.mxu0 0.0
    %3070 = vmatprep.subr.mxu0 0.0
    %3071 = vmatpush1.msra.mxu0 0.0
    %3072 = vmatprep.subr.mxu0 0.0
    %3073 = vmatpush1.msra.mxu0 0.0
    %3074 = vmatprep.subr.mxu0 0.0
    %3075 = vmatpush1.msra.mxu0 0.0
    %3076 = vmatprep.subr.mxu0 0.0
    %3077 = vmatpush1.msra.mxu0 0.0
    %3078 = vmatprep.subr.mxu0 0.0
    %3079 = vmatpush1.msra.mxu0 0.0
    %3080 = vmatprep.subr.mxu0 0.0
    %3081 = vmatpush1.msra.mxu0 0.0
    %3082 = vmatprep.subr.mxu0 0.0
    %3083 = vmatpush1.msra.mxu0 0.0
    %3084 = vmatprep.subr.mxu0 0.0
    %3085 = vmatpush1.msra.mxu0 0.0
    %3086 = vmatprep.subr.mxu0 0.0
    %3087 = vmatpush1.msra.mxu0 0.0
    %3088 = vmatprep.subr.mxu0 0.0
    %3089 = vmatpush1.msra.mxu0 0.0
    %3090 = vmatprep.subr.mxu0 0.0
    %3091 = vmatpush1.msra.mxu0 0.0
    %3092 = vmatprep.subr.mxu0 0.0
    %3093 = vmatpush1.msra.mxu0 0.0
    %3094 = vmatprep.subr.mxu0 0.0
    %3095 = vmatpush1.msra.mxu0 0.0
    %3096 = vmatprep.subr.mxu0 0.0
    %3097 = vmatpush1.msra.mxu0 0.0
    %3098 = vmatprep.subr.mxu0 0.0
    %3099 = vmatpush1.msra.mxu0 0.0
    %3100 = vmatprep.subr.mxu0 0.0
    %3101 = vmatpush1.msra.mxu0 0.0
    %3102 = vmatprep.subr.mxu0 0.0
    %3103 = vmatpush1.msra.mxu0 0.0
    %3104 = vmatprep.subr.mxu0 0.0
    %3105 = vmatpush1.msra.mxu0 0.0
    %3106 = vmatprep.subr.mxu0 0.0
    %3107 = vmatpush1.msra.mxu0 0.0
    %3108 = vmatprep.subr.mxu0 0.0
    %3109 = vmatpush1.msra.mxu0 0.0
    %3110 = vmatprep.mubr.f32.mxu0 0.0
    %3111 = vmatmul.mubr.f32.gmra.mrb[0].mxu0 %v3044
    %v3112 = vpop.f32.mrb[0].mxu0
    %v3113 = vadd.f32 0.0, %v3112
    %v3114 = vpop.f32.mrb[0].mxu0
    %v3115 = vadd.f32 0.0, %v3114
    %3116 = vdwg.mxu0
    %v3117 = vadd.f32 %v3115, %v630
    %v3118 = vmax.f32 %v3117, 0.0
    %v3120 = vsel %vm113, %v3118, 0
    %3122 = vmatprep.subr.mxu0 0.0
    %3123 = vmatpush1.msra.mxu0 %v599
    %3124 = vmatprep.subr.mxu0 0.0
    %3125 = vmatpush1.msra.mxu0 %v600
    %3126 = vmatprep.subr.mxu0 0.0
    %3127 = vmatpush1.msra.mxu0 %v601
    %3128 = vmatprep.subr.mxu0 0.0
    %3129 = vmatpush1.msra.mxu0 %v602
    %3130 = vmatprep.subr.mxu0 0.0
    %3131 = vmatpush1.msra.mxu0 0.0
    %3132 = vmatprep.subr.mxu0 0.0
    %3133 = vmatpush1.msra.mxu0 0.0
    %3134 = vmatprep.subr.mxu0 0.0
    %3135 = vmatpush1.msra.mxu0 0.0
    %3136 = vmatprep.subr.mxu0 0.0
    %3137 = vmatpush1.msra.mxu0 0.0
    %3138 = vmatprep.subr.mxu0 0.0
    %3139 = vmatpush1.msra.mxu0 0.0
    %3140 = vmatprep.subr.mxu0 0.0
    %3141 = vmatpush1.msra.mxu0 0.0
    %3142 = vmatprep.subr.mxu0 0.0
    %3143 = vmatpush1.msra.mxu0 0.0
    %3144 = vmatprep.subr.mxu0 0.0
    %3145 = vmatpush1.msra.mxu0 0.0
    %3146 = vmatprep.subr.mxu0 0.0
    %3147 = vmatpush1.msra.mxu0 0.0
    %3148 = vmatprep.subr.mxu0 0.0
    %3149 = vmatpush1.msra.mxu0 0.0
    %3150 = vmatprep.subr.mxu0 0.0
    %3151 = vmatpush1.msra.mxu0 0.0
    %3152 = vmatprep.subr.mxu0 0.0
    %3153 = vmatpush1.msra.mxu0 0.0
    %3154 = vmatprep.subr.mxu0 0.0
    %3155 = vmatpush1.msra.mxu0 0.0
    %3156 = vmatprep.subr.mxu0 0.0
    %3157 = vmatpush1.msra.mxu0 0.0
    %3158 = vmatprep.subr.mxu0 0.0
    %3159 = vmatpush1.msra.mxu0 0.0
    %3160 = vmatprep.subr.mxu0 0.0
    %3161 = vmatpush1.msra.mxu0 0.0
    %3162 = vmatprep.subr.mxu0 0.0
    %3163 = vmatpush1.msra.mxu0 0.0
    %3164 = vmatprep.subr.mxu0 0.0
    %3165 = vmatpush1.msra.mxu0 0.0
    %3166 = vmatprep.subr.mxu0 0.0
    %3167 = vmatpush1.msra.mxu0 0.0
    %3168 = vmatprep.subr.mxu0 0.0
    %3169 = vmatpush1.msra.mxu0 0.0
    %3170 = vmatprep.subr.mxu0 0.0
    %3171 = vmatpush1.msra.mxu0 0.0
    %3172 = vmatprep.subr.mxu0 0.0
    %3173 = vmatpush1.msra.mxu0 0.0
    %3174 = vmatprep.subr.mxu0 0.0
    %3175 = vmatpush1.msra.mxu0 0.0
    %3176 = vmatprep.subr.mxu0 0.0
    %3177 = vmatpush1.msra.mxu0 0.0
    %3178 = vmatprep.subr.mxu0 0.0
    %3179 = vmatpush1.msra.mxu0 0.0
    %3180 = vmatprep.subr.mxu0 0.0
    %3181 = vmatpush1.msra.mxu0 0.0
    %3182 = vmatprep.subr.mxu0 0.0
    %3183 = vmatpush1.msra.mxu0 0.0
    %3184 = vmatprep.subr.mxu0 0.0
    %3185 = vmatpush1.msra.mxu0 0.0
    %3186 = vmatprep.mubr.f32.mxu0 0.0
    %3187 = vmatmul.mubr.f32.gmra.mrb[0].mxu0 %v3120
    %v3188 = vpop.f32.mrb[0].mxu0
    %v3189 = vadd.f32 %v637, %v3188
    %v3190 = vpop.f32.mrb[0].mxu0
    %3191 = vdwg.mxu0
    %s3192 = scalar_lea.vmem [#allocation14], 14
    %3193 = vst.msk [vmem:[%s3192] sm:$0x3] %vm1150, %v3189
    %v3194 = vsel %vm1150, %v3189, -inf
    %3195 = vmax.xlane.f32.xlu0 %v3194
    %v3196 = vpop.xlane.xlu0 %3195
    %vm3197 = vcmp.eq.f32.partialorder %v3189, %v3196
    %v3198 = vsel %vm3197, 1, 0
    %v3199 = vcvt.s32.f32 %v3198
    %v3201 = vsel %vm1158, %v3199, 0
    %3203 = vmatprep.subr.mxu0 0.0
    %3204 = vmatpush1.msra.mxu0 %v609
    %3205 = vmatprep.subr.mxu0 0.0
    %3206 = vmatpush1.msra.mxu0 %v610
    %3207 = vmatprep.subr.mxu0 0.0
    %3208 = vmatpush1.msra.mxu0 0.0
    %3209 = vmatprep.subr.mxu0 0.0
    %3210 = vmatpush1.msra.mxu0 0.0
    %3211 = vmatprep.subr.mxu0 0.0
    %3212 = vmatpush1.msra.mxu0 0.0
    %3213 = vmatprep.subr.mxu0 0.0
    %3214 = vmatpush1.msra.mxu0 0.0
    %3215 = vmatprep.subr.mxu0 0.0
    %3216 = vmatpush1.msra.mxu0 0.0
    %3217 = vmatprep.subr.mxu0 0.0
    %3218 = vmatpush1.msra.mxu0 0.0
    %3219 = vmatprep.subr.mxu0 0.0
    %3220 = vmatpush1.msra.mxu0 0.0
    %3221 = vmatprep.subr.mxu0 0.0
    %3222 = vmatpush1.msra.mxu0 0.0
    %3223 = vmatprep.subr.mxu0 0.0
    %3224 = vmatpush1.msra.mxu0 0.0
    %3225 = vmatprep.subr.mxu0 0.0
    %3226 = vmatpush1.msra.mxu0 0.0
    %3227 = vmatprep.subr.mxu0 0.0
    %3228 = vmatpush1.msra.mxu0 0.0
    %3229 = vmatprep.subr.mxu0 0.0
    %3230 = vmatpush1.msra.mxu0 0.0
    %3231 = vmatprep.subr.mxu0 0.0
    %3232 = vmatpush1.msra.mxu0 0.0
    %3233 = vmatprep.subr.mxu0 0.0
    %3234 = vmatpush1.msra.mxu0 0.0
    %3235 = vmatprep.subr.mxu0 0.0
    %3236 = vmatpush1.msra.mxu0 0.0
    %3237 = vmatprep.subr.mxu0 0.0
    %3238 = vmatpush1.msra.mxu0 0.0
    %3239 = vmatprep.subr.mxu0 0.0
    %3240 = vmatpush1.msra.mxu0 0.0
    %3241 = vmatprep.subr.mxu0 0.0
    %3242 = vmatpush1.msra.mxu0 0.0
    %3243 = vmatprep.subr.mxu0 0.0
    %3244 = vmatpush1.msra.mxu0 0.0
    %3245 = vmatprep.subr.mxu0 0.0
    %3246 = vmatpush1.msra.mxu0 0.0
    %3247 = vmatprep.subr.mxu0 0.0
    %3248 = vmatpush1.msra.mxu0 0.0
    %3249 = vmatprep.subr.mxu0 0.0
    %3250 = vmatpush1.msra.mxu0 0.0
    %3251 = vmatprep.subr.mxu0 0.0
    %3252 = vmatpush1.msra.mxu0 0.0
    %3253 = vmatprep.subr.mxu0 0.0
    %3254 = vmatpush1.msra.mxu0 0.0
    %3255 = vmatprep.subr.mxu0 0.0
    %3256 = vmatpush1.msra.mxu0 0.0
    %3257 = vmatprep.subr.mxu0 0.0
    %3258 = vmatpush1.msra.mxu0 0.0
    %3259 = vmatprep.subr.mxu0 0.0
    %3260 = vmatpush1.msra.mxu0 0.0
    %3261 = vmatprep.subr.mxu0 0.0
    %3262 = vmatpush1.msra.mxu0 0.0
    %3263 = vmatprep.subr.mxu0 0.0
    %3264 = vmatpush1.msra.mxu0 0.0
    %3265 = vmatprep.subr.mxu0 0.0
    %3266 = vmatpush1.msra.mxu0 0.0
    %3267 = vmatprep.mubr.f32.mxu0 0.0
    %3268 = vmatmul.mubr.f32.gmra.mrb[0].mxu0 %v3201
    %v3269 = vpop.f32.mrb[0].mxu0
    %v3270 = vadd.f32 %v2251, %v3269
    %v3271 = vpop.f32.mrb[0].mxu0
    %3272 = vdwg.mxu0
    %v3273 = vadd.f32 %v2249, %v2092
    %v3274 = vmul.f32 %v3273, 0.5
    %v3275 = vtanh.pop %v3274
    %v3276 = vmul.f32 %v3275, 0.5
    %v3277 = vadd.f32 %v3276, 0.5
    %v3278 = vtanh.pop %v3273
    %v3279 = vmul.f32 %v3277, %v2013
    %3281 = vrot.lane.b32.xlu0 %v3278, 64
    %v3282 = vpop.permute.xlu0 %3281
    %v3284 = vmul.f32 %v3277, %v3282
    %3286 = vrot.lane.b32.xlu0 %v3284, 32
    %v3287 = vpop.permute.xlu0 %3286
    %v3289 = vadd.f32 %v3279, %v3287
    %v3290 = vtanh.pop %v3289
    %3292 = vrot.lane.b32.xlu0 %v3290, 64
    %v3293 = vpop.permute.xlu0 %3292
    %v3295 = vmul.f32 %v3277, %v3293
    %3297 = vrot.lane.b32.xlu0 %v3295, 32
    %v3298 = vpop.permute.xlu0 %3297
    %v3299 = vsel %vm113, %v3298, 0
    %3301 = vmatprep.subr.mxu0 %v580
    %3302 = vmatpush1.msra.mxu0 %v579
    %3303 = vmatprep.subr.mxu0 %v582
    %3304 = vmatpush1.msra.mxu0 %v581
    %3305 = vmatprep.subr.mxu0 %v584
    %3306 = vmatpush1.msra.mxu0 %v583
    %3307 = vmatprep.subr.mxu0 %v586
    %3308 = vmatpush1.msra.mxu0 %v585
    %3309 = vmatprep.subr.mxu0 0.0
    %3310 = vmatpush1.msra.mxu0 0.0
    %3311 = vmatprep.subr.mxu0 0.0
    %3312 = vmatpush1.msra.mxu0 0.0
    %3313 = vmatprep.subr.mxu0 0.0
    %3314 = vmatpush1.msra.mxu0 0.0
    %3315 = vmatprep.subr.mxu0 0.0
    %3316 = vmatpush1.msra.mxu0 0.0
    %3317 = vmatprep.subr.mxu0 0.0
    %3318 = vmatpush1.msra.mxu0 0.0
    %3319 = vmatprep.subr.mxu0 0.0
    %3320 = vmatpush1.msra.mxu0 0.0
    %3321 = vmatprep.subr.mxu0 0.0
    %3322 = vmatpush1.msra.mxu0 0.0
    %3323 = vmatprep.subr.mxu0 0.0
    %3324 = vmatpush1.msra.mxu0 0.0
    %3325 = vmatprep.subr.mxu0 0.0
    %3326 = vmatpush1.msra.mxu0 0.0
    %3327 = vmatprep.subr.mxu0 0.0
    %3328 = vmatpush1.msra.mxu0 0.0
    %3329 = vmatprep.subr.mxu0 0.0
    %3330 = vmatpush1.msra.mxu0 0.0
    %3331 = vmatprep.subr.mxu0 0.0
    %3332 = vmatpush1.msra.mxu0 0.0
    %3333 = vmatprep.subr.mxu0 0.0
    %3334 = vmatpush1.msra.mxu0 0.0
    %3335 = vmatprep.subr.mxu0 0.0
    %3336 = vmatpush1.msra.mxu0 0.0
    %3337 = vmatprep.subr.mxu0 0.0
    %3338 = vmatpush1.msra.mxu0 0.0
    %3339 = vmatprep.subr.mxu0 0.0
    %3340 = vmatpush1.msra.mxu0 0.0
    %3341 = vmatprep.subr.mxu0 0.0
    %3342 = vmatpush1.msra.mxu0 0.0
    %3343 = vmatprep.subr.mxu0 0.0
    %3344 = vmatpush1.msra.mxu0 0.0
    %3345 = vmatprep.subr.mxu0 0.0
    %3346 = vmatpush1.msra.mxu0 0.0
    %3347 = vmatprep.subr.mxu0 0.0
    %3348 = vmatpush1.msra.mxu0 0.0
    %3349 = vmatprep.subr.mxu0 0.0
    %3350 = vmatpush1.msra.mxu0 0.0
    %3351 = vmatprep.subr.mxu0 0.0
    %3352 = vmatpush1.msra.mxu0 0.0
    %3353 = vmatprep.subr.mxu0 0.0
    %3354 = vmatpush1.msra.mxu0 0.0
    %3355 = vmatprep.subr.mxu0 0.0
    %3356 = vmatpush1.msra.mxu0 0.0
    %3357 = vmatprep.subr.mxu0 0.0
    %3358 = vmatpush1.msra.mxu0 0.0
    %3359 = vmatprep.subr.mxu0 0.0
    %3360 = vmatpush1.msra.mxu0 0.0
    %3361 = vmatprep.subr.mxu0 0.0
    %3362 = vmatpush1.msra.mxu0 0.0
    %3363 = vmatprep.subr.mxu0 0.0
    %3364 = vmatpush1.msra.mxu0 0.0
    %3365 = vmatprep.mubr.f32.mxu0 0.0
    %3366 = vmatmul.mubr.f32.gmra.mrb[0].mxu0 %v3299
    %v3367 = vpop.f32.mrb[0].mxu0
    %v3368 = vadd.f32 0.0, %v3367
    %v3369 = vpop.f32.mrb[0].mxu0
    %v3370 = vadd.f32 0.0, %v3369
    %3371 = vdwg.mxu0
    %v3372 = vadd.f32 %v3370, %v616
    %v3373 = vmax.f32 %v3372, 0.0
    %v3375 = vsel %vm113, %v3373, 0
    %3377 = vmatprep.subr.mxu0 0.0
    %3378 = vmatpush1.msra.mxu0 %v587
    %3379 = vmatprep.subr.mxu0 0.0
    %3380 = vmatpush1.msra.mxu0 %v588
    %3381 = vmatprep.subr.mxu0 0.0
    %3382 = vmatpush1.msra.mxu0 %v589
    %3383 = vmatprep.subr.mxu0 0.0
    %3384 = vmatpush1.msra.mxu0 %v590
    %3385 = vmatprep.subr.mxu0 0.0
    %3386 = vmatpush1.msra.mxu0 0.0
    %3387 = vmatprep.subr.mxu0 0.0
    %3388 = vmatpush1.msra.mxu0 0.0
    %3389 = vmatprep.subr.mxu0 0.0
    %3390 = vmatpush1.msra.mxu0 0.0
    %3391 = vmatprep.subr.mxu0 0.0
    %3392 = vmatpush1.msra.mxu0 0.0
    %3393 = vmatprep.subr.mxu0 0.0
    %3394 = vmatpush1.msra.mxu0 0.0
    %3395 = vmatprep.subr.mxu0 0.0
    %3396 = vmatpush1.msra.mxu0 0.0
    %3397 = vmatprep.subr.mxu0 0.0
    %3398 = vmatpush1.msra.mxu0 0.0
    %3399 = vmatprep.subr.mxu0 0.0
    %3400 = vmatpush1.msra.mxu0 0.0
    %3401 = vmatprep.subr.mxu0 0.0
    %3402 = vmatpush1.msra.mxu0 0.0
    %3403 = vmatprep.subr.mxu0 0.0
    %3404 = vmatpush1.msra.mxu0 0.0
    %3405 = vmatprep.subr.mxu0 0.0
    %3406 = vmatpush1.msra.mxu0 0.0
    %3407 = vmatprep.subr.mxu0 0.0
    %3408 = vmatpush1.msra.mxu0 0.0
    %3409 = vmatprep.subr.mxu0 0.0
    %3410 = vmatpush1.msra.mxu0 0.0
    %3411 = vmatprep.subr.mxu0 0.0
    %3412 = vmatpush1.msra.mxu0 0.0
    %3413 = vmatprep.subr.mxu0 0.0
    %3414 = vmatpush1.msra.mxu0 0.0
    %3415 = vmatprep.subr.mxu0 0.0
    %3416 = vmatpush1.msra.mxu0 0.0
    %3417 = vmatprep.subr.mxu0 0.0
    %3418 = vmatpush1.msra.mxu0 0.0
    %3419 = vmatprep.subr.mxu0 0.0
    %3420 = vmatpush1.msra.mxu0 0.0
    %3421 = vmatprep.subr.mxu0 0.0
    %3422 = vmatpush1.msra.mxu0 0.0
    %3423 = vmatprep.subr.mxu0 0.0
    %3424 = vmatpush1.msra.mxu0 0.0
    %3425 = vmatprep.subr.mxu0 0.0
    %3426 = vmatpush1.msra.mxu0 0.0
    %3427 = vmatprep.subr.mxu0 0.0
    %3428 = vmatpush1.msra.mxu0 0.0
    %3429 = vmatprep.subr.mxu0 0.0
    %3430 = vmatpush1.msra.mxu0 0.0
    %3431 = vmatprep.subr.mxu0 0.0
    %3432 = vmatpush1.msra.mxu0 0.0
    %3433 = vmatprep.subr.mxu0 0.0
    %3434 = vmatpush1.msra.mxu0 0.0
    %3435 = vmatprep.subr.mxu0 0.0
    %3436 = vmatpush1.msra.mxu0 0.0
    %3437 = vmatprep.subr.mxu0 0.0
    %3438 = vmatpush1.msra.mxu0 0.0
    %3439 = vmatprep.subr.mxu0 0.0
    %3440 = vmatpush1.msra.mxu0 0.0
    %3441 = vmatprep.mubr.f32.mxu0 0.0
    %3442 = vmatmul.mubr.f32.gmra.mrb[0].mxu0 %v3375
    %v3443 = vpop.f32.mrb[0].mxu0
    %v3444 = vadd.f32 %v623, %v3443
    %v3445 = vpop.f32.mrb[0].mxu0
    %3446 = vdwg.mxu0
    %s3447 = scalar_lea.vmem [#allocation12], 4
    %3448 = vst.msk [vmem:[%s3447] sm:$0x3] %vm813, %v3444
    %v3449 = vsel %vm813, %v3444, -inf
    %3450 = vmax.xlane.f32.xlu0 %v3449
    %v3451 = vpop.xlane.xlu0 %3450
    %vm3452 = vcmp.eq.f32.partialorder %v3444, %v3451
    %v3453 = vsel %vm3452, 1, 0
    %v3454 = vcvt.s32.f32 %v3453
    %v3456 = vsel %vm821, %v3454, 0
    %3458 = vmatprep.subr.mxu0 %v604
    %3459 = vmatpush1.msra.mxu0 %v603
    %3460 = vmatprep.subr.mxu0 %v830
    %3461 = vmatpush1.msra.mxu0 %v827
    %3462 = vmatprep.subr.mxu0 0.0
    %3463 = vmatpush1.msra.mxu0 0.0
    %3464 = vmatprep.subr.mxu0 0.0
    %3465 = vmatpush1.msra.mxu0 0.0
    %3466 = vmatprep.subr.mxu0 0.0
    %3467 = vmatpush1.msra.mxu0 0.0
    %3468 = vmatprep.subr.mxu0 0.0
    %3469 = vmatpush1.msra.mxu0 0.0
    %3470 = vmatprep.subr.mxu0 0.0
    %3471 = vmatpush1.msra.mxu0 0.0
    %3472 = vmatprep.subr.mxu0 0.0
    %3473 = vmatpush1.msra.mxu0 0.0
    %3474 = vmatprep.subr.mxu0 0.0
    %3475 = vmatpush1.msra.mxu0 0.0
    %3476 = vmatprep.subr.mxu0 0.0
    %3477 = vmatpush1.msra.mxu0 0.0
    %3478 = vmatprep.subr.mxu0 0.0
    %3479 = vmatpush1.msra.mxu0 0.0
    %3480 = vmatprep.subr.mxu0 0.0
    %3481 = vmatpush1.msra.mxu0 0.0
    %3482 = vmatprep.subr.mxu0 0.0
    %3483 = vmatpush1.msra.mxu0 0.0
    %3484 = vmatprep.subr.mxu0 0.0
    %3485 = vmatpush1.msra.mxu0 0.0
    %3486 = vmatprep.subr.mxu0 0.0
    %3487 = vmatpush1.msra.mxu0 0.0
    %3488 = vmatprep.subr.mxu0 0.0
    %3489 = vmatpush1.msra.mxu0 0.0
    %3490 = vmatprep.subr.mxu0 0.0
    %3491 = vmatpush1.msra.mxu0 0.0
    %3492 = vmatprep.subr.mxu0 0.0
    %3493 = vmatpush1.msra.mxu0 0.0
    %3494 = vmatprep.subr.mxu0 0.0
    %3495 = vmatpush1.msra.mxu0 0.0
    %3496 = vmatprep.subr.mxu0 0.0
    %3497 = vmatpush1.msra.mxu0 0.0
    %3498 = vmatprep.subr.mxu0 0.0
    %3499 = vmatpush1.msra.mxu0 0.0
    %3500 = vmatprep.subr.mxu0 0.0
    %3501 = vmatpush1.msra.mxu0 0.0
    %3502 = vmatprep.subr.mxu0 0.0
    %3503 = vmatpush1.msra.mxu0 0.0
    %3504 = vmatprep.subr.mxu0 0.0
    %3505 = vmatpush1.msra.mxu0 0.0
    %3506 = vmatprep.subr.mxu0 0.0
    %3507 = vmatpush1.msra.mxu0 0.0
    %3508 = vmatprep.subr.mxu0 0.0
    %3509 = vmatpush1.msra.mxu0 0.0
    %3510 = vmatprep.subr.mxu0 0.0
    %3511 = vmatpush1.msra.mxu0 0.0
    %3512 = vmatprep.subr.mxu0 0.0
    %3513 = vmatpush1.msra.mxu0 0.0
    %3514 = vmatprep.subr.mxu0 0.0
    %3515 = vmatpush1.msra.mxu0 0.0
    %3516 = vmatprep.subr.mxu0 0.0
    %3517 = vmatpush1.msra.mxu0 0.0
    %3518 = vmatprep.subr.mxu0 0.0
    %3519 = vmatpush1.msra.mxu0 0.0
    %3520 = vmatprep.subr.mxu0 0.0
    %3521 = vmatpush1.msra.mxu0 0.0
    %3522 = vmatprep.mubr.f32.mxu0 0.0
    %3523 = vmatmul.mubr.f32.gmra.mrb[0].mxu0 %v3456
    %v3524 = vpop.f32.mrb[0].mxu0
    %v3525 = vadd.f32 %v506, %v3524
    %v3526 = vpop.f32.mrb[0].mxu0
    %v3527 = vadd.f32 %v575, %v3526
    %3528 = vdwg.mxu0
    %v3529 = vadd.f32 %v3270, %v3113
    %v3530 = vmul.f32 %v3529, 0.5
    %v3531 = vtanh.pop %v3530
    %v3532 = vmul.f32 %v3531, 0.5
    %v3533 = vadd.f32 %v3532, 0.5
    %v3534 = vtanh.pop %v3529
    %v3535 = vmul.f32 %v3533, %v3034
    %3537 = vrot.lane.b32.xlu0 %v3534, 64
    %v3538 = vpop.permute.xlu0 %3537
    %v3540 = vmul.f32 %v3533, %v3538
    %3542 = vrot.lane.b32.xlu0 %v3540, 32
    %v3543 = vpop.permute.xlu0 %3542
    %v3545 = vadd.f32 %v3535, %v3543
    %v3546 = vtanh.pop %v3545
    %3548 = vrot.lane.b32.xlu0 %v3546, 64
    %v3549 = vpop.permute.xlu0 %3548
    %v3551 = vmul.f32 %v3533, %v3549
    %3553 = vrot.lane.b32.xlu0 %v3551, 32
    %v3554 = vpop.permute.xlu0 %3553
    %v3555 = vsel %vm113, %v3554, 0
    %3557 = vmatprep.subr.mxu0 %v592
    %3558 = vmatpush1.msra.mxu0 %v591
    %3559 = vmatprep.subr.mxu0 %v594
    %3560 = vmatpush1.msra.mxu0 %v593
    %3561 = vmatprep.subr.mxu0 %v596
    %3562 = vmatpush1.msra.mxu0 %v595
    %3563 = vmatprep.subr.mxu0 %v598
    %3564 = vmatpush1.msra.mxu0 %v597
    %3565 = vmatprep.subr.mxu0 0.0
    %3566 = vmatpush1.msra.mxu0 0.0
    %3567 = vmatprep.subr.mxu0 0.0
    %3568 = vmatpush1.msra.mxu0 0.0
    %3569 = vmatprep.subr.mxu0 0.0
    %3570 = vmatpush1.msra.mxu0 0.0
    %3571 = vmatprep.subr.mxu0 0.0
    %3572 = vmatpush1.msra.mxu0 0.0
    %3573 = vmatprep.subr.mxu0 0.0
    %3574 = vmatpush1.msra.mxu0 0.0
    %3575 = vmatprep.subr.mxu0 0.0
    %3576 = vmatpush1.msra.mxu0 0.0
    %3577 = vmatprep.subr.mxu0 0.0
    %3578 = vmatpush1.msra.mxu0 0.0
    %3579 = vmatprep.subr.mxu0 0.0
    %3580 = vmatpush1.msra.mxu0 0.0
    %3581 = vmatprep.subr.mxu0 0.0
    %3582 = vmatpush1.msra.mxu0 0.0
    %3583 = vmatprep.subr.mxu0 0.0
    %3584 = vmatpush1.msra.mxu0 0.0
    %3585 = vmatprep.subr.mxu0 0.0
    %3586 = vmatpush1.msra.mxu0 0.0
    %3587 = vmatprep.subr.mxu0 0.0
    %3588 = vmatpush1.msra.mxu0 0.0
    %3589 = vmatprep.subr.mxu0 0.0
    %3590 = vmatpush1.msra.mxu0 0.0
    %3591 = vmatprep.subr.mxu0 0.0
    %3592 = vmatpush1.msra.mxu0 0.0
    %3593 = vmatprep.subr.mxu0 0.0
    %3594 = vmatpush1.msra.mxu0 0.0
    %3595 = vmatprep.subr.mxu0 0.0
    %3596 = vmatpush1.msra.mxu0 0.0
    %3597 = vmatprep.subr.mxu0 0.0
    %3598 = vmatpush1.msra.mxu0 0.0
    %3599 = vmatprep.subr.mxu0 0.0
    %3600 = vmatpush1.msra.mxu0 0.0
    %3601 = vmatprep.subr.mxu0 0.0
    %3602 = vmatpush1.msra.mxu0 0.0
    %3603 = vmatprep.subr.mxu0 0.0
    %3604 = vmatpush1.msra.mxu0 0.0
    %3605 = vmatprep.subr.mxu0 0.0
    %3606 = vmatpush1.msra.mxu0 0.0
    %3607 = vmatprep.subr.mxu0 0.0
    %3608 = vmatpush1.msra.mxu0 0.0
    %3609 = vmatprep.subr.mxu0 0.0
    %3610 = vmatpush1.msra.mxu0 0.0
    %3611 = vmatprep.subr.mxu0 0.0
    %3612 = vmatpush1.msra.mxu0 0.0
    %3613 = vmatprep.subr.mxu0 0.0
    %3614 = vmatpush1.msra.mxu0 0.0
    %3615 = vmatprep.subr.mxu0 0.0
    %3616 = vmatpush1.msra.mxu0 0.0
    %3617 = vmatprep.subr.mxu0 0.0
    %3618 = vmatpush1.msra.mxu0 0.0
    %3619 = vmatprep.subr.mxu0 0.0
    %3620 = vmatpush1.msra.mxu0 0.0
    %3621 = vmatprep.mubr.f32.mxu0 0.0
    %3622 = vmatmul.mubr.f32.gmra.mrb[0].mxu0 %v3555
    %v3623 = vpop.f32.mrb[0].mxu0
    %v3624 = vadd.f32 0.0, %v3623
    %v3625 = vpop.f32.mrb[0].mxu0
    %v3626 = vadd.f32 0.0, %v3625
    %3627 = vdwg.mxu0
    %v3628 = vadd.f32 %v3626, %v630
    %v3629 = vmax.f32 %v3628, 0.0
    %v3631 = vsel %vm113, %v3629, 0
    %3633 = vmatprep.subr.mxu0 0.0
    %3634 = vmatpush1.msra.mxu0 %v599
    %3635 = vmatprep.subr.mxu0 0.0
    %3636 = vmatpush1.msra.mxu0 %v600
    %3637 = vmatprep.subr.mxu0 0.0
    %3638 = vmatpush1.msra.mxu0 %v601
    %3639 = vmatprep.subr.mxu0 0.0
    %3640 = vmatpush1.msra.mxu0 %v602
    %3641 = vmatprep.subr.mxu0 0.0
    %3642 = vmatpush1.msra.mxu0 0.0
    %3643 = vmatprep.subr.mxu0 0.0
    %3644 = vmatpush1.msra.mxu0 0.0
    %3645 = vmatprep.subr.mxu0 0.0
    %3646 = vmatpush1.msra.mxu0 0.0
    %3647 = vmatprep.subr.mxu0 0.0
    %3648 = vmatpush1.msra.mxu0 0.0
    %3649 = vmatprep.subr.mxu0 0.0
    %3650 = vmatpush1.msra.mxu0 0.0
    %3651 = vmatprep.subr.mxu0 0.0
    %3652 = vmatpush1.msra.mxu0 0.0
    %3653 = vmatprep.subr.mxu0 0.0
    %3654 = vmatpush1.msra.mxu0 0.0
    %3655 = vmatprep.subr.mxu0 0.0
    %3656 = vmatpush1.msra.mxu0 0.0
    %3657 = vmatprep.subr.mxu0 0.0
    %3658 = vmatpush1.msra.mxu0 0.0
    %3659 = vmatprep.subr.mxu0 0.0
    %3660 = vmatpush1.msra.mxu0 0.0
    %3661 = vmatprep.subr.mxu0 0.0
    %3662 = vmatpush1.msra.mxu0 0.0
    %3663 = vmatprep.subr.mxu0 0.0
    %3664 = vmatpush1.msra.mxu0 0.0
    %3665 = vmatprep.subr.mxu0 0.0
    %3666 = vmatpush1.msra.mxu0 0.0
    %3667 = vmatprep.subr.mxu0 0.0
    %3668 = vmatpush1.msra.mxu0 0.0
    %3669 = vmatprep.subr.mxu0 0.0
    %3670 = vmatpush1.msra.mxu0 0.0
    %3671 = vmatprep.subr.mxu0 0.0
    %3672 = vmatpush1.msra.mxu0 0.0
    %3673 = vmatprep.subr.mxu0 0.0
    %3674 = vmatpush1.msra.mxu0 0.0
    %3675 = vmatprep.subr.mxu0 0.0
    %3676 = vmatpush1.msra.mxu0 0.0
    %3677 = vmatprep.subr.mxu0 0.0
    %3678 = vmatpush1.msra.mxu0 0.0
    %3679 = vmatprep.subr.mxu0 0.0
    %3680 = vmatpush1.msra.mxu0 0.0
    %3681 = vmatprep.subr.mxu0 0.0
    %3682 = vmatpush1.msra.mxu0 0.0
    %3683 = vmatprep.subr.mxu0 0.0
    %3684 = vmatpush1.msra.mxu0 0.0
    %3685 = vmatprep.subr.mxu0 0.0
    %3686 = vmatpush1.msra.mxu0 0.0
    %3687 = vmatprep.subr.mxu0 0.0
    %3688 = vmatpush1.msra.mxu0 0.0
    %3689 = vmatprep.subr.mxu0 0.0
    %3690 = vmatpush1.msra.mxu0 0.0
    %3691 = vmatprep.subr.mxu0 0.0
    %3692 = vmatpush1.msra.mxu0 0.0
    %3693 = vmatprep.subr.mxu0 0.0
    %3694 = vmatpush1.msra.mxu0 0.0
    %3695 = vmatprep.subr.mxu0 0.0
    %3696 = vmatpush1.msra.mxu0 0.0
    %3697 = vmatprep.mubr.f32.mxu0 0.0
    %3698 = vmatmul.mubr.f32.gmra.mrb[0].mxu0 %v3631
    %v3699 = vpop.f32.mrb[0].mxu0
    %v3700 = vadd.f32 %v637, %v3699
    %v3701 = vpop.f32.mrb[0].mxu0
    %3702 = vdwg.mxu0
    %s3703 = scalar_lea.vmem [#allocation14], 16
    %3704 = vst.msk [vmem:[%s3703] sm:$0x3] %vm1150, %v3700
    %v3705 = vsel %vm1150, %v3700, -inf
    %3706 = vmax.xlane.f32.xlu0 %v3705
    %v3707 = vpop.xlane.xlu0 %3706
    %vm3708 = vcmp.eq.f32.partialorder %v3700, %v3707
    %v3709 = vsel %vm3708, 1, 0
    %v3710 = vcvt.s32.f32 %v3709
    %v3712 = vsel %vm1158, %v3710, 0
    %3714 = vmatprep.subr.mxu0 0.0
    %3715 = vmatpush1.msra.mxu0 %v609
    %3716 = vmatprep.subr.mxu0 0.0
    %3717 = vmatpush1.msra.mxu0 %v610
    %3718 = vmatprep.subr.mxu0 0.0
    %3719 = vmatpush1.msra.mxu0 0.0
    %3720 = vmatprep.subr.mxu0 0.0
    %3721 = vmatpush1.msra.mxu0 0.0
    %3722 = vmatprep.subr.mxu0 0.0
    %3723 = vmatpush1.msra.mxu0 0.0
    %3724 = vmatprep.subr.mxu0 0.0
    %3725 = vmatpush1.msra.mxu0 0.0
    %3726 = vmatprep.subr.mxu0 0.0
    %3727 = vmatpush1.msra.mxu0 0.0
    %3728 = vmatprep.subr.mxu0 0.0
    %3729 = vmatpush1.msra.mxu0 0.0
    %3730 = vmatprep.subr.mxu0 0.0
    %3731 = vmatpush1.msra.mxu0 0.0
    %3732 = vmatprep.subr.mxu0 0.0
    %3733 = vmatpush1.msra.mxu0 0.0
    %3734 = vmatprep.subr.mxu0 0.0
    %3735 = vmatpush1.msra.mxu0 0.0
    %3736 = vmatprep.subr.mxu0 0.0
    %3737 = vmatpush1.msra.mxu0 0.0
    %3738 = vmatprep.subr.mxu0 0.0
    %3739 = vmatpush1.msra.mxu0 0.0
    %3740 = vmatprep.subr.mxu0 0.0
    %3741 = vmatpush1.msra.mxu0 0.0
    %3742 = vmatprep.subr.mxu0 0.0
    %3743 = vmatpush1.msra.mxu0 0.0
    %3744 = vmatprep.subr.mxu0 0.0
    %3745 = vmatpush1.msra.mxu0 0.0
    %3746 = vmatprep.subr.mxu0 0.0
    %3747 = vmatpush1.msra.mxu0 0.0
    %3748 = vmatprep.subr.mxu0 0.0
    %3749 = vmatpush1.msra.mxu0 0.0
    %3750 = vmatprep.subr.mxu0 0.0
    %3751 = vmatpush1.msra.mxu0 0.0
    %3752 = vmatprep.subr.mxu0 0.0
    %3753 = vmatpush1.msra.mxu0 0.0
    %3754 = vmatprep.subr.mxu0 0.0
    %3755 = vmatpush1.msra.mxu0 0.0
    %3756 = vmatprep.subr.mxu0 0.0
    %3757 = vmatpush1.msra.mxu0 0.0
    %3758 = vmatprep.subr.mxu0 0.0
    %3759 = vmatpush1.msra.mxu0 0.0
    %3760 = vmatprep.subr.mxu0 0.0
    %3761 = vmatpush1.msra.mxu0 0.0
    %3762 = vmatprep.subr.mxu0 0.0
    %3763 = vmatpush1.msra.mxu0 0.0
    %3764 = vmatprep.subr.mxu0 0.0
    %3765 = vmatpush1.msra.mxu0 0.0
    %3766 = vmatprep.subr.mxu0 0.0
    %3767 = vmatpush1.msra.mxu0 0.0
    %3768 = vmatprep.subr.mxu0 0.0
    %3769 = vmatpush1.msra.mxu0 0.0
    %3770 = vmatprep.subr.mxu0 0.0
    %3771 = vmatpush1.msra.mxu0 0.0
    %3772 = vmatprep.subr.mxu0 0.0
    %3773 = vmatpush1.msra.mxu0 0.0
    %3774 = vmatprep.subr.mxu0 0.0
    %3775 = vmatpush1.msra.mxu0 0.0
    %3776 = vmatprep.subr.mxu0 0.0
    %3777 = vmatpush1.msra.mxu0 0.0
    %3778 = vmatprep.mubr.f32.mxu0 0.0
    %3779 = vmatmul.mubr.f32.gmra.mrb[0].mxu0 %v3712
    %v3780 = vpop.f32.mrb[0].mxu0
    %v3781 = vadd.f32 %v3527, %v3780
    %v3782 = vpop.f32.mrb[0].mxu0
    %3783 = vdwg.mxu0
    %v3784 = vadd.f32 %v3781, %v3624
    %v3785 = vmul.f32 %v3784, 0.5
    %v3786 = vtanh.pop %v3785
    %v3787 = vmul.f32 %v3786, 0.5
    %v3788 = vadd.f32 %v3787, 0.5
    %v3789 = vtanh.pop %v3784
    %v3790 = vmul.f32 %v3788, %v3545
    %3792 = vrot.lane.b32.xlu0 %v3789, 64
    %v3793 = vpop.permute.xlu0 %3792
    %v3795 = vmul.f32 %v3788, %v3793
    %3797 = vrot.lane.b32.xlu0 %v3795, 32
    %v3798 = vpop.permute.xlu0 %3797
    %v3800 = vadd.f32 %v3790, %v3798
    %v3801 = vtanh.pop %v3800
    %3803 = vrot.lane.b32.xlu0 %v3801, 64
    %v3804 = vpop.permute.xlu0 %3803
    %v3806 = vmul.f32 %v3788, %v3804
    %3808 = vrot.lane.b32.xlu0 %v3806, 32
    %v3809 = vpop.permute.xlu0 %3808
    %v3810 = vsel %vm113, %v3809, 0
    %3812 = vmatprep.subr.mxu0 %v592
    %3813 = vmatpush1.msra.mxu0 %v591
    %3814 = vmatprep.subr.mxu0 %v594
    %3815 = vmatpush1.msra.mxu0 %v593
    %3816 = vmatprep.subr.mxu0 %v596
    %3817 = vmatpush1.msra.mxu0 %v595
    %3818 = vmatprep.subr.mxu0 %v598
    %3819 = vmatpush1.msra.mxu0 %v597
    %3820 = vmatprep.subr.mxu0 0.0
    %3821 = vmatpush1.msra.mxu0 0.0
    %3822 = vmatprep.subr.mxu0 0.0
    %3823 = vmatpush1.msra.mxu0 0.0
    %3824 = vmatprep.subr.mxu0 0.0
    %3825 = vmatpush1.msra.mxu0 0.0
    %3826 = vmatprep.subr.mxu0 0.0
    %3827 = vmatpush1.msra.mxu0 0.0
    %3828 = vmatprep.subr.mxu0 0.0
    %3829 = vmatpush1.msra.mxu0 0.0
    %3830 = vmatprep.subr.mxu0 0.0
    %3831 = vmatpush1.msra.mxu0 0.0
    %3832 = vmatprep.subr.mxu0 0.0
    %3833 = vmatpush1.msra.mxu0 0.0
    %3834 = vmatprep.subr.mxu0 0.0
    %3835 = vmatpush1.msra.mxu0 0.0
    %3836 = vmatprep.subr.mxu0 0.0
    %3837 = vmatpush1.msra.mxu0 0.0
    %3838 = vmatprep.subr.mxu0 0.0
    %3839 = vmatpush1.msra.mxu0 0.0
    %3840 = vmatprep.subr.mxu0 0.0
    %3841 = vmatpush1.msra.mxu0 0.0
    %3842 = vmatprep.subr.mxu0 0.0
    %3843 = vmatpush1.msra.mxu0 0.0
    %3844 = vmatprep.subr.mxu0 0.0
    %3845 = vmatpush1.msra.mxu0 0.0
    %3846 = vmatprep.subr.mxu0 0.0
    %3847 = vmatpush1.msra.mxu0 0.0
    %3848 = vmatprep.subr.mxu0 0.0
    %3849 = vmatpush1.msra.mxu0 0.0
    %3850 = vmatprep.subr.mxu0 0.0
    %3851 = vmatpush1.msra.mxu0 0.0
    %3852 = vmatprep.subr.mxu0 0.0
    %3853 = vmatpush1.msra.mxu0 0.0
    %3854 = vmatprep.subr.mxu0 0.0
    %3855 = vmatpush1.msra.mxu0 0.0
    %3856 = vmatprep.subr.mxu0 0.0
    %3857 = vmatpush1.msra.mxu0 0.0
    %3858 = vmatprep.subr.mxu0 0.0
    %3859 = vmatpush1.msra.mxu0 0.0
    %3860 = vmatprep.subr.mxu0 0.0
    %3861 = vmatpush1.msra.mxu0 0.0
    %3862 = vmatprep.subr.mxu0 0.0
    %3863 = vmatpush1.msra.mxu0 0.0
    %3864 = vmatprep.subr.mxu0 0.0
    %3865 = vmatpush1.msra.mxu0 0.0
    %3866 = vmatprep.subr.mxu0 0.0
    %3867 = vmatpush1.msra.mxu0 0.0
    %3868 = vmatprep.subr.mxu0 0.0
    %3869 = vmatpush1.msra.mxu0 0.0
    %3870 = vmatprep.subr.mxu0 0.0
    %3871 = vmatpush1.msra.mxu0 0.0
    %3872 = vmatprep.subr.mxu0 0.0
    %3873 = vmatpush1.msra.mxu0 0.0
    %3874 = vmatprep.subr.mxu0 0.0
    %3875 = vmatpush1.msra.mxu0 0.0
    %3876 = vmatprep.mubr.f32.mxu0 0.0
    %3877 = vmatmul.mubr.f32.gmra.mrb[0].mxu0 %v3810
    %v3878 = vpop.f32.mrb[0].mxu0
    %v3879 = vadd.f32 0.0, %v3878
    %v3880 = vpop.f32.mrb[0].mxu0
    %v3881 = vadd.f32 0.0, %v3880
    %3882 = vdwg.mxu0
    %v3883 = vadd.f32 %v3881, %v630
    %v3884 = vmax.f32 %v3883, 0.0
    %v3886 = vsel %vm113, %v3884, 0
    %3888 = vmatprep.subr.mxu0 0.0
    %3889 = vmatpush1.msra.mxu0 %v599
    %3890 = vmatprep.subr.mxu0 0.0
    %3891 = vmatpush1.msra.mxu0 %v600
    %3892 = vmatprep.subr.mxu0 0.0
    %3893 = vmatpush1.msra.mxu0 %v601
    %3894 = vmatprep.subr.mxu0 0.0
    %3895 = vmatpush1.msra.mxu0 %v602
    %3896 = vmatprep.subr.mxu0 0.0
    %3897 = vmatpush1.msra.mxu0 0.0
    %3898 = vmatprep.subr.mxu0 0.0
    %3899 = vmatpush1.msra.mxu0 0.0
    %3900 = vmatprep.subr.mxu0 0.0
    %3901 = vmatpush1.msra.mxu0 0.0
    %3902 = vmatprep.subr.mxu0 0.0
    %3903 = vmatpush1.msra.mxu0 0.0
    %3904 = vmatprep.subr.mxu0 0.0
    %3905 = vmatpush1.msra.mxu0 0.0
    %3906 = vmatprep.subr.mxu0 0.0
    %3907 = vmatpush1.msra.mxu0 0.0
    %3908 = vmatprep.subr.mxu0 0.0
    %3909 = vmatpush1.msra.mxu0 0.0
    %3910 = vmatprep.subr.mxu0 0.0
    %3911 = vmatpush1.msra.mxu0 0.0
    %3912 = vmatprep.subr.mxu0 0.0
    %3913 = vmatpush1.msra.mxu0 0.0
    %3914 = vmatprep.subr.mxu0 0.0
    %3915 = vmatpush1.msra.mxu0 0.0
    %3916 = vmatprep.subr.mxu0 0.0
    %3917 = vmatpush1.msra.mxu0 0.0
    %3918 = vmatprep.subr.mxu0 0.0
    %3919 = vmatpush1.msra.mxu0 0.0
    %3920 = vmatprep.subr.mxu0 0.0
    %3921 = vmatpush1.msra.mxu0 0.0
    %3922 = vmatprep.subr.mxu0 0.0
    %3923 = vmatpush1.msra.mxu0 0.0
    %3924 = vmatprep.subr.mxu0 0.0
    %3925 = vmatpush1.msra.mxu0 0.0
    %3926 = vmatprep.subr.mxu0 0.0
    %3927 = vmatpush1.msra.mxu0 0.0
    %3928 = vmatprep.subr.mxu0 0.0
    %3929 = vmatpush1.msra.mxu0 0.0
    %3930 = vmatprep.subr.mxu0 0.0
    %3931 = vmatpush1.msra.mxu0 0.0
    %3932 = vmatprep.subr.mxu0 0.0
    %3933 = vmatpush1.msra.mxu0 0.0
    %3934 = vmatprep.subr.mxu0 0.0
    %3935 = vmatpush1.msra.mxu0 0.0
    %3936 = vmatprep.subr.mxu0 0.0
    %3937 = vmatpush1.msra.mxu0 0.0
    %3938 = vmatprep.subr.mxu0 0.0
    %3939 = vmatpush1.msra.mxu0 0.0
    %3940 = vmatprep.subr.mxu0 0.0
    %3941 = vmatpush1.msra.mxu0 0.0
    %3942 = vmatprep.subr.mxu0 0.0
    %3943 = vmatpush1.msra.mxu0 0.0
    %3944 = vmatprep.subr.mxu0 0.0
    %3945 = vmatpush1.msra.mxu0 0.0
    %3946 = vmatprep.subr.mxu0 0.0
    %3947 = vmatpush1.msra.mxu0 0.0
    %3948 = vmatprep.subr.mxu0 0.0
    %3949 = vmatpush1.msra.mxu0 0.0
    %3950 = vmatprep.subr.mxu0 0.0
    %3951 = vmatpush1.msra.mxu0 0.0
    %3952 = vmatprep.mubr.f32.mxu0 0.0
    %3953 = vmatmul.mubr.f32.gmra.mrb[0].mxu0 %v3886
    %v3954 = vpop.f32.mrb[0].mxu0
    %v3955 = vadd.f32 %v637, %v3954
    %v3956 = vpop.f32.mrb[0].mxu0
    %3957 = vdwg.mxu0
    %s3958 = scalar_lea.vmem [#allocation14], 18
    %3959 = vst.msk [vmem:[%s3958] sm:$0x3] %vm1150, %v3955
    %v3960 = vsel %vm1150, %v3955, -inf
    %3961 = vmax.xlane.f32.xlu0 %v3960
    %v3962 = vpop.xlane.xlu0 %3961
    %vm3963 = vcmp.eq.f32.partialorder %v3955, %v3962
    %v3964 = vsel %vm3963, 1, 0
    %v3965 = vcvt.s32.f32 %v3964
    %v3967 = vsel %vm1158, %v3965, 0
    %3969 = vmatprep.subr.mxu0 0.0
    %3970 = vmatpush1.msra.mxu0 %v609
    %3971 = vmatprep.subr.mxu0 0.0
    %3972 = vmatpush1.msra.mxu0 %v610
    %3973 = vmatprep.subr.mxu0 0.0
    %3974 = vmatpush1.msra.mxu0 0.0
    %3975 = vmatprep.subr.mxu0 0.0
    %3976 = vmatpush1.msra.mxu0 0.0
    %3977 = vmatprep.subr.mxu0 0.0
    %3978 = vmatpush1.msra.mxu0 0.0
    %3979 = vmatprep.subr.mxu0 0.0
    %3980 = vmatpush1.msra.mxu0 0.0
    %3981 = vmatprep.subr.mxu0 0.0
    %3982 = vmatpush1.msra.mxu0 0.0
    %3983 = vmatprep.subr.mxu0 0.0
    %3984 = vmatpush1.msra.mxu0 0.0
    %3985 = vmatprep.subr.mxu0 0.0
    %3986 = vmatpush1.msra.mxu0 0.0
    %3987 = vmatprep.subr.mxu0 0.0
    %3988 = vmatpush1.msra.mxu0 0.0
    %3989 = vmatprep.subr.mxu0 0.0
    %3990 = vmatpush1.msra.mxu0 0.0
    %3991 = vmatprep.subr.mxu0 0.0
    %3992 = vmatpush1.msra.mxu0 0.0
    %3993 = vmatprep.subr.mxu0 0.0
    %3994 = vmatpush1.msra.mxu0 0.0
    %3995 = vmatprep.subr.mxu0 0.0
    %3996 = vmatpush1.msra.mxu0 0.0
    %3997 = vmatprep.subr.mxu0 0.0
    %3998 = vmatpush1.msra.mxu0 0.0
    %3999 = vmatprep.subr.mxu0 0.0
    %4000 = vmatpush1.msra.mxu0 0.0
    %4001 = vmatprep.subr.mxu0 0.0
    %4002 = vmatpush1.msra.mxu0 0.0
    %4003 = vmatprep.subr.mxu0 0.0
    %4004 = vmatpush1.msra.mxu0 0.0
    %4005 = vmatprep.subr.mxu0 0.0
    %4006 = vmatpush1.msra.mxu0 0.0
    %4007 = vmatprep.subr.mxu0 0.0
    %4008 = vmatpush1.msra.mxu0 0.0
    %4009 = vmatprep.subr.mxu0 0.0
    %4010 = vmatpush1.msra.mxu0 0.0
    %4011 = vmatprep.subr.mxu0 0.0
    %4012 = vmatpush1.msra.mxu0 0.0
    %4013 = vmatprep.subr.mxu0 0.0
    %4014 = vmatpush1.msra.mxu0 0.0
    %4015 = vmatprep.subr.mxu0 0.0
    %4016 = vmatpush1.msra.mxu0 0.0
    %4017 = vmatprep.subr.mxu0 0.0
    %4018 = vmatpush1.msra.mxu0 0.0
    %4019 = vmatprep.subr.mxu0 0.0
    %4020 = vmatpush1.msra.mxu0 0.0
    %4021 = vmatprep.subr.mxu0 0.0
    %4022 = vmatpush1.msra.mxu0 0.0
    %4023 = vmatprep.subr.mxu0 0.0
    %4024 = vmatpush1.msra.mxu0 0.0
    %4025 = vmatprep.subr.mxu0 0.0
    %4026 = vmatpush1.msra.mxu0 0.0
    %4027 = vmatprep.subr.mxu0 0.0
    %4028 = vmatpush1.msra.mxu0 0.0
    %4029 = vmatprep.subr.mxu0 0.0
    %4030 = vmatpush1.msra.mxu0 0.0
    %4031 = vmatprep.subr.mxu0 0.0
    %4032 = vmatpush1.msra.mxu0 0.0
    %4033 = vmatprep.mubr.f32.mxu0 0.0
    %4034 = vmatmul.mubr.f32.gmra.mrb[0].mxu0 %v3967
    %v4035 = vpop.f32.mrb[0].mxu0
    %v4036 = vadd.f32 %v3527, %v4035
    %v4037 = vpop.f32.mrb[0].mxu0
    %4038 = vdwg.mxu0
    %v4039 = vadd.f32 %v4036, %v3879
    %v4040 = vmul.f32 %v4039, 0.5
    %v4041 = vtanh.pop %v4040
    %v4042 = vmul.f32 %v4041, 0.5
    %v4043 = vadd.f32 %v4042, 0.5
    %v4044 = vtanh.pop %v4039
    %v4045 = vmul.f32 %v4043, %v3800
    %4047 = vrot.lane.b32.xlu0 %v4044, 64
    %v4048 = vpop.permute.xlu0 %4047
    %v4050 = vmul.f32 %v4043, %v4048
    %4052 = vrot.lane.b32.xlu0 %v4050, 32
    %v4053 = vpop.permute.xlu0 %4052
    %v4055 = vadd.f32 %v4045, %v4053
    %v4056 = vtanh.pop %v4055
    %4058 = vrot.lane.b32.xlu0 %v4056, 64
    %v4059 = vpop.permute.xlu0 %4058
    %v4061 = vmul.f32 %v4043, %v4059
    %4063 = vrot.lane.b32.xlu0 %v4061, 32
    %v4064 = vpop.permute.xlu0 %4063
    %v4065 = vsel %vm113, %v4064, 0
    %4067 = vmatprep.subr.mxu0 %v592
    %4068 = vmatpush1.msra.mxu0 %v591
    %4069 = vmatprep.subr.mxu0 %v594
    %4070 = vmatpush1.msra.mxu0 %v593
    %4071 = vmatprep.subr.mxu0 %v596
    %4072 = vmatpush1.msra.mxu0 %v595
    %4073 = vmatprep.subr.mxu0 %v598
    %4074 = vmatpush1.msra.mxu0 %v597
    %4075 = vmatprep.subr.mxu0 0.0
    %4076 = vmatpush1.msra.mxu0 0.0
    %4077 = vmatprep.subr.mxu0 0.0
    %4078 = vmatpush1.msra.mxu0 0.0
    %4079 = vmatprep.subr.mxu0 0.0
    %4080 = vmatpush1.msra.mxu0 0.0
    %4081 = vmatprep.subr.mxu0 0.0
    %4082 = vmatpush1.msra.mxu0 0.0
    %4083 = vmatprep.subr.mxu0 0.0
    %4084 = vmatpush1.msra.mxu0 0.0
    %4085 = vmatprep.subr.mxu0 0.0
    %4086 = vmatpush1.msra.mxu0 0.0
    %4087 = vmatprep.subr.mxu0 0.0
    %4088 = vmatpush1.msra.mxu0 0.0
    %4089 = vmatprep.subr.mxu0 0.0
    %4090 = vmatpush1.msra.mxu0 0.0
    %4091 = vmatprep.subr.mxu0 0.0
    %4092 = vmatpush1.msra.mxu0 0.0
    %4093 = vmatprep.subr.mxu0 0.0
    %4094 = vmatpush1.msra.mxu0 0.0
    %4095 = vmatprep.subr.mxu0 0.0
    %4096 = vmatpush1.msra.mxu0 0.0
    %4097 = vmatprep.subr.mxu0 0.0
    %4098 = vmatpush1.msra.mxu0 0.0
    %4099 = vmatprep.subr.mxu0 0.0
    %4100 = vmatpush1.msra.mxu0 0.0
    %4101 = vmatprep.subr.mxu0 0.0
    %4102 = vmatpush1.msra.mxu0 0.0
    %4103 = vmatprep.subr.mxu0 0.0
    %4104 = vmatpush1.msra.mxu0 0.0
    %4105 = vmatprep.subr.mxu0 0.0
    %4106 = vmatpush1.msra.mxu0 0.0
    %4107 = vmatprep.subr.mxu0 0.0
    %4108 = vmatpush1.msra.mxu0 0.0
    %4109 = vmatprep.subr.mxu0 0.0
    %4110 = vmatpush1.msra.mxu0 0.0
    %4111 = vmatprep.subr.mxu0 0.0
    %4112 = vmatpush1.msra.mxu0 0.0
    %4113 = vmatprep.subr.mxu0 0.0
    %4114 = vmatpush1.msra.mxu0 0.0
    %4115 = vmatprep.subr.mxu0 0.0
    %4116 = vmatpush1.msra.mxu0 0.0
    %4117 = vmatprep.subr.mxu0 0.0
    %4118 = vmatpush1.msra.mxu0 0.0
    %4119 = vmatprep.subr.mxu0 0.0
    %4120 = vmatpush1.msra.mxu0 0.0
    %4121 = vmatprep.subr.mxu0 0.0
    %4122 = vmatpush1.msra.mxu0 0.0
    %4123 = vmatprep.subr.mxu0 0.0
    %4124 = vmatpush1.msra.mxu0 0.0
    %4125 = vmatprep.subr.mxu0 0.0
    %4126 = vmatpush1.msra.mxu0 0.0
    %4127 = vmatprep.subr.mxu0 0.0
    %4128 = vmatpush1.msra.mxu0 0.0
    %4129 = vmatprep.subr.mxu0 0.0
    %4130 = vmatpush1.msra.mxu0 0.0
    %4131 = vmatprep.mubr.f32.mxu0 0.0
    %4132 = vmatmul.mubr.f32.gmra.mrb[0].mxu0 %v4065
    %v4133 = vpop.f32.mrb[0].mxu0
    %v4134 = vadd.f32 0.0, %v4133
    %v4135 = vpop.f32.mrb[0].mxu0
    %v4136 = vadd.f32 0.0, %v4135
    %4137 = vdwg.mxu0
    %v4138 = vadd.f32 %v4136, %v630
    %v4139 = vmax.f32 %v4138, 0.0
    %v4141 = vsel %vm113, %v4139, 0
    %4143 = vmatprep.subr.mxu0 0.0
    %4144 = vmatpush1.msra.mxu0 %v599
    %4145 = vmatprep.subr.mxu0 0.0
    %4146 = vmatpush1.msra.mxu0 %v600
    %4147 = vmatprep.subr.mxu0 0.0
    %4148 = vmatpush1.msra.mxu0 %v601
    %4149 = vmatprep.subr.mxu0 0.0
    %4150 = vmatpush1.msra.mxu0 %v602
    %4151 = vmatprep.subr.mxu0 0.0
    %4152 = vmatpush1.msra.mxu0 0.0
    %4153 = vmatprep.subr.mxu0 0.0
    %4154 = vmatpush1.msra.mxu0 0.0
    %4155 = vmatprep.subr.mxu0 0.0
    %4156 = vmatpush1.msra.mxu0 0.0
    %4157 = vmatprep.subr.mxu0 0.0
    %4158 = vmatpush1.msra.mxu0 0.0
    %4159 = vmatprep.subr.mxu0 0.0
    %4160 = vmatpush1.msra.mxu0 0.0
    %4161 = vmatprep.subr.mxu0 0.0
    %4162 = vmatpush1.msra.mxu0 0.0
    %4163 = vmatprep.subr.mxu0 0.0
    %4164 = vmatpush1.msra.mxu0 0.0
    %4165 = vmatprep.subr.mxu0 0.0
    %4166 = vmatpush1.msra.mxu0 0.0
    %4167 = vmatprep.subr.mxu0 0.0
    %4168 = vmatpush1.msra.mxu0 0.0
    %4169 = vmatprep.subr.mxu0 0.0
    %4170 = vmatpush1.msra.mxu0 0.0
    %4171 = vmatprep.subr.mxu0 0.0
    %4172 = vmatpush1.msra.mxu0 0.0
    %4173 = vmatprep.subr.mxu0 0.0
    %4174 = vmatpush1.msra.mxu0 0.0
    %4175 = vmatprep.subr.mxu0 0.0
    %4176 = vmatpush1.msra.mxu0 0.0
    %4177 = vmatprep.subr.mxu0 0.0
    %4178 = vmatpush1.msra.mxu0 0.0
    %4179 = vmatprep.subr.mxu0 0.0
    %4180 = vmatpush1.msra.mxu0 0.0
    %4181 = vmatprep.subr.mxu0 0.0
    %4182 = vmatpush1.msra.mxu0 0.0
    %4183 = vmatprep.subr.mxu0 0.0
    %4184 = vmatpush1.msra.mxu0 0.0
    %4185 = vmatprep.subr.mxu0 0.0
    %4186 = vmatpush1.msra.mxu0 0.0
    %4187 = vmatprep.subr.mxu0 0.0
    %4188 = vmatpush1.msra.mxu0 0.0
    %4189 = vmatprep.subr.mxu0 0.0
    %4190 = vmatpush1.msra.mxu0 0.0
    %4191 = vmatprep.subr.mxu0 0.0
    %4192 = vmatpush1.msra.mxu0 0.0
    %4193 = vmatprep.subr.mxu0 0.0
    %4194 = vmatpush1.msra.mxu0 0.0
    %4195 = vmatprep.subr.mxu0 0.0
    %4196 = vmatpush1.msra.mxu0 0.0
    %4197 = vmatprep.subr.mxu0 0.0
    %4198 = vmatpush1.msra.mxu0 0.0
    %4199 = vmatprep.subr.mxu0 0.0
    %4200 = vmatpush1.msra.mxu0 0.0
    %4201 = vmatprep.subr.mxu0 0.0
    %4202 = vmatpush1.msra.mxu0 0.0
    %4203 = vmatprep.subr.mxu0 0.0
    %4204 = vmatpush1.msra.mxu0 0.0
    %4205 = vmatprep.subr.mxu0 0.0
    %4206 = vmatpush1.msra.mxu0 0.0
    %4207 = vmatprep.mubr.f32.mxu0 0.0
    %4208 = vmatmul.mubr.f32.gmra.mrb[0].mxu0 %v4141
    %v4209 = vpop.f32.mrb[0].mxu0
    %v4210 = vadd.f32 %v637, %v4209
    %v4211 = vpop.f32.mrb[0].mxu0
    %4212 = vdwg.mxu0
    %s4213 = scalar_lea.vmem [#allocation14], 20
    %4214 = vst.msk [vmem:[%s4213] sm:$0x3] %vm1150, %v4210
    %v4215 = vsel %vm1150, %v4210, -inf
    %4216 = vmax.xlane.f32.xlu0 %v4215
    %v4217 = vpop.xlane.xlu0 %4216
    %vm4218 = vcmp.eq.f32.partialorder %v4210, %v4217
    %v4219 = vsel %vm4218, 1, 0
    %v4220 = vcvt.s32.f32 %v4219
    %v4222 = vsel %vm1158, %v4220, 0
    %4224 = vmatprep.subr.mxu0 0.0
    %4225 = vmatpush1.msra.mxu0 %v609
    %4226 = vmatprep.subr.mxu0 0.0
    %4227 = vmatpush1.msra.mxu0 %v610
    %4228 = vmatprep.subr.mxu0 0.0
    %4229 = vmatpush1.msra.mxu0 0.0
    %4230 = vmatprep.subr.mxu0 0.0
    %4231 = vmatpush1.msra.mxu0 0.0
    %4232 = vmatprep.subr.mxu0 0.0
    %4233 = vmatpush1.msra.mxu0 0.0
    %4234 = vmatprep.subr.mxu0 0.0
    %4235 = vmatpush1.msra.mxu0 0.0
    %4236 = vmatprep.subr.mxu0 0.0
    %4237 = vmatpush1.msra.mxu0 0.0
    %4238 = vmatprep.subr.mxu0 0.0
    %4239 = vmatpush1.msra.mxu0 0.0
    %4240 = vmatprep.subr.mxu0 0.0
    %4241 = vmatpush1.msra.mxu0 0.0
    %4242 = vmatprep.subr.mxu0 0.0
    %4243 = vmatpush1.msra.mxu0 0.0
    %4244 = vmatprep.subr.mxu0 0.0
    %4245 = vmatpush1.msra.mxu0 0.0
    %4246 = vmatprep.subr.mxu0 0.0
    %4247 = vmatpush1.msra.mxu0 0.0
    %4248 = vmatprep.subr.mxu0 0.0
    %4249 = vmatpush1.msra.mxu0 0.0
    %4250 = vmatprep.subr.mxu0 0.0
    %4251 = vmatpush1.msra.mxu0 0.0
    %4252 = vmatprep.subr.mxu0 0.0
    %4253 = vmatpush1.msra.mxu0 0.0
    %4254 = vmatprep.subr.mxu0 0.0
    %4255 = vmatpush1.msra.mxu0 0.0
    %4256 = vmatprep.subr.mxu0 0.0
    %4257 = vmatpush1.msra.mxu0 0.0
    %4258 = vmatprep.subr.mxu0 0.0
    %4259 = vmatpush1.msra.mxu0 0.0
    %4260 = vmatprep.subr.mxu0 0.0
    %4261 = vmatpush1.msra.mxu0 0.0
    %4262 = vmatprep.subr.mxu0 0.0
    %4263 = vmatpush1.msra.mxu0 0.0
    %4264 = vmatprep.subr.mxu0 0.0
    %4265 = vmatpush1.msra.mxu0 0.0
    %4266 = vmatprep.subr.mxu0 0.0
    %4267 = vmatpush1.msra.mxu0 0.0
    %4268 = vmatprep.subr.mxu0 0.0
    %4269 = vmatpush1.msra.mxu0 0.0
    %4270 = vmatprep.subr.mxu0 0.0
    %4271 = vmatpush1.msra.mxu0 0.0
    %4272 = vmatprep.subr.mxu0 0.0
    %4273 = vmatpush1.msra.mxu0 0.0
    %4274 = vmatprep.subr.mxu0 0.0
    %4275 = vmatpush1.msra.mxu0 0.0
    %4276 = vmatprep.subr.mxu0 0.0
    %4277 = vmatpush1.msra.mxu0 0.0
    %4278 = vmatprep.subr.mxu0 0.0
    %4279 = vmatpush1.msra.mxu0 0.0
    %4280 = vmatprep.subr.mxu0 0.0
    %4281 = vmatpush1.msra.mxu0 0.0
    %4282 = vmatprep.subr.mxu0 0.0
    %4283 = vmatpush1.msra.mxu0 0.0
    %4284 = vmatprep.subr.mxu0 0.0
    %4285 = vmatpush1.msra.mxu0 0.0
    %4286 = vmatprep.subr.mxu0 0.0
    %4287 = vmatpush1.msra.mxu0 0.0
    %4288 = vmatprep.mubr.f32.mxu0 0.0
    %4289 = vmatmul.mubr.f32.gmra.mrb[0].mxu0 %v4222
    %v4290 = vpop.f32.mrb[0].mxu0
    %v4291 = vadd.f32 %v3527, %v4290
    %v4292 = vpop.f32.mrb[0].mxu0
    %4293 = vdwg.mxu0
    %v4294 = vadd.f32 %v4291, %v4134
    %v4295 = vmul.f32 %v4294, 0.5
    %v4296 = vtanh.pop %v4295
    %v4297 = vmul.f32 %v4296, 0.5
    %v4298 = vadd.f32 %v4297, 0.5
    %v4299 = vtanh.pop %v4294
    %v4300 = vmul.f32 %v4298, %v4055
    %4302 = vrot.lane.b32.xlu0 %v4299, 64
    %v4303 = vpop.permute.xlu0 %4302
    %v4305 = vmul.f32 %v4298, %v4303
    %4307 = vrot.lane.b32.xlu0 %v4305, 32
    %v4308 = vpop.permute.xlu0 %4307
    %v4310 = vadd.f32 %v4300, %v4308
    %v4311 = vtanh.pop %v4310
    %4313 = vrot.lane.b32.xlu0 %v4311, 64
    %v4314 = vpop.permute.xlu0 %4313
    %v4316 = vmul.f32 %v4298, %v4314
    %4318 = vrot.lane.b32.xlu0 %v4316, 32
    %v4319 = vpop.permute.xlu0 %4318
    %v4320 = vsel %vm113, %v4319, 0
    %4322 = vmatprep.subr.mxu0 %v592
    %4323 = vmatpush1.msra.mxu0 %v591
    %4324 = vmatprep.subr.mxu0 %v594
    %4325 = vmatpush1.msra.mxu0 %v593
    %4326 = vmatprep.subr.mxu0 %v596
    %4327 = vmatpush1.msra.mxu0 %v595
    %4328 = vmatprep.subr.mxu0 %v598
    %4329 = vmatpush1.msra.mxu0 %v597
    %4330 = vmatprep.subr.mxu0 0.0
    %4331 = vmatpush1.msra.mxu0 0.0
    %4332 = vmatprep.subr.mxu0 0.0
    %4333 = vmatpush1.msra.mxu0 0.0
    %4334 = vmatprep.subr.mxu0 0.0
    %4335 = vmatpush1.msra.mxu0 0.0
    %4336 = vmatprep.subr.mxu0 0.0
    %4337 = vmatpush1.msra.mxu0 0.0
    %4338 = vmatprep.subr.mxu0 0.0
    %4339 = vmatpush1.msra.mxu0 0.0
    %4340 = vmatprep.subr.mxu0 0.0
    %4341 = vmatpush1.msra.mxu0 0.0
    %4342 = vmatprep.subr.mxu0 0.0
    %4343 = vmatpush1.msra.mxu0 0.0
    %4344 = vmatprep.subr.mxu0 0.0
    %4345 = vmatpush1.msra.mxu0 0.0
    %4346 = vmatprep.subr.mxu0 0.0
    %4347 = vmatpush1.msra.mxu0 0.0
    %4348 = vmatprep.subr.mxu0 0.0
    %4349 = vmatpush1.msra.mxu0 0.0
    %4350 = vmatprep.subr.mxu0 0.0
    %4351 = vmatpush1.msra.mxu0 0.0
    %4352 = vmatprep.subr.mxu0 0.0
    %4353 = vmatpush1.msra.mxu0 0.0
    %4354 = vmatprep.subr.mxu0 0.0
    %4355 = vmatpush1.msra.mxu0 0.0
    %4356 = vmatprep.subr.mxu0 0.0
    %4357 = vmatpush1.msra.mxu0 0.0
    %4358 = vmatprep.subr.mxu0 0.0
    %4359 = vmatpush1.msra.mxu0 0.0
    %4360 = vmatprep.subr.mxu0 0.0
    %4361 = vmatpush1.msra.mxu0 0.0
    %4362 = vmatprep.subr.mxu0 0.0
    %4363 = vmatpush1.msra.mxu0 0.0
    %4364 = vmatprep.subr.mxu0 0.0
    %4365 = vmatpush1.msra.mxu0 0.0
    %4366 = vmatprep.subr.mxu0 0.0
    %4367 = vmatpush1.msra.mxu0 0.0
    %4368 = vmatprep.subr.mxu0 0.0
    %4369 = vmatpush1.msra.mxu0 0.0
    %4370 = vmatprep.subr.mxu0 0.0
    %4371 = vmatpush1.msra.mxu0 0.0
    %4372 = vmatprep.subr.mxu0 0.0
    %4373 = vmatpush1.msra.mxu0 0.0
    %4374 = vmatprep.subr.mxu0 0.0
    %4375 = vmatpush1.msra.mxu0 0.0
    %4376 = vmatprep.subr.mxu0 0.0
    %4377 = vmatpush1.msra.mxu0 0.0
    %4378 = vmatprep.subr.mxu0 0.0
    %4379 = vmatpush1.msra.mxu0 0.0
    %4380 = vmatprep.subr.mxu0 0.0
    %4381 = vmatpush1.msra.mxu0 0.0
    %4382 = vmatprep.subr.mxu0 0.0
    %4383 = vmatpush1.msra.mxu0 0.0
    %4384 = vmatprep.subr.mxu0 0.0
    %4385 = vmatpush1.msra.mxu0 0.0
    %4386 = vmatprep.mubr.f32.mxu0 0.0
    %4387 = vmatmul.mubr.f32.gmra.mrb[0].mxu0 %v4320
    %v4388 = vpop.f32.mrb[0].mxu0
    %v4389 = vadd.f32 0.0, %v4388
    %v4390 = vpop.f32.mrb[0].mxu0
    %v4391 = vadd.f32 0.0, %v4390
    %4392 = vdwg.mxu0
    %v4393 = vadd.f32 %v4391, %v630
    %v4394 = vmax.f32 %v4393, 0.0
    %v4396 = vsel %vm113, %v4394, 0
    %4398 = vmatprep.subr.mxu0 0.0
    %4399 = vmatpush1.msra.mxu0 %v599
    %4400 = vmatprep.subr.mxu0 0.0
    %4401 = vmatpush1.msra.mxu0 %v600
    %4402 = vmatprep.subr.mxu0 0.0
    %4403 = vmatpush1.msra.mxu0 %v601
    %4404 = vmatprep.subr.mxu0 0.0
    %4405 = vmatpush1.msra.mxu0 %v602
    %4406 = vmatprep.subr.mxu0 0.0
    %4407 = vmatpush1.msra.mxu0 0.0
    %4408 = vmatprep.subr.mxu0 0.0
    %4409 = vmatpush1.msra.mxu0 0.0
    %4410 = vmatprep.subr.mxu0 0.0
    %4411 = vmatpush1.msra.mxu0 0.0
    %4412 = vmatprep.subr.mxu0 0.0
    %4413 = vmatpush1.msra.mxu0 0.0
    %4414 = vmatprep.subr.mxu0 0.0
    %4415 = vmatpush1.msra.mxu0 0.0
    %4416 = vmatprep.subr.mxu0 0.0
    %4417 = vmatpush1.msra.mxu0 0.0
    %4418 = vmatprep.subr.mxu0 0.0
    %4419 = vmatpush1.msra.mxu0 0.0
    %4420 = vmatprep.subr.mxu0 0.0
    %4421 = vmatpush1.msra.mxu0 0.0
    %4422 = vmatprep.subr.mxu0 0.0
    %4423 = vmatpush1.msra.mxu0 0.0
    %4424 = vmatprep.subr.mxu0 0.0
    %4425 = vmatpush1.msra.mxu0 0.0
    %4426 = vmatprep.subr.mxu0 0.0
    %4427 = vmatpush1.msra.mxu0 0.0
    %4428 = vmatprep.subr.mxu0 0.0
    %4429 = vmatpush1.msra.mxu0 0.0
    %4430 = vmatprep.subr.mxu0 0.0
    %4431 = vmatpush1.msra.mxu0 0.0
    %4432 = vmatprep.subr.mxu0 0.0
    %4433 = vmatpush1.msra.mxu0 0.0
    %4434 = vmatprep.subr.mxu0 0.0
    %4435 = vmatpush1.msra.mxu0 0.0
    %4436 = vmatprep.subr.mxu0 0.0
    %4437 = vmatpush1.msra.mxu0 0.0
    %4438 = vmatprep.subr.mxu0 0.0
    %4439 = vmatpush1.msra.mxu0 0.0
    %4440 = vmatprep.subr.mxu0 0.0
    %4441 = vmatpush1.msra.mxu0 0.0
    %4442 = vmatprep.subr.mxu0 0.0
    %4443 = vmatpush1.msra.mxu0 0.0
    %4444 = vmatprep.subr.mxu0 0.0
    %4445 = vmatpush1.msra.mxu0 0.0
    %4446 = vmatprep.subr.mxu0 0.0
    %4447 = vmatpush1.msra.mxu0 0.0
    %4448 = vmatprep.subr.mxu0 0.0
    %4449 = vmatpush1.msra.mxu0 0.0
    %4450 = vmatprep.subr.mxu0 0.0
    %4451 = vmatpush1.msra.mxu0 0.0
    %4452 = vmatprep.subr.mxu0 0.0
    %4453 = vmatpush1.msra.mxu0 0.0
    %4454 = vmatprep.subr.mxu0 0.0
    %4455 = vmatpush1.msra.mxu0 0.0
    %4456 = vmatprep.subr.mxu0 0.0
    %4457 = vmatpush1.msra.mxu0 0.0
    %4458 = vmatprep.subr.mxu0 0.0
    %4459 = vmatpush1.msra.mxu0 0.0
    %4460 = vmatprep.subr.mxu0 0.0
    %4461 = vmatpush1.msra.mxu0 0.0
    %4462 = vmatprep.mubr.f32.mxu0 0.0
    %4463 = vmatmul.mubr.f32.gmra.mrb[0].mxu0 %v4396
    %v4464 = vpop.f32.mrb[0].mxu0
    %v4465 = vadd.f32 %v637, %v4464
    %v4466 = vpop.f32.mrb[0].mxu0
    %4467 = vdwg.mxu0
    %s4468 = scalar_lea.vmem [#allocation14], 22
    %4469 = vst.msk [vmem:[%s4468] sm:$0x3] %vm1150, %v4465
    %v4470 = vsel %vm1150, %v4465, -inf
    %4471 = vmax.xlane.f32.xlu0 %v4470
    %v4472 = vpop.xlane.xlu0 %4471
    %vm4473 = vcmp.eq.f32.partialorder %v4465, %v4472
    %v4474 = vsel %vm4473, 1, 0
    %v4475 = vcvt.s32.f32 %v4474
    %v4477 = vsel %vm1158, %v4475, 0
    %4479 = vmatprep.subr.mxu0 0.0
    %4480 = vmatpush1.msra.mxu0 %v609
    %4481 = vmatprep.subr.mxu0 0.0
    %4482 = vmatpush1.msra.mxu0 %v610
    %4483 = vmatprep.subr.mxu0 0.0
    %4484 = vmatpush1.msra.mxu0 0.0
    %4485 = vmatprep.subr.mxu0 0.0
    %4486 = vmatpush1.msra.mxu0 0.0
    %4487 = vmatprep.subr.mxu0 0.0
    %4488 = vmatpush1.msra.mxu0 0.0
    %4489 = vmatprep.subr.mxu0 0.0
    %4490 = vmatpush1.msra.mxu0 0.0
    %4491 = vmatprep.subr.mxu0 0.0
    %4492 = vmatpush1.msra.mxu0 0.0
    %4493 = vmatprep.subr.mxu0 0.0
    %4494 = vmatpush1.msra.mxu0 0.0
    %4495 = vmatprep.subr.mxu0 0.0
    %4496 = vmatpush1.msra.mxu0 0.0
    %4497 = vmatprep.subr.mxu0 0.0
    %4498 = vmatpush1.msra.mxu0 0.0
    %4499 = vmatprep.subr.mxu0 0.0
    %4500 = vmatpush1.msra.mxu0 0.0
    %4501 = vmatprep.subr.mxu0 0.0
    %4502 = vmatpush1.msra.mxu0 0.0
    %4503 = vmatprep.subr.mxu0 0.0
    %4504 = vmatpush1.msra.mxu0 0.0
    %4505 = vmatprep.subr.mxu0 0.0
    %4506 = vmatpush1.msra.mxu0 0.0
    %4507 = vmatprep.subr.mxu0 0.0
    %4508 = vmatpush1.msra.mxu0 0.0
    %4509 = vmatprep.subr.mxu0 0.0
    %4510 = vmatpush1.msra.mxu0 0.0
    %4511 = vmatprep.subr.mxu0 0.0
    %4512 = vmatpush1.msra.mxu0 0.0
    %4513 = vmatprep.subr.mxu0 0.0
    %4514 = vmatpush1.msra.mxu0 0.0
    %4515 = vmatprep.subr.mxu0 0.0
    %4516 = vmatpush1.msra.mxu0 0.0
    %4517 = vmatprep.subr.mxu0 0.0
    %4518 = vmatpush1.msra.mxu0 0.0
    %4519 = vmatprep.subr.mxu0 0.0
    %4520 = vmatpush1.msra.mxu0 0.0
    %4521 = vmatprep.subr.mxu0 0.0
    %4522 = vmatpush1.msra.mxu0 0.0
    %4523 = vmatprep.subr.mxu0 0.0
    %4524 = vmatpush1.msra.mxu0 0.0
    %4525 = vmatprep.subr.mxu0 0.0
    %4526 = vmatpush1.msra.mxu0 0.0
    %4527 = vmatprep.subr.mxu0 0.0
    %4528 = vmatpush1.msra.mxu0 0.0
    %4529 = vmatprep.subr.mxu0 0.0
    %4530 = vmatpush1.msra.mxu0 0.0
    %4531 = vmatprep.subr.mxu0 0.0
    %4532 = vmatpush1.msra.mxu0 0.0
    %4533 = vmatprep.subr.mxu0 0.0
    %4534 = vmatpush1.msra.mxu0 0.0
    %4535 = vmatprep.subr.mxu0 0.0
    %4536 = vmatpush1.msra.mxu0 0.0
    %4537 = vmatprep.subr.mxu0 0.0
    %4538 = vmatpush1.msra.mxu0 0.0
    %4539 = vmatprep.subr.mxu0 0.0
    %4540 = vmatpush1.msra.mxu0 0.0
    %4541 = vmatprep.subr.mxu0 0.0
    %4542 = vmatpush1.msra.mxu0 0.0
    %4543 = vmatprep.mubr.f32.mxu0 0.0
    %4544 = vmatmul.mubr.f32.gmra.mrb[0].mxu0 %v4477
    %v4545 = vpop.f32.mrb[0].mxu0
    %v4546 = vadd.f32 %v3527, %v4545
    %v4547 = vpop.f32.mrb[0].mxu0
    %4548 = vdwg.mxu0
    %v4549 = vadd.f32 %v3525, %v3368
    %v4550 = vmul.f32 %v4549, 0.5
    %v4551 = vtanh.pop %v4550
    %v4552 = vmul.f32 %v4551, 0.5
    %v4553 = vadd.f32 %v4552, 0.5
    %v4554 = vtanh.pop %v4549
    %v4555 = vmul.f32 %v4553, %v3289
    %4557 = vrot.lane.b32.xlu0 %v4554, 64
    %v4558 = vpop.permute.xlu0 %4557
    %v4560 = vmul.f32 %v4553, %v4558
    %4562 = vrot.lane.b32.xlu0 %v4560, 32
    %v4563 = vpop.permute.xlu0 %4562
    %v4565 = vadd.f32 %v4555, %v4563
    %v4566 = vtanh.pop %v4565
    %4568 = vrot.lane.b32.xlu0 %v4566, 64
    %v4569 = vpop.permute.xlu0 %4568
    %v4571 = vmul.f32 %v4553, %v4569
    %4573 = vrot.lane.b32.xlu0 %v4571, 32
    %v4574 = vpop.permute.xlu0 %4573
    %v4575 = vsel %vm113, %v4574, 0
    %4577 = vmatprep.subr.mxu0 %v580
    %4578 = vmatpush1.msra.mxu0 %v579
    %4579 = vmatprep.subr.mxu0 %v582
    %4580 = vmatpush1.msra.mxu0 %v581
    %4581 = vmatprep.subr.mxu0 %v584
    %4582 = vmatpush1.msra.mxu0 %v583
    %4583 = vmatprep.subr.mxu0 %v586
    %4584 = vmatpush1.msra.mxu0 %v585
    %4585 = vmatprep.subr.mxu0 0.0
    %4586 = vmatpush1.msra.mxu0 0.0
    %4587 = vmatprep.subr.mxu0 0.0
    %4588 = vmatpush1.msra.mxu0 0.0
    %4589 = vmatprep.subr.mxu0 0.0
    %4590 = vmatpush1.msra.mxu0 0.0
    %4591 = vmatprep.subr.mxu0 0.0
    %4592 = vmatpush1.msra.mxu0 0.0
    %4593 = vmatprep.subr.mxu0 0.0
    %4594 = vmatpush1.msra.mxu0 0.0
    %4595 = vmatprep.subr.mxu0 0.0
    %4596 = vmatpush1.msra.mxu0 0.0
    %4597 = vmatprep.subr.mxu0 0.0
    %4598 = vmatpush1.msra.mxu0 0.0
    %4599 = vmatprep.subr.mxu0 0.0
    %4600 = vmatpush1.msra.mxu0 0.0
    %4601 = vmatprep.subr.mxu0 0.0
    %4602 = vmatpush1.msra.mxu0 0.0
    %4603 = vmatprep.subr.mxu0 0.0
    %4604 = vmatpush1.msra.mxu0 0.0
    %4605 = vmatprep.subr.mxu0 0.0
    %4606 = vmatpush1.msra.mxu0 0.0
    %4607 = vmatprep.subr.mxu0 0.0
    %4608 = vmatpush1.msra.mxu0 0.0
    %4609 = vmatprep.subr.mxu0 0.0
    %4610 = vmatpush1.msra.mxu0 0.0
    %4611 = vmatprep.subr.mxu0 0.0
    %4612 = vmatpush1.msra.mxu0 0.0
    %4613 = vmatprep.subr.mxu0 0.0
    %4614 = vmatpush1.msra.mxu0 0.0
    %4615 = vmatprep.subr.mxu0 0.0
    %4616 = vmatpush1.msra.mxu0 0.0
    %4617 = vmatprep.subr.mxu0 0.0
    %4618 = vmatpush1.msra.mxu0 0.0
    %4619 = vmatprep.subr.mxu0 0.0
    %4620 = vmatpush1.msra.mxu0 0.0
    %4621 = vmatprep.subr.mxu0 0.0
    %4622 = vmatpush1.msra.mxu0 0.0
    %4623 = vmatprep.subr.mxu0 0.0
    %4624 = vmatpush1.msra.mxu0 0.0
    %4625 = vmatprep.subr.mxu0 0.0
    %4626 = vmatpush1.msra.mxu0 0.0
    %4627 = vmatprep.subr.mxu0 0.0
    %4628 = vmatpush1.msra.mxu0 0.0
    %4629 = vmatprep.subr.mxu0 0.0
    %4630 = vmatpush1.msra.mxu0 0.0
    %4631 = vmatprep.subr.mxu0 0.0
    %4632 = vmatpush1.msra.mxu0 0.0
    %4633 = vmatprep.subr.mxu0 0.0
    %4634 = vmatpush1.msra.mxu0 0.0
    %4635 = vmatprep.subr.mxu0 0.0
    %4636 = vmatpush1.msra.mxu0 0.0
    %4637 = vmatprep.subr.mxu0 0.0
    %4638 = vmatpush1.msra.mxu0 0.0
    %4639 = vmatprep.subr.mxu0 0.0
    %4640 = vmatpush1.msra.mxu0 0.0
    %4641 = vmatprep.mubr.f32.mxu0 0.0
    %4642 = vmatmul.mubr.f32.gmra.mrb[0].mxu0 %v4575
    %v4643 = vpop.f32.mrb[0].mxu0
    %v4644 = vpop.f32.mrb[0].mxu0
    %v4645 = vadd.f32 0.0, %v4644
    %4646 = vdwg.mxu0
    %v4647 = vadd.f32 %v4645, %v616
    %v4648 = vmax.f32 %v4647, 0.0
    %v4650 = vsel %vm113, %v4648, 0
    %4652 = vmatprep.subr.mxu0 0.0
    %4653 = vmatpush1.msra.mxu0 %v587
    %4654 = vmatprep.subr.mxu0 0.0
    %4655 = vmatpush1.msra.mxu0 %v588
    %4656 = vmatprep.subr.mxu0 0.0
    %4657 = vmatpush1.msra.mxu0 %v589
    %4658 = vmatprep.subr.mxu0 0.0
    %4659 = vmatpush1.msra.mxu0 %v590
    %4660 = vmatprep.subr.mxu0 0.0
    %4661 = vmatpush1.msra.mxu0 0.0
    %4662 = vmatprep.subr.mxu0 0.0
    %4663 = vmatpush1.msra.mxu0 0.0
    %4664 = vmatprep.subr.mxu0 0.0
    %4665 = vmatpush1.msra.mxu0 0.0
    %4666 = vmatprep.subr.mxu0 0.0
    %4667 = vmatpush1.msra.mxu0 0.0
    %4668 = vmatprep.subr.mxu0 0.0
    %4669 = vmatpush1.msra.mxu0 0.0
    %4670 = vmatprep.subr.mxu0 0.0
    %4671 = vmatpush1.msra.mxu0 0.0
    %4672 = vmatprep.subr.mxu0 0.0
    %4673 = vmatpush1.msra.mxu0 0.0
    %4674 = vmatprep.subr.mxu0 0.0
    %4675 = vmatpush1.msra.mxu0 0.0
    %4676 = vmatprep.subr.mxu0 0.0
    %4677 = vmatpush1.msra.mxu0 0.0
    %4678 = vmatprep.subr.mxu0 0.0
    %4679 = vmatpush1.msra.mxu0 0.0
    %4680 = vmatprep.subr.mxu0 0.0
    %4681 = vmatpush1.msra.mxu0 0.0
    %4682 = vmatprep.subr.mxu0 0.0
    %4683 = vmatpush1.msra.mxu0 0.0
    %4684 = vmatprep.subr.mxu0 0.0
    %4685 = vmatpush1.msra.mxu0 0.0
    %4686 = vmatprep.subr.mxu0 0.0
    %4687 = vmatpush1.msra.mxu0 0.0
    %4688 = vmatprep.subr.mxu0 0.0
    %4689 = vmatpush1.msra.mxu0 0.0
    %4690 = vmatprep.subr.mxu0 0.0
    %4691 = vmatpush1.msra.mxu0 0.0
    %4692 = vmatprep.subr.mxu0 0.0
    %4693 = vmatpush1.msra.mxu0 0.0
    %4694 = vmatprep.subr.mxu0 0.0
    %4695 = vmatpush1.msra.mxu0 0.0
    %4696 = vmatprep.subr.mxu0 0.0
    %4697 = vmatpush1.msra.mxu0 0.0
    %4698 = vmatprep.subr.mxu0 0.0
    %4699 = vmatpush1.msra.mxu0 0.0
    %4700 = vmatprep.subr.mxu0 0.0
    %4701 = vmatpush1.msra.mxu0 0.0
    %4702 = vmatprep.subr.mxu0 0.0
    %4703 = vmatpush1.msra.mxu0 0.0
    %4704 = vmatprep.subr.mxu0 0.0
    %4705 = vmatpush1.msra.mxu0 0.0
    %4706 = vmatprep.subr.mxu0 0.0
    %4707 = vmatpush1.msra.mxu0 0.0
    %4708 = vmatprep.subr.mxu0 0.0
    %4709 = vmatpush1.msra.mxu0 0.0
    %4710 = vmatprep.subr.mxu0 0.0
    %4711 = vmatpush1.msra.mxu0 0.0
    %4712 = vmatprep.subr.mxu0 0.0
    %4713 = vmatpush1.msra.mxu0 0.0
    %4714 = vmatprep.subr.mxu0 0.0
    %4715 = vmatpush1.msra.mxu0 0.0
    %4716 = vmatprep.mubr.f32.mxu0 0.0
    %4717 = vmatmul.mubr.f32.gmra.mrb[0].mxu0 %v4650
    %v4718 = vpop.f32.mrb[0].mxu0
    %v4719 = vadd.f32 %v623, %v4718
    %v4720 = vpop.f32.mrb[0].mxu0
    %4721 = vdwg.mxu0
    %s4722 = scalar_lea.vmem [#allocation12], 6
    %4723 = vst.msk [vmem:[%s4722] sm:$0x3] %vm813, %v4719
    %v4724 = vsel %vm813, %v4719, -inf
    %4725 = vmax.xlane.f32.xlu0 %v4724
    %v4726 = vpop.xlane.xlu0 %4725
    %vm4727 = vcmp.eq.f32.partialorder %v4719, %v4726
    %v4728 = vsel %vm4727, 1, 0
    %v4729 = vcvt.s32.f32 %v4728
    %v4731 = vsel %vm821, %v4729, 0
    %4733 = vmatprep.subr.mxu0 %v604
    %4734 = vmatpush1.msra.mxu0 %v603
    %4735 = vmatprep.subr.mxu0 %v830
    %4736 = vmatpush1.msra.mxu0 %v827
    %4737 = vmatprep.subr.mxu0 0.0
    %4738 = vmatpush1.msra.mxu0 0.0
    %4739 = vmatprep.subr.mxu0 0.0
    %4740 = vmatpush1.msra.mxu0 0.0
    %4741 = vmatprep.subr.mxu0 0.0
    %4742 = vmatpush1.msra.mxu0 0.0
    %4743 = vmatprep.subr.mxu0 0.0
    %4744 = vmatpush1.msra.mxu0 0.0
    %4745 = vmatprep.subr.mxu0 0.0
    %4746 = vmatpush1.msra.mxu0 0.0
    %4747 = vmatprep.subr.mxu0 0.0
    %4748 = vmatpush1.msra.mxu0 0.0
    %4749 = vmatprep.subr.mxu0 0.0
    %4750 = vmatpush1.msra.mxu0 0.0
    %4751 = vmatprep.subr.mxu0 0.0
    %4752 = vmatpush1.msra.mxu0 0.0
    %4753 = vmatprep.subr.mxu0 0.0
    %4754 = vmatpush1.msra.mxu0 0.0
    %4755 = vmatprep.subr.mxu0 0.0
    %4756 = vmatpush1.msra.mxu0 0.0
    %4757 = vmatprep.subr.mxu0 0.0
    %4758 = vmatpush1.msra.mxu0 0.0
    %4759 = vmatprep.subr.mxu0 0.0
    %4760 = vmatpush1.msra.mxu0 0.0
    %4761 = vmatprep.subr.mxu0 0.0
    %4762 = vmatpush1.msra.mxu0 0.0
    %4763 = vmatprep.subr.mxu0 0.0
    %4764 = vmatpush1.msra.mxu0 0.0
    %4765 = vmatprep.subr.mxu0 0.0
    %4766 = vmatpush1.msra.mxu0 0.0
    %4767 = vmatprep.subr.mxu0 0.0
    %4768 = vmatpush1.msra.mxu0 0.0
    %4769 = vmatprep.subr.mxu0 0.0
    %4770 = vmatpush1.msra.mxu0 0.0
    %4771 = vmatprep.subr.mxu0 0.0
    %4772 = vmatpush1.msra.mxu0 0.0
    %4773 = vmatprep.subr.mxu0 0.0
    %4774 = vmatpush1.msra.mxu0 0.0
    %4775 = vmatprep.subr.mxu0 0.0
    %4776 = vmatpush1.msra.mxu0 0.0
    %4777 = vmatprep.subr.mxu0 0.0
    %4778 = vmatpush1.msra.mxu0 0.0
    %4779 = vmatprep.subr.mxu0 0.0
    %4780 = vmatpush1.msra.mxu0 0.0
    %4781 = vmatprep.subr.mxu0 0.0
    %4782 = vmatpush1.msra.mxu0 0.0
    %4783 = vmatprep.subr.mxu0 0.0
    %4784 = vmatpush1.msra.mxu0 0.0
    %4785 = vmatprep.subr.mxu0 0.0
    %4786 = vmatpush1.msra.mxu0 0.0
    %4787 = vmatprep.subr.mxu0 0.0
    %4788 = vmatpush1.msra.mxu0 0.0
    %4789 = vmatprep.subr.mxu0 0.0
    %4790 = vmatpush1.msra.mxu0 0.0
    %4791 = vmatprep.subr.mxu0 0.0
    %4792 = vmatpush1.msra.mxu0 0.0
    %4793 = vmatprep.subr.mxu0 0.0
    %4794 = vmatpush1.msra.mxu0 0.0
    %4795 = vmatprep.subr.mxu0 0.0
    %4796 = vmatpush1.msra.mxu0 0.0
    %4797 = vmatprep.mubr.f32.mxu0 0.0
    %4798 = vmatmul.mubr.f32.gmra.mrb[0].mxu0 %v4731
    %v4799 = vpop.f32.mrb[0].mxu0
    %v4800 = vpop.f32.mrb[0].mxu0
    %v4801 = vadd.f32 %v575, %v4800
    %4802 = vdwg.mxu0
    %v4803 = vadd.f32 %v4546, %v4389
    %v4804 = vmul.f32 %v4803, 0.5
    %v4805 = vtanh.pop %v4804
    %v4806 = vmul.f32 %v4805, 0.5
    %v4807 = vadd.f32 %v4806, 0.5
    %v4808 = vtanh.pop %v4803
    %v4809 = vmul.f32 %v4807, %v4310
    %4811 = vrot.lane.b32.xlu0 %v4808, 64
    %v4812 = vpop.permute.xlu0 %4811
    %v4814 = vmul.f32 %v4807, %v4812
    %4816 = vrot.lane.b32.xlu0 %v4814, 32
    %v4817 = vpop.permute.xlu0 %4816
    %v4819 = vadd.f32 %v4809, %v4817
    %v4820 = vtanh.pop %v4819
    %4822 = vrot.lane.b32.xlu0 %v4820, 64
    %v4823 = vpop.permute.xlu0 %4822
    %v4825 = vmul.f32 %v4807, %v4823
    %4827 = vrot.lane.b32.xlu0 %v4825, 32
    %v4828 = vpop.permute.xlu0 %4827
    %v4829 = vsel %vm113, %v4828, 0
    %4831 = vmatprep.subr.mxu0 %v592
    %4832 = vmatpush1.msra.mxu0 %v591
    %4833 = vmatprep.subr.mxu0 %v594
    %4834 = vmatpush1.msra.mxu0 %v593
    %4835 = vmatprep.subr.mxu0 %v596
    %4836 = vmatpush1.msra.mxu0 %v595
    %4837 = vmatprep.subr.mxu0 %v598
    %4838 = vmatpush1.msra.mxu0 %v597
    %4839 = vmatprep.subr.mxu0 0.0
    %4840 = vmatpush1.msra.mxu0 0.0
    %4841 = vmatprep.subr.mxu0 0.0
    %4842 = vmatpush1.msra.mxu0 0.0
    %4843 = vmatprep.subr.mxu0 0.0
    %4844 = vmatpush1.msra.mxu0 0.0
    %4845 = vmatprep.subr.mxu0 0.0
    %4846 = vmatpush1.msra.mxu0 0.0
    %4847 = vmatprep.subr.mxu0 0.0
    %4848 = vmatpush1.msra.mxu0 0.0
    %4849 = vmatprep.subr.mxu0 0.0
    %4850 = vmatpush1.msra.mxu0 0.0
    %4851 = vmatprep.subr.mxu0 0.0
    %4852 = vmatpush1.msra.mxu0 0.0
    %4853 = vmatprep.subr.mxu0 0.0
    %4854 = vmatpush1.msra.mxu0 0.0
    %4855 = vmatprep.subr.mxu0 0.0
    %4856 = vmatpush1.msra.mxu0 0.0
    %4857 = vmatprep.subr.mxu0 0.0
    %4858 = vmatpush1.msra.mxu0 0.0
    %4859 = vmatprep.subr.mxu0 0.0
    %4860 = vmatpush1.msra.mxu0 0.0
    %4861 = vmatprep.subr.mxu0 0.0
    %4862 = vmatpush1.msra.mxu0 0.0
    %4863 = vmatprep.subr.mxu0 0.0
    %4864 = vmatpush1.msra.mxu0 0.0
    %4865 = vmatprep.subr.mxu0 0.0
    %4866 = vmatpush1.msra.mxu0 0.0
    %4867 = vmatprep.subr.mxu0 0.0
    %4868 = vmatpush1.msra.mxu0 0.0
    %4869 = vmatprep.subr.mxu0 0.0
    %4870 = vmatpush1.msra.mxu0 0.0
    %4871 = vmatprep.subr.mxu0 0.0
    %4872 = vmatpush1.msra.mxu0 0.0
    %4873 = vmatprep.subr.mxu0 0.0
    %4874 = vmatpush1.msra.mxu0 0.0
    %4875 = vmatprep.subr.mxu0 0.0
    %4876 = vmatpush1.msra.mxu0 0.0
    %4877 = vmatprep.subr.mxu0 0.0
    %4878 = vmatpush1.msra.mxu0 0.0
    %4879 = vmatprep.subr.mxu0 0.0
    %4880 = vmatpush1.msra.mxu0 0.0
    %4881 = vmatprep.subr.mxu0 0.0
    %4882 = vmatpush1.msra.mxu0 0.0
    %4883 = vmatprep.subr.mxu0 0.0
    %4884 = vmatpush1.msra.mxu0 0.0
    %4885 = vmatprep.subr.mxu0 0.0
    %4886 = vmatpush1.msra.mxu0 0.0
    %4887 = vmatprep.subr.mxu0 0.0
    %4888 = vmatpush1.msra.mxu0 0.0
    %4889 = vmatprep.subr.mxu0 0.0
    %4890 = vmatpush1.msra.mxu0 0.0
    %4891 = vmatprep.subr.mxu0 0.0
    %4892 = vmatpush1.msra.mxu0 0.0
    %4893 = vmatprep.subr.mxu0 0.0
    %4894 = vmatpush1.msra.mxu0 0.0
    %4895 = vmatprep.mubr.f32.mxu0 0.0
    %4896 = vmatmul.mubr.f32.gmra.mrb[0].mxu0 %v4829
    %v4897 = vpop.f32.mrb[0].mxu0
    %v4898 = vadd.f32 0.0, %v4897
    %v4899 = vpop.f32.mrb[0].mxu0
    %v4900 = vadd.f32 0.0, %v4899
    %4901 = vdwg.mxu0
    %v4902 = vadd.f32 %v4900, %v630
    %v4903 = vmax.f32 %v4902, 0.0
    %v4905 = vsel %vm113, %v4903, 0
    %4907 = vmatprep.subr.mxu0 0.0
    %4908 = vmatpush1.msra.mxu0 %v599
    %4909 = vmatprep.subr.mxu0 0.0
    %4910 = vmatpush1.msra.mxu0 %v600
    %4911 = vmatprep.subr.mxu0 0.0
    %4912 = vmatpush1.msra.mxu0 %v601
    %4913 = vmatprep.subr.mxu0 0.0
    %4914 = vmatpush1.msra.mxu0 %v602
    %4915 = vmatprep.subr.mxu0 0.0
    %4916 = vmatpush1.msra.mxu0 0.0
    %4917 = vmatprep.subr.mxu0 0.0
    %4918 = vmatpush1.msra.mxu0 0.0
    %4919 = vmatprep.subr.mxu0 0.0
    %4920 = vmatpush1.msra.mxu0 0.0
    %4921 = vmatprep.subr.mxu0 0.0
    %4922 = vmatpush1.msra.mxu0 0.0
    %4923 = vmatprep.subr.mxu0 0.0
    %4924 = vmatpush1.msra.mxu0 0.0
    %4925 = vmatprep.subr.mxu0 0.0
    %4926 = vmatpush1.msra.mxu0 0.0
    %4927 = vmatprep.subr.mxu0 0.0
    %4928 = vmatpush1.msra.mxu0 0.0
    %4929 = vmatprep.subr.mxu0 0.0
    %4930 = vmatpush1.msra.mxu0 0.0
    %4931 = vmatprep.subr.mxu0 0.0
    %4932 = vmatpush1.msra.mxu0 0.0
    %4933 = vmatprep.subr.mxu0 0.0
    %4934 = vmatpush1.msra.mxu0 0.0
    %4935 = vmatprep.subr.mxu0 0.0
    %4936 = vmatpush1.msra.mxu0 0.0
    %4937 = vmatprep.subr.mxu0 0.0
    %4938 = vmatpush1.msra.mxu0 0.0
    %4939 = vmatprep.subr.mxu0 0.0
    %4940 = vmatpush1.msra.mxu0 0.0
    %4941 = vmatprep.subr.mxu0 0.0
    %4942 = vmatpush1.msra.mxu0 0.0
    %4943 = vmatprep.subr.mxu0 0.0
    %4944 = vmatpush1.msra.mxu0 0.0
    %4945 = vmatprep.subr.mxu0 0.0
    %4946 = vmatpush1.msra.mxu0 0.0
    %4947 = vmatprep.subr.mxu0 0.0
    %4948 = vmatpush1.msra.mxu0 0.0
    %4949 = vmatprep.subr.mxu0 0.0
    %4950 = vmatpush1.msra.mxu0 0.0
    %4951 = vmatprep.subr.mxu0 0.0
    %4952 = vmatpush1.msra.mxu0 0.0
    %4953 = vmatprep.subr.mxu0 0.0
    %4954 = vmatpush1.msra.mxu0 0.0
    %4955 = vmatprep.subr.mxu0 0.0
    %4956 = vmatpush1.msra.mxu0 0.0
    %4957 = vmatprep.subr.mxu0 0.0
    %4958 = vmatpush1.msra.mxu0 0.0
    %4959 = vmatprep.subr.mxu0 0.0
    %4960 = vmatpush1.msra.mxu0 0.0
    %4961 = vmatprep.subr.mxu0 0.0
    %4962 = vmatpush1.msra.mxu0 0.0
    %4963 = vmatprep.subr.mxu0 0.0
    %4964 = vmatpush1.msra.mxu0 0.0
    %4965 = vmatprep.subr.mxu0 0.0
    %4966 = vmatpush1.msra.mxu0 0.0
    %4967 = vmatprep.subr.mxu0 0.0
    %4968 = vmatpush1.msra.mxu0 0.0
    %4969 = vmatprep.subr.mxu0 0.0
    %4970 = vmatpush1.msra.mxu0 0.0
    %4971 = vmatprep.mubr.f32.mxu0 0.0
    %4972 = vmatmul.mubr.f32.gmra.mrb[0].mxu0 %v4905
    %v4973 = vpop.f32.mrb[0].mxu0
    %v4974 = vadd.f32 %v637, %v4973
    %v4975 = vpop.f32.mrb[0].mxu0
    %4976 = vdwg.mxu0
    %s4977 = scalar_lea.vmem [#allocation14], 24
    %4978 = vst.msk [vmem:[%s4977] sm:$0x3] %vm1150, %v4974
    %v4979 = vsel %vm1150, %v4974, -inf
    %4980 = vmax.xlane.f32.xlu0 %v4979
    %v4981 = vpop.xlane.xlu0 %4980
    %vm4982 = vcmp.eq.f32.partialorder %v4974, %v4981
    %v4983 = vsel %vm4982, 1, 0
    %v4984 = vcvt.s32.f32 %v4983
    %v4986 = vsel %vm1158, %v4984, 0
    %4988 = vmatprep.subr.mxu0 0.0
    %4989 = vmatpush1.msra.mxu0 %v609
    %4990 = vmatprep.subr.mxu0 0.0
    %4991 = vmatpush1.msra.mxu0 %v610
    %4992 = vmatprep.subr.mxu0 0.0
    %4993 = vmatpush1.msra.mxu0 0.0
    %4994 = vmatprep.subr.mxu0 0.0
    %4995 = vmatpush1.msra.mxu0 0.0
    %4996 = vmatprep.subr.mxu0 0.0
    %4997 = vmatpush1.msra.mxu0 0.0
    %4998 = vmatprep.subr.mxu0 0.0
    %4999 = vmatpush1.msra.mxu0 0.0
    %5000 = vmatprep.subr.mxu0 0.0
    %5001 = vmatpush1.msra.mxu0 0.0
    %5002 = vmatprep.subr.mxu0 0.0
    %5003 = vmatpush1.msra.mxu0 0.0
    %5004 = vmatprep.subr.mxu0 0.0
    %5005 = vmatpush1.msra.mxu0 0.0
    %5006 = vmatprep.subr.mxu0 0.0
    %5007 = vmatpush1.msra.mxu0 0.0
    %5008 = vmatprep.subr.mxu0 0.0
    %5009 = vmatpush1.msra.mxu0 0.0
    %5010 = vmatprep.subr.mxu0 0.0
    %5011 = vmatpush1.msra.mxu0 0.0
    %5012 = vmatprep.subr.mxu0 0.0
    %5013 = vmatpush1.msra.mxu0 0.0
    %5014 = vmatprep.subr.mxu0 0.0
    %5015 = vmatpush1.msra.mxu0 0.0
    %5016 = vmatprep.subr.mxu0 0.0
    %5017 = vmatpush1.msra.mxu0 0.0
    %5018 = vmatprep.subr.mxu0 0.0
    %5019 = vmatpush1.msra.mxu0 0.0
    %5020 = vmatprep.subr.mxu0 0.0
    %5021 = vmatpush1.msra.mxu0 0.0
    %5022 = vmatprep.subr.mxu0 0.0
    %5023 = vmatpush1.msra.mxu0 0.0
    %5024 = vmatprep.subr.mxu0 0.0
    %5025 = vmatpush1.msra.mxu0 0.0
    %5026 = vmatprep.subr.mxu0 0.0
    %5027 = vmatpush1.msra.mxu0 0.0
    %5028 = vmatprep.subr.mxu0 0.0
    %5029 = vmatpush1.msra.mxu0 0.0
    %5030 = vmatprep.subr.mxu0 0.0
    %5031 = vmatpush1.msra.mxu0 0.0
    %5032 = vmatprep.subr.mxu0 0.0
    %5033 = vmatpush1.msra.mxu0 0.0
    %5034 = vmatprep.subr.mxu0 0.0
    %5035 = vmatpush1.msra.mxu0 0.0
    %5036 = vmatprep.subr.mxu0 0.0
    %5037 = vmatpush1.msra.mxu0 0.0
    %5038 = vmatprep.subr.mxu0 0.0
    %5039 = vmatpush1.msra.mxu0 0.0
    %5040 = vmatprep.subr.mxu0 0.0
    %5041 = vmatpush1.msra.mxu0 0.0
    %5042 = vmatprep.subr.mxu0 0.0
    %5043 = vmatpush1.msra.mxu0 0.0
    %5044 = vmatprep.subr.mxu0 0.0
    %5045 = vmatpush1.msra.mxu0 0.0
    %5046 = vmatprep.subr.mxu0 0.0
    %5047 = vmatpush1.msra.mxu0 0.0
    %5048 = vmatprep.subr.mxu0 0.0
    %5049 = vmatpush1.msra.mxu0 0.0
    %5050 = vmatprep.subr.mxu0 0.0
    %5051 = vmatpush1.msra.mxu0 0.0
    %5052 = vmatprep.mubr.f32.mxu0 0.0
    %5053 = vmatmul.mubr.f32.gmra.mrb[0].mxu0 %v4986
    %v5054 = vpop.f32.mrb[0].mxu0
    %v5055 = vadd.f32 %v4801, %v5054
    %v5056 = vpop.f32.mrb[0].mxu0
    %5057 = vdwg.mxu0
    %v5058 = vadd.f32 %v5055, %v4898
    %v5059 = vmul.f32 %v5058, 0.5
    %v5060 = vtanh.pop %v5059
    %v5061 = vmul.f32 %v5060, 0.5
    %v5062 = vadd.f32 %v5061, 0.5
    %v5063 = vtanh.pop %v5058
    %v5064 = vmul.f32 %v5062, %v4819
    %5066 = vrot.lane.b32.xlu0 %v5063, 64
    %v5067 = vpop.permute.xlu0 %5066
    %v5069 = vmul.f32 %v5062, %v5067
    %5071 = vrot.lane.b32.xlu0 %v5069, 32
    %v5072 = vpop.permute.xlu0 %5071
    %v5074 = vadd.f32 %v5064, %v5072
    %v5075 = vtanh.pop %v5074
    %5077 = vrot.lane.b32.xlu0 %v5075, 64
    %v5078 = vpop.permute.xlu0 %5077
    %v5080 = vmul.f32 %v5062, %v5078
    %5082 = vrot.lane.b32.xlu0 %v5080, 32
    %v5083 = vpop.permute.xlu0 %5082
    %v5084 = vsel %vm113, %v5083, 0
    %5086 = vmatprep.subr.mxu0 %v592
    %5087 = vmatpush1.msra.mxu0 %v591
    %5088 = vmatprep.subr.mxu0 %v594
    %5089 = vmatpush1.msra.mxu0 %v593
    %5090 = vmatprep.subr.mxu0 %v596
    %5091 = vmatpush1.msra.mxu0 %v595
    %5092 = vmatprep.subr.mxu0 %v598
    %5093 = vmatpush1.msra.mxu0 %v597
    %5094 = vmatprep.subr.mxu0 0.0
    %5095 = vmatpush1.msra.mxu0 0.0
    %5096 = vmatprep.subr.mxu0 0.0
    %5097 = vmatpush1.msra.mxu0 0.0
    %5098 = vmatprep.subr.mxu0 0.0
    %5099 = vmatpush1.msra.mxu0 0.0
    %5100 = vmatprep.subr.mxu0 0.0
    %5101 = vmatpush1.msra.mxu0 0.0
    %5102 = vmatprep.subr.mxu0 0.0
    %5103 = vmatpush1.msra.mxu0 0.0
    %5104 = vmatprep.subr.mxu0 0.0
    %5105 = vmatpush1.msra.mxu0 0.0
    %5106 = vmatprep.subr.mxu0 0.0
    %5107 = vmatpush1.msra.mxu0 0.0
    %5108 = vmatprep.subr.mxu0 0.0
    %5109 = vmatpush1.msra.mxu0 0.0
    %5110 = vmatprep.subr.mxu0 0.0
    %5111 = vmatpush1.msra.mxu0 0.0
    %5112 = vmatprep.subr.mxu0 0.0
    %5113 = vmatpush1.msra.mxu0 0.0
    %5114 = vmatprep.subr.mxu0 0.0
    %5115 = vmatpush1.msra.mxu0 0.0
    %5116 = vmatprep.subr.mxu0 0.0
    %5117 = vmatpush1.msra.mxu0 0.0
    %5118 = vmatprep.subr.mxu0 0.0
    %5119 = vmatpush1.msra.mxu0 0.0
    %5120 = vmatprep.subr.mxu0 0.0
    %5121 = vmatpush1.msra.mxu0 0.0
    %5122 = vmatprep.subr.mxu0 0.0
    %5123 = vmatpush1.msra.mxu0 0.0
    %5124 = vmatprep.subr.mxu0 0.0
    %5125 = vmatpush1.msra.mxu0 0.0
    %5126 = vmatprep.subr.mxu0 0.0
    %5127 = vmatpush1.msra.mxu0 0.0
    %5128 = vmatprep.subr.mxu0 0.0
    %5129 = vmatpush1.msra.mxu0 0.0
    %5130 = vmatprep.subr.mxu0 0.0
    %5131 = vmatpush1.msra.mxu0 0.0
    %5132 = vmatprep.subr.mxu0 0.0
    %5133 = vmatpush1.msra.mxu0 0.0
    %5134 = vmatprep.subr.mxu0 0.0
    %5135 = vmatpush1.msra.mxu0 0.0
    %5136 = vmatprep.subr.mxu0 0.0
    %5137 = vmatpush1.msra.mxu0 0.0
    %5138 = vmatprep.subr.mxu0 0.0
    %5139 = vmatpush1.msra.mxu0 0.0
    %5140 = vmatprep.subr.mxu0 0.0
    %5141 = vmatpush1.msra.mxu0 0.0
    %5142 = vmatprep.subr.mxu0 0.0
    %5143 = vmatpush1.msra.mxu0 0.0
    %5144 = vmatprep.subr.mxu0 0.0
    %5145 = vmatpush1.msra.mxu0 0.0
    %5146 = vmatprep.subr.mxu0 0.0
    %5147 = vmatpush1.msra.mxu0 0.0
    %5148 = vmatprep.subr.mxu0 0.0
    %5149 = vmatpush1.msra.mxu0 0.0
    %5150 = vmatprep.mubr.f32.mxu0 0.0
    %5151 = vmatmul.mubr.f32.gmra.mrb[0].mxu0 %v5084
    %v5152 = vpop.f32.mrb[0].mxu0
    %v5153 = vadd.f32 0.0, %v5152
    %v5154 = vpop.f32.mrb[0].mxu0
    %v5155 = vadd.f32 0.0, %v5154
    %5156 = vdwg.mxu0
    %v5157 = vadd.f32 %v5155, %v630
    %v5158 = vmax.f32 %v5157, 0.0
    %v5160 = vsel %vm113, %v5158, 0
    %5162 = vmatprep.subr.mxu0 0.0
    %5163 = vmatpush1.msra.mxu0 %v599
    %5164 = vmatprep.subr.mxu0 0.0
    %5165 = vmatpush1.msra.mxu0 %v600
    %5166 = vmatprep.subr.mxu0 0.0
    %5167 = vmatpush1.msra.mxu0 %v601
    %5168 = vmatprep.subr.mxu0 0.0
    %5169 = vmatpush1.msra.mxu0 %v602
    %5170 = vmatprep.subr.mxu0 0.0
    %5171 = vmatpush1.msra.mxu0 0.0
    %5172 = vmatprep.subr.mxu0 0.0
    %5173 = vmatpush1.msra.mxu0 0.0
    %5174 = vmatprep.subr.mxu0 0.0
    %5175 = vmatpush1.msra.mxu0 0.0
    %5176 = vmatprep.subr.mxu0 0.0
    %5177 = vmatpush1.msra.mxu0 0.0
    %5178 = vmatprep.subr.mxu0 0.0
    %5179 = vmatpush1.msra.mxu0 0.0
    %5180 = vmatprep.subr.mxu0 0.0
    %5181 = vmatpush1.msra.mxu0 0.0
    %5182 = vmatprep.subr.mxu0 0.0
    %5183 = vmatpush1.msra.mxu0 0.0
    %5184 = vmatprep.subr.mxu0 0.0
    %5185 = vmatpush1.msra.mxu0 0.0
    %5186 = vmatprep.subr.mxu0 0.0
    %5187 = vmatpush1.msra.mxu0 0.0
    %5188 = vmatprep.subr.mxu0 0.0
    %5189 = vmatpush1.msra.mxu0 0.0
    %5190 = vmatprep.subr.mxu0 0.0
    %5191 = vmatpush1.msra.mxu0 0.0
    %5192 = vmatprep.subr.mxu0 0.0
    %5193 = vmatpush1.msra.mxu0 0.0
    %5194 = vmatprep.subr.mxu0 0.0
    %5195 = vmatpush1.msra.mxu0 0.0
    %5196 = vmatprep.subr.mxu0 0.0
    %5197 = vmatpush1.msra.mxu0 0.0
    %5198 = vmatprep.subr.mxu0 0.0
    %5199 = vmatpush1.msra.mxu0 0.0
    %5200 = vmatprep.subr.mxu0 0.0
    %5201 = vmatpush1.msra.mxu0 0.0
    %5202 = vmatprep.subr.mxu0 0.0
    %5203 = vmatpush1.msra.mxu0 0.0
    %5204 = vmatprep.subr.mxu0 0.0
    %5205 = vmatpush1.msra.mxu0 0.0
    %5206 = vmatprep.subr.mxu0 0.0
    %5207 = vmatpush1.msra.mxu0 0.0
    %5208 = vmatprep.subr.mxu0 0.0
    %5209 = vmatpush1.msra.mxu0 0.0
    %5210 = vmatprep.subr.mxu0 0.0
    %5211 = vmatpush1.msra.mxu0 0.0
    %5212 = vmatprep.subr.mxu0 0.0
    %5213 = vmatpush1.msra.mxu0 0.0
    %5214 = vmatprep.subr.mxu0 0.0
    %5215 = vmatpush1.msra.mxu0 0.0
    %5216 = vmatprep.subr.mxu0 0.0
    %5217 = vmatpush1.msra.mxu0 0.0
    %5218 = vmatprep.subr.mxu0 0.0
    %5219 = vmatpush1.msra.mxu0 0.0
    %5220 = vmatprep.subr.mxu0 0.0
    %5221 = vmatpush1.msra.mxu0 0.0
    %5222 = vmatprep.subr.mxu0 0.0
    %5223 = vmatpush1.msra.mxu0 0.0
    %5224 = vmatprep.subr.mxu0 0.0
    %5225 = vmatpush1.msra.mxu0 0.0
    %5226 = vmatprep.mubr.f32.mxu0 0.0
    %5227 = vmatmul.mubr.f32.gmra.mrb[0].mxu0 %v5160
    %v5228 = vpop.f32.mrb[0].mxu0
    %v5229 = vadd.f32 %v637, %v5228
    %v5230 = vpop.f32.mrb[0].mxu0
    %5231 = vdwg.mxu0
    %s5232 = scalar_lea.vmem [#allocation14], 26
    %5233 = vst.msk [vmem:[%s5232] sm:$0x3] %vm1150, %v5229
    %v5234 = vsel %vm1150, %v5229, -inf
    %5235 = vmax.xlane.f32.xlu0 %v5234
    %v5236 = vpop.xlane.xlu0 %5235
    %vm5237 = vcmp.eq.f32.partialorder %v5229, %v5236
    %v5238 = vsel %vm5237, 1, 0
    %v5239 = vcvt.s32.f32 %v5238
    %v5241 = vsel %vm1158, %v5239, 0
    %5243 = vmatprep.subr.mxu0 0.0
    %5244 = vmatpush1.msra.mxu0 %v609
    %5245 = vmatprep.subr.mxu0 0.0
    %5246 = vmatpush1.msra.mxu0 %v610
    %5247 = vmatprep.subr.mxu0 0.0
    %5248 = vmatpush1.msra.mxu0 0.0
    %5249 = vmatprep.subr.mxu0 0.0
    %5250 = vmatpush1.msra.mxu0 0.0
    %5251 = vmatprep.subr.mxu0 0.0
    %5252 = vmatpush1.msra.mxu0 0.0
    %5253 = vmatprep.subr.mxu0 0.0
    %5254 = vmatpush1.msra.mxu0 0.0
    %5255 = vmatprep.subr.mxu0 0.0
    %5256 = vmatpush1.msra.mxu0 0.0
    %5257 = vmatprep.subr.mxu0 0.0
    %5258 = vmatpush1.msra.mxu0 0.0
    %5259 = vmatprep.subr.mxu0 0.0
    %5260 = vmatpush1.msra.mxu0 0.0
    %5261 = vmatprep.subr.mxu0 0.0
    %5262 = vmatpush1.msra.mxu0 0.0
    %5263 = vmatprep.subr.mxu0 0.0
    %5264 = vmatpush1.msra.mxu0 0.0
    %5265 = vmatprep.subr.mxu0 0.0
    %5266 = vmatpush1.msra.mxu0 0.0
    %5267 = vmatprep.subr.mxu0 0.0
    %5268 = vmatpush1.msra.mxu0 0.0
    %5269 = vmatprep.subr.mxu0 0.0
    %5270 = vmatpush1.msra.mxu0 0.0
    %5271 = vmatprep.subr.mxu0 0.0
    %5272 = vmatpush1.msra.mxu0 0.0
    %5273 = vmatprep.subr.mxu0 0.0
    %5274 = vmatpush1.msra.mxu0 0.0
    %5275 = vmatprep.subr.mxu0 0.0
    %5276 = vmatpush1.msra.mxu0 0.0
    %5277 = vmatprep.subr.mxu0 0.0
    %5278 = vmatpush1.msra.mxu0 0.0
    %5279 = vmatprep.subr.mxu0 0.0
    %5280 = vmatpush1.msra.mxu0 0.0
    %5281 = vmatprep.subr.mxu0 0.0
    %5282 = vmatpush1.msra.mxu0 0.0
    %5283 = vmatprep.subr.mxu0 0.0
    %5284 = vmatpush1.msra.mxu0 0.0
    %5285 = vmatprep.subr.mxu0 0.0
    %5286 = vmatpush1.msra.mxu0 0.0
    %5287 = vmatprep.subr.mxu0 0.0
    %5288 = vmatpush1.msra.mxu0 0.0
    %5289 = vmatprep.subr.mxu0 0.0
    %5290 = vmatpush1.msra.mxu0 0.0
    %5291 = vmatprep.subr.mxu0 0.0
    %5292 = vmatpush1.msra.mxu0 0.0
    %5293 = vmatprep.subr.mxu0 0.0
    %5294 = vmatpush1.msra.mxu0 0.0
    %5295 = vmatprep.subr.mxu0 0.0
    %5296 = vmatpush1.msra.mxu0 0.0
    %5297 = vmatprep.subr.mxu0 0.0
    %5298 = vmatpush1.msra.mxu0 0.0
    %5299 = vmatprep.subr.mxu0 0.0
    %5300 = vmatpush1.msra.mxu0 0.0
    %5301 = vmatprep.subr.mxu0 0.0
    %5302 = vmatpush1.msra.mxu0 0.0
    %5303 = vmatprep.subr.mxu0 0.0
    %5304 = vmatpush1.msra.mxu0 0.0
    %5305 = vmatprep.subr.mxu0 0.0
    %5306 = vmatpush1.msra.mxu0 0.0
    %5307 = vmatprep.mubr.f32.mxu0 0.0
    %5308 = vmatmul.mubr.f32.gmra.mrb[0].mxu0 %v5241
    %v5309 = vpop.f32.mrb[0].mxu0
    %v5310 = vadd.f32 %v4801, %v5309
    %v5311 = vpop.f32.mrb[0].mxu0
    %5312 = vdwg.mxu0
    %v5313 = vadd.f32 %v5310, %v5153
    %v5314 = vmul.f32 %v5313, 0.5
    %v5315 = vtanh.pop %v5314
    %v5316 = vmul.f32 %v5315, 0.5
    %v5317 = vadd.f32 %v5316, 0.5
    %v5318 = vtanh.pop %v5313
    %v5319 = vmul.f32 %v5317, %v5074
    %5321 = vrot.lane.b32.xlu0 %v5318, 64
    %v5322 = vpop.permute.xlu0 %5321
    %v5324 = vmul.f32 %v5317, %v5322
    %5326 = vrot.lane.b32.xlu0 %v5324, 32
    %v5327 = vpop.permute.xlu0 %5326
    %v5329 = vadd.f32 %v5319, %v5327
    %v5330 = vtanh.pop %v5329
    %5332 = vrot.lane.b32.xlu0 %v5330, 64
    %v5333 = vpop.permute.xlu0 %5332
    %v5335 = vmul.f32 %v5317, %v5333
    %5337 = vrot.lane.b32.xlu0 %v5335, 32
    %v5338 = vpop.permute.xlu0 %5337
    %v5339 = vsel %vm113, %v5338, 0
    %5341 = vmatprep.subr.mxu0 %v592
    %5342 = vmatpush1.msra.mxu0 %v591
    %5343 = vmatprep.subr.mxu0 %v594
    %5344 = vmatpush1.msra.mxu0 %v593
    %5345 = vmatprep.subr.mxu0 %v596
    %5346 = vmatpush1.msra.mxu0 %v595
    %5347 = vmatprep.subr.mxu0 %v598
    %5348 = vmatpush1.msra.mxu0 %v597
    %5349 = vmatprep.subr.mxu0 0.0
    %5350 = vmatpush1.msra.mxu0 0.0
    %5351 = vmatprep.subr.mxu0 0.0
    %5352 = vmatpush1.msra.mxu0 0.0
    %5353 = vmatprep.subr.mxu0 0.0
    %5354 = vmatpush1.msra.mxu0 0.0
    %5355 = vmatprep.subr.mxu0 0.0
    %5356 = vmatpush1.msra.mxu0 0.0
    %5357 = vmatprep.subr.mxu0 0.0
    %5358 = vmatpush1.msra.mxu0 0.0
    %5359 = vmatprep.subr.mxu0 0.0
    %5360 = vmatpush1.msra.mxu0 0.0
    %5361 = vmatprep.subr.mxu0 0.0
    %5362 = vmatpush1.msra.mxu0 0.0
    %5363 = vmatprep.subr.mxu0 0.0
    %5364 = vmatpush1.msra.mxu0 0.0
    %5365 = vmatprep.subr.mxu0 0.0
    %5366 = vmatpush1.msra.mxu0 0.0
    %5367 = vmatprep.subr.mxu0 0.0
    %5368 = vmatpush1.msra.mxu0 0.0
    %5369 = vmatprep.subr.mxu0 0.0
    %5370 = vmatpush1.msra.mxu0 0.0
    %5371 = vmatprep.subr.mxu0 0.0
    %5372 = vmatpush1.msra.mxu0 0.0
    %5373 = vmatprep.subr.mxu0 0.0
    %5374 = vmatpush1.msra.mxu0 0.0
    %5375 = vmatprep.subr.mxu0 0.0
    %5376 = vmatpush1.msra.mxu0 0.0
    %5377 = vmatprep.subr.mxu0 0.0
    %5378 = vmatpush1.msra.mxu0 0.0
    %5379 = vmatprep.subr.mxu0 0.0
    %5380 = vmatpush1.msra.mxu0 0.0
    %5381 = vmatprep.subr.mxu0 0.0
    %5382 = vmatpush1.msra.mxu0 0.0
    %5383 = vmatprep.subr.mxu0 0.0
    %5384 = vmatpush1.msra.mxu0 0.0
    %5385 = vmatprep.subr.mxu0 0.0
    %5386 = vmatpush1.msra.mxu0 0.0
    %5387 = vmatprep.subr.mxu0 0.0
    %5388 = vmatpush1.msra.mxu0 0.0
    %5389 = vmatprep.subr.mxu0 0.0
    %5390 = vmatpush1.msra.mxu0 0.0
    %5391 = vmatprep.subr.mxu0 0.0
    %5392 = vmatpush1.msra.mxu0 0.0
    %5393 = vmatprep.subr.mxu0 0.0
    %5394 = vmatpush1.msra.mxu0 0.0
    %5395 = vmatprep.subr.mxu0 0.0
    %5396 = vmatpush1.msra.mxu0 0.0
    %5397 = vmatprep.subr.mxu0 0.0
    %5398 = vmatpush1.msra.mxu0 0.0
    %5399 = vmatprep.subr.mxu0 0.0
    %5400 = vmatpush1.msra.mxu0 0.0
    %5401 = vmatprep.subr.mxu0 0.0
    %5402 = vmatpush1.msra.mxu0 0.0
    %5403 = vmatprep.subr.mxu0 0.0
    %5404 = vmatpush1.msra.mxu0 0.0
    %5405 = vmatprep.mubr.f32.mxu0 0.0
    %5406 = vmatmul.mubr.f32.gmra.mrb[0].mxu0 %v5339
    %v5407 = vpop.f32.mrb[0].mxu0
    %v5408 = vadd.f32 0.0, %v5407
    %v5409 = vpop.f32.mrb[0].mxu0
    %v5410 = vadd.f32 0.0, %v5409
    %5411 = vdwg.mxu0
    %v5412 = vadd.f32 %v5410, %v630
    %v5413 = vmax.f32 %v5412, 0.0
    %v5415 = vsel %vm113, %v5413, 0
    %5417 = vmatprep.subr.mxu0 0.0
    %5418 = vmatpush1.msra.mxu0 %v599
    %5419 = vmatprep.subr.mxu0 0.0
    %5420 = vmatpush1.msra.mxu0 %v600
    %5421 = vmatprep.subr.mxu0 0.0
    %5422 = vmatpush1.msra.mxu0 %v601
    %5423 = vmatprep.subr.mxu0 0.0
    %5424 = vmatpush1.msra.mxu0 %v602
    %5425 = vmatprep.subr.mxu0 0.0
    %5426 = vmatpush1.msra.mxu0 0.0
    %5427 = vmatprep.subr.mxu0 0.0
    %5428 = vmatpush1.msra.mxu0 0.0
    %5429 = vmatprep.subr.mxu0 0.0
    %5430 = vmatpush1.msra.mxu0 0.0
    %5431 = vmatprep.subr.mxu0 0.0
    %5432 = vmatpush1.msra.mxu0 0.0
    %5433 = vmatprep.subr.mxu0 0.0
    %5434 = vmatpush1.msra.mxu0 0.0
    %5435 = vmatprep.subr.mxu0 0.0
    %5436 = vmatpush1.msra.mxu0 0.0
    %5437 = vmatprep.subr.mxu0 0.0
    %5438 = vmatpush1.msra.mxu0 0.0
    %5439 = vmatprep.subr.mxu0 0.0
    %5440 = vmatpush1.msra.mxu0 0.0
    %5441 = vmatprep.subr.mxu0 0.0
    %5442 = vmatpush1.msra.mxu0 0.0
    %5443 = vmatprep.subr.mxu0 0.0
    %5444 = vmatpush1.msra.mxu0 0.0
    %5445 = vmatprep.subr.mxu0 0.0
    %5446 = vmatpush1.msra.mxu0 0.0
    %5447 = vmatprep.subr.mxu0 0.0
    %5448 = vmatpush1.msra.mxu0 0.0
    %5449 = vmatprep.subr.mxu0 0.0
    %5450 = vmatpush1.msra.mxu0 0.0
    %5451 = vmatprep.subr.mxu0 0.0
    %5452 = vmatpush1.msra.mxu0 0.0
    %5453 = vmatprep.subr.mxu0 0.0
    %5454 = vmatpush1.msra.mxu0 0.0
    %5455 = vmatprep.subr.mxu0 0.0
    %5456 = vmatpush1.msra.mxu0 0.0
    %5457 = vmatprep.subr.mxu0 0.0
    %5458 = vmatpush1.msra.mxu0 0.0
    %5459 = vmatprep.subr.mxu0 0.0
    %5460 = vmatpush1.msra.mxu0 0.0
    %5461 = vmatprep.subr.mxu0 0.0
    %5462 = vmatpush1.msra.mxu0 0.0
    %5463 = vmatprep.subr.mxu0 0.0
    %5464 = vmatpush1.msra.mxu0 0.0
    %5465 = vmatprep.subr.mxu0 0.0
    %5466 = vmatpush1.msra.mxu0 0.0
    %5467 = vmatprep.subr.mxu0 0.0
    %5468 = vmatpush1.msra.mxu0 0.0
    %5469 = vmatprep.subr.mxu0 0.0
    %5470 = vmatpush1.msra.mxu0 0.0
    %5471 = vmatprep.subr.mxu0 0.0
    %5472 = vmatpush1.msra.mxu0 0.0
    %5473 = vmatprep.subr.mxu0 0.0
    %5474 = vmatpush1.msra.mxu0 0.0
    %5475 = vmatprep.subr.mxu0 0.0
    %5476 = vmatpush1.msra.mxu0 0.0
    %5477 = vmatprep.subr.mxu0 0.0
    %5478 = vmatpush1.msra.mxu0 0.0
    %5479 = vmatprep.subr.mxu0 0.0
    %5480 = vmatpush1.msra.mxu0 0.0
    %5481 = vmatprep.mubr.f32.mxu0 0.0
    %5482 = vmatmul.mubr.f32.gmra.mrb[0].mxu0 %v5415
    %v5483 = vpop.f32.mrb[0].mxu0
    %v5484 = vadd.f32 %v637, %v5483
    %v5485 = vpop.f32.mrb[0].mxu0
    %5486 = vdwg.mxu0
    %s5487 = scalar_lea.vmem [#allocation14], 28
    %5488 = vst.msk [vmem:[%s5487] sm:$0x3] %vm1150, %v5484
    %v5489 = vsel %vm1150, %v5484, -inf
    %5490 = vmax.xlane.f32.xlu0 %v5489
    %v5491 = vpop.xlane.xlu0 %5490
    %vm5492 = vcmp.eq.f32.partialorder %v5484, %v5491
    %v5493 = vsel %vm5492, 1, 0
    %v5494 = vcvt.s32.f32 %v5493
    %v5496 = vsel %vm1158, %v5494, 0
    %5498 = vmatprep.subr.mxu0 0.0
    %5499 = vmatpush1.msra.mxu0 %v609
    %5500 = vmatprep.subr.mxu0 0.0
    %5501 = vmatpush1.msra.mxu0 %v610
    %5502 = vmatprep.subr.mxu0 0.0
    %5503 = vmatpush1.msra.mxu0 0.0
    %5504 = vmatprep.subr.mxu0 0.0
    %5505 = vmatpush1.msra.mxu0 0.0
    %5506 = vmatprep.subr.mxu0 0.0
    %5507 = vmatpush1.msra.mxu0 0.0
    %5508 = vmatprep.subr.mxu0 0.0
    %5509 = vmatpush1.msra.mxu0 0.0
    %5510 = vmatprep.subr.mxu0 0.0
    %5511 = vmatpush1.msra.mxu0 0.0
    %5512 = vmatprep.subr.mxu0 0.0
    %5513 = vmatpush1.msra.mxu0 0.0
    %5514 = vmatprep.subr.mxu0 0.0
    %5515 = vmatpush1.msra.mxu0 0.0
    %5516 = vmatprep.subr.mxu0 0.0
    %5517 = vmatpush1.msra.mxu0 0.0
    %5518 = vmatprep.subr.mxu0 0.0
    %5519 = vmatpush1.msra.mxu0 0.0
    %5520 = vmatprep.subr.mxu0 0.0
    %5521 = vmatpush1.msra.mxu0 0.0
    %5522 = vmatprep.subr.mxu0 0.0
    %5523 = vmatpush1.msra.mxu0 0.0
    %5524 = vmatprep.subr.mxu0 0.0
    %5525 = vmatpush1.msra.mxu0 0.0
    %5526 = vmatprep.subr.mxu0 0.0
    %5527 = vmatpush1.msra.mxu0 0.0
    %5528 = vmatprep.subr.mxu0 0.0
    %5529 = vmatpush1.msra.mxu0 0.0
    %5530 = vmatprep.subr.mxu0 0.0
    %5531 = vmatpush1.msra.mxu0 0.0
    %5532 = vmatprep.subr.mxu0 0.0
    %5533 = vmatpush1.msra.mxu0 0.0
    %5534 = vmatprep.subr.mxu0 0.0
    %5535 = vmatpush1.msra.mxu0 0.0
    %5536 = vmatprep.subr.mxu0 0.0
    %5537 = vmatpush1.msra.mxu0 0.0
    %5538 = vmatprep.subr.mxu0 0.0
    %5539 = vmatpush1.msra.mxu0 0.0
    %5540 = vmatprep.subr.mxu0 0.0
    %5541 = vmatpush1.msra.mxu0 0.0
    %5542 = vmatprep.subr.mxu0 0.0
    %5543 = vmatpush1.msra.mxu0 0.0
    %5544 = vmatprep.subr.mxu0 0.0
    %5545 = vmatpush1.msra.mxu0 0.0
    %5546 = vmatprep.subr.mxu0 0.0
    %5547 = vmatpush1.msra.mxu0 0.0
    %5548 = vmatprep.subr.mxu0 0.0
    %5549 = vmatpush1.msra.mxu0 0.0
    %5550 = vmatprep.subr.mxu0 0.0
    %5551 = vmatpush1.msra.mxu0 0.0
    %5552 = vmatprep.subr.mxu0 0.0
    %5553 = vmatpush1.msra.mxu0 0.0
    %5554 = vmatprep.subr.mxu0 0.0
    %5555 = vmatpush1.msra.mxu0 0.0
    %5556 = vmatprep.subr.mxu0 0.0
    %5557 = vmatpush1.msra.mxu0 0.0
    %5558 = vmatprep.subr.mxu0 0.0
    %5559 = vmatpush1.msra.mxu0 0.0
    %5560 = vmatprep.subr.mxu0 0.0
    %5561 = vmatpush1.msra.mxu0 0.0
    %5562 = vmatprep.mubr.f32.mxu0 0.0
    %5563 = vmatmul.mubr.f32.gmra.mrb[0].mxu0 %v5496
    %v5564 = vpop.f32.mrb[0].mxu0
    %v5565 = vadd.f32 %v4801, %v5564
    %v5566 = vpop.f32.mrb[0].mxu0
    %5567 = vdwg.mxu0
    %v5568 = vadd.f32 %v5565, %v5408
    %v5569 = vmul.f32 %v5568, 0.5
    %v5570 = vtanh.pop %v5569
    %v5571 = vmul.f32 %v5570, 0.5
    %v5572 = vadd.f32 %v5571, 0.5
    %v5573 = vtanh.pop %v5568
    %v5574 = vmul.f32 %v5572, %v5329
    %5576 = vrot.lane.b32.xlu0 %v5573, 64
    %v5577 = vpop.permute.xlu0 %5576
    %v5579 = vmul.f32 %v5572, %v5577
    %5581 = vrot.lane.b32.xlu0 %v5579, 32
    %v5582 = vpop.permute.xlu0 %5581
    %v5584 = vadd.f32 %v5574, %v5582
    %v5585 = vtanh.pop %v5584
    %5587 = vrot.lane.b32.xlu0 %v5585, 64
    %v5588 = vpop.permute.xlu0 %5587
    %v5590 = vmul.f32 %v5572, %v5588
    %5592 = vrot.lane.b32.xlu0 %v5590, 32
    %v5593 = vpop.permute.xlu0 %5592
    %v5594 = vsel %vm113, %v5593, 0
    %5596 = vmatprep.subr.mxu0 %v592
    %5597 = vmatpush1.msra.mxu0 %v591
    %5598 = vmatprep.subr.mxu0 %v594
    %5599 = vmatpush1.msra.mxu0 %v593
    %5600 = vmatprep.subr.mxu0 %v596
    %5601 = vmatpush1.msra.mxu0 %v595
    %5602 = vmatprep.subr.mxu0 %v598
    %5603 = vmatpush1.msra.mxu0 %v597
    %5604 = vmatprep.subr.mxu0 0.0
    %5605 = vmatpush1.msra.mxu0 0.0
    %5606 = vmatprep.subr.mxu0 0.0
    %5607 = vmatpush1.msra.mxu0 0.0
    %5608 = vmatprep.subr.mxu0 0.0
    %5609 = vmatpush1.msra.mxu0 0.0
    %5610 = vmatprep.subr.mxu0 0.0
    %5611 = vmatpush1.msra.mxu0 0.0
    %5612 = vmatprep.subr.mxu0 0.0
    %5613 = vmatpush1.msra.mxu0 0.0
    %5614 = vmatprep.subr.mxu0 0.0
    %5615 = vmatpush1.msra.mxu0 0.0
    %5616 = vmatprep.subr.mxu0 0.0
    %5617 = vmatpush1.msra.mxu0 0.0
    %5618 = vmatprep.subr.mxu0 0.0
    %5619 = vmatpush1.msra.mxu0 0.0
    %5620 = vmatprep.subr.mxu0 0.0
    %5621 = vmatpush1.msra.mxu0 0.0
    %5622 = vmatprep.subr.mxu0 0.0
    %5623 = vmatpush1.msra.mxu0 0.0
    %5624 = vmatprep.subr.mxu0 0.0
    %5625 = vmatpush1.msra.mxu0 0.0
    %5626 = vmatprep.subr.mxu0 0.0
    %5627 = vmatpush1.msra.mxu0 0.0
    %5628 = vmatprep.subr.mxu0 0.0
    %5629 = vmatpush1.msra.mxu0 0.0
    %5630 = vmatprep.subr.mxu0 0.0
    %5631 = vmatpush1.msra.mxu0 0.0
    %5632 = vmatprep.subr.mxu0 0.0
    %5633 = vmatpush1.msra.mxu0 0.0
    %5634 = vmatprep.subr.mxu0 0.0
    %5635 = vmatpush1.msra.mxu0 0.0
    %5636 = vmatprep.subr.mxu0 0.0
    %5637 = vmatpush1.msra.mxu0 0.0
    %5638 = vmatprep.subr.mxu0 0.0
    %5639 = vmatpush1.msra.mxu0 0.0
    %5640 = vmatprep.subr.mxu0 0.0
    %5641 = vmatpush1.msra.mxu0 0.0
    %5642 = vmatprep.subr.mxu0 0.0
    %5643 = vmatpush1.msra.mxu0 0.0
    %5644 = vmatprep.subr.mxu0 0.0
    %5645 = vmatpush1.msra.mxu0 0.0
    %5646 = vmatprep.subr.mxu0 0.0
    %5647 = vmatpush1.msra.mxu0 0.0
    %5648 = vmatprep.subr.mxu0 0.0
    %5649 = vmatpush1.msra.mxu0 0.0
    %5650 = vmatprep.subr.mxu0 0.0
    %5651 = vmatpush1.msra.mxu0 0.0
    %5652 = vmatprep.subr.mxu0 0.0
    %5653 = vmatpush1.msra.mxu0 0.0
    %5654 = vmatprep.subr.mxu0 0.0
    %5655 = vmatpush1.msra.mxu0 0.0
    %5656 = vmatprep.subr.mxu0 0.0
    %5657 = vmatpush1.msra.mxu0 0.0
    %5658 = vmatprep.subr.mxu0 0.0
    %5659 = vmatpush1.msra.mxu0 0.0
    %5660 = vmatprep.mubr.f32.mxu0 0.0
    %5661 = vmatmul.mubr.f32.gmra.mrb[0].mxu0 %v5594
    %v5662 = vpop.f32.mrb[0].mxu0
    %v5663 = vpop.f32.mrb[0].mxu0
    %v5664 = vadd.f32 0.0, %v5663
    %5665 = vdwg.mxu0
    %v5666 = vadd.f32 %v5664, %v630
    %v5667 = vmax.f32 %v5666, 0.0
    %v5669 = vsel %vm113, %v5667, 0
    %5671 = vmatprep.subr.mxu0 0.0
    %5672 = vmatpush1.msra.mxu0 %v599
    %5673 = vmatprep.subr.mxu0 0.0
    %5674 = vmatpush1.msra.mxu0 %v600
    %5675 = vmatprep.subr.mxu0 0.0
    %5676 = vmatpush1.msra.mxu0 %v601
    %5677 = vmatprep.subr.mxu0 0.0
    %5678 = vmatpush1.msra.mxu0 %v602
    %5679 = vmatprep.subr.mxu0 0.0
    %5680 = vmatpush1.msra.mxu0 0.0
    %5681 = vmatprep.subr.mxu0 0.0
    %5682 = vmatpush1.msra.mxu0 0.0
    %5683 = vmatprep.subr.mxu0 0.0
    %5684 = vmatpush1.msra.mxu0 0.0
    %5685 = vmatprep.subr.mxu0 0.0
    %5686 = vmatpush1.msra.mxu0 0.0
    %5687 = vmatprep.subr.mxu0 0.0
    %5688 = vmatpush1.msra.mxu0 0.0
    %5689 = vmatprep.subr.mxu0 0.0
    %5690 = vmatpush1.msra.mxu0 0.0
    %5691 = vmatprep.subr.mxu0 0.0
    %5692 = vmatpush1.msra.mxu0 0.0
    %5693 = vmatprep.subr.mxu0 0.0
    %5694 = vmatpush1.msra.mxu0 0.0
    %5695 = vmatprep.subr.mxu0 0.0
    %5696 = vmatpush1.msra.mxu0 0.0
    %5697 = vmatprep.subr.mxu0 0.0
    %5698 = vmatpush1.msra.mxu0 0.0
    %5699 = vmatprep.subr.mxu0 0.0
    %5700 = vmatpush1.msra.mxu0 0.0
    %5701 = vmatprep.subr.mxu0 0.0
    %5702 = vmatpush1.msra.mxu0 0.0
    %5703 = vmatprep.subr.mxu0 0.0
    %5704 = vmatpush1.msra.mxu0 0.0
    %5705 = vmatprep.subr.mxu0 0.0
    %5706 = vmatpush1.msra.mxu0 0.0
    %5707 = vmatprep.subr.mxu0 0.0
    %5708 = vmatpush1.msra.mxu0 0.0
    %5709 = vmatprep.subr.mxu0 0.0
    %5710 = vmatpush1.msra.mxu0 0.0
    %5711 = vmatprep.subr.mxu0 0.0
    %5712 = vmatpush1.msra.mxu0 0.0
    %5713 = vmatprep.subr.mxu0 0.0
    %5714 = vmatpush1.msra.mxu0 0.0
    %5715 = vmatprep.subr.mxu0 0.0
    %5716 = vmatpush1.msra.mxu0 0.0
    %5717 = vmatprep.subr.mxu0 0.0
    %5718 = vmatpush1.msra.mxu0 0.0
    %5719 = vmatprep.subr.mxu0 0.0
    %5720 = vmatpush1.msra.mxu0 0.0
    %5721 = vmatprep.subr.mxu0 0.0
    %5722 = vmatpush1.msra.mxu0 0.0
    %5723 = vmatprep.subr.mxu0 0.0
    %5724 = vmatpush1.msra.mxu0 0.0
    %5725 = vmatprep.subr.mxu0 0.0
    %5726 = vmatpush1.msra.mxu0 0.0
    %5727 = vmatprep.subr.mxu0 0.0
    %5728 = vmatpush1.msra.mxu0 0.0
    %5729 = vmatprep.subr.mxu0 0.0
    %5730 = vmatpush1.msra.mxu0 0.0
    %5731 = vmatprep.subr.mxu0 0.0
    %5732 = vmatpush1.msra.mxu0 0.0
    %5733 = vmatprep.subr.mxu0 0.0
    %5734 = vmatpush1.msra.mxu0 0.0
    %5735 = vmatprep.mubr.f32.mxu0 0.0
    %5736 = vmatmul.mubr.f32.gmra.mrb[0].mxu0 %v5669
    %v5737 = vpop.f32.mrb[0].mxu0
    %v5738 = vadd.f32 %v637, %v5737
    %v5739 = vpop.f32.mrb[0].mxu0
    %5740 = vdwg.mxu0
    %s5741 = scalar_lea.vmem [#allocation14], 30
    %5742 = vst.msk [vmem:[%s5741] sm:$0x3] %vm1150, %v5738
    // Predicated region
    $region46: #{tpu_custom_call.1} parent=1 // pred_check
      _
    $region47: #{tpu_custom_call.1} parent=1 // pred_check_branch
      %5744 = sbr.rel (0) target = $region49
    $region48: #{tpu_custom_call.1} parent=1 // pred_region
      %s5746 = ssub.s32 32, 32
      %5747 = vsyncadd [#allocation4], %s5746
      %s5749 = sshll.u32 [#allocation11], 4
      %s5750 = int_to_ptr.vmem [resolvable:$true] %s5749
      %5752 = dma.vmem_to_hbm [thread:$0]  %s5750, 32, %s6, [#allocation4]
    $region49: #{tpu_custom_call.1} parent=1 // pred_fallthru
      _
    // Predicated region
    $region50: #{tpu_custom_call.1} parent=1 // pred_check
      _
    $region51: #{tpu_custom_call.1} parent=1 // pred_check_branch
      %5754 = sbr.rel (0) target = $region53
    $region52: #{tpu_custom_call.1} parent=1 // pred_region
      %s5756 = ssub.s32 128, 128
      %5757 = vsyncadd [#allocation13], %s5756
      %s5758 = sshll.u32 [#allocation12], 4
      %s5759 = int_to_ptr.vmem [resolvable:$true] %s5758
      %5764 = dma.vmem_to_hbm [thread:$0]  %s5759, 128, %s7, [#allocation13], 32, 32, 2
    $region53: #{tpu_custom_call.1} parent=1 // pred_fallthru
      _
    // Predicated region
    $region54: #{tpu_custom_call.1} parent=1 // pred_check
      _
    $region55: #{tpu_custom_call.1} parent=1 // pred_check_branch
      %5766 = sbr.rel (0) target = $region57
    $region56: #{tpu_custom_call.1} parent=1 // pred_region
      %s5768 = ssub.s32 512, 512
      %5769 = vsyncadd [#allocation13], %s5768
      %s5770 = sshll.u32 [#allocation14], 4
      %s5771 = int_to_ptr.vmem [resolvable:$true] %s5770
      %5776 = dma.vmem_to_hbm [thread:$0]  %s5771, 512, %s8, [#allocation13], 32, 32, 2
    $region57: #{tpu_custom_call.1} parent=1 // pred_fallthru
      _
    // Predicated region
    $region58: #{tpu_custom_call.1} parent=1 // pred_check
      _
    $region59: #{tpu_custom_call.1} parent=1 // pred_check_branch
      %5778 = sbr.rel (0) target = $region61
    $region60: #{tpu_custom_call.1} parent=1 // pred_region
      %5779 = dma.done [#allocation4], 32
    $region61: #{tpu_custom_call.1} parent=1 // pred_fallthru
      _
    // Predicated region
    $region62: #{tpu_custom_call.1} parent=1 // pred_check
      _
    $region63: #{tpu_custom_call.1} parent=1 // pred_check_branch
      %5781 = sbr.rel (0) target = $region65
    $region64: #{tpu_custom_call.1} parent=1 // pred_region
      %5782 = dma.done [#allocation13], 128
    $region65: #{tpu_custom_call.1} parent=1 // pred_fallthru
      _
    // Predicated region
    $region66: #{tpu_custom_call.1} parent=1 // pred_check
      _
    $region67: #{tpu_custom_call.1} parent=1 // pred_check_branch
      %5784 = sbr.rel (0) target = $region69
    $region68: #{tpu_custom_call.1} parent=1 // pred_region
      %5785 = dma.done [#allocation13], 512
    $region69: #{tpu_custom_call.1} parent=1 // pred_fallthru
      _
    %5786 = vsyncpa [#allocation3], 1
    %5787 = vsyncpa [#allocation6], 1
    %5788 = vsyncpa [#allocation9], 1
    %5789 = vsyncpa [#allocation4], 1
    %5790 = vsyncpa [#allocation13], 1

</llo_original>
